<compile_context>
chip_gen: v6e
topology: v6e:2x2x1
jax: 0.10.0
libtpu: 0.0.40
codegen_flags: <defaults>
</compile_context>

<pallas_src>
import jax
import jax.numpy as jnp
from jax.experimental import pallas as pl
from jax.experimental.pallas import tpu as pltpu

# ---- small Mistral-like config (vocab_size=2, num_hidden_layers=4 as in
# ClsNet.__init__; other dims scaled down so this synthetic kernel runs fast) ----
BATCH = 2
SEQ = 8
D_MODEL = 32
N_HEADS = 4
N_KV_HEADS = 2
REP = N_HEADS // N_KV_HEADS
HEAD_DIM = D_MODEL // N_HEADS
HALF = HEAD_DIM // 2
INTERMEDIATE = 64
N_LAYERS = 4
VOCAB = 2
RMS_EPS = 1e-6
ROPE_THETA = 10000.0
MASK_VAL = -1e9                       # large finite mask (avoids -inf rows in softmax)

QE = N_HEADS * HEAD_DIM               # 32: per-section width after kv expansion
QKV_E = 3 * QE                        # 96: q | k(expanded) | v(expanded)


# --------------------------- fused Pallas kernel ----------------------------
def _rmsnorm(x, w_row):
    # x: (S, D) f32, w_row: (1, D) f32
    var = jnp.mean(x * x, axis=-1, keepdims=True)
    return x * jax.lax.rsqrt(var + RMS_EPS) * w_row


def _clsnet_fused_kernel(x_ref, ln1_ref, ln2_ref, lnf_ref,
                         wqkv_ref, wqkvr_ref, wo_ref, wgu_ref, wdp_ref,
                         cos_ref, sin_ref, bias_ref, o_ref):
    S, H, Dh = SEQ, N_HEADS, HEAD_DIM

    h = x_ref[0].astype(jnp.float32)          # (S, D) — one batch element per grid step
    cos = cos_ref[...]                        # (S, QKV_E); ones over v columns
    sin = sin_ref[...]                        # (S, QKV_E); zeros over v columns
    bias = bias_ref[0]                        # (S, S) causal + padding additive bias

    for l in range(N_LAYERS):                 # static unroll; weights stay VMEM-resident
        # ---------------- self-attention block ----------------
        hn = _rmsnorm(h, ln1_ref[l]).astype(jnp.bfloat16)
        qkv = jnp.dot(hn, wqkv_ref[l], preferred_element_type=jnp.float32)   # (S, 96)
        qkvr = jnp.dot(hn, wqkvr_ref[l], preferred_element_type=jnp.float32)  # rotate-half via weights
        qkv = qkv * cos + qkvr * sin          # RoPE on whole q|k slab; v passes through

        q = qkv[:, :QE].reshape(S, H, Dh)
        k = qkv[:, QE:2 * QE].reshape(S, H, Dh)
        v = qkv[:, 2 * QE:].reshape(S, H, Dh)

        # one batched QK^T + one batched PV per layer (softmax scale folded into wqkv)
        s = jnp.einsum('qhd,khd->hqk', q.astype(jnp.bfloat16), k.astype(jnp.bfloat16),
                       preferred_element_type=jnp.float32) + bias[None]
        s = s - jnp.max(s, axis=-1, keepdims=True)          # f32 softmax
        p = jnp.exp(s)
        p = p / jnp.sum(p, axis=-1, keepdims=True)
        ctx = jnp.einsum('hqk,khd->qhd', p.astype(jnp.bfloat16), v.astype(jnp.bfloat16),
                         preferred_element_type=jnp.float32)                  # (S, H, Dh)
        attn = jnp.dot(ctx.reshape(S, D_MODEL).astype(jnp.bfloat16), wo_ref[l],
                       preferred_element_type=jnp.float32)
        h = h + attn

        # --------------------- MLP block (SwiGLU) ----------------------
        hn = _rmsnorm(h, ln2_ref[l]).astype(jnp.bfloat16)
        gu = jnp.dot(hn, wgu_ref[l], preferred_element_type=jnp.float32)      # (S, 2I)
        # silu(gu) * roll(gu, I): top I lanes = silu(g)*u; bottom lanes are killed
        # by the zeroed bottom half of wd_pad — no offset-64 lane slice needed.
        act = gu * jax.nn.sigmoid(gu) * pltpu.roll(gu, shift=INTERMEDIATE, axis=1)
        mlp = jnp.dot(act.astype(jnp.bfloat16), wdp_ref[l],
                      preferred_element_type=jnp.float32)
        h = h + mlp

    o_ref[0] = _rmsnorm(h, lnf_ref[...])      # final RMSNorm'd hidden states


# ------------------------------ JAX wrapper ---------------------------------
def mistral_forward(params, inputs_embeds, attention_mask):
    B, S, D = inputs_embeds.shape

    # RoPE tables: (S, Dh), expanded over q|k head columns (NOT tiled over batch)
    inv = 1.0 / (ROPE_THETA ** (jnp.arange(0, HEAD_DIM, 2, dtype=jnp.float32) / HEAD_DIM))
    freqs = jnp.outer(jnp.arange(S, dtype=jnp.float32), inv)
    emb = jnp.concatenate([freqs, freqs], axis=-1)                  # (S, Dh)
    cos_h, sin_h = jnp.cos(emb), jnp.sin(emb)
    cos_full = jnp.concatenate(
        [jnp.tile(cos_h, (1, 2 * N_HEADS)), jnp.ones((S, QE), jnp.float32)], axis=-1)
    sin_full = jnp.concatenate(
        [jnp.tile(sin_h, (1, 2 * N_HEADS)), jnp.zeros((S, QE), jnp.float32)], axis=-1)

    # additive attention bias: causal + padding (head-independent), finite mask val
    causal = jnp.tril(jnp.ones((S, S), dtype=bool))
    allowed = causal[None, :, :] & (attention_mask[:, None, :] > 0)
    bias = jnp.where(allowed, 0.0, MASK_VAL).astype(jnp.float32)    # (B, S, S)

    def full(shape):  # whole-array block, same for every grid step
        return pl.BlockSpec(shape, lambda b, _n=len(shape): (0,) * _n)

    hn = pl.pallas_call(
        _clsnet_fused_kernel,
        grid=(B,),                                                   # batch-parallel grid
        in_specs=[
            pl.BlockSpec((1, S, D_MODEL), lambda b: (b, 0, 0)),      # x
            full((N_LAYERS, 1, D_MODEL)),                            # ln1
            full((N_LAYERS, 1, D_MODEL)),                            # ln2
            full((1, D_MODEL)),                                      # ln_f
            full((N_LAYERS, D_MODEL, QKV_E)),                        # wqkv (q scaled)
            full((N_LAYERS, D_MODEL, QKV_E)),                        # wqkv_rot (= wqkv @ R)
            full((N_LAYERS, D_MODEL, D_MODEL)),                      # wo
            full((N_LAYERS, D_MODEL, 2 * INTERMEDIATE)),             # wgu (gate|up fused)
            full((N_LAYERS, 2 * INTERMEDIATE, D_MODEL)),             # wd padded (zero bottom)
            full((S, QKV_E)),                                        # cos
            full((S, QKV_E)),                                        # sin
            pl.BlockSpec((1, S, S), lambda b: (b, 0, 0)),            # bias
        ],
        out_specs=pl.BlockSpec((1, S, D_MODEL), lambda b: (b, 0, 0)),
        out_shape=jax.ShapeDtypeStruct((B, S, D_MODEL), jnp.float32),
        compiler_params=pltpu.CompilerParams(
            dimension_semantics=("parallel",)),   # uses both TCs on v7x; no-op on v5e/v6e
    )(inputs_embeds.astype(jnp.float32),
      params["ln1"], params["ln2"], params["ln_f"],
      params["wqkv"], params["wqkv_rot"], params["wo"], params["wgu"], params["wd_pad"],
      cos_full, sin_full, bias)

    # tiny lm_head (D=32 -> 2) in plain JAX: avoids 2-lane masked stores in-kernel
    logits = jnp.einsum('bsd,dv->bsv', hn, params["lm_head"])
    return logits.astype(jnp.float32)             # logits.float()


def weighted_cross_entropy(logits, labels):
    # CrossEntropyLoss(weight=[1]*(vocab-2)+[0.15, 0.85]) on shifted logits/labels,
    # ignore_index=-100, weighted-mean reduction.
    class_w = jnp.array([0.15, 0.85], dtype=jnp.float32)
    shift_logits = logits[:, :-1, :].reshape(-1, VOCAB)
    shift_labels = labels[:, 1:].reshape(-1)
    valid = shift_labels != -100
    safe = jnp.where(valid, shift_labels, 0)
    logp = jax.nn.log_softmax(shift_logits.astype(jnp.float32), axis=-1)
    nll = -jnp.take_along_axis(logp, safe[:, None], axis=-1)[:, 0]
    w = jnp.where(valid, class_w[safe], 0.0)
    return jnp.sum(w * nll) / jnp.sum(w)


def init_params(key):
    ks = jax.random.split(key, 7)

    def nrm(kk, shape):
        return 0.02 * jax.random.normal(kk, shape, dtype=jnp.float32)

    # NOTE: HF/PyTorch nn.Linear stores (out, in); these synthetic weights are (in, out).
    wq = nrm(ks[0], (N_LAYERS, D_MODEL, N_HEADS * HEAD_DIM)) / (HEAD_DIM ** 0.5)  # fold 1/sqrt(Dh)
    wk = nrm(ks[1], (N_LAYERS, D_MODEL, N_KV_HEADS * HEAD_DIM))
    wv = nrm(ks[2], (N_LAYERS, D_MODEL, N_KV_HEADS * HEAD_DIM))

    def expand_kv(w):   # GQA handled once at init: replicate each kv head's columns REP times
        w = w.reshape(N_LAYERS, D_MODEL, N_KV_HEADS, 1, HEAD_DIM)
        w = jnp.broadcast_to(w, (N_LAYERS, D_MODEL, N_KV_HEADS, REP, HEAD_DIM))
        return w.reshape(N_LAYERS, D_MODEL, N_HEADS * HEAD_DIM)

    wqkv = jnp.concatenate([wq, expand_kv(wk), expand_kv(wv)], axis=-1)   # (L, D, 96)

    # rotate-half as a constant block-diagonal permutation folded into a weight tensor
    R = jnp.zeros((QKV_E, QKV_E), jnp.float32)
    eye = jnp.eye(HALF, dtype=jnp.float32)
    for hblk in range(2 * N_HEADS):            # q heads + expanded k heads; v block stays zero
        o = hblk * HEAD_DIM
        R = R.at[o + HALF:o + HEAD_DIM, o:o + HALF].set(-eye)
        R = R.at[o:o + HALF, o + HALF:o + HEAD_DIM].set(eye)
    wqkv_rot = jnp.einsum('ldo,oj->ldj', wqkv, R)

    wd = nrm(ks[4], (N_LAYERS, INTERMEDIATE, D_MODEL))
    wd_pad = jnp.concatenate([wd, jnp.zeros_like(wd)], axis=1)            # (L, 2I, D)

    return dict(
        ln1=jnp.ones((N_LAYERS, 1, D_MODEL), jnp.float32),
        ln2=jnp.ones((N_LAYERS, 1, D_MODEL), jnp.float32),
        ln_f=jnp.ones((1, D_MODEL), jnp.float32),
        wqkv=wqkv.astype(jnp.bfloat16),
        wqkv_rot=wqkv_rot.astype(jnp.bfloat16),
        wo=nrm(ks[5], (N_LAYERS, D_MODEL, D_MODEL)).astype(jnp.bfloat16),
        wgu=nrm(ks[3], (N_LAYERS, D_MODEL, 2 * INTERMEDIATE)).astype(jnp.bfloat16),
        wd_pad=wd_pad.astype(jnp.bfloat16),
        lm_head=nrm(ks[6], (D_MODEL, VOCAB)),
    )


@jax.jit
def clsnet_forward(params, x, cls_labels, cls_attention_mask):
    """ClsNet.forward: returns (loss, logits) like CausalLMOutputWithPast."""
    logits = mistral_forward(params, x, cls_attention_mask)
    loss = weighted_cross_entropy(logits, cls_labels)
    return loss, logits


if __name__ == "__main__":
    key = jax.random.PRNGKey(0)
    pkey, xkey, lkey = jax.random.split(key, 3)
    params = init_params(pkey)

    x = jax.random.normal(xkey, (BATCH, SEQ, D_MODEL), dtype=jnp.float32)
    cls_attention_mask = jnp.ones((BATCH, SEQ), dtype=jnp.int32).at[1, -1].set(0)
    cls_labels = jax.random.randint(lkey, (BATCH, SEQ), 0, VOCAB, dtype=jnp.int32)
    cls_labels = cls_labels.at[1, -1].set(-100)   # padded position ignored in loss

    loss, logits = clsnet_forward(params, x, cls_labels, cls_attention_mask)
    jax.block_until_ready((loss, logits))
    assert logits.shape == (BATCH, SEQ, VOCAB) and logits.dtype == jnp.float32
    assert jnp.isfinite(loss)
    print("KERNEL_OK")
</pallas_src>

<mosaic_0001>
module attributes {stable_mosaic.version = 11 : i64} {
  func.func @_clsnet_fused_kernel(%arg0: i32, %arg1: memref<1x8x32xf32, #tpu.memory_space<vmem>>, %arg2: memref<4x1x32xf32, #tpu.memory_space<vmem>>, %arg3: memref<4x1x32xf32, #tpu.memory_space<vmem>>, %arg4: memref<1x32xf32, #tpu.memory_space<vmem>>, %arg5: memref<4x32x96xbf16, #tpu.memory_space<vmem>>, %arg6: memref<4x32x96xbf16, #tpu.memory_space<vmem>>, %arg7: memref<4x32x32xbf16, #tpu.memory_space<vmem>>, %arg8: memref<4x32x128xbf16, #tpu.memory_space<vmem>>, %arg9: memref<4x128x32xbf16, #tpu.memory_space<vmem>>, %arg10: memref<8x96xf32, #tpu.memory_space<vmem>>, %arg11: memref<8x96xf32, #tpu.memory_space<vmem>>, %arg12: memref<1x8x8xf32, #tpu.memory_space<vmem>>, %arg13: memref<1x8x32xf32, #tpu.memory_space<vmem>>) attributes {dimension_semantics = [#tpu.dimension_semantics<parallel>], iteration_bounds = array<i64: 2>, scalar_prefetch = 0 : i64, scratch_operands = 0 : i64, tpu.core_type = #tpu.core_type<tc>, window_params = [{transform_indices = @transform_0, window_bounds = array<i64: 1, 8, 32>}, {pipeline_mode = #tpu.pipeline_mode<synchronous>, transform_indices = @transform_1, window_bounds = array<i64: 4, 1, 32>}, {pipeline_mode = #tpu.pipeline_mode<synchronous>, transform_indices = @transform_2, window_bounds = array<i64: 4, 1, 32>}, {pipeline_mode = #tpu.pipeline_mode<synchronous>, transform_indices = @transform_3, window_bounds = array<i64: 1, 32>}, {pipeline_mode = #tpu.pipeline_mode<synchronous>, transform_indices = @transform_4, window_bounds = array<i64: 4, 32, 96>}, {pipeline_mode = #tpu.pipeline_mode<synchronous>, transform_indices = @transform_5, window_bounds = array<i64: 4, 32, 96>}, {pipeline_mode = #tpu.pipeline_mode<synchronous>, transform_indices = @transform_6, window_bounds = array<i64: 4, 32, 32>}, {pipeline_mode = #tpu.pipeline_mode<synchronous>, transform_indices = @transform_7, window_bounds = array<i64: 4, 32, 128>}, {pipeline_mode = #tpu.pipeline_mode<synchronous>, transform_indices = @transform_8, window_bounds = array<i64: 4, 128, 32>}, {pipeline_mode = #tpu.pipeline_mode<synchronous>, transform_indices = @transform_9, window_bounds = array<i64: 8, 96>}, {pipeline_mode = #tpu.pipeline_mode<synchronous>, transform_indices = @transform_10, window_bounds = array<i64: 8, 96>}, {transform_indices = @transform_11, window_bounds = array<i64: 1, 8, 8>}, {transform_indices = @transform_12, window_bounds = array<i64: 1, 8, 32>}]} {
    %c0 = arith.constant 0 : index
    %c0_0 = arith.constant 0 : index
    %c0_1 = arith.constant 0 : index
    %0 = vector.load %arg1[%c0, %c0_0, %c0_1] : memref<1x8x32xf32, #tpu.memory_space<vmem>>, vector<1x8x32xf32>
    %1 = vector.shape_cast %0 : vector<1x8x32xf32> to vector<8x32xf32>
    %c0_2 = arith.constant 0 : index
    %c0_3 = arith.constant 0 : index
    %2 = vector.load %arg10[%c0_2, %c0_3] : memref<8x96xf32, #tpu.memory_space<vmem>>, vector<8x96xf32>
    %c0_4 = arith.constant 0 : index
    %c0_5 = arith.constant 0 : index
    %3 = vector.load %arg11[%c0_4, %c0_5] : memref<8x96xf32, #tpu.memory_space<vmem>>, vector<8x96xf32>
    %c0_6 = arith.constant 0 : index
    %c0_7 = arith.constant 0 : index
    %c0_8 = arith.constant 0 : index
    %4 = vector.load %arg12[%c0_6, %c0_7, %c0_8] : memref<1x8x8xf32, #tpu.memory_space<vmem>>, vector<1x8x8xf32>
    %5 = vector.shape_cast %4 : vector<1x8x8xf32> to vector<8x8xf32>
    %c0_9 = arith.constant 0 : index
    %c0_10 = arith.constant 0 : index
    %c0_11 = arith.constant 0 : index
    %6 = vector.load %arg2[%c0_9, %c0_10, %c0_11] : memref<4x1x32xf32, #tpu.memory_space<vmem>>, vector<1x1x32xf32>
    %7 = vector.shape_cast %6 : vector<1x1x32xf32> to vector<1x32xf32>
    %8 = arith.mulf %1, %1 : vector<8x32xf32>
    %cst = arith.constant dense<0.000000e+00> : vector<8xf32>
    %9 = vector.multi_reduction <add>, %8, %cst [1] : vector<8x32xf32> to vector<8xf32>
    %10 = vector.shape_cast %9 : vector<8xf32> to vector<8x1xf32>
    %cst_12 = arith.constant 3.200000e+01 : f32
    %11 = vector.broadcast %cst_12 : f32 to vector<8x1xf32>
    %12 = arith.divf %10, %11 : vector<8x1xf32>
    %cst_13 = arith.constant 9.99999997E-7 : f32
    %13 = vector.broadcast %cst_13 : f32 to vector<8x1xf32>
    %14 = arith.addf %12, %13 : vector<8x1xf32>
    %15 = math.rsqrt %14 : vector<8x1xf32>
    %16 = vector.broadcast %15 : vector<8x1xf32> to vector<8x32xf32>
    %17 = arith.mulf %1, %16 : vector<8x32xf32>
    %18 = vector.broadcast %7 : vector<1x32xf32> to vector<8x32xf32>
    %19 = arith.mulf %17, %18 : vector<8x32xf32>
    %20 = arith.truncf %19 : vector<8x32xf32> to vector<8x32xbf16>
    %c0_14 = arith.constant 0 : index
    %c0_15 = arith.constant 0 : index
    %c0_16 = arith.constant 0 : index
    %21 = vector.load %arg5[%c0_14, %c0_15, %c0_16] : memref<4x32x96xbf16, #tpu.memory_space<vmem>>, vector<1x32x96xbf16>
    %22 = vector.shape_cast %21 : vector<1x32x96xbf16> to vector<32x96xbf16>
    %cst_17 = arith.constant dense<0.000000e+00> : vector<8x96xf32>
    %23 = tpu.matmul %20, %22, %cst_17 {dimension_numbers = #tpu.dot_dimension_numbers<[1], [0], [0], [1], [0, 0, 1, 1], [], []>} : vector<8x32xbf16>, vector<32x96xbf16>, vector<8x96xf32> -> vector<8x96xf32>
    %c0_18 = arith.constant 0 : index
    %c0_19 = arith.constant 0 : index
    %c0_20 = arith.constant 0 : index
    %24 = vector.load %arg6[%c0_18, %c0_19, %c0_20] : memref<4x32x96xbf16, #tpu.memory_space<vmem>>, vector<1x32x96xbf16>
    %25 = vector.shape_cast %24 : vector<1x32x96xbf16> to vector<32x96xbf16>
    %cst_21 = arith.constant dense<0.000000e+00> : vector<8x96xf32>
    %26 = tpu.matmul %20, %25, %cst_21 {dimension_numbers = #tpu.dot_dimension_numbers<[1], [0], [0], [1], [0, 0, 1, 1], [], []>} : vector<8x32xbf16>, vector<32x96xbf16>, vector<8x96xf32> -> vector<8x96xf32>
    %27 = arith.mulf %23, %2 : vector<8x96xf32>
    %28 = arith.mulf %26, %3 : vector<8x96xf32>
    %29 = arith.addf %27, %28 : vector<8x96xf32>
    %30 = vector.extract_strided_slice %29 {offsets = [0, 0], sizes = [8, 32], strides = [1, 1]} : vector<8x96xf32> to vector<8x32xf32>
    %31 = vector.shape_cast %30 : vector<8x32xf32> to vector<8x4x8xf32>
    %32 = vector.extract_strided_slice %29 {offsets = [0, 32], sizes = [8, 32], strides = [1, 1]} : vector<8x96xf32> to vector<8x32xf32>
    %33 = vector.shape_cast %32 : vector<8x32xf32> to vector<8x4x8xf32>
    %34 = vector.extract_strided_slice %29 {offsets = [0, 64], sizes = [8, 32], strides = [1, 1]} : vector<8x96xf32> to vector<8x32xf32>
    %35 = vector.shape_cast %34 : vector<8x32xf32> to vector<8x4x8xf32>
    %36 = arith.truncf %31 : vector<8x4x8xf32> to vector<8x4x8xbf16>
    %37 = arith.truncf %33 : vector<8x4x8xf32> to vector<8x4x8xbf16>
    "tpu.trace_start"() <{level = 10 : i32, message = "qhd,khd->hqk"}> : () -> ()
    %cst_22 = arith.constant dense<0.000000e+00> : vector<4x8x8xf32>
    %38 = tpu.matmul %36, %37, %cst_22 {dimension_numbers = #tpu.dot_dimension_numbers<[2], [2], [0], [0], [0, 1, 0, 0, 1, 0], [1], [1]>} : vector<8x4x8xbf16>, vector<8x4x8xbf16>, vector<4x8x8xf32> -> vector<4x8x8xf32>
    "tpu.trace_stop"() : () -> ()
    %39 = vector.shape_cast %5 : vector<8x8xf32> to vector<1x8x8xf32>
    %40 = vector.broadcast %39 : vector<1x8x8xf32> to vector<4x8x8xf32>
    %41 = arith.addf %38, %40 : vector<4x8x8xf32>
    %cst_23 = arith.constant dense<0xFF800000> : vector<4x8xf32>
    %42 = vector.multi_reduction <maximumf>, %41, %cst_23 [2] : vector<4x8x8xf32> to vector<4x8xf32>
    %43 = vector.shape_cast %42 : vector<4x8xf32> to vector<4x8x1xf32>
    %44 = vector.broadcast %43 : vector<4x8x1xf32> to vector<4x8x8xf32>
    %45 = arith.subf %41, %44 : vector<4x8x8xf32>
    %46 = math.exp %45 : vector<4x8x8xf32>
    %cst_24 = arith.constant dense<0.000000e+00> : vector<4x8xf32>
    %47 = vector.multi_reduction <add>, %46, %cst_24 [2] : vector<4x8x8xf32> to vector<4x8xf32>
    %48 = vector.shape_cast %47 : vector<4x8xf32> to vector<4x8x1xf32>
    %49 = vector.broadcast %48 : vector<4x8x1xf32> to vector<4x8x8xf32>
    %50 = arith.divf %46, %49 : vector<4x8x8xf32>
    %51 = arith.truncf %50 : vector<4x8x8xf32> to vector<4x8x8xbf16>
    %52 = arith.truncf %35 : vector<8x4x8xf32> to vector<8x4x8xbf16>
    "tpu.trace_start"() <{level = 10 : i32, message = "hqk,khd->qhd"}> : () -> ()
    %cst_25 = arith.constant dense<0.000000e+00> : vector<4x8x8xf32>
    %53 = tpu.matmul %52, %51, %cst_25 {dimension_numbers = #tpu.dot_dimension_numbers<[0], [2], [2], [1], [0, 1, 0, 2, 1, 1], [1], [0]>} : vector<8x4x8xbf16>, vector<4x8x8xbf16>, vector<4x8x8xf32> -> vector<4x8x8xf32>
    %54 = tpu.transpose %53, [2, 0, 1] : vector<4x8x8xf32> -> vector<8x4x8xf32>
    "tpu.trace_stop"() : () -> ()
    %55 = vector.shape_cast %54 : vector<8x4x8xf32> to vector<8x32xf32>
    %56 = arith.truncf %55 : vector<8x32xf32> to vector<8x32xbf16>
    %c0_26 = arith.constant 0 : index
    %c0_27 = arith.constant 0 : index
    %c0_28 = arith.constant 0 : index
    %57 = vector.load %arg7[%c0_26, %c0_27, %c0_28] : memref<4x32x32xbf16, #tpu.memory_space<vmem>>, vector<1x32x32xbf16>
    %58 = vector.shape_cast %57 : vector<1x32x32xbf16> to vector<32x32xbf16>
    %cst_29 = arith.constant dense<0.000000e+00> : vector<8x32xf32>
    %59 = tpu.matmul %56, %58, %cst_29 {dimension_numbers = #tpu.dot_dimension_numbers<[1], [0], [0], [1], [0, 0, 1, 1], [], []>} : vector<8x32xbf16>, vector<32x32xbf16>, vector<8x32xf32> -> vector<8x32xf32>
    %60 = arith.addf %1, %59 : vector<8x32xf32>
    %c0_30 = arith.constant 0 : index
    %c0_31 = arith.constant 0 : index
    %c0_32 = arith.constant 0 : index
    %61 = vector.load %arg3[%c0_30, %c0_31, %c0_32] : memref<4x1x32xf32, #tpu.memory_space<vmem>>, vector<1x1x32xf32>
    %62 = vector.shape_cast %61 : vector<1x1x32xf32> to vector<1x32xf32>
    %63 = arith.mulf %60, %60 : vector<8x32xf32>
    %cst_33 = arith.constant dense<0.000000e+00> : vector<8xf32>
    %64 = vector.multi_reduction <add>, %63, %cst_33 [1] : vector<8x32xf32> to vector<8xf32>
    %65 = vector.shape_cast %64 : vector<8xf32> to vector<8x1xf32>
    %cst_34 = arith.constant 3.200000e+01 : f32
    %66 = vector.broadcast %cst_34 : f32 to vector<8x1xf32>
    %67 = arith.divf %65, %66 : vector<8x1xf32>
    %cst_35 = arith.constant 9.99999997E-7 : f32
    %68 = vector.broadcast %cst_35 : f32 to vector<8x1xf32>
    %69 = arith.addf %67, %68 : vector<8x1xf32>
    %70 = math.rsqrt %69 : vector<8x1xf32>
    %71 = vector.broadcast %70 : vector<8x1xf32> to vector<8x32xf32>
    %72 = arith.mulf %60, %71 : vector<8x32xf32>
    %73 = vector.broadcast %62 : vector<1x32xf32> to vector<8x32xf32>
    %74 = arith.mulf %72, %73 : vector<8x32xf32>
    %75 = arith.truncf %74 : vector<8x32xf32> to vector<8x32xbf16>
    %c0_36 = arith.constant 0 : index
    %c0_37 = arith.constant 0 : index
    %c0_38 = arith.constant 0 : index
    %76 = vector.load %arg8[%c0_36, %c0_37, %c0_38] : memref<4x32x128xbf16, #tpu.memory_space<vmem>>, vector<1x32x128xbf16>
    %77 = vector.shape_cast %76 : vector<1x32x128xbf16> to vector<32x128xbf16>
    %cst_39 = arith.constant dense<0.000000e+00> : vector<8x128xf32>
    %78 = tpu.matmul %75, %77, %cst_39 {dimension_numbers = #tpu.dot_dimension_numbers<[1], [0], [0], [1], [0, 0, 1, 1], [], []>} : vector<8x32xbf16>, vector<32x128xbf16>, vector<8x128xf32> -> vector<8x128xf32>
    %79 = arith.negf %78 : vector<8x128xf32>
    %80 = math.exp %79 : vector<8x128xf32>
    %cst_40 = arith.constant 1.000000e+00 : f32
    %81 = vector.broadcast %cst_40 : f32 to vector<8x128xf32>
    %82 = arith.addf %81, %80 : vector<8x128xf32>
    %83 = arith.divf %81, %82 : vector<8x128xf32>
    %84 = arith.mulf %78, %83 : vector<8x128xf32>
    %c64_i32 = arith.constant 64 : i32
    %85 = tpu.dynamic_rotate %78 by %c64_i32 dim 1 : vector<8x128xf32>, i32 -> vector<8x128xf32>
    %86 = arith.mulf %84, %85 : vector<8x128xf32>
    %87 = arith.truncf %86 : vector<8x128xf32> to vector<8x128xbf16>
    %c0_41 = arith.constant 0 : index
    %c0_42 = arith.constant 0 : index
    %c0_43 = arith.constant 0 : index
    %88 = vector.load %arg9[%c0_41, %c0_42, %c0_43] : memref<4x128x32xbf16, #tpu.memory_space<vmem>>, vector<1x128x32xbf16>
    %89 = vector.shape_cast %88 : vector<1x128x32xbf16> to vector<128x32xbf16>
    %cst_44 = arith.constant dense<0.000000e+00> : vector<8x32xf32>
    %90 = tpu.matmul %87, %89, %cst_44 {dimension_numbers = #tpu.dot_dimension_numbers<[1], [0], [0], [1], [0, 0, 1, 1], [], []>} : vector<8x128xbf16>, vector<128x32xbf16>, vector<8x32xf32> -> vector<8x32xf32>
    %91 = arith.addf %60, %90 : vector<8x32xf32>
    %c1 = arith.constant 1 : index
    %c0_45 = arith.constant 0 : index
    %c0_46 = arith.constant 0 : index
    %92 = vector.load %arg2[%c1, %c0_45, %c0_46] : memref<4x1x32xf32, #tpu.memory_space<vmem>>, vector<1x1x32xf32>
    %93 = vector.shape_cast %92 : vector<1x1x32xf32> to vector<1x32xf32>
    %94 = arith.mulf %91, %91 : vector<8x32xf32>
    %cst_47 = arith.constant dense<0.000000e+00> : vector<8xf32>
    %95 = vector.multi_reduction <add>, %94, %cst_47 [1] : vector<8x32xf32> to vector<8xf32>
    %96 = vector.shape_cast %95 : vector<8xf32> to vector<8x1xf32>
    %cst_48 = arith.constant 3.200000e+01 : f32
    %97 = vector.broadcast %cst_48 : f32 to vector<8x1xf32>
    %98 = arith.divf %96, %97 : vector<8x1xf32>
    %cst_49 = arith.constant 9.99999997E-7 : f32
    %99 = vector.broadcast %cst_49 : f32 to vector<8x1xf32>
    %100 = arith.addf %98, %99 : vector<8x1xf32>
    %101 = math.rsqrt %100 : vector<8x1xf32>
    %102 = vector.broadcast %101 : vector<8x1xf32> to vector<8x32xf32>
    %103 = arith.mulf %91, %102 : vector<8x32xf32>
    %104 = vector.broadcast %93 : vector<1x32xf32> to vector<8x32xf32>
    %105 = arith.mulf %103, %104 : vector<8x32xf32>
    %106 = arith.truncf %105 : vector<8x32xf32> to vector<8x32xbf16>
    %c1_50 = arith.constant 1 : index
    %c0_51 = arith.constant 0 : index
    %c0_52 = arith.constant 0 : index
    %107 = vector.load %arg5[%c1_50, %c0_51, %c0_52] : memref<4x32x96xbf16, #tpu.memory_space<vmem>>, vector<1x32x96xbf16>
    %108 = vector.shape_cast %107 : vector<1x32x96xbf16> to vector<32x96xbf16>
    %cst_53 = arith.constant dense<0.000000e+00> : vector<8x96xf32>
    %109 = tpu.matmul %106, %108, %cst_53 {dimension_numbers = #tpu.dot_dimension_numbers<[1], [0], [0], [1], [0, 0, 1, 1], [], []>} : vector<8x32xbf16>, vector<32x96xbf16>, vector<8x96xf32> -> vector<8x96xf32>
    %c1_54 = arith.constant 1 : index
    %c0_55 = arith.constant 0 : index
    %c0_56 = arith.constant 0 : index
    %110 = vector.load %arg6[%c1_54, %c0_55, %c0_56] : memref<4x32x96xbf16, #tpu.memory_space<vmem>>, vector<1x32x96xbf16>
    %111 = vector.shape_cast %110 : vector<1x32x96xbf16> to vector<32x96xbf16>
    %cst_57 = arith.constant dense<0.000000e+00> : vector<8x96xf32>
    %112 = tpu.matmul %106, %111, %cst_57 {dimension_numbers = #tpu.dot_dimension_numbers<[1], [0], [0], [1], [0, 0, 1, 1], [], []>} : vector<8x32xbf16>, vector<32x96xbf16>, vector<8x96xf32> -> vector<8x96xf32>
    %113 = arith.mulf %109, %2 : vector<8x96xf32>
    %114 = arith.mulf %112, %3 : vector<8x96xf32>
    %115 = arith.addf %113, %114 : vector<8x96xf32>
    %116 = vector.extract_strided_slice %115 {offsets = [0, 0], sizes = [8, 32], strides = [1, 1]} : vector<8x96xf32> to vector<8x32xf32>
    %117 = vector.shape_cast %116 : vector<8x32xf32> to vector<8x4x8xf32>
    %118 = vector.extract_strided_slice %115 {offsets = [0, 32], sizes = [8, 32], strides = [1, 1]} : vector<8x96xf32> to vector<8x32xf32>
    %119 = vector.shape_cast %118 : vector<8x32xf32> to vector<8x4x8xf32>
    %120 = vector.extract_strided_slice %115 {offsets = [0, 64], sizes = [8, 32], strides = [1, 1]} : vector<8x96xf32> to vector<8x32xf32>
    %121 = vector.shape_cast %120 : vector<8x32xf32> to vector<8x4x8xf32>
    %122 = arith.truncf %117 : vector<8x4x8xf32> to vector<8x4x8xbf16>
    %123 = arith.truncf %119 : vector<8x4x8xf32> to vector<8x4x8xbf16>
    "tpu.trace_start"() <{level = 10 : i32, message = "qhd,khd->hqk"}> : () -> ()
    %cst_58 = arith.constant dense<0.000000e+00> : vector<4x8x8xf32>
    %124 = tpu.matmul %122, %123, %cst_58 {dimension_numbers = #tpu.dot_dimension_numbers<[2], [2], [0], [0], [0, 1, 0, 0, 1, 0], [1], [1]>} : vector<8x4x8xbf16>, vector<8x4x8xbf16>, vector<4x8x8xf32> -> vector<4x8x8xf32>
    "tpu.trace_stop"() : () -> ()
    %125 = vector.shape_cast %5 : vector<8x8xf32> to vector<1x8x8xf32>
    %126 = vector.broadcast %125 : vector<1x8x8xf32> to vector<4x8x8xf32>
    %127 = arith.addf %124, %126 : vector<4x8x8xf32>
    %cst_59 = arith.constant dense<0xFF800000> : vector<4x8xf32>
    %128 = vector.multi_reduction <maximumf>, %127, %cst_59 [2] : vector<4x8x8xf32> to vector<4x8xf32>
    %129 = vector.shape_cast %128 : vector<4x8xf32> to vector<4x8x1xf32>
    %130 = vector.broadcast %129 : vector<4x8x1xf32> to vector<4x8x8xf32>
    %131 = arith.subf %127, %130 : vector<4x8x8xf32>
    %132 = math.exp %131 : vector<4x8x8xf32>
    %cst_60 = arith.constant dense<0.000000e+00> : vector<4x8xf32>
    %133 = vector.multi_reduction <add>, %132, %cst_60 [2] : vector<4x8x8xf32> to vector<4x8xf32>
    %134 = vector.shape_cast %133 : vector<4x8xf32> to vector<4x8x1xf32>
    %135 = vector.broadcast %134 : vector<4x8x1xf32> to vector<4x8x8xf32>
    %136 = arith.divf %132, %135 : vector<4x8x8xf32>
    %137 = arith.truncf %136 : vector<4x8x8xf32> to vector<4x8x8xbf16>
    %138 = arith.truncf %121 : vector<8x4x8xf32> to vector<8x4x8xbf16>
    "tpu.trace_start"() <{level = 10 : i32, message = "hqk,khd->qhd"}> : () -> ()
    %cst_61 = arith.constant dense<0.000000e+00> : vector<4x8x8xf32>
    %139 = tpu.matmul %138, %137, %cst_61 {dimension_numbers = #tpu.dot_dimension_numbers<[0], [2], [2], [1], [0, 1, 0, 2, 1, 1], [1], [0]>} : vector<8x4x8xbf16>, vector<4x8x8xbf16>, vector<4x8x8xf32> -> vector<4x8x8xf32>
    %140 = tpu.transpose %139, [2, 0, 1] : vector<4x8x8xf32> -> vector<8x4x8xf32>
    "tpu.trace_stop"() : () -> ()
    %141 = vector.shape_cast %140 : vector<8x4x8xf32> to vector<8x32xf32>
    %142 = arith.truncf %141 : vector<8x32xf32> to vector<8x32xbf16>
    %c1_62 = arith.constant 1 : index
    %c0_63 = arith.constant 0 : index
    %c0_64 = arith.constant 0 : index
    %143 = vector.load %arg7[%c1_62, %c0_63, %c0_64] : memref<4x32x32xbf16, #tpu.memory_space<vmem>>, vector<1x32x32xbf16>
    %144 = vector.shape_cast %143 : vector<1x32x32xbf16> to vector<32x32xbf16>
    %cst_65 = arith.constant dense<0.000000e+00> : vector<8x32xf32>
    %145 = tpu.matmul %142, %144, %cst_65 {dimension_numbers = #tpu.dot_dimension_numbers<[1], [0], [0], [1], [0, 0, 1, 1], [], []>} : vector<8x32xbf16>, vector<32x32xbf16>, vector<8x32xf32> -> vector<8x32xf32>
    %146 = arith.addf %91, %145 : vector<8x32xf32>
    %c1_66 = arith.constant 1 : index
    %c0_67 = arith.constant 0 : index
    %c0_68 = arith.constant 0 : index
    %147 = vector.load %arg3[%c1_66, %c0_67, %c0_68] : memref<4x1x32xf32, #tpu.memory_space<vmem>>, vector<1x1x32xf32>
    %148 = vector.shape_cast %147 : vector<1x1x32xf32> to vector<1x32xf32>
    %149 = arith.mulf %146, %146 : vector<8x32xf32>
    %cst_69 = arith.constant dense<0.000000e+00> : vector<8xf32>
    %150 = vector.multi_reduction <add>, %149, %cst_69 [1] : vector<8x32xf32> to vector<8xf32>
    %151 = vector.shape_cast %150 : vector<8xf32> to vector<8x1xf32>
    %cst_70 = arith.constant 3.200000e+01 : f32
    %152 = vector.broadcast %cst_70 : f32 to vector<8x1xf32>
    %153 = arith.divf %151, %152 : vector<8x1xf32>
    %cst_71 = arith.constant 9.99999997E-7 : f32
    %154 = vector.broadcast %cst_71 : f32 to vector<8x1xf32>
    %155 = arith.addf %153, %154 : vector<8x1xf32>
    %156 = math.rsqrt %155 : vector<8x1xf32>
    %157 = vector.broadcast %156 : vector<8x1xf32> to vector<8x32xf32>
    %158 = arith.mulf %146, %157 : vector<8x32xf32>
    %159 = vector.broadcast %148 : vector<1x32xf32> to vector<8x32xf32>
    %160 = arith.mulf %158, %159 : vector<8x32xf32>
    %161 = arith.truncf %160 : vector<8x32xf32> to vector<8x32xbf16>
    %c1_72 = arith.constant 1 : index
    %c0_73 = arith.constant 0 : index
    %c0_74 = arith.constant 0 : index
    %162 = vector.load %arg8[%c1_72, %c0_73, %c0_74] : memref<4x32x128xbf16, #tpu.memory_space<vmem>>, vector<1x32x128xbf16>
    %163 = vector.shape_cast %162 : vector<1x32x128xbf16> to vector<32x128xbf16>
    %cst_75 = arith.constant dense<0.000000e+00> : vector<8x128xf32>
    %164 = tpu.matmul %161, %163, %cst_75 {dimension_numbers = #tpu.dot_dimension_numbers<[1], [0], [0], [1], [0, 0, 1, 1], [], []>} : vector<8x32xbf16>, vector<32x128xbf16>, vector<8x128xf32> -> vector<8x128xf32>
    %165 = arith.negf %164 : vector<8x128xf32>
    %166 = math.exp %165 : vector<8x128xf32>
    %cst_76 = arith.constant 1.000000e+00 : f32
    %167 = vector.broadcast %cst_76 : f32 to vector<8x128xf32>
    %168 = arith.addf %167, %166 : vector<8x128xf32>
    %169 = arith.divf %167, %168 : vector<8x128xf32>
    %170 = arith.mulf %164, %169 : vector<8x128xf32>
    %c64_i32_77 = arith.constant 64 : i32
    %171 = tpu.dynamic_rotate %164 by %c64_i32_77 dim 1 : vector<8x128xf32>, i32 -> vector<8x128xf32>
    %172 = arith.mulf %170, %171 : vector<8x128xf32>
    %173 = arith.truncf %172 : vector<8x128xf32> to vector<8x128xbf16>
    %c1_78 = arith.constant 1 : index
    %c0_79 = arith.constant 0 : index
    %c0_80 = arith.constant 0 : index
    %174 = vector.load %arg9[%c1_78, %c0_79, %c0_80] : memref<4x128x32xbf16, #tpu.memory_space<vmem>>, vector<1x128x32xbf16>
    %175 = vector.shape_cast %174 : vector<1x128x32xbf16> to vector<128x32xbf16>
    %cst_81 = arith.constant dense<0.000000e+00> : vector<8x32xf32>
    %176 = tpu.matmul %173, %175, %cst_81 {dimension_numbers = #tpu.dot_dimension_numbers<[1], [0], [0], [1], [0, 0, 1, 1], [], []>} : vector<8x128xbf16>, vector<128x32xbf16>, vector<8x32xf32> -> vector<8x32xf32>
    %177 = arith.addf %146, %176 : vector<8x32xf32>
    %c2 = arith.constant 2 : index
    %c0_82 = arith.constant 0 : index
    %c0_83 = arith.constant 0 : index
    %178 = vector.load %arg2[%c2, %c0_82, %c0_83] : memref<4x1x32xf32, #tpu.memory_space<vmem>>, vector<1x1x32xf32>
    %179 = vector.shape_cast %178 : vector<1x1x32xf32> to vector<1x32xf32>
    %180 = arith.mulf %177, %177 : vector<8x32xf32>
    %cst_84 = arith.constant dense<0.000000e+00> : vector<8xf32>
    %181 = vector.multi_reduction <add>, %180, %cst_84 [1] : vector<8x32xf32> to vector<8xf32>
    %182 = vector.shape_cast %181 : vector<8xf32> to vector<8x1xf32>
    %cst_85 = arith.constant 3.200000e+01 : f32
    %183 = vector.broadcast %cst_85 : f32 to vector<8x1xf32>
    %184 = arith.divf %182, %183 : vector<8x1xf32>
    %cst_86 = arith.constant 9.99999997E-7 : f32
    %185 = vector.broadcast %cst_86 : f32 to vector<8x1xf32>
    %186 = arith.addf %184, %185 : vector<8x1xf32>
    %187 = math.rsqrt %186 : vector<8x1xf32>
    %188 = vector.broadcast %187 : vector<8x1xf32> to vector<8x32xf32>
    %189 = arith.mulf %177, %188 : vector<8x32xf32>
    %190 = vector.broadcast %179 : vector<1x32xf32> to vector<8x32xf32>
    %191 = arith.mulf %189, %190 : vector<8x32xf32>
    %192 = arith.truncf %191 : vector<8x32xf32> to vector<8x32xbf16>
    %c2_87 = arith.constant 2 : index
    %c0_88 = arith.constant 0 : index
    %c0_89 = arith.constant 0 : index
    %193 = vector.load %arg5[%c2_87, %c0_88, %c0_89] : memref<4x32x96xbf16, #tpu.memory_space<vmem>>, vector<1x32x96xbf16>
    %194 = vector.shape_cast %193 : vector<1x32x96xbf16> to vector<32x96xbf16>
    %cst_90 = arith.constant dense<0.000000e+00> : vector<8x96xf32>
    %195 = tpu.matmul %192, %194, %cst_90 {dimension_numbers = #tpu.dot_dimension_numbers<[1], [0], [0], [1], [0, 0, 1, 1], [], []>} : vector<8x32xbf16>, vector<32x96xbf16>, vector<8x96xf32> -> vector<8x96xf32>
    %c2_91 = arith.constant 2 : index
    %c0_92 = arith.constant 0 : index
    %c0_93 = arith.constant 0 : index
    %196 = vector.load %arg6[%c2_91, %c0_92, %c0_93] : memref<4x32x96xbf16, #tpu.memory_space<vmem>>, vector<1x32x96xbf16>
    %197 = vector.shape_cast %196 : vector<1x32x96xbf16> to vector<32x96xbf16>
    %cst_94 = arith.constant dense<0.000000e+00> : vector<8x96xf32>
    %198 = tpu.matmul %192, %197, %cst_94 {dimension_numbers = #tpu.dot_dimension_numbers<[1], [0], [0], [1], [0, 0, 1, 1], [], []>} : vector<8x32xbf16>, vector<32x96xbf16>, vector<8x96xf32> -> vector<8x96xf32>
    %199 = arith.mulf %195, %2 : vector<8x96xf32>
    %200 = arith.mulf %198, %3 : vector<8x96xf32>
    %201 = arith.addf %199, %200 : vector<8x96xf32>
    %202 = vector.extract_strided_slice %201 {offsets = [0, 0], sizes = [8, 32], strides = [1, 1]} : vector<8x96xf32> to vector<8x32xf32>
    %203 = vector.shape_cast %202 : vector<8x32xf32> to vector<8x4x8xf32>
    %204 = vector.extract_strided_slice %201 {offsets = [0, 32], sizes = [8, 32], strides = [1, 1]} : vector<8x96xf32> to vector<8x32xf32>
    %205 = vector.shape_cast %204 : vector<8x32xf32> to vector<8x4x8xf32>
    %206 = vector.extract_strided_slice %201 {offsets = [0, 64], sizes = [8, 32], strides = [1, 1]} : vector<8x96xf32> to vector<8x32xf32>
    %207 = vector.shape_cast %206 : vector<8x32xf32> to vector<8x4x8xf32>
    %208 = arith.truncf %203 : vector<8x4x8xf32> to vector<8x4x8xbf16>
    %209 = arith.truncf %205 : vector<8x4x8xf32> to vector<8x4x8xbf16>
    "tpu.trace_start"() <{level = 10 : i32, message = "qhd,khd->hqk"}> : () -> ()
    %cst_95 = arith.constant dense<0.000000e+00> : vector<4x8x8xf32>
    %210 = tpu.matmul %208, %209, %cst_95 {dimension_numbers = #tpu.dot_dimension_numbers<[2], [2], [0], [0], [0, 1, 0, 0, 1, 0], [1], [1]>} : vector<8x4x8xbf16>, vector<8x4x8xbf16>, vector<4x8x8xf32> -> vector<4x8x8xf32>
    "tpu.trace_stop"() : () -> ()
    %211 = vector.shape_cast %5 : vector<8x8xf32> to vector<1x8x8xf32>
    %212 = vector.broadcast %211 : vector<1x8x8xf32> to vector<4x8x8xf32>
    %213 = arith.addf %210, %212 : vector<4x8x8xf32>
    %cst_96 = arith.constant dense<0xFF800000> : vector<4x8xf32>
    %214 = vector.multi_reduction <maximumf>, %213, %cst_96 [2] : vector<4x8x8xf32> to vector<4x8xf32>
    %215 = vector.shape_cast %214 : vector<4x8xf32> to vector<4x8x1xf32>
    %216 = vector.broadcast %215 : vector<4x8x1xf32> to vector<4x8x8xf32>
    %217 = arith.subf %213, %216 : vector<4x8x8xf32>
    %218 = math.exp %217 : vector<4x8x8xf32>
    %cst_97 = arith.constant dense<0.000000e+00> : vector<4x8xf32>
    %219 = vector.multi_reduction <add>, %218, %cst_97 [2] : vector<4x8x8xf32> to vector<4x8xf32>
    %220 = vector.shape_cast %219 : vector<4x8xf32> to vector<4x8x1xf32>
    %221 = vector.broadcast %220 : vector<4x8x1xf32> to vector<4x8x8xf32>
    %222 = arith.divf %218, %221 : vector<4x8x8xf32>
    %223 = arith.truncf %222 : vector<4x8x8xf32> to vector<4x8x8xbf16>
    %224 = arith.truncf %207 : vector<8x4x8xf32> to vector<8x4x8xbf16>
    "tpu.trace_start"() <{level = 10 : i32, message = "hqk,khd->qhd"}> : () -> ()
    %cst_98 = arith.constant dense<0.000000e+00> : vector<4x8x8xf32>
    %225 = tpu.matmul %224, %223, %cst_98 {dimension_numbers = #tpu.dot_dimension_numbers<[0], [2], [2], [1], [0, 1, 0, 2, 1, 1], [1], [0]>} : vector<8x4x8xbf16>, vector<4x8x8xbf16>, vector<4x8x8xf32> -> vector<4x8x8xf32>
    %226 = tpu.transpose %225, [2, 0, 1] : vector<4x8x8xf32> -> vector<8x4x8xf32>
    "tpu.trace_stop"() : () -> ()
    %227 = vector.shape_cast %226 : vector<8x4x8xf32> to vector<8x32xf32>
    %228 = arith.truncf %227 : vector<8x32xf32> to vector<8x32xbf16>
    %c2_99 = arith.constant 2 : index
    %c0_100 = arith.constant 0 : index
    %c0_101 = arith.constant 0 : index
    %229 = vector.load %arg7[%c2_99, %c0_100, %c0_101] : memref<4x32x32xbf16, #tpu.memory_space<vmem>>, vector<1x32x32xbf16>
    %230 = vector.shape_cast %229 : vector<1x32x32xbf16> to vector<32x32xbf16>
    %cst_102 = arith.constant dense<0.000000e+00> : vector<8x32xf32>
    %231 = tpu.matmul %228, %230, %cst_102 {dimension_numbers = #tpu.dot_dimension_numbers<[1], [0], [0], [1], [0, 0, 1, 1], [], []>} : vector<8x32xbf16>, vector<32x32xbf16>, vector<8x32xf32> -> vector<8x32xf32>
    %232 = arith.addf %177, %231 : vector<8x32xf32>
    %c2_103 = arith.constant 2 : index
    %c0_104 = arith.constant 0 : index
    %c0_105 = arith.constant 0 : index
    %233 = vector.load %arg3[%c2_103, %c0_104, %c0_105] : memref<4x1x32xf32, #tpu.memory_space<vmem>>, vector<1x1x32xf32>
    %234 = vector.shape_cast %233 : vector<1x1x32xf32> to vector<1x32xf32>
    %235 = arith.mulf %232, %232 : vector<8x32xf32>
    %cst_106 = arith.constant dense<0.000000e+00> : vector<8xf32>
    %236 = vector.multi_reduction <add>, %235, %cst_106 [1] : vector<8x32xf32> to vector<8xf32>
    %237 = vector.shape_cast %236 : vector<8xf32> to vector<8x1xf32>
    %cst_107 = arith.constant 3.200000e+01 : f32
    %238 = vector.broadcast %cst_107 : f32 to vector<8x1xf32>
    %239 = arith.divf %237, %238 : vector<8x1xf32>
    %cst_108 = arith.constant 9.99999997E-7 : f32
    %240 = vector.broadcast %cst_108 : f32 to vector<8x1xf32>
    %241 = arith.addf %239, %240 : vector<8x1xf32>
    %242 = math.rsqrt %241 : vector<8x1xf32>
    %243 = vector.broadcast %242 : vector<8x1xf32> to vector<8x32xf32>
    %244 = arith.mulf %232, %243 : vector<8x32xf32>
    %245 = vector.broadcast %234 : vector<1x32xf32> to vector<8x32xf32>
    %246 = arith.mulf %244, %245 : vector<8x32xf32>
    %247 = arith.truncf %246 : vector<8x32xf32> to vector<8x32xbf16>
    %c2_109 = arith.constant 2 : index
    %c0_110 = arith.constant 0 : index
    %c0_111 = arith.constant 0 : index
    %248 = vector.load %arg8[%c2_109, %c0_110, %c0_111] : memref<4x32x128xbf16, #tpu.memory_space<vmem>>, vector<1x32x128xbf16>
    %249 = vector.shape_cast %248 : vector<1x32x128xbf16> to vector<32x128xbf16>
    %cst_112 = arith.constant dense<0.000000e+00> : vector<8x128xf32>
    %250 = tpu.matmul %247, %249, %cst_112 {dimension_numbers = #tpu.dot_dimension_numbers<[1], [0], [0], [1], [0, 0, 1, 1], [], []>} : vector<8x32xbf16>, vector<32x128xbf16>, vector<8x128xf32> -> vector<8x128xf32>
    %251 = arith.negf %250 : vector<8x128xf32>
    %252 = math.exp %251 : vector<8x128xf32>
    %cst_113 = arith.constant 1.000000e+00 : f32
    %253 = vector.broadcast %cst_113 : f32 to vector<8x128xf32>
    %254 = arith.addf %253, %252 : vector<8x128xf32>
    %255 = arith.divf %253, %254 : vector<8x128xf32>
    %256 = arith.mulf %250, %255 : vector<8x128xf32>
    %c64_i32_114 = arith.constant 64 : i32
    %257 = tpu.dynamic_rotate %250 by %c64_i32_114 dim 1 : vector<8x128xf32>, i32 -> vector<8x128xf32>
    %258 = arith.mulf %256, %257 : vector<8x128xf32>
    %259 = arith.truncf %258 : vector<8x128xf32> to vector<8x128xbf16>
    %c2_115 = arith.constant 2 : index
    %c0_116 = arith.constant 0 : index
    %c0_117 = arith.constant 0 : index
    %260 = vector.load %arg9[%c2_115, %c0_116, %c0_117] : memref<4x128x32xbf16, #tpu.memory_space<vmem>>, vector<1x128x32xbf16>
    %261 = vector.shape_cast %260 : vector<1x128x32xbf16> to vector<128x32xbf16>
    %cst_118 = arith.constant dense<0.000000e+00> : vector<8x32xf32>
    %262 = tpu.matmul %259, %261, %cst_118 {dimension_numbers = #tpu.dot_dimension_numbers<[1], [0], [0], [1], [0, 0, 1, 1], [], []>} : vector<8x128xbf16>, vector<128x32xbf16>, vector<8x32xf32> -> vector<8x32xf32>
    %263 = arith.addf %232, %262 : vector<8x32xf32>
    %c3 = arith.constant 3 : index
    %c0_119 = arith.constant 0 : index
    %c0_120 = arith.constant 0 : index
    %264 = vector.load %arg2[%c3, %c0_119, %c0_120] : memref<4x1x32xf32, #tpu.memory_space<vmem>>, vector<1x1x32xf32>
    %265 = vector.shape_cast %264 : vector<1x1x32xf32> to vector<1x32xf32>
    %266 = arith.mulf %263, %263 : vector<8x32xf32>
    %cst_121 = arith.constant dense<0.000000e+00> : vector<8xf32>
    %267 = vector.multi_reduction <add>, %266, %cst_121 [1] : vector<8x32xf32> to vector<8xf32>
    %268 = vector.shape_cast %267 : vector<8xf32> to vector<8x1xf32>
    %cst_122 = arith.constant 3.200000e+01 : f32
    %269 = vector.broadcast %cst_122 : f32 to vector<8x1xf32>
    %270 = arith.divf %268, %269 : vector<8x1xf32>
    %cst_123 = arith.constant 9.99999997E-7 : f32
    %271 = vector.broadcast %cst_123 : f32 to vector<8x1xf32>
    %272 = arith.addf %270, %271 : vector<8x1xf32>
    %273 = math.rsqrt %272 : vector<8x1xf32>
    %274 = vector.broadcast %273 : vector<8x1xf32> to vector<8x32xf32>
    %275 = arith.mulf %263, %274 : vector<8x32xf32>
    %276 = vector.broadcast %265 : vector<1x32xf32> to vector<8x32xf32>
    %277 = arith.mulf %275, %276 : vector<8x32xf32>
    %278 = arith.truncf %277 : vector<8x32xf32> to vector<8x32xbf16>
    %c3_124 = arith.constant 3 : index
    %c0_125 = arith.constant 0 : index
    %c0_126 = arith.constant 0 : index
    %279 = vector.load %arg5[%c3_124, %c0_125, %c0_126] : memref<4x32x96xbf16, #tpu.memory_space<vmem>>, vector<1x32x96xbf16>
    %280 = vector.shape_cast %279 : vector<1x32x96xbf16> to vector<32x96xbf16>
    %cst_127 = arith.constant dense<0.000000e+00> : vector<8x96xf32>
    %281 = tpu.matmul %278, %280, %cst_127 {dimension_numbers = #tpu.dot_dimension_numbers<[1], [0], [0], [1], [0, 0, 1, 1], [], []>} : vector<8x32xbf16>, vector<32x96xbf16>, vector<8x96xf32> -> vector<8x96xf32>
    %c3_128 = arith.constant 3 : index
    %c0_129 = arith.constant 0 : index
    %c0_130 = arith.constant 0 : index
    %282 = vector.load %arg6[%c3_128, %c0_129, %c0_130] : memref<4x32x96xbf16, #tpu.memory_space<vmem>>, vector<1x32x96xbf16>
    %283 = vector.shape_cast %282 : vector<1x32x96xbf16> to vector<32x96xbf16>
    %cst_131 = arith.constant dense<0.000000e+00> : vector<8x96xf32>
    %284 = tpu.matmul %278, %283, %cst_131 {dimension_numbers = #tpu.dot_dimension_numbers<[1], [0], [0], [1], [0, 0, 1, 1], [], []>} : vector<8x32xbf16>, vector<32x96xbf16>, vector<8x96xf32> -> vector<8x96xf32>
    %285 = arith.mulf %281, %2 : vector<8x96xf32>
    %286 = arith.mulf %284, %3 : vector<8x96xf32>
    %287 = arith.addf %285, %286 : vector<8x96xf32>
    %288 = vector.extract_strided_slice %287 {offsets = [0, 0], sizes = [8, 32], strides = [1, 1]} : vector<8x96xf32> to vector<8x32xf32>
    %289 = vector.shape_cast %288 : vector<8x32xf32> to vector<8x4x8xf32>
    %290 = vector.extract_strided_slice %287 {offsets = [0, 32], sizes = [8, 32], strides = [1, 1]} : vector<8x96xf32> to vector<8x32xf32>
    %291 = vector.shape_cast %290 : vector<8x32xf32> to vector<8x4x8xf32>
    %292 = vector.extract_strided_slice %287 {offsets = [0, 64], sizes = [8, 32], strides = [1, 1]} : vector<8x96xf32> to vector<8x32xf32>
    %293 = vector.shape_cast %292 : vector<8x32xf32> to vector<8x4x8xf32>
    %294 = arith.truncf %289 : vector<8x4x8xf32> to vector<8x4x8xbf16>
    %295 = arith.truncf %291 : vector<8x4x8xf32> to vector<8x4x8xbf16>
    "tpu.trace_start"() <{level = 10 : i32, message = "qhd,khd->hqk"}> : () -> ()
    %cst_132 = arith.constant dense<0.000000e+00> : vector<4x8x8xf32>
    %296 = tpu.matmul %294, %295, %cst_132 {dimension_numbers = #tpu.dot_dimension_numbers<[2], [2], [0], [0], [0, 1, 0, 0, 1, 0], [1], [1]>} : vector<8x4x8xbf16>, vector<8x4x8xbf16>, vector<4x8x8xf32> -> vector<4x8x8xf32>
    "tpu.trace_stop"() : () -> ()
    %297 = vector.shape_cast %5 : vector<8x8xf32> to vector<1x8x8xf32>
    %298 = vector.broadcast %297 : vector<1x8x8xf32> to vector<4x8x8xf32>
    %299 = arith.addf %296, %298 : vector<4x8x8xf32>
    %cst_133 = arith.constant dense<0xFF800000> : vector<4x8xf32>
    %300 = vector.multi_reduction <maximumf>, %299, %cst_133 [2] : vector<4x8x8xf32> to vector<4x8xf32>
    %301 = vector.shape_cast %300 : vector<4x8xf32> to vector<4x8x1xf32>
    %302 = vector.broadcast %301 : vector<4x8x1xf32> to vector<4x8x8xf32>
    %303 = arith.subf %299, %302 : vector<4x8x8xf32>
    %304 = math.exp %303 : vector<4x8x8xf32>
    %cst_134 = arith.constant dense<0.000000e+00> : vector<4x8xf32>
    %305 = vector.multi_reduction <add>, %304, %cst_134 [2] : vector<4x8x8xf32> to vector<4x8xf32>
    %306 = vector.shape_cast %305 : vector<4x8xf32> to vector<4x8x1xf32>
    %307 = vector.broadcast %306 : vector<4x8x1xf32> to vector<4x8x8xf32>
    %308 = arith.divf %304, %307 : vector<4x8x8xf32>
    %309 = arith.truncf %308 : vector<4x8x8xf32> to vector<4x8x8xbf16>
    %310 = arith.truncf %293 : vector<8x4x8xf32> to vector<8x4x8xbf16>
    "tpu.trace_start"() <{level = 10 : i32, message = "hqk,khd->qhd"}> : () -> ()
    %cst_135 = arith.constant dense<0.000000e+00> : vector<4x8x8xf32>
    %311 = tpu.matmul %310, %309, %cst_135 {dimension_numbers = #tpu.dot_dimension_numbers<[0], [2], [2], [1], [0, 1, 0, 2, 1, 1], [1], [0]>} : vector<8x4x8xbf16>, vector<4x8x8xbf16>, vector<4x8x8xf32> -> vector<4x8x8xf32>
    %312 = tpu.transpose %311, [2, 0, 1] : vector<4x8x8xf32> -> vector<8x4x8xf32>
    "tpu.trace_stop"() : () -> ()
    %313 = vector.shape_cast %312 : vector<8x4x8xf32> to vector<8x32xf32>
    %314 = arith.truncf %313 : vector<8x32xf32> to vector<8x32xbf16>
    %c3_136 = arith.constant 3 : index
    %c0_137 = arith.constant 0 : index
    %c0_138 = arith.constant 0 : index
    %315 = vector.load %arg7[%c3_136, %c0_137, %c0_138] : memref<4x32x32xbf16, #tpu.memory_space<vmem>>, vector<1x32x32xbf16>
    %316 = vector.shape_cast %315 : vector<1x32x32xbf16> to vector<32x32xbf16>
    %cst_139 = arith.constant dense<0.000000e+00> : vector<8x32xf32>
    %317 = tpu.matmul %314, %316, %cst_139 {dimension_numbers = #tpu.dot_dimension_numbers<[1], [0], [0], [1], [0, 0, 1, 1], [], []>} : vector<8x32xbf16>, vector<32x32xbf16>, vector<8x32xf32> -> vector<8x32xf32>
    %318 = arith.addf %263, %317 : vector<8x32xf32>
    %c3_140 = arith.constant 3 : index
    %c0_141 = arith.constant 0 : index
    %c0_142 = arith.constant 0 : index
    %319 = vector.load %arg3[%c3_140, %c0_141, %c0_142] : memref<4x1x32xf32, #tpu.memory_space<vmem>>, vector<1x1x32xf32>
    %320 = vector.shape_cast %319 : vector<1x1x32xf32> to vector<1x32xf32>
    %321 = arith.mulf %318, %318 : vector<8x32xf32>
    %cst_143 = arith.constant dense<0.000000e+00> : vector<8xf32>
    %322 = vector.multi_reduction <add>, %321, %cst_143 [1] : vector<8x32xf32> to vector<8xf32>
    %323 = vector.shape_cast %322 : vector<8xf32> to vector<8x1xf32>
    %cst_144 = arith.constant 3.200000e+01 : f32
    %324 = vector.broadcast %cst_144 : f32 to vector<8x1xf32>
    %325 = arith.divf %323, %324 : vector<8x1xf32>
    %cst_145 = arith.constant 9.99999997E-7 : f32
    %326 = vector.broadcast %cst_145 : f32 to vector<8x1xf32>
    %327 = arith.addf %325, %326 : vector<8x1xf32>
    %328 = math.rsqrt %327 : vector<8x1xf32>
    %329 = vector.broadcast %328 : vector<8x1xf32> to vector<8x32xf32>
    %330 = arith.mulf %318, %329 : vector<8x32xf32>
    %331 = vector.broadcast %320 : vector<1x32xf32> to vector<8x32xf32>
    %332 = arith.mulf %330, %331 : vector<8x32xf32>
    %333 = arith.truncf %332 : vector<8x32xf32> to vector<8x32xbf16>
    %c3_146 = arith.constant 3 : index
    %c0_147 = arith.constant 0 : index
    %c0_148 = arith.constant 0 : index
    %334 = vector.load %arg8[%c3_146, %c0_147, %c0_148] : memref<4x32x128xbf16, #tpu.memory_space<vmem>>, vector<1x32x128xbf16>
    %335 = vector.shape_cast %334 : vector<1x32x128xbf16> to vector<32x128xbf16>
    %cst_149 = arith.constant dense<0.000000e+00> : vector<8x128xf32>
    %336 = tpu.matmul %333, %335, %cst_149 {dimension_numbers = #tpu.dot_dimension_numbers<[1], [0], [0], [1], [0, 0, 1, 1], [], []>} : vector<8x32xbf16>, vector<32x128xbf16>, vector<8x128xf32> -> vector<8x128xf32>
    %337 = arith.negf %336 : vector<8x128xf32>
    %338 = math.exp %337 : vector<8x128xf32>
    %cst_150 = arith.constant 1.000000e+00 : f32
    %339 = vector.broadcast %cst_150 : f32 to vector<8x128xf32>
    %340 = arith.addf %339, %338 : vector<8x128xf32>
    %341 = arith.divf %339, %340 : vector<8x128xf32>
    %342 = arith.mulf %336, %341 : vector<8x128xf32>
    %c64_i32_151 = arith.constant 64 : i32
    %343 = tpu.dynamic_rotate %336 by %c64_i32_151 dim 1 : vector<8x128xf32>, i32 -> vector<8x128xf32>
    %344 = arith.mulf %342, %343 : vector<8x128xf32>
    %345 = arith.truncf %344 : vector<8x128xf32> to vector<8x128xbf16>
    %c3_152 = arith.constant 3 : index
    %c0_153 = arith.constant 0 : index
    %c0_154 = arith.constant 0 : index
    %346 = vector.load %arg9[%c3_152, %c0_153, %c0_154] : memref<4x128x32xbf16, #tpu.memory_space<vmem>>, vector<1x128x32xbf16>
    %347 = vector.shape_cast %346 : vector<1x128x32xbf16> to vector<128x32xbf16>
    %cst_155 = arith.constant dense<0.000000e+00> : vector<8x32xf32>
    %348 = tpu.matmul %345, %347, %cst_155 {dimension_numbers = #tpu.dot_dimension_numbers<[1], [0], [0], [1], [0, 0, 1, 1], [], []>} : vector<8x128xbf16>, vector<128x32xbf16>, vector<8x32xf32> -> vector<8x32xf32>
    %349 = arith.addf %318, %348 : vector<8x32xf32>
    %c0_156 = arith.constant 0 : index
    %c0_157 = arith.constant 0 : index
    %350 = vector.load %arg4[%c0_156, %c0_157] : memref<1x32xf32, #tpu.memory_space<vmem>>, vector<1x32xf32>
    %351 = arith.mulf %349, %349 : vector<8x32xf32>
    %cst_158 = arith.constant dense<0.000000e+00> : vector<8xf32>
    %352 = vector.multi_reduction <add>, %351, %cst_158 [1] : vector<8x32xf32> to vector<8xf32>
    %353 = vector.shape_cast %352 : vector<8xf32> to vector<8x1xf32>
    %cst_159 = arith.constant 3.200000e+01 : f32
    %354 = vector.broadcast %cst_159 : f32 to vector<8x1xf32>
    %355 = arith.divf %353, %354 : vector<8x1xf32>
    %cst_160 = arith.constant 9.99999997E-7 : f32
    %356 = vector.broadcast %cst_160 : f32 to vector<8x1xf32>
    %357 = arith.addf %355, %356 : vector<8x1xf32>
    %358 = math.rsqrt %357 : vector<8x1xf32>
    %359 = vector.broadcast %358 : vector<8x1xf32> to vector<8x32xf32>
    %360 = arith.mulf %349, %359 : vector<8x32xf32>
    %361 = vector.broadcast %350 : vector<1x32xf32> to vector<8x32xf32>
    %362 = arith.mulf %360, %361 : vector<8x32xf32>
    %c0_161 = arith.constant 0 : index
    %c0_162 = arith.constant 0 : index
    %c0_163 = arith.constant 0 : index
    %363 = vector.load %arg13[%c0_161, %c0_162, %c0_163] : memref<1x8x32xf32, #tpu.memory_space<vmem>>, vector<1x8x32xf32>
    %364 = vector.shape_cast %363 : vector<1x8x32xf32> to vector<8x32xf32>
    %365 = vector.shape_cast %362 : vector<8x32xf32> to vector<1x8x32xf32>
    tpu.vector_store %arg13[%c0_161, %c0_162, %c0_163], %365 {strides = array<i32>} : memref<1x8x32xf32, #tpu.memory_space<vmem>>, vector<1x8x32xf32>,
    return
  }
  func.func @transform_0(%arg0: i32) -> (i32, i32, i32) {
    %c0_i32 = arith.constant 0 : i32
    %c0_i32_0 = arith.constant 0 : i32
    %c0_i32_1 = arith.constant 0 : i32
    return %arg0, %c0_i32, %c0_i32_0 : i32, i32, i32
  }
  func.func @transform_1(%arg0: i32) -> (i32, i32, i32) {
    %c0_i32 = arith.constant 0 : i32
    %c0_i32_0 = arith.constant 0 : i32
    %c0_i32_1 = arith.constant 0 : i32
    %c0_i32_2 = arith.constant 0 : i32
    return %c0_i32, %c0_i32_0, %c0_i32_1 : i32, i32, i32
  }
  func.func @transform_2(%arg0: i32) -> (i32, i32, i32) {
    %c0_i32 = arith.constant 0 : i32
    %c0_i32_0 = arith.constant 0 : i32
    %c0_i32_1 = arith.constant 0 : i32
    %c0_i32_2 = arith.constant 0 : i32
    return %c0_i32, %c0_i32_0, %c0_i32_1 : i32, i32, i32
  }
  func.func @transform_3(%arg0: i32) -> (i32, i32) {
    %c0_i32 = arith.constant 0 : i32
    %c0_i32_0 = arith.constant 0 : i32
    %c0_i32_1 = arith.constant 0 : i32
    return %c0_i32, %c0_i32_0 : i32, i32
  }
  func.func @transform_4(%arg0: i32) -> (i32, i32, i32) {
    %c0_i32 = arith.constant 0 : i32
    %c0_i32_0 = arith.constant 0 : i32
    %c0_i32_1 = arith.constant 0 : i32
    %c0_i32_2 = arith.constant 0 : i32
    return %c0_i32, %c0_i32_0, %c0_i32_1 : i32, i32, i32
  }
  func.func @transform_5(%arg0: i32) -> (i32, i32, i32) {
    %c0_i32 = arith.constant 0 : i32
    %c0_i32_0 = arith.constant 0 : i32
    %c0_i32_1 = arith.constant 0 : i32
    %c0_i32_2 = arith.constant 0 : i32
    return %c0_i32, %c0_i32_0, %c0_i32_1 : i32, i32, i32
  }
  func.func @transform_6(%arg0: i32) -> (i32, i32, i32) {
    %c0_i32 = arith.constant 0 : i32
    %c0_i32_0 = arith.constant 0 : i32
    %c0_i32_1 = arith.constant 0 : i32
    %c0_i32_2 = arith.constant 0 : i32
    return %c0_i32, %c0_i32_0, %c0_i32_1 : i32, i32, i32
  }
  func.func @transform_7(%arg0: i32) -> (i32, i32, i32) {
    %c0_i32 = arith.constant 0 : i32
    %c0_i32_0 = arith.constant 0 : i32
    %c0_i32_1 = arith.constant 0 : i32
    %c0_i32_2 = arith.constant 0 : i32
    return %c0_i32, %c0_i32_0, %c0_i32_1 : i32, i32, i32
  }
  func.func @transform_8(%arg0: i32) -> (i32, i32, i32) {
    %c0_i32 = arith.constant 0 : i32
    %c0_i32_0 = arith.constant 0 : i32
    %c0_i32_1 = arith.constant 0 : i32
    %c0_i32_2 = arith.constant 0 : i32
    return %c0_i32, %c0_i32_0, %c0_i32_1 : i32, i32, i32
  }
  func.func @transform_9(%arg0: i32) -> (i32, i32) {
    %c0_i32 = arith.constant 0 : i32
    %c0_i32_0 = arith.constant 0 : i32
    %c0_i32_1 = arith.constant 0 : i32
    return %c0_i32, %c0_i32_0 : i32, i32
  }
  func.func @transform_10(%arg0: i32) -> (i32, i32) {
    %c0_i32 = arith.constant 0 : i32
    %c0_i32_0 = arith.constant 0 : i32
    %c0_i32_1 = arith.constant 0 : i32
    return %c0_i32, %c0_i32_0 : i32, i32
  }
  func.func @transform_11(%arg0: i32) -> (i32, i32, i32) {
    %c0_i32 = arith.constant 0 : i32
    %c0_i32_0 = arith.constant 0 : i32
    %c0_i32_1 = arith.constant 0 : i32
    return %arg0, %c0_i32, %c0_i32_0 : i32, i32, i32
  }
  func.func @transform_12(%arg0: i32) -> (i32, i32, i32) {
    %c0_i32 = arith.constant 0 : i32
    %c0_i32_0 = arith.constant 0 : i32
    %c0_i32_1 = arith.constant 0 : i32
    return %arg0, %c0_i32, %c0_i32_0 : i32, i32, i32
  }
}

</mosaic_0001>

<llo_original>
// kernel: tile.14
$region0: #{tile.14}
  %s0 = inlined_call_operand.vmem [shape: f32[8,8,8], index: 0, kind: input, shape index: {}]
  %s1 = inlined_call_operand.vmem [shape: f32[8,64], index: 1, kind: output, shape index: {}]
  %v2 = vld [vmem:[%s0] ss:$8 sm:$0xf]
  %v3 = vld [vmem:[%s0] ss:$8 sm:$0xf0]
  %vm4 = vcmask 1047556
  %v5 = vsel %vm4, %v3, %v2
  %vm6 = vcmask 64512
  %7 = vst.msk [vmem:[%s1] sm:$0xff] %vm6, %v5
  %s8 = scalar_lea.vmem %s0, 7
  %v9 = vld [vmem:[%s8] ss:$8 sm:$0xf]
  %s10 = scalar_lea.vmem %s0, 7
  %v11 = vld [vmem:[%s10] ss:$8 sm:$0xf0]
  %vm12 = vcmask 1047556
  %v13 = vsel %vm12, %v11, %v9
  %14 = vrot.lane.b32.xlu0 %v13, 56
  %v15 = vpop.permute.xlu0 %14
  %vm16 = vcmask 523712
  %17 = vst.msk [vmem:[%s1] sm:$0xff] %vm16, %v15
  %s18 = scalar_lea.vmem %s0, 6
  %v19 = vld [vmem:[%s18] ss:$8 sm:$0xf]
  %s20 = scalar_lea.vmem %s0, 6
  %v21 = vld [vmem:[%s20] ss:$8 sm:$0xf0]
  %vm22 = vcmask 1047556
  %v23 = vsel %vm22, %v21, %v19
  %24 = vrot.lane.b32.xlu0 %v23, 48
  %v25 = vpop.permute.xlu0 %24
  %vm26 = vcmask 458112
  %27 = vst.msk [vmem:[%s1] sm:$0xff] %vm26, %v25
  %s28 = scalar_lea.vmem %s0, 5
  %v29 = vld [vmem:[%s28] ss:$8 sm:$0xf]
  %s30 = scalar_lea.vmem %s0, 5
  %v31 = vld [vmem:[%s30] ss:$8 sm:$0xf0]
  %vm32 = vcmask 1047556
  %v33 = vsel %vm32, %v31, %v29
  %34 = vrot.lane.b32.xlu0 %v33, 40
  %v35 = vpop.permute.xlu0 %34
  %vm36 = vcmask 392512
  %37 = vst.msk [vmem:[%s1] sm:$0xff] %vm36, %v35
  %s38 = scalar_lea.vmem %s0, 4
  %v39 = vld [vmem:[%s38] ss:$8 sm:$0xf]
  %s40 = scalar_lea.vmem %s0, 4
  %v41 = vld [vmem:[%s40] ss:$8 sm:$0xf0]
  %vm42 = vcmask 1047556
  %v43 = vsel %vm42, %v41, %v39
  %44 = vrot.lane.b32.xlu0 %v43, 32
  %v45 = vpop.permute.xlu0 %44
  %vm46 = vcmask 326912
  %47 = vst.msk [vmem:[%s1] sm:$0xff] %vm46, %v45
  %s48 = scalar_lea.vmem %s0, 3
  %v49 = vld [vmem:[%s48] ss:$8 sm:$0xf]
  %s50 = scalar_lea.vmem %s0, 3
  %v51 = vld [vmem:[%s50] ss:$8 sm:$0xf0]
  %vm52 = vcmask 1047556
  %v53 = vsel %vm52, %v51, %v49
  %54 = vrot.lane.b32.xlu0 %v53, 24
  %v55 = vpop.permute.xlu0 %54
  %vm56 = vcmask 261312
  %57 = vst.msk [vmem:[%s1] sm:$0xff] %vm56, %v55
  %s58 = scalar_lea.vmem %s0, 2
  %v59 = vld [vmem:[%s58] ss:$8 sm:$0xf]
  %s60 = scalar_lea.vmem %s0, 2
  %v61 = vld [vmem:[%s60] ss:$8 sm:$0xf0]
  %vm62 = vcmask 1047556
  %v63 = vsel %vm62, %v61, %v59
  %64 = vrot.lane.b32.xlu0 %v63, 16
  %v65 = vpop.permute.xlu0 %64
  %vm66 = vcmask 195712
  %67 = vst.msk [vmem:[%s1] sm:$0xff] %vm66, %v65
  %s68 = scalar_lea.vmem %s0, 1
  %v69 = vld [vmem:[%s68] ss:$8 sm:$0xf]
  %s70 = scalar_lea.vmem %s0, 1
  %v71 = vld [vmem:[%s70] ss:$8 sm:$0xf0]
  %vm72 = vcmask 1047556
  %v73 = vsel %vm72, %v71, %v69
  %74 = vrot.lane.b32.xlu0 %v73, 8
  %v75 = vpop.permute.xlu0 %74
  %vm76 = vcmask 130112
  %77 = vst.msk [vmem:[%s1] sm:$0xff] %vm76, %v75

// kernel: clsnet_forward.1
$region0: #{clsnet_forward.1}
  #allocation0 [shape = 'u32[]', space=smem, size = 0x4, offset = 0x4, fixed_abs, tag = 'smem constant byte address 0x4 - core index']
  #allocation1 [shape = 'u32[144,128]{1,0:T(1,128)}', space=vmem, size = 0x12000, scoped, tag = 'internal scratch']
  %s0 = inlined_call_operand.vmem [shape: f32[2,8,32], index: 0, kind: input, shape index: {}]
  %s1 = inlined_call_operand.vmem [shape: f32[4,1,32], index: 1, kind: input, shape index: {}]
  %s2 = inlined_call_operand.vmem [shape: f32[4,1,32], index: 2, kind: input, shape index: {}]
  %s3 = inlined_call_operand.vmem [shape: f32[1,32], index: 3, kind: input, shape index: {}]
  %s4 = inlined_call_operand.vmem [shape: bf16[4,32,96], index: 4, kind: input, shape index: {}]
  %s5 = inlined_call_operand.vmem [shape: bf16[4,32,96], index: 5, kind: input, shape index: {}]
  %s6 = inlined_call_operand.vmem [shape: bf16[4,32,32], index: 6, kind: input, shape index: {}]
  %s7 = inlined_call_operand.vmem [shape: bf16[4,32,128], index: 7, kind: input, shape index: {}]
  %s8 = inlined_call_operand.vmem [shape: bf16[4,128,32], index: 8, kind: input, shape index: {}]
  %s9 = inlined_call_operand.vmem [shape: f32[8,96], index: 9, kind: input, shape index: {}]
  %s10 = inlined_call_operand.vmem [shape: f32[8,96], index: 10, kind: input, shape index: {}]
  %s11 = inlined_call_operand.vmem [shape: f32[2,8,8], index: 11, kind: input, shape index: {}]
  %s12 = inlined_call_operand.vmem [shape: f32[2,8,32], index: 12, kind: output, shape index: {}]
  %s13 = sld [smem:[#allocation0]]
  $region81: #{clsnet_forward.1} parent=0
    _
  %s15 = ssub.s32 1, %s13
  %s16 = scalar_select 0, %s15, %s13
  loop: start=0, step=1, limit=4
  $region2: #{clsnet_forward.1} parent=0 // loop_pre_header
    _
  $region3: #{clsnet_forward.1} parent=0 // loop_header
    %s18 = sphi 0, %s22
    %p19 = scmp.ge.s32.totalorder %s18, 4
    %s28 = sphi 0, %s30
    %s31 = sphi 0, %s28
    %s32 = sphi 0, %s31
    %s48 = sphi 0, %s32
    %s52 = sphi 0, %s52
    %s54 = sphi 0, %s52
    %s55 = sphi 0, %s54
    %s69 = sphi 0, %s55
    %s73 = sphi 0, %s73
    %s75 = sphi 0, %s73
    %s76 = sphi 0, %s75
    %s90 = sphi 0, %s76
    %s94 = sphi 0, %s94
    %s96 = sphi 0, %s94
    %s97 = sphi 0, %s96
    %s111 = sphi 0, %s97
    %s115 = sphi 0, %s115
    %s117 = sphi 0, %s115
    %s118 = sphi 0, %s117
    %s132 = sphi 0, %s118
    %s136 = sphi 0, %s136
    %s138 = sphi 0, %s136
    %s139 = sphi 0, %s138
    %s153 = sphi 0, %s139
    %s157 = sphi 0, %s157
    %s159 = sphi 0, %s157
    %s160 = sphi 0, %s159
    %s174 = sphi 0, %s160
    %s178 = sphi 0, %s178
    %s180 = sphi 0, %s178
    %s181 = sphi 0, %s180
    %s195 = sphi 0, %s181
    %s199 = sphi 0, %s199
    %s201 = sphi 0, %s199
    %s202 = sphi 0, %s201
    %s216 = sphi 0, %s202
    %s220 = sphi 0, %s220
    %s222 = sphi 0, %s220
    %s223 = sphi 0, %s222
    %s237 = sphi 0, %s223
    %s241 = sphi 0, %s241
    %s243 = sphi 0, %s241
    %s244 = sphi 0, %s243
    %s258 = sphi 0, %s244
    %s264 = sphi 0, %s266
    %s267 = sphi 0, %s264
    %s268 = sphi 0, %s267
    %s284 = sphi 0, %s268
    %s290 = sphi 0, %s292
    %s293 = sphi 0, %s290
    %s294 = sphi 0, %s293
    %s310 = sphi 0, %s294
  $region4: #{clsnet_forward.1} parent=0 // loop_header_branch
    %21 = sbr.rel (%p19) target = $region8
  $region5: #{clsnet_forward.1} parent=0 // loop_body
    %s23 = ssub.s32 %s18, 1
    %s24 = ssub.s32 %s18, 2
    %s25 = sadd.s32 %s18, 1
    %s26 = ssub.s32 %s18, %s25
    %p27 = scmp.eq.s32.totalorder %s26, 0
    %s29 = sadd.s32 %s28, 1
    %s30 = scalar_select %p27, %s28, %s29
    %p33 = pneg %p27
    %p34 = scmp.eq.s32.totalorder %s18, 1
    %p35 = por %p33, %p34
    %p36 = scmp.ne.s32.totalorder %s28, %s31
    %p37 = scmp.eq.s32.totalorder %s18, 0
    %p38 = por %p36, %p37
    %p39 = scmp.ne.s32.totalorder %s28, %s31
    %p40 = scmp.eq.s32.totalorder %s23, 1
    %p41 = por %p39, %p40
    %p42 = scmp.ne.s32.totalorder %s31, %s32
    %p43 = scmp.eq.s32.totalorder %s23, 0
    %p44 = por %p42, %p43
    %p45 = scmp.ne.s32.totalorder %s31, %s32
    %p46 = scmp.eq.s32.totalorder %s24, 1
    %p47 = por %p45, %p46
    %p49 = scmp.ne.s32.totalorder %s32, %s48
    %p50 = scmp.eq.s32.totalorder %s24, 0
    %p51 = por %p49, %p50
    %s53 = sadd.s32 %s52, 1
    %p56 = scmp.eq.s32.totalorder %s18, 1
    %p57 = scmp.ne.s32.totalorder %s52, %s54
    %p58 = scmp.eq.s32.totalorder %s18, 0
    %p59 = por %p57, %p58
    %p60 = scmp.ne.s32.totalorder %s52, %s54
    %p61 = scmp.eq.s32.totalorder %s23, 1
    %p62 = por %p60, %p61
    %p63 = scmp.ne.s32.totalorder %s54, %s55
    %p64 = scmp.eq.s32.totalorder %s23, 0
    %p65 = por %p63, %p64
    %p66 = scmp.ne.s32.totalorder %s54, %s55
    %p67 = scmp.eq.s32.totalorder %s24, 1
    %p68 = por %p66, %p67
    %p70 = scmp.ne.s32.totalorder %s55, %s69
    %p71 = scmp.eq.s32.totalorder %s24, 0
    %p72 = por %p70, %p71
    %s74 = sadd.s32 %s73, 1
    %p77 = scmp.eq.s32.totalorder %s18, 1
    %p78 = scmp.ne.s32.totalorder %s73, %s75
    %p79 = scmp.eq.s32.totalorder %s18, 0
    %p80 = por %p78, %p79
    %p81 = scmp.ne.s32.totalorder %s73, %s75
    %p82 = scmp.eq.s32.totalorder %s23, 1
    %p83 = por %p81, %p82
    %p84 = scmp.ne.s32.totalorder %s75, %s76
    %p85 = scmp.eq.s32.totalorder %s23, 0
    %p86 = por %p84, %p85
    %p87 = scmp.ne.s32.totalorder %s75, %s76
    %p88 = scmp.eq.s32.totalorder %s24, 1
    %p89 = por %p87, %p88
    %p91 = scmp.ne.s32.totalorder %s76, %s90
    %p92 = scmp.eq.s32.totalorder %s24, 0
    %p93 = por %p91, %p92
    %s95 = sadd.s32 %s94, 1
    %p98 = scmp.eq.s32.totalorder %s18, 1
    %p99 = scmp.ne.s32.totalorder %s94, %s96
    %p100 = scmp.eq.s32.totalorder %s18, 0
    %p101 = por %p99, %p100
    %p102 = scmp.ne.s32.totalorder %s94, %s96
    %p103 = scmp.eq.s32.totalorder %s23, 1
    %p104 = por %p102, %p103
    %p105 = scmp.ne.s32.totalorder %s96, %s97
    %p106 = scmp.eq.s32.totalorder %s23, 0
    %p107 = por %p105, %p106
    %p108 = scmp.ne.s32.totalorder %s96, %s97
    %p109 = scmp.eq.s32.totalorder %s24, 1
    %p110 = por %p108, %p109
    %p112 = scmp.ne.s32.totalorder %s97, %s111
    %p113 = scmp.eq.s32.totalorder %s24, 0
    %p114 = por %p112, %p113
    %s116 = sadd.s32 %s115, 1
    %p119 = scmp.eq.s32.totalorder %s18, 1
    %p120 = scmp.ne.s32.totalorder %s115, %s117
    %p121 = scmp.eq.s32.totalorder %s18, 0
    %p122 = por %p120, %p121
    %p123 = scmp.ne.s32.totalorder %s115, %s117
    %p124 = scmp.eq.s32.totalorder %s23, 1
    %p125 = por %p123, %p124
    %p126 = scmp.ne.s32.totalorder %s117, %s118
    %p127 = scmp.eq.s32.totalorder %s23, 0
    %p128 = por %p126, %p127
    %p129 = scmp.ne.s32.totalorder %s117, %s118
    %p130 = scmp.eq.s32.totalorder %s24, 1
    %p131 = por %p129, %p130
    %p133 = scmp.ne.s32.totalorder %s118, %s132
    %p134 = scmp.eq.s32.totalorder %s24, 0
    %p135 = por %p133, %p134
    %s137 = sadd.s32 %s136, 1
    %p140 = scmp.eq.s32.totalorder %s18, 1
    %p141 = scmp.ne.s32.totalorder %s136, %s138
    %p142 = scmp.eq.s32.totalorder %s18, 0
    %p143 = por %p141, %p142
    %p144 = scmp.ne.s32.totalorder %s136, %s138
    %p145 = scmp.eq.s32.totalorder %s23, 1
    %p146 = por %p144, %p145
    %p147 = scmp.ne.s32.totalorder %s138, %s139
    %p148 = scmp.eq.s32.totalorder %s23, 0
    %p149 = por %p147, %p148
    %p150 = scmp.ne.s32.totalorder %s138, %s139
    %p151 = scmp.eq.s32.totalorder %s24, 1
    %p152 = por %p150, %p151
    %p154 = scmp.ne.s32.totalorder %s139, %s153
    %p155 = scmp.eq.s32.totalorder %s24, 0
    %p156 = por %p154, %p155
    %s158 = sadd.s32 %s157, 1
    %p161 = scmp.eq.s32.totalorder %s18, 1
    %p162 = scmp.ne.s32.totalorder %s157, %s159
    %p163 = scmp.eq.s32.totalorder %s18, 0
    %p164 = por %p162, %p163
    %p165 = scmp.ne.s32.totalorder %s157, %s159
    %p166 = scmp.eq.s32.totalorder %s23, 1
    %p167 = por %p165, %p166
    %p168 = scmp.ne.s32.totalorder %s159, %s160
    %p169 = scmp.eq.s32.totalorder %s23, 0
    %p170 = por %p168, %p169
    %p171 = scmp.ne.s32.totalorder %s159, %s160
    %p172 = scmp.eq.s32.totalorder %s24, 1
    %p173 = por %p171, %p172
    %p175 = scmp.ne.s32.totalorder %s160, %s174
    %p176 = scmp.eq.s32.totalorder %s24, 0
    %p177 = por %p175, %p176
    %s179 = sadd.s32 %s178, 1
    %p182 = scmp.eq.s32.totalorder %s18, 1
    %p183 = scmp.ne.s32.totalorder %s178, %s180
    %p184 = scmp.eq.s32.totalorder %s18, 0
    %p185 = por %p183, %p184
    %p186 = scmp.ne.s32.totalorder %s178, %s180
    %p187 = scmp.eq.s32.totalorder %s23, 1
    %p188 = por %p186, %p187
    %p189 = scmp.ne.s32.totalorder %s180, %s181
    %p190 = scmp.eq.s32.totalorder %s23, 0
    %p191 = por %p189, %p190
    %p192 = scmp.ne.s32.totalorder %s180, %s181
    %p193 = scmp.eq.s32.totalorder %s24, 1
    %p194 = por %p192, %p193
    %p196 = scmp.ne.s32.totalorder %s181, %s195
    %p197 = scmp.eq.s32.totalorder %s24, 0
    %p198 = por %p196, %p197
    %s200 = sadd.s32 %s199, 1
    %p203 = scmp.eq.s32.totalorder %s18, 1
    %p204 = scmp.ne.s32.totalorder %s199, %s201
    %p205 = scmp.eq.s32.totalorder %s18, 0
    %p206 = por %p204, %p205
    %p207 = scmp.ne.s32.totalorder %s199, %s201
    %p208 = scmp.eq.s32.totalorder %s23, 1
    %p209 = por %p207, %p208
    %p210 = scmp.ne.s32.totalorder %s201, %s202
    %p211 = scmp.eq.s32.totalorder %s23, 0
    %p212 = por %p210, %p211
    %p213 = scmp.ne.s32.totalorder %s201, %s202
    %p214 = scmp.eq.s32.totalorder %s24, 1
    %p215 = por %p213, %p214
    %p217 = scmp.ne.s32.totalorder %s202, %s216
    %p218 = scmp.eq.s32.totalorder %s24, 0
    %p219 = por %p217, %p218
    %s221 = sadd.s32 %s220, 1
    %p224 = scmp.eq.s32.totalorder %s18, 1
    %p225 = scmp.ne.s32.totalorder %s220, %s222
    %p226 = scmp.eq.s32.totalorder %s18, 0
    %p227 = por %p225, %p226
    %p228 = scmp.ne.s32.totalorder %s220, %s222
    %p229 = scmp.eq.s32.totalorder %s23, 1
    %p230 = por %p228, %p229
    %p231 = scmp.ne.s32.totalorder %s222, %s223
    %p232 = scmp.eq.s32.totalorder %s23, 0
    %p233 = por %p231, %p232
    %p234 = scmp.ne.s32.totalorder %s222, %s223
    %p235 = scmp.eq.s32.totalorder %s24, 1
    %p236 = por %p234, %p235
    %p238 = scmp.ne.s32.totalorder %s223, %s237
    %p239 = scmp.eq.s32.totalorder %s24, 0
    %p240 = por %p238, %p239
    %s242 = sadd.s32 %s241, 1
    %p245 = scmp.eq.s32.totalorder %s18, 1
    %p246 = scmp.ne.s32.totalorder %s241, %s243
    %p247 = scmp.eq.s32.totalorder %s18, 0
    %p248 = por %p246, %p247
    %p249 = scmp.ne.s32.totalorder %s241, %s243
    %p250 = scmp.eq.s32.totalorder %s23, 1
    %p251 = por %p249, %p250
    %p252 = scmp.ne.s32.totalorder %s243, %s244
    %p253 = scmp.eq.s32.totalorder %s23, 0
    %p254 = por %p252, %p253
    %p255 = scmp.ne.s32.totalorder %s243, %s244
    %p256 = scmp.eq.s32.totalorder %s24, 1
    %p257 = por %p255, %p256
    %p259 = scmp.ne.s32.totalorder %s244, %s258
    %p260 = scmp.eq.s32.totalorder %s24, 0
    %p261 = por %p259, %p260
    %s262 = ssub.s32 %s18, %s25
    %p263 = scmp.eq.s32.totalorder %s262, 0
    %s265 = sadd.s32 %s264, 1
    %s266 = scalar_select %p263, %s264, %s265
    %p269 = pneg %p263
    %p270 = scmp.eq.s32.totalorder %s18, 1
    %p271 = por %p269, %p270
    %p272 = scmp.ne.s32.totalorder %s264, %s267
    %p273 = scmp.eq.s32.totalorder %s18, 0
    %p274 = por %p272, %p273
    %p275 = scmp.ne.s32.totalorder %s264, %s267
    %p276 = scmp.eq.s32.totalorder %s23, 1
    %p277 = por %p275, %p276
    %p278 = scmp.ne.s32.totalorder %s267, %s268
    %p279 = scmp.eq.s32.totalorder %s23, 0
    %p280 = por %p278, %p279
    %p281 = scmp.ne.s32.totalorder %s267, %s268
    %p282 = scmp.eq.s32.totalorder %s24, 1
    %p283 = por %p281, %p282
    %p285 = scmp.ne.s32.totalorder %s268, %s284
    %p286 = scmp.eq.s32.totalorder %s24, 0
    %p287 = por %p285, %p286
    %s288 = ssub.s32 %s18, %s25
    %p289 = scmp.eq.s32.totalorder %s288, 0
    %s291 = sadd.s32 %s290, 1
    %s292 = scalar_select %p289, %s290, %s291
    %p295 = pneg %p289
    %p296 = scmp.eq.s32.totalorder %s18, 1
    %p297 = por %p295, %p296
    %p298 = scmp.ne.s32.totalorder %s290, %s293
    %p299 = scmp.eq.s32.totalorder %s18, 0
    %p300 = por %p298, %p299
    %p301 = scmp.ne.s32.totalorder %s290, %s293
    %p302 = scmp.eq.s32.totalorder %s23, 1
    %p303 = por %p301, %p302
    %p304 = scmp.ne.s32.totalorder %s293, %s294
    %p305 = scmp.eq.s32.totalorder %s23, 0
    %p306 = por %p304, %p305
    %p307 = scmp.ne.s32.totalorder %s293, %s294
    %p308 = scmp.eq.s32.totalorder %s24, 1
    %p309 = por %p307, %p308
    %p311 = scmp.ne.s32.totalorder %s294, %s310
    %p312 = scmp.eq.s32.totalorder %s24, 0
    %p313 = por %p311, %p312
    %p314 = scmp.le.s32.totalorder 1, %s18
    %p315 = scmp.lt.s32.totalorder %s18, 3
    %p316 = pnand %p314, %p315
    %p317 = pneg %p316
    // Predicated region
    $region9: #{clsnet_forward.1} parent=5 // pred_check
      _
    $region10: #{clsnet_forward.1} parent=5 // pred_check_branch
      %319 = sbr.rel (%p316) target = $region12
    $region11: #{clsnet_forward.1} parent=5 // pred_region
      %s320 = ssub.s32 %s18, 1
      // Predicated region
      $region13: #{clsnet_forward.1} parent=11 // pred_check
        %p321 = pneg %p65
      $region14: #{clsnet_forward.1} parent=11 // pred_check_branch
        %323 = sbr.rel (%p321) target = $region16
      $region15: #{clsnet_forward.1} parent=11 // pred_region
        _
      $region16: #{clsnet_forward.1} parent=11 // pred_fallthru
        _
      // Predicated region
      $region17: #{clsnet_forward.1} parent=11 // pred_check
        %p324 = pneg %p86
      $region18: #{clsnet_forward.1} parent=11 // pred_check_branch
        %326 = sbr.rel (%p324) target = $region20
      $region19: #{clsnet_forward.1} parent=11 // pred_region
        _
      $region20: #{clsnet_forward.1} parent=11 // pred_fallthru
        _
      // Predicated region
      $region21: #{clsnet_forward.1} parent=11 // pred_check
        %p327 = pneg %p107
      $region22: #{clsnet_forward.1} parent=11 // pred_check_branch
        %329 = sbr.rel (%p327) target = $region24
      $region23: #{clsnet_forward.1} parent=11 // pred_region
        _
      $region24: #{clsnet_forward.1} parent=11 // pred_fallthru
        _
      // Predicated region
      $region25: #{clsnet_forward.1} parent=11 // pred_check
        %p330 = pneg %p128
      $region26: #{clsnet_forward.1} parent=11 // pred_check_branch
        %332 = sbr.rel (%p330) target = $region28
      $region27: #{clsnet_forward.1} parent=11 // pred_region
        _
      $region28: #{clsnet_forward.1} parent=11 // pred_fallthru
        _
      // Predicated region
      $region29: #{clsnet_forward.1} parent=11 // pred_check
        %p333 = pneg %p149
      $region30: #{clsnet_forward.1} parent=11 // pred_check_branch
        %335 = sbr.rel (%p333) target = $region32
      $region31: #{clsnet_forward.1} parent=11 // pred_region
        _
      $region32: #{clsnet_forward.1} parent=11 // pred_fallthru
        _
      // Predicated region
      $region33: #{clsnet_forward.1} parent=11 // pred_check
        %p336 = pneg %p170
      $region34: #{clsnet_forward.1} parent=11 // pred_check_branch
        %338 = sbr.rel (%p336) target = $region36
      $region35: #{clsnet_forward.1} parent=11 // pred_region
        _
      $region36: #{clsnet_forward.1} parent=11 // pred_fallthru
        _
      // Predicated region
      $region37: #{clsnet_forward.1} parent=11 // pred_check
        %p339 = pneg %p191
      $region38: #{clsnet_forward.1} parent=11 // pred_check_branch
        %341 = sbr.rel (%p339) target = $region40
      $region39: #{clsnet_forward.1} parent=11 // pred_region
        _
      $region40: #{clsnet_forward.1} parent=11 // pred_fallthru
        _
      // Predicated region
      $region41: #{clsnet_forward.1} parent=11 // pred_check
        %p342 = pneg %p212
      $region42: #{clsnet_forward.1} parent=11 // pred_check_branch
        %344 = sbr.rel (%p342) target = $region44
      $region43: #{clsnet_forward.1} parent=11 // pred_region
        _
      $region44: #{clsnet_forward.1} parent=11 // pred_fallthru
        _
      // Predicated region
      $region45: #{clsnet_forward.1} parent=11 // pred_check
        %p345 = pneg %p233
      $region46: #{clsnet_forward.1} parent=11 // pred_check_branch
        %347 = sbr.rel (%p345) target = $region48
      $region47: #{clsnet_forward.1} parent=11 // pred_region
        _
      $region48: #{clsnet_forward.1} parent=11 // pred_fallthru
        _
      // Predicated region
      $region49: #{clsnet_forward.1} parent=11 // pred_check
        %p348 = pneg %p254
      $region50: #{clsnet_forward.1} parent=11 // pred_check_branch
        %350 = sbr.rel (%p348) target = $region52
      $region51: #{clsnet_forward.1} parent=11 // pred_region
        _
      $region52: #{clsnet_forward.1} parent=11 // pred_fallthru
        _
    $region12: #{clsnet_forward.1} parent=5 // pred_fallthru
      _
    %p351 = scmp.lt.s32.totalorder %s18, 2
    // Predicated region
    $region53: #{clsnet_forward.1} parent=5 // pred_check
      %p352 = pneg %p351
    $region54: #{clsnet_forward.1} parent=5 // pred_check_branch
      %354 = sbr.rel (%p352) target = $region56
    $region55: #{clsnet_forward.1} parent=5 // pred_region
      // Predicated region
      $region57: #{clsnet_forward.1} parent=55 // pred_check
        %p355 = pneg %p38
      $region58: #{clsnet_forward.1} parent=55 // pred_check_branch
        %357 = sbr.rel (%p355) target = $region60
      $region59: #{clsnet_forward.1} parent=55 // pred_region
        %p358 = scmp.lt.s32.totalorder %s18, 1
        %s359 = scalar_select %p358, %s18, 1
        %s360 = smul.addr %s359, 8
        %s361 = scalar_lea.vmem %s0, %s360
      $region60: #{clsnet_forward.1} parent=55 // pred_fallthru
        _
      // Predicated region
      $region61: #{clsnet_forward.1} parent=55 // pred_check
        %p362 = pneg %p274
      $region62: #{clsnet_forward.1} parent=55 // pred_check_branch
        %364 = sbr.rel (%p362) target = $region64
      $region63: #{clsnet_forward.1} parent=55 // pred_region
        %p365 = scmp.lt.s32.totalorder %s18, 1
        %s366 = scalar_select %p365, %s18, 1
        %s367 = smul.addr %s366, 8
        %s368 = scalar_lea.vmem %s11, %s367
      $region64: #{clsnet_forward.1} parent=55 // pred_fallthru
        _
    $region56: #{clsnet_forward.1} parent=5 // pred_fallthru
      _
    %p369 = scmp.le.s32.totalorder 1, %s18
    %p370 = scmp.lt.s32.totalorder %s18, 3
    %p371 = pnand %p369, %p370
    %p372 = pneg %p371
    // Predicated region
    $region65: #{clsnet_forward.1} parent=5 // pred_check
      _
    $region66: #{clsnet_forward.1} parent=5 // pred_check_branch
      %374 = sbr.rel (%p371) target = $region68
    $region67: #{clsnet_forward.1} parent=5 // pred_region
      %s375 = ssub.s32 %s18, 1
      %p376 = scmp.lt.s32.totalorder %s23, 1
      %s377 = scalar_select %p376, %s23, 1
      %s378 = smul.addr %s377, 8
      %s379 = scalar_lea.vmem %s0, %s378
      %p380 = pneg %p44
      %p381 = pneg %p41
      %p382 = pneg %p65
      %p383 = pneg %p62
      %p384 = pneg %p86
      %p385 = pneg %p83
      %p386 = pneg %p107
      %p387 = pneg %p104
      %p388 = pneg %p128
      %p389 = pneg %p125
      %p390 = pneg %p149
      %p391 = pneg %p146
      %p392 = pneg %p170
      %p393 = pneg %p167
      %p394 = pneg %p191
      %p395 = pneg %p188
      %p396 = pneg %p212
      %p397 = pneg %p209
      %p398 = pneg %p233
      %p399 = pneg %p230
      %p400 = pneg %p254
      %p401 = pneg %p251
      %p402 = scmp.lt.s32.totalorder %s23, 1
      %s403 = scalar_select %p402, %s23, 1
      %s404 = smul.addr %s403, 8
      %s405 = scalar_lea.vmem %s11, %s404
      %p406 = pneg %p280
      %p407 = pneg %p277
      %p408 = pneg %p306
      %p409 = pneg %p303
      %p410 = scmp.lt.s32.totalorder %s23, 1
      %s411 = scalar_select %p410, %s23, 1
      %s412 = smul.addr %s411, 8
      %s413 = scalar_lea.vmem %s12, %s412
      %p414 = scmp.lt.s32.totalorder %s23, 1
      %s415 = scalar_select %p414, %s23, 1
      %s416 = smul.addr %s415, 8
      %s417 = scalar_lea.vmem %s0, %s416
      %p418 = scmp.lt.s32.totalorder %s23, 1
      %s419 = scalar_select %p418, %s23, 1
      %s420 = smul.addr %s419, 8
      %s421 = scalar_lea.vmem %s11, %s420
      %p422 = scmp.lt.s32.totalorder %s23, 1
      %s423 = scalar_select %p422, %s23, 1
      %s424 = smul.addr %s423, 8
      %s425 = scalar_lea.vmem %s12, %s424
      %v427 = vld [vmem:[%s417] sm:$0xff]
      %v428 = vld [vmem:[%s9] sm:$0xff]
      %v429 = vld [vmem:[%s10] sm:$0xff]
      %v430 = vld [vmem:[%s421] sm:$0xff]
      %v431 = vld [vmem:[%s1] sm:$0x1]
      %v432 = vmul.f32 %v427, %v427
      %vm433 = vcmask 261120
      %v434 = vsel %vm433, %v432, 0.0
      %435 = vadd.xlane.f32.xlu0 %v434
      %v436 = vpop.xlane.xlu0 %435
      %v437 = vrcp.pop 32.0
      %v438 = vmul.f32 %v436, %v437
      %v439 = vadd.f32 %v438, 1e-06
      %v440 = vrsqrt.pop %v439
      %v441 = vmul.f32 %v427, %v440
      %v443 = vlaneseq
      %v444 = vshrl.u32 %v443, 7
      %v445 = vsub.s32 0, %v444
      %v446 = vrot.slane %v431, %v445
      %v448 = vmul.f32 %v441, %v446
      %v449 = vpack.c.bf16 %v448, %v448
      %v450 = vld [vmem:[%s4] sm:$0xf]
      %v451 = vld [vmem:[%s4 + $0x4] sm:$0xf]
      %v452 = vld [vmem:[%s4 + $0x8] sm:$0xf]
      %v453 = vld [vmem:[%s4 + $0xc] sm:$0xf]
      %v458 = vunpack.c.l.b16 %v450
      %v459 = vunpack.c.l.b16 %v451
      %v460 = vunpack.c.l.b16 %v452
      %v461 = vunpack.c.l.b16 %v453
      %v462 = vpack.c.b16 %v459, %v458
      %v463 = vpack.c.b16 %v461, %v460
      %v467 = vsel %vm433, %v449, 0
      %469 = vmatprep.subr.bf16.mxu0 0
      %470 = vmatpush1.bf16.msra.mxu0 0
      %471 = vmatprep.subr.bf16.mxu0 0
      %472 = vmatpush1.bf16.msra.mxu0 0
      %473 = vmatprep.subr.bf16.mxu0 0
      %474 = vmatpush1.bf16.msra.mxu0 0
      %475 = vmatprep.subr.bf16.mxu0 0
      %476 = vmatpush1.bf16.msra.mxu0 0
      %477 = vmatprep.subr.bf16.mxu0 0
      %478 = vmatpush1.bf16.msra.mxu0 0
      %479 = vmatprep.subr.bf16.mxu0 0
      %480 = vmatpush1.bf16.msra.mxu0 0
      %481 = vmatprep.subr.bf16.mxu0 0
      %482 = vmatpush1.bf16.msra.mxu0 %v463
      %483 = vmatprep.subr.bf16.mxu0 0
      %484 = vmatpush1.bf16.msra.mxu0 %v462
      %485 = vmatprep.subr.bf16.mxu0 0
      %486 = vmatpush2.bf16.msra.mxu0 0
      %487 = vmatprep.subr.bf16.mxu0 0
      %488 = vmatpush2.bf16.msra.mxu0 0
      %489 = vmatprep.subr.bf16.mxu0 0
      %490 = vmatpush2.bf16.msra.mxu0 0
      %491 = vmatprep.subr.bf16.mxu0 0
      %492 = vmatpush2.bf16.msra.mxu0 0
      %493 = vmatprep.subr.bf16.mxu0 0
      %494 = vmatpush2.bf16.msra.mxu0 0
      %495 = vmatprep.subr.bf16.mxu0 0
      %496 = vmatpush2.bf16.msra.mxu0 0
      %497 = vmatprep.subr.bf16.mxu0 0
      %498 = vmatpush2.bf16.msra.mxu0 0
      %499 = vmatprep.subr.bf16.mxu0 0
      %500 = vmatpush2.bf16.msra.mxu0 0
      %501 = vmatprep.mubr.bf16.mxu0 0
      %502 = vmatmul.mubr.bf16.gmra.mxu0 %v467
      %v503 = vpop.f32.mrf.mxu0
      %v504 = vadd.f32 0.0, %v503
      %v505 = vpop.f32.mrf.mxu0
      %v506 = vpop.f32.mrf.mxu0
      %v507 = vpop.f32.mrf.mxu0
      %508 = vdwg.mxu0
      %v509 = vld [vmem:[%s5] sm:$0xf]
      %v510 = vld [vmem:[%s5 + $0x4] sm:$0xf]
      %v511 = vld [vmem:[%s5 + $0x8] sm:$0xf]
      %v512 = vld [vmem:[%s5 + $0xc] sm:$0xf]
      %v517 = vunpack.c.l.b16 %v509
      %v518 = vunpack.c.l.b16 %v510
      %v519 = vunpack.c.l.b16 %v511
      %v520 = vunpack.c.l.b16 %v512
      %v521 = vpack.c.b16 %v518, %v517
      %v522 = vpack.c.b16 %v520, %v519
      %525 = vmatprep.subr.bf16.mxu0 0
      %526 = vmatpush1.bf16.msra.mxu0 0
      %527 = vmatprep.subr.bf16.mxu0 0
      %528 = vmatpush1.bf16.msra.mxu0 0
      %529 = vmatprep.subr.bf16.mxu0 0
      %530 = vmatpush1.bf16.msra.mxu0 0
      %531 = vmatprep.subr.bf16.mxu0 0
      %532 = vmatpush1.bf16.msra.mxu0 0
      %533 = vmatprep.subr.bf16.mxu0 0
      %534 = vmatpush1.bf16.msra.mxu0 0
      %535 = vmatprep.subr.bf16.mxu0 0
      %536 = vmatpush1.bf16.msra.mxu0 0
      %537 = vmatprep.subr.bf16.mxu0 0
      %538 = vmatpush1.bf16.msra.mxu0 %v522
      %539 = vmatprep.subr.bf16.mxu0 0
      %540 = vmatpush1.bf16.msra.mxu0 %v521
      %541 = vmatprep.subr.bf16.mxu0 0
      %542 = vmatpush2.bf16.msra.mxu0 0
      %543 = vmatprep.subr.bf16.mxu0 0
      %544 = vmatpush2.bf16.msra.mxu0 0
      %545 = vmatprep.subr.bf16.mxu0 0
      %546 = vmatpush2.bf16.msra.mxu0 0
      %547 = vmatprep.subr.bf16.mxu0 0
      %548 = vmatpush2.bf16.msra.mxu0 0
      %549 = vmatprep.subr.bf16.mxu0 0
      %550 = vmatpush2.bf16.msra.mxu0 0
      %551 = vmatprep.subr.bf16.mxu0 0
      %552 = vmatpush2.bf16.msra.mxu0 0
      %553 = vmatprep.subr.bf16.mxu0 0
      %554 = vmatpush2.bf16.msra.mxu0 0
      %555 = vmatprep.subr.bf16.mxu0 0
      %556 = vmatpush2.bf16.msra.mxu0 0
      %557 = vmatprep.mubr.bf16.mxu0 0
      %558 = vmatmul.mubr.bf16.gmra.mxu0 %v467
      %v559 = vpop.f32.mrf.mxu0
      %v560 = vadd.f32 0.0, %v559
      %v561 = vpop.f32.mrf.mxu0
      %v562 = vpop.f32.mrf.mxu0
      %v563 = vpop.f32.mrf.mxu0
      %564 = vdwg.mxu0
      %v565 = vmul.f32 %v504, %v428
      %v566 = vmul.f32 %v560, %v429
      %v567 = vadd.f32 %v565, %v566
      %569 = vrot.lane.b32.xlu0 %v567, 120
      %v570 = vpop.permute.xlu0 %569
      %572 = vrot.lane.b32.xlu0 %v567, 112
      %v573 = vpop.permute.xlu0 %572
      %575 = vrot.lane.b32.xlu0 %v567, 104
      %v576 = vpop.permute.xlu0 %575
      %v578 = vcombine.low %v567, %v573
      %v579 = vcombine.high %v567, %v573
      %v581 = vunpack.c.l.s4 1983009808
      %v582 = vunpack.c.0.s8 %v581
      %v583 = vlaneseq
      %v584 = vshrl.u32 %v583, 7
      %v585 = vsub.s32 %v582, %v584
      %v586 = vrot.slane %v578, %v585
      %v588 = vunpack.c.l.s4 1983009808
      %v589 = vunpack.c.0.s8 %v588
      %v590 = vlaneseq
      %v591 = vshrl.u32 %v590, 7
      %v592 = vsub.s32 %v589, %v591
      %v593 = vrot.slane %v579, %v592
      %v594 = vcombine.low %v570, %v576
      %v595 = vcombine.high %v570, %v576
      %v597 = vunpack.c.l.s4 1983009808
      %v598 = vunpack.c.0.s8 %v597
      %v599 = vlaneseq
      %v600 = vshrl.u32 %v599, 7
      %v601 = vsub.s32 %v598, %v600
      %v602 = vrot.slane %v594, %v601
      %v604 = vunpack.c.l.s4 1983009808
      %v605 = vunpack.c.0.s8 %v604
      %v606 = vlaneseq
      %v607 = vshrl.u32 %v606, 7
      %v608 = vsub.s32 %v605, %v607
      %v609 = vrot.slane %v595, %v608
      %v610 = vcombine.low %v586, %v602
      %v611 = vcombine.high %v586, %v602
      %v613 = vunpack.c.l.s4 1934713408
      %v614 = vunpack.c.0.s8 %v613
      %v615 = vlaneseq
      %v616 = vshrl.u32 %v615, 7
      %v617 = vsub.s32 %v614, %v616
      %v618 = vrot.slane %v610, %v617
      %v620 = vunpack.c.l.s4 1934713408
      %v621 = vunpack.c.0.s8 %v620
      %v622 = vlaneseq
      %v623 = vshrl.u32 %v622, 7
      %v624 = vsub.s32 %v621, %v623
      %v625 = vrot.slane %v611, %v624
      %v626 = vcombine.low %v593, %v609
      %v627 = vcombine.high %v593, %v609
      %v629 = vunpack.c.l.s4 1934713408
      %v630 = vunpack.c.0.s8 %v629
      %v631 = vlaneseq
      %v632 = vshrl.u32 %v631, 7
      %v633 = vsub.s32 %v630, %v632
      %v634 = vrot.slane %v626, %v633
      %v636 = vunpack.c.l.s4 1934713408
      %v637 = vunpack.c.0.s8 %v636
      %v638 = vlaneseq
      %v639 = vshrl.u32 %v638, 7
      %v640 = vsub.s32 %v637, %v639
      %v641 = vrot.slane %v627, %v640
      %v642 = vcombine.high %v618, 0.0
      %v643 = vcombine.high %v625, 0.0
      %v644 = vcombine.high %v634, 0.0
      %v645 = vcombine.high %v641, 0.0
      %646 = vrot.lane.b32.xlu0 %v567, 96
      %v647 = vpop.permute.xlu0 %646
      %648 = vrot.lane.b32.xlu0 %v570, 96
      %v649 = vpop.permute.xlu0 %648
      %650 = vrot.lane.b32.xlu0 %v573, 96
      %v651 = vpop.permute.xlu0 %650
      %652 = vrot.lane.b32.xlu0 %v576, 96
      %v653 = vpop.permute.xlu0 %652
      %v658 = vcombine.low %v647, %v651
      %v659 = vcombine.high %v647, %v651
      %v661 = vunpack.c.l.s4 1983009808
      %v662 = vunpack.c.0.s8 %v661
      %v663 = vlaneseq
      %v664 = vshrl.u32 %v663, 7
      %v665 = vsub.s32 %v662, %v664
      %v666 = vrot.slane %v658, %v665
      %v668 = vunpack.c.l.s4 1983009808
      %v669 = vunpack.c.0.s8 %v668
      %v670 = vlaneseq
      %v671 = vshrl.u32 %v670, 7
      %v672 = vsub.s32 %v669, %v671
      %v673 = vrot.slane %v659, %v672
      %v674 = vcombine.low %v649, %v653
      %v675 = vcombine.high %v649, %v653
      %v677 = vunpack.c.l.s4 1983009808
      %v678 = vunpack.c.0.s8 %v677
      %v679 = vlaneseq
      %v680 = vshrl.u32 %v679, 7
      %v681 = vsub.s32 %v678, %v680
      %v682 = vrot.slane %v674, %v681
      %v684 = vunpack.c.l.s4 1983009808
      %v685 = vunpack.c.0.s8 %v684
      %v686 = vlaneseq
      %v687 = vshrl.u32 %v686, 7
      %v688 = vsub.s32 %v685, %v687
      %v689 = vrot.slane %v675, %v688
      %v690 = vcombine.low %v666, %v682
      %v691 = vcombine.high %v666, %v682
      %v693 = vunpack.c.l.s4 1934713408
      %v694 = vunpack.c.0.s8 %v693
      %v695 = vlaneseq
      %v696 = vshrl.u32 %v695, 7
      %v697 = vsub.s32 %v694, %v696
      %v698 = vrot.slane %v690, %v697
      %v700 = vunpack.c.l.s4 1934713408
      %v701 = vunpack.c.0.s8 %v700
      %v702 = vlaneseq
      %v703 = vshrl.u32 %v702, 7
      %v704 = vsub.s32 %v701, %v703
      %v705 = vrot.slane %v691, %v704
      %v706 = vcombine.low %v673, %v689
      %v707 = vcombine.high %v673, %v689
      %v709 = vunpack.c.l.s4 1934713408
      %v710 = vunpack.c.0.s8 %v709
      %v711 = vlaneseq
      %v712 = vshrl.u32 %v711, 7
      %v713 = vsub.s32 %v710, %v712
      %v714 = vrot.slane %v706, %v713
      %v716 = vunpack.c.l.s4 1934713408
      %v717 = vunpack.c.0.s8 %v716
      %v718 = vlaneseq
      %v719 = vshrl.u32 %v718, 7
      %v720 = vsub.s32 %v717, %v719
      %v721 = vrot.slane %v707, %v720
      %v722 = vcombine.high %v698, 0.0
      %v723 = vcombine.high %v705, 0.0
      %v724 = vcombine.high %v714, 0.0
      %v725 = vcombine.high %v721, 0.0
      %726 = vrot.lane.b32.xlu0 %v567, 64
      %v727 = vpop.permute.xlu0 %726
      %728 = vrot.lane.b32.xlu0 %v570, 64
      %v729 = vpop.permute.xlu0 %728
      %730 = vrot.lane.b32.xlu0 %v573, 64
      %v731 = vpop.permute.xlu0 %730
      %732 = vrot.lane.b32.xlu0 %v576, 64
      %v733 = vpop.permute.xlu0 %732
      %v738 = vcombine.low %v727, %v731
      %v739 = vcombine.high %v727, %v731
      %v741 = vunpack.c.l.s4 1983009808
      %v742 = vunpack.c.0.s8 %v741
      %v743 = vlaneseq
      %v744 = vshrl.u32 %v743, 7
      %v745 = vsub.s32 %v742, %v744
      %v746 = vrot.slane %v738, %v745
      %v748 = vunpack.c.l.s4 1983009808
      %v749 = vunpack.c.0.s8 %v748
      %v750 = vlaneseq
      %v751 = vshrl.u32 %v750, 7
      %v752 = vsub.s32 %v749, %v751
      %v753 = vrot.slane %v739, %v752
      %v754 = vcombine.low %v729, %v733
      %v755 = vcombine.high %v729, %v733
      %v757 = vunpack.c.l.s4 1983009808
      %v758 = vunpack.c.0.s8 %v757
      %v759 = vlaneseq
      %v760 = vshrl.u32 %v759, 7
      %v761 = vsub.s32 %v758, %v760
      %v762 = vrot.slane %v754, %v761
      %v764 = vunpack.c.l.s4 1983009808
      %v765 = vunpack.c.0.s8 %v764
      %v766 = vlaneseq
      %v767 = vshrl.u32 %v766, 7
      %v768 = vsub.s32 %v765, %v767
      %v769 = vrot.slane %v755, %v768
      %v770 = vcombine.low %v746, %v762
      %v771 = vcombine.high %v746, %v762
      %v773 = vunpack.c.l.s4 1934713408
      %v774 = vunpack.c.0.s8 %v773
      %v775 = vlaneseq
      %v776 = vshrl.u32 %v775, 7
      %v777 = vsub.s32 %v774, %v776
      %v778 = vrot.slane %v770, %v777
      %v780 = vunpack.c.l.s4 1934713408
      %v781 = vunpack.c.0.s8 %v780
      %v782 = vlaneseq
      %v783 = vshrl.u32 %v782, 7
      %v784 = vsub.s32 %v781, %v783
      %v785 = vrot.slane %v771, %v784
      %v786 = vcombine.low %v753, %v769
      %v787 = vcombine.high %v753, %v769
      %v789 = vunpack.c.l.s4 1934713408
      %v790 = vunpack.c.0.s8 %v789
      %v791 = vlaneseq
      %v792 = vshrl.u32 %v791, 7
      %v793 = vsub.s32 %v790, %v792
      %v794 = vrot.slane %v786, %v793
      %v796 = vunpack.c.l.s4 1934713408
      %v797 = vunpack.c.0.s8 %v796
      %v798 = vlaneseq
      %v799 = vshrl.u32 %v798, 7
      %v800 = vsub.s32 %v797, %v799
      %v801 = vrot.slane %v787, %v800
      %v802 = vcombine.high %v778, 0.0
      %v803 = vcombine.high %v785, 0.0
      %v804 = vcombine.high %v794, 0.0
      %v805 = vcombine.high %v801, 0.0
      %v806 = vpack.c.bf16 %v618, %v618
      %v807 = vpack.c.bf16 %v642, %v642
      %v808 = vpack.c.bf16 %v625, %v625
      %v809 = vpack.c.bf16 %v643, %v643
      %v810 = vpack.c.bf16 %v634, %v634
      %v811 = vpack.c.bf16 %v644, %v644
      %v812 = vpack.c.bf16 %v641, %v641
      %v813 = vpack.c.bf16 %v645, %v645
      %v814 = vpack.c.bf16 %v698, %v698
      %v815 = vpack.c.bf16 %v722, %v722
      %v816 = vpack.c.bf16 %v705, %v705
      %v817 = vpack.c.bf16 %v723, %v723
      %v818 = vpack.c.bf16 %v714, %v714
      %v819 = vpack.c.bf16 %v724, %v724
      %v820 = vpack.c.bf16 %v721, %v721
      %v821 = vpack.c.bf16 %v725, %v725
      %v822 = vcombine.low %v806, %v810
      %v824 = vunpack.c.l.s4 1983009808
      %v825 = vunpack.c.0.s8 %v824
      %v826 = vlaneseq
      %v827 = vshrl.u32 %v826, 7
      %v828 = vsub.s32 %v825, %v827
      %v829 = vrot.slane %v822, %v828
      %v830 = vcombine.low %v808, %v812
      %v832 = vunpack.c.l.s4 1983009808
      %v833 = vunpack.c.0.s8 %v832
      %v834 = vlaneseq
      %v835 = vshrl.u32 %v834, 7
      %v836 = vsub.s32 %v833, %v835
      %v837 = vrot.slane %v830, %v836
      %v838 = vcombine.low %v829, %v837
      %v840 = vunpack.c.l.s4 1934713408
      %v841 = vunpack.c.0.s8 %v840
      %v842 = vlaneseq
      %v843 = vshrl.u32 %v842, 7
      %v844 = vsub.s32 %v841, %v843
      %v845 = vrot.slane %v838, %v844
      %v846 = vcombine.high %v845, 0
      %v847 = vcombine.low %v807, %v811
      %v849 = vunpack.c.l.s4 1983009808
      %v850 = vunpack.c.0.s8 %v849
      %v851 = vlaneseq
      %v852 = vshrl.u32 %v851, 7
      %v853 = vsub.s32 %v850, %v852
      %v854 = vrot.slane %v847, %v853
      %v855 = vcombine.low %v809, %v813
      %v857 = vunpack.c.l.s4 1983009808
      %v858 = vunpack.c.0.s8 %v857
      %v859 = vlaneseq
      %v860 = vshrl.u32 %v859, 7
      %v861 = vsub.s32 %v858, %v860
      %v862 = vrot.slane %v855, %v861
      %v863 = vcombine.low %v854, %v862
      %v865 = vunpack.c.l.s4 1934713408
      %v866 = vunpack.c.0.s8 %v865
      %v867 = vlaneseq
      %v868 = vshrl.u32 %v867, 7
      %v869 = vsub.s32 %v866, %v868
      %v870 = vrot.slane %v863, %v869
      %v871 = vcombine.high %v870, 0
      %v874 = vpack.i.b16 %v870, %v845
      %v875 = vshrl.u32 %v845, 16
      %v876 = vshrl.u32 %v870, 16
      %v877 = vpack.i.b16 %v876, %v875
      %v880 = vpack.i.b16 %v871, %v846
      %v881 = vshrl.u32 %v846, 16
      %v882 = vshrl.u32 %v871, 16
      %v883 = vpack.i.b16 %v882, %v881
      %884 = vxpose.xlu0.c.b16.start [1/8] %v814, 128
      %885 = vxpose.xlu0.c.b16.cont [2/8] 0, 128
      %886 = vxpose.xlu0.c.b16.cont [3/8] 0, 128
      %887 = vxpose.xlu0.c.b16.cont [4/8] 0, 128
      %888 = vxpose.xlu0.c.b16.cont [5/8] 0, 128
      %889 = vxpose.xlu0.c.b16.cont [6/8] 0, 128
      %890 = vxpose.xlu0.c.b16.cont [7/8] 0, 128
      %891 = vxpose.xlu0.c.b16.end [8/8] 0, 128
      %v892 = vpop.trf.xlu0
      %v893 = vpop.trf.xlu0
      %v894 = vpop.trf.xlu0
      %v895 = vpop.trf.xlu0
      %v896 = vpop.trf.xlu0
      %v897 = vpop.trf.xlu0
      %v898 = vpop.trf.xlu0
      %v899 = vpop.trf.xlu0
      %900 = vxpose.xlu0.c.b16.start [1/8] %v815, 128
      %901 = vxpose.xlu0.c.b16.cont [2/8] 0, 128
      %902 = vxpose.xlu0.c.b16.cont [3/8] 0, 128
      %903 = vxpose.xlu0.c.b16.cont [4/8] 0, 128
      %904 = vxpose.xlu0.c.b16.cont [5/8] 0, 128
      %905 = vxpose.xlu0.c.b16.cont [6/8] 0, 128
      %906 = vxpose.xlu0.c.b16.cont [7/8] 0, 128
      %907 = vxpose.xlu0.c.b16.end [8/8] 0, 128
      %v908 = vpop.trf.xlu0
      %v909 = vpop.trf.xlu0
      %v910 = vpop.trf.xlu0
      %v911 = vpop.trf.xlu0
      %v912 = vpop.trf.xlu0
      %v913 = vpop.trf.xlu0
      %v914 = vpop.trf.xlu0
      %v915 = vpop.trf.xlu0
      %916 = vxpose.xlu0.c.b16.start [1/8] %v816, 128
      %917 = vxpose.xlu0.c.b16.cont [2/8] 0, 128
      %918 = vxpose.xlu0.c.b16.cont [3/8] 0, 128
      %919 = vxpose.xlu0.c.b16.cont [4/8] 0, 128
      %920 = vxpose.xlu0.c.b16.cont [5/8] 0, 128
      %921 = vxpose.xlu0.c.b16.cont [6/8] 0, 128
      %922 = vxpose.xlu0.c.b16.cont [7/8] 0, 128
      %923 = vxpose.xlu0.c.b16.end [8/8] 0, 128
      %v924 = vpop.trf.xlu0
      %v925 = vpop.trf.xlu0
      %v926 = vpop.trf.xlu0
      %v927 = vpop.trf.xlu0
      %v928 = vpop.trf.xlu0
      %v929 = vpop.trf.xlu0
      %v930 = vpop.trf.xlu0
      %v931 = vpop.trf.xlu0
      %932 = vxpose.xlu0.c.b16.start [1/8] %v817, 128
      %933 = vxpose.xlu0.c.b16.cont [2/8] 0, 128
      %934 = vxpose.xlu0.c.b16.cont [3/8] 0, 128
      %935 = vxpose.xlu0.c.b16.cont [4/8] 0, 128
      %936 = vxpose.xlu0.c.b16.cont [5/8] 0, 128
      %937 = vxpose.xlu0.c.b16.cont [6/8] 0, 128
      %938 = vxpose.xlu0.c.b16.cont [7/8] 0, 128
      %939 = vxpose.xlu0.c.b16.end [8/8] 0, 128
      %v940 = vpop.trf.xlu0
      %v941 = vpop.trf.xlu0
      %v942 = vpop.trf.xlu0
      %v943 = vpop.trf.xlu0
      %v944 = vpop.trf.xlu0
      %v945 = vpop.trf.xlu0
      %v946 = vpop.trf.xlu0
      %v947 = vpop.trf.xlu0
      %948 = vxpose.xlu0.c.b16.start [1/8] %v818, 128
      %949 = vxpose.xlu0.c.b16.cont [2/8] 0, 128
      %950 = vxpose.xlu0.c.b16.cont [3/8] 0, 128
      %951 = vxpose.xlu0.c.b16.cont [4/8] 0, 128
      %952 = vxpose.xlu0.c.b16.cont [5/8] 0, 128
      %953 = vxpose.xlu0.c.b16.cont [6/8] 0, 128
      %954 = vxpose.xlu0.c.b16.cont [7/8] 0, 128
      %955 = vxpose.xlu0.c.b16.end [8/8] 0, 128
      %v956 = vpop.trf.xlu0
      %v957 = vpop.trf.xlu0
      %v958 = vpop.trf.xlu0
      %v959 = vpop.trf.xlu0
      %v960 = vpop.trf.xlu0
      %v961 = vpop.trf.xlu0
      %v962 = vpop.trf.xlu0
      %v963 = vpop.trf.xlu0
      %964 = vxpose.xlu0.c.b16.start [1/8] %v819, 128
      %965 = vxpose.xlu0.c.b16.cont [2/8] 0, 128
      %966 = vxpose.xlu0.c.b16.cont [3/8] 0, 128
      %967 = vxpose.xlu0.c.b16.cont [4/8] 0, 128
      %968 = vxpose.xlu0.c.b16.cont [5/8] 0, 128
      %969 = vxpose.xlu0.c.b16.cont [6/8] 0, 128
      %970 = vxpose.xlu0.c.b16.cont [7/8] 0, 128
      %971 = vxpose.xlu0.c.b16.end [8/8] 0, 128
      %v972 = vpop.trf.xlu0
      %v973 = vpop.trf.xlu0
      %v974 = vpop.trf.xlu0
      %v975 = vpop.trf.xlu0
      %v976 = vpop.trf.xlu0
      %v977 = vpop.trf.xlu0
      %v978 = vpop.trf.xlu0
      %v979 = vpop.trf.xlu0
      %980 = vxpose.xlu0.c.b16.start [1/8] %v820, 128
      %981 = vxpose.xlu0.c.b16.cont [2/8] 0, 128
      %982 = vxpose.xlu0.c.b16.cont [3/8] 0, 128
      %983 = vxpose.xlu0.c.b16.cont [4/8] 0, 128
      %984 = vxpose.xlu0.c.b16.cont [5/8] 0, 128
      %985 = vxpose.xlu0.c.b16.cont [6/8] 0, 128
      %986 = vxpose.xlu0.c.b16.cont [7/8] 0, 128
      %987 = vxpose.xlu0.c.b16.end [8/8] 0, 128
      %v988 = vpop.trf.xlu0
      %v989 = vpop.trf.xlu0
      %v990 = vpop.trf.xlu0
      %v991 = vpop.trf.xlu0
      %v992 = vpop.trf.xlu0
      %v993 = vpop.trf.xlu0
      %v994 = vpop.trf.xlu0
      %v995 = vpop.trf.xlu0
      %996 = vxpose.xlu0.c.b16.start [1/8] %v821, 128
      %997 = vxpose.xlu0.c.b16.cont [2/8] 0, 128
      %998 = vxpose.xlu0.c.b16.cont [3/8] 0, 128
      %999 = vxpose.xlu0.c.b16.cont [4/8] 0, 128
      %1000 = vxpose.xlu0.c.b16.cont [5/8] 0, 128
      %1001 = vxpose.xlu0.c.b16.cont [6/8] 0, 128
      %1002 = vxpose.xlu0.c.b16.cont [7/8] 0, 128
      %1003 = vxpose.xlu0.c.b16.end [8/8] 0, 128
      %v1004 = vpop.trf.xlu0
      %v1005 = vpop.trf.xlu0
      %v1006 = vpop.trf.xlu0
      %v1007 = vpop.trf.xlu0
      %v1008 = vpop.trf.xlu0
      %v1009 = vpop.trf.xlu0
      %v1010 = vpop.trf.xlu0
      %v1011 = vpop.trf.xlu0
      %v1012 = vcombine.low %v892, %v956
      %v1014 = vunpack.c.l.s4 1983009808
      %v1015 = vunpack.c.0.s8 %v1014
      %v1016 = vlaneseq
      %v1017 = vshrl.u32 %v1016, 7
      %v1018 = vsub.s32 %v1015, %v1017
      %v1019 = vrot.slane %v1012, %v1018
      %v1020 = vcombine.low %v924, %v988
      %v1022 = vunpack.c.l.s4 1983009808
      %v1023 = vunpack.c.0.s8 %v1022
      %v1024 = vlaneseq
      %v1025 = vshrl.u32 %v1024, 7
      %v1026 = vsub.s32 %v1023, %v1025
      %v1027 = vrot.slane %v1020, %v1026
      %v1028 = vcombine.low %v1019, %v1027
      %v1029 = vcombine.high %v1019, %v1027
      %v1031 = vunpack.c.l.s4 1934713408
      %v1032 = vunpack.c.0.s8 %v1031
      %v1033 = vlaneseq
      %v1034 = vshrl.u32 %v1033, 7
      %v1035 = vsub.s32 %v1032, %v1034
      %v1036 = vrot.slane %v1028, %v1035
      %v1038 = vunpack.c.l.s4 1934713408
      %v1039 = vunpack.c.0.s8 %v1038
      %v1040 = vlaneseq
      %v1041 = vshrl.u32 %v1040, 7
      %v1042 = vsub.s32 %v1039, %v1041
      %v1043 = vrot.slane %v1029, %v1042
      %v1044 = vcombine.high %v1036, 0
      %v1045 = vcombine.high %v1043, 0
      %v1046 = vcombine.low %v908, %v972
      %v1048 = vunpack.c.l.s4 1983009808
      %v1049 = vunpack.c.0.s8 %v1048
      %v1050 = vlaneseq
      %v1051 = vshrl.u32 %v1050, 7
      %v1052 = vsub.s32 %v1049, %v1051
      %v1053 = vrot.slane %v1046, %v1052
      %v1054 = vcombine.low %v940, %v1004
      %v1056 = vunpack.c.l.s4 1983009808
      %v1057 = vunpack.c.0.s8 %v1056
      %v1058 = vlaneseq
      %v1059 = vshrl.u32 %v1058, 7
      %v1060 = vsub.s32 %v1057, %v1059
      %v1061 = vrot.slane %v1054, %v1060
      %v1062 = vcombine.low %v1053, %v1061
      %v1063 = vcombine.high %v1053, %v1061
      %v1065 = vunpack.c.l.s4 1934713408
      %v1066 = vunpack.c.0.s8 %v1065
      %v1067 = vlaneseq
      %v1068 = vshrl.u32 %v1067, 7
      %v1069 = vsub.s32 %v1066, %v1068
      %v1070 = vrot.slane %v1062, %v1069
      %v1072 = vunpack.c.l.s4 1934713408
      %v1073 = vunpack.c.0.s8 %v1072
      %v1074 = vlaneseq
      %v1075 = vshrl.u32 %v1074, 7
      %v1076 = vsub.s32 %v1073, %v1075
      %v1077 = vrot.slane %v1063, %v1076
      %v1078 = vcombine.high %v1070, 0
      %v1079 = vcombine.high %v1077, 0
      %v1082 = vpack.i.b16 %v1070, %v1036
      %v1084 = vshrl.u32 %v1036, 16
      %v1085 = vshrl.u32 %v1070, 16
      %v1086 = vpack.i.b16 %v1085, %v1084
      %v1090 = vpack.i.b16 %v1078, %v1044
      %v1092 = vshrl.u32 %v1044, 16
      %v1093 = vshrl.u32 %v1078, 16
      %v1094 = vpack.i.b16 %v1093, %v1092
      %v1098 = vpack.i.b16 %v1077, %v1043
      %v1100 = vshrl.u32 %v1043, 16
      %v1101 = vshrl.u32 %v1077, 16
      %v1102 = vpack.i.b16 %v1101, %v1100
      %v1106 = vpack.i.b16 %v1079, %v1045
      %v1108 = vshrl.u32 %v1045, 16
      %v1109 = vshrl.u32 %v1079, 16
      %v1110 = vpack.i.b16 %v1109, %v1108
      %1112 = vxpose.xlu0.c.b16.start [1/8] %v1082, 128
      %1113 = vxpose.xlu0.c.b16.cont [2/8] 0, 128
      %1114 = vxpose.xlu0.c.b16.cont [3/8] 0, 128
      %1115 = vxpose.xlu0.c.b16.cont [4/8] 0, 128
      %1116 = vxpose.xlu0.c.b16.cont [5/8] 0, 128
      %1117 = vxpose.xlu0.c.b16.cont [6/8] 0, 128
      %1118 = vxpose.xlu0.c.b16.cont [7/8] 0, 128
      %1119 = vxpose.xlu0.c.b16.end [8/8] 0, 128
      %v1120 = vpop.trf.xlu0
      %v1121 = vpop.trf.xlu0
      %v1122 = vpop.trf.xlu0
      %v1123 = vpop.trf.xlu0
      %v1124 = vpop.trf.xlu0
      %v1125 = vpop.trf.xlu0
      %v1126 = vpop.trf.xlu0
      %v1127 = vpop.trf.xlu0
      %1128 = vxpose.xlu0.c.b16.start [1/8] %v1086, 128
      %1129 = vxpose.xlu0.c.b16.cont [2/8] 0, 128
      %1130 = vxpose.xlu0.c.b16.cont [3/8] 0, 128
      %1131 = vxpose.xlu0.c.b16.cont [4/8] 0, 128
      %1132 = vxpose.xlu0.c.b16.cont [5/8] 0, 128
      %1133 = vxpose.xlu0.c.b16.cont [6/8] 0, 128
      %1134 = vxpose.xlu0.c.b16.cont [7/8] 0, 128
      %1135 = vxpose.xlu0.c.b16.end [8/8] 0, 128
      %v1136 = vpop.trf.xlu0
      %v1137 = vpop.trf.xlu0
      %v1138 = vpop.trf.xlu0
      %v1139 = vpop.trf.xlu0
      %v1140 = vpop.trf.xlu0
      %v1141 = vpop.trf.xlu0
      %v1142 = vpop.trf.xlu0
      %v1143 = vpop.trf.xlu0
      %1144 = vxpose.xlu0.c.b16.start [1/8] %v1090, 128
      %1145 = vxpose.xlu0.c.b16.cont [2/8] 0, 128
      %1146 = vxpose.xlu0.c.b16.cont [3/8] 0, 128
      %1147 = vxpose.xlu0.c.b16.cont [4/8] 0, 128
      %1148 = vxpose.xlu0.c.b16.cont [5/8] 0, 128
      %1149 = vxpose.xlu0.c.b16.cont [6/8] 0, 128
      %1150 = vxpose.xlu0.c.b16.cont [7/8] 0, 128
      %1151 = vxpose.xlu0.c.b16.end [8/8] 0, 128
      %v1152 = vpop.trf.xlu0
      %v1153 = vpop.trf.xlu0
      %v1154 = vpop.trf.xlu0
      %v1155 = vpop.trf.xlu0
      %v1156 = vpop.trf.xlu0
      %v1157 = vpop.trf.xlu0
      %v1158 = vpop.trf.xlu0
      %v1159 = vpop.trf.xlu0
      %1160 = vxpose.xlu0.c.b16.start [1/8] %v1094, 128
      %1161 = vxpose.xlu0.c.b16.cont [2/8] 0, 128
      %1162 = vxpose.xlu0.c.b16.cont [3/8] 0, 128
      %1163 = vxpose.xlu0.c.b16.cont [4/8] 0, 128
      %1164 = vxpose.xlu0.c.b16.cont [5/8] 0, 128
      %1165 = vxpose.xlu0.c.b16.cont [6/8] 0, 128
      %1166 = vxpose.xlu0.c.b16.cont [7/8] 0, 128
      %1167 = vxpose.xlu0.c.b16.end [8/8] 0, 128
      %v1168 = vpop.trf.xlu0
      %v1169 = vpop.trf.xlu0
      %v1170 = vpop.trf.xlu0
      %v1171 = vpop.trf.xlu0
      %v1172 = vpop.trf.xlu0
      %v1173 = vpop.trf.xlu0
      %v1174 = vpop.trf.xlu0
      %v1175 = vpop.trf.xlu0
      %1176 = vxpose.xlu0.c.b16.start [1/8] %v1098, 128
      %1177 = vxpose.xlu0.c.b16.cont [2/8] 0, 128
      %1178 = vxpose.xlu0.c.b16.cont [3/8] 0, 128
      %1179 = vxpose.xlu0.c.b16.cont [4/8] 0, 128
      %1180 = vxpose.xlu0.c.b16.cont [5/8] 0, 128
      %1181 = vxpose.xlu0.c.b16.cont [6/8] 0, 128
      %1182 = vxpose.xlu0.c.b16.cont [7/8] 0, 128
      %1183 = vxpose.xlu0.c.b16.end [8/8] 0, 128
      %v1184 = vpop.trf.xlu0
      %v1185 = vpop.trf.xlu0
      %v1186 = vpop.trf.xlu0
      %v1187 = vpop.trf.xlu0
      %v1188 = vpop.trf.xlu0
      %v1189 = vpop.trf.xlu0
      %v1190 = vpop.trf.xlu0
      %v1191 = vpop.trf.xlu0
      %1192 = vxpose.xlu0.c.b16.start [1/8] %v1102, 128
      %1193 = vxpose.xlu0.c.b16.cont [2/8] 0, 128
      %1194 = vxpose.xlu0.c.b16.cont [3/8] 0, 128
      %1195 = vxpose.xlu0.c.b16.cont [4/8] 0, 128
      %1196 = vxpose.xlu0.c.b16.cont [5/8] 0, 128
      %1197 = vxpose.xlu0.c.b16.cont [6/8] 0, 128
      %1198 = vxpose.xlu0.c.b16.cont [7/8] 0, 128
      %1199 = vxpose.xlu0.c.b16.end [8/8] 0, 128
      %v1200 = vpop.trf.xlu0
      %v1201 = vpop.trf.xlu0
      %v1202 = vpop.trf.xlu0
      %v1203 = vpop.trf.xlu0
      %v1204 = vpop.trf.xlu0
      %v1205 = vpop.trf.xlu0
      %v1206 = vpop.trf.xlu0
      %v1207 = vpop.trf.xlu0
      %1208 = vxpose.xlu0.c.b16.start [1/8] %v1106, 128
      %1209 = vxpose.xlu0.c.b16.cont [2/8] 0, 128
      %1210 = vxpose.xlu0.c.b16.cont [3/8] 0, 128
      %1211 = vxpose.xlu0.c.b16.cont [4/8] 0, 128
      %1212 = vxpose.xlu0.c.b16.cont [5/8] 0, 128
      %1213 = vxpose.xlu0.c.b16.cont [6/8] 0, 128
      %1214 = vxpose.xlu0.c.b16.cont [7/8] 0, 128
      %1215 = vxpose.xlu0.c.b16.end [8/8] 0, 128
      %v1216 = vpop.trf.xlu0
      %v1217 = vpop.trf.xlu0
      %v1218 = vpop.trf.xlu0
      %v1219 = vpop.trf.xlu0
      %v1220 = vpop.trf.xlu0
      %v1221 = vpop.trf.xlu0
      %v1222 = vpop.trf.xlu0
      %v1223 = vpop.trf.xlu0
      %1224 = vxpose.xlu0.c.b16.start [1/8] %v1110, 128
      %1225 = vxpose.xlu0.c.b16.cont [2/8] 0, 128
      %1226 = vxpose.xlu0.c.b16.cont [3/8] 0, 128
      %1227 = vxpose.xlu0.c.b16.cont [4/8] 0, 128
      %1228 = vxpose.xlu0.c.b16.cont [5/8] 0, 128
      %1229 = vxpose.xlu0.c.b16.cont [6/8] 0, 128
      %1230 = vxpose.xlu0.c.b16.cont [7/8] 0, 128
      %1231 = vxpose.xlu0.c.b16.end [8/8] 0, 128
      %v1232 = vpop.trf.xlu0
      %v1233 = vpop.trf.xlu0
      %v1234 = vpop.trf.xlu0
      %v1235 = vpop.trf.xlu0
      %v1236 = vpop.trf.xlu0
      %v1237 = vpop.trf.xlu0
      %v1238 = vpop.trf.xlu0
      %v1239 = vpop.trf.xlu0
      %v1240 = vcombine.low %v1120, %v1184
      %v1242 = vunpack.c.l.s4 1983009808
      %v1243 = vunpack.c.0.s8 %v1242
      %v1244 = vlaneseq
      %v1245 = vshrl.u32 %v1244, 7
      %v1246 = vsub.s32 %v1243, %v1245
      %v1247 = vrot.slane %v1240, %v1246
      %v1248 = vcombine.low %v1152, %v1216
      %v1250 = vunpack.c.l.s4 1983009808
      %v1251 = vunpack.c.0.s8 %v1250
      %v1252 = vlaneseq
      %v1253 = vshrl.u32 %v1252, 7
      %v1254 = vsub.s32 %v1251, %v1253
      %v1255 = vrot.slane %v1248, %v1254
      %v1256 = vcombine.low %v1247, %v1255
      %v1258 = vunpack.c.l.s4 1934713408
      %v1259 = vunpack.c.0.s8 %v1258
      %v1260 = vlaneseq
      %v1261 = vshrl.u32 %v1260, 7
      %v1262 = vsub.s32 %v1259, %v1261
      %v1263 = vrot.slane %v1256, %v1262
      %v1264 = vcombine.high %v1263, 0
      %v1265 = vcombine.low %v1136, %v1200
      %v1267 = vunpack.c.l.s4 1983009808
      %v1268 = vunpack.c.0.s8 %v1267
      %v1269 = vlaneseq
      %v1270 = vshrl.u32 %v1269, 7
      %v1271 = vsub.s32 %v1268, %v1270
      %v1272 = vrot.slane %v1265, %v1271
      %v1273 = vcombine.low %v1168, %v1232
      %v1275 = vunpack.c.l.s4 1983009808
      %v1276 = vunpack.c.0.s8 %v1275
      %v1277 = vlaneseq
      %v1278 = vshrl.u32 %v1277, 7
      %v1279 = vsub.s32 %v1276, %v1278
      %v1280 = vrot.slane %v1273, %v1279
      %v1281 = vcombine.low %v1272, %v1280
      %v1283 = vunpack.c.l.s4 1934713408
      %v1284 = vunpack.c.0.s8 %v1283
      %v1285 = vlaneseq
      %v1286 = vshrl.u32 %v1285, 7
      %v1287 = vsub.s32 %v1284, %v1286
      %v1288 = vrot.slane %v1281, %v1287
      %v1289 = vcombine.high %v1288, 0
      %v1292 = vpack.i.b16 %v1288, %v1263
      %v1293 = vshrl.u32 %v1263, 16
      %v1294 = vshrl.u32 %v1288, 16
      %v1295 = vpack.i.b16 %v1294, %v1293
      %v1298 = vpack.i.b16 %v1289, %v1264
      %v1299 = vshrl.u32 %v1264, 16
      %v1300 = vshrl.u32 %v1289, 16
      %v1301 = vpack.i.b16 %v1300, %v1299
      %vm1302 = vcmask 64512
      %v1304 = vsel %vm1302, %v874, 0
      %vm1306 = vcmask 1043456
      %v1308 = vsel %vm1306, %v1292, 0
      %1310 = vmatprep.subr.bf16.mxu0 0
      %1311 = vmatpush1.bf16.msra.mxu0 0
      %1312 = vmatprep.subr.bf16.mxu0 0
      %1313 = vmatpush1.bf16.msra.mxu0 0
      %1314 = vmatprep.subr.bf16.mxu0 0
      %1315 = vmatpush1.bf16.msra.mxu0 0
      %1316 = vmatprep.subr.bf16.mxu0 0
      %1317 = vmatpush1.bf16.msra.mxu0 0
      %1318 = vmatprep.subr.bf16.mxu0 0
      %1319 = vmatpush1.bf16.msra.mxu0 0
      %1320 = vmatprep.subr.bf16.mxu0 0
      %1321 = vmatpush1.bf16.msra.mxu0 0
      %1322 = vmatprep.subr.bf16.mxu0 0
      %1323 = vmatpush1.bf16.msra.mxu0 0
      %1324 = vmatprep.subr.bf16.mxu0 0
      %1325 = vmatpush1.bf16.msra.mxu0 %v1308
      %1326 = vmatprep.subr.bf16.mxu0 0
      %1327 = vmatpush2.bf16.msra.mxu0 0
      %1328 = vmatprep.subr.bf16.mxu0 0
      %1329 = vmatpush2.bf16.msra.mxu0 0
      %1330 = vmatprep.subr.bf16.mxu0 0
      %1331 = vmatpush2.bf16.msra.mxu0 0
      %1332 = vmatprep.subr.bf16.mxu0 0
      %1333 = vmatpush2.bf16.msra.mxu0 0
      %1334 = vmatprep.subr.bf16.mxu0 0
      %1335 = vmatpush2.bf16.msra.mxu0 0
      %1336 = vmatprep.subr.bf16.mxu0 0
      %1337 = vmatpush2.bf16.msra.mxu0 0
      %1338 = vmatprep.subr.bf16.mxu0 0
      %1339 = vmatpush2.bf16.msra.mxu0 0
      %1340 = vmatprep.subr.bf16.mxu0 0
      %1341 = vmatpush2.bf16.msra.mxu0 0
      %1342 = vmatprep.mubr.bf16.mxu0 0
      %1343 = vmatmul.mubr.bf16.gmra.mxu0 %v1304
      %v1344 = vpop.f32.mrf.mxu0
      %v1345 = vadd.f32 %v430, %v1344
      %v1346 = vpop.f32.mrf.mxu0
      %v1347 = vpop.f32.mrf.mxu0
      %v1348 = vpop.f32.mrf.mxu0
      %1349 = vdwg.mxu0
      %v1351 = vsel %vm1302, %v877, 0
      %v1354 = vsel %vm1306, %v1295, 0
      %1356 = vmatprep.subr.bf16.mxu0 0
      %1357 = vmatpush1.bf16.msra.mxu0 0
      %1358 = vmatprep.subr.bf16.mxu0 0
      %1359 = vmatpush1.bf16.msra.mxu0 0
      %1360 = vmatprep.subr.bf16.mxu0 0
      %1361 = vmatpush1.bf16.msra.mxu0 0
      %1362 = vmatprep.subr.bf16.mxu0 0
      %1363 = vmatpush1.bf16.msra.mxu0 0
      %1364 = vmatprep.subr.bf16.mxu0 0
      %1365 = vmatpush1.bf16.msra.mxu0 0
      %1366 = vmatprep.subr.bf16.mxu0 0
      %1367 = vmatpush1.bf16.msra.mxu0 0
      %1368 = vmatprep.subr.bf16.mxu0 0
      %1369 = vmatpush1.bf16.msra.mxu0 0
      %1370 = vmatprep.subr.bf16.mxu0 0
      %1371 = vmatpush1.bf16.msra.mxu0 %v1354
      %1372 = vmatprep.subr.bf16.mxu0 0
      %1373 = vmatpush2.bf16.msra.mxu0 0
      %1374 = vmatprep.subr.bf16.mxu0 0
      %1375 = vmatpush2.bf16.msra.mxu0 0
      %1376 = vmatprep.subr.bf16.mxu0 0
      %1377 = vmatpush2.bf16.msra.mxu0 0
      %1378 = vmatprep.subr.bf16.mxu0 0
      %1379 = vmatpush2.bf16.msra.mxu0 0
      %1380 = vmatprep.subr.bf16.mxu0 0
      %1381 = vmatpush2.bf16.msra.mxu0 0
      %1382 = vmatprep.subr.bf16.mxu0 0
      %1383 = vmatpush2.bf16.msra.mxu0 0
      %1384 = vmatprep.subr.bf16.mxu0 0
      %1385 = vmatpush2.bf16.msra.mxu0 0
      %1386 = vmatprep.subr.bf16.mxu0 0
      %1387 = vmatpush2.bf16.msra.mxu0 0
      %1388 = vmatprep.mubr.bf16.mxu0 0
      %1389 = vmatmul.mubr.bf16.gmra.mxu0 %v1351
      %v1390 = vpop.f32.mrf.mxu0
      %v1391 = vadd.f32 %v430, %v1390
      %v1392 = vpop.f32.mrf.mxu0
      %v1393 = vpop.f32.mrf.mxu0
      %v1394 = vpop.f32.mrf.mxu0
      %1395 = vdwg.mxu0
      %v1397 = vsel %vm1302, %v880, 0
      %v1400 = vsel %vm1306, %v1298, 0
      %1402 = vmatprep.subr.bf16.mxu0 0
      %1403 = vmatpush1.bf16.msra.mxu0 0
      %1404 = vmatprep.subr.bf16.mxu0 0
      %1405 = vmatpush1.bf16.msra.mxu0 0
      %1406 = vmatprep.subr.bf16.mxu0 0
      %1407 = vmatpush1.bf16.msra.mxu0 0
      %1408 = vmatprep.subr.bf16.mxu0 0
      %1409 = vmatpush1.bf16.msra.mxu0 0
      %1410 = vmatprep.subr.bf16.mxu0 0
      %1411 = vmatpush1.bf16.msra.mxu0 0
      %1412 = vmatprep.subr.bf16.mxu0 0
      %1413 = vmatpush1.bf16.msra.mxu0 0
      %1414 = vmatprep.subr.bf16.mxu0 0
      %1415 = vmatpush1.bf16.msra.mxu0 0
      %1416 = vmatprep.subr.bf16.mxu0 0
      %1417 = vmatpush1.bf16.msra.mxu0 %v1400
      %1418 = vmatprep.subr.bf16.mxu0 0
      %1419 = vmatpush2.bf16.msra.mxu0 0
      %1420 = vmatprep.subr.bf16.mxu0 0
      %1421 = vmatpush2.bf16.msra.mxu0 0
      %1422 = vmatprep.subr.bf16.mxu0 0
      %1423 = vmatpush2.bf16.msra.mxu0 0
      %1424 = vmatprep.subr.bf16.mxu0 0
      %1425 = vmatpush2.bf16.msra.mxu0 0
      %1426 = vmatprep.subr.bf16.mxu0 0
      %1427 = vmatpush2.bf16.msra.mxu0 0
      %1428 = vmatprep.subr.bf16.mxu0 0
      %1429 = vmatpush2.bf16.msra.mxu0 0
      %1430 = vmatprep.subr.bf16.mxu0 0
      %1431 = vmatpush2.bf16.msra.mxu0 0
      %1432 = vmatprep.subr.bf16.mxu0 0
      %1433 = vmatpush2.bf16.msra.mxu0 0
      %1434 = vmatprep.mubr.bf16.mxu0 0
      %1435 = vmatmul.mubr.bf16.gmra.mxu0 %v1397
      %v1436 = vpop.f32.mrf.mxu0
      %v1437 = vadd.f32 %v430, %v1436
      %v1438 = vpop.f32.mrf.mxu0
      %v1439 = vpop.f32.mrf.mxu0
      %v1440 = vpop.f32.mrf.mxu0
      %1441 = vdwg.mxu0
      %v1443 = vsel %vm1302, %v883, 0
      %v1446 = vsel %vm1306, %v1301, 0
      %1448 = vmatprep.subr.bf16.mxu0 0
      %1449 = vmatpush1.bf16.msra.mxu0 0
      %1450 = vmatprep.subr.bf16.mxu0 0
      %1451 = vmatpush1.bf16.msra.mxu0 0
      %1452 = vmatprep.subr.bf16.mxu0 0
      %1453 = vmatpush1.bf16.msra.mxu0 0
      %1454 = vmatprep.subr.bf16.mxu0 0
      %1455 = vmatpush1.bf16.msra.mxu0 0
      %1456 = vmatprep.subr.bf16.mxu0 0
      %1457 = vmatpush1.bf16.msra.mxu0 0
      %1458 = vmatprep.subr.bf16.mxu0 0
      %1459 = vmatpush1.bf16.msra.mxu0 0
      %1460 = vmatprep.subr.bf16.mxu0 0
      %1461 = vmatpush1.bf16.msra.mxu0 0
      %1462 = vmatprep.subr.bf16.mxu0 0
      %1463 = vmatpush1.bf16.msra.mxu0 %v1446
      %1464 = vmatprep.subr.bf16.mxu0 0
      %1465 = vmatpush2.bf16.msra.mxu0 0
      %1466 = vmatprep.subr.bf16.mxu0 0
      %1467 = vmatpush2.bf16.msra.mxu0 0
      %1468 = vmatprep.subr.bf16.mxu0 0
      %1469 = vmatpush2.bf16.msra.mxu0 0
      %1470 = vmatprep.subr.bf16.mxu0 0
      %1471 = vmatpush2.bf16.msra.mxu0 0
      %1472 = vmatprep.subr.bf16.mxu0 0
      %1473 = vmatpush2.bf16.msra.mxu0 0
      %1474 = vmatprep.subr.bf16.mxu0 0
      %1475 = vmatpush2.bf16.msra.mxu0 0
      %1476 = vmatprep.subr.bf16.mxu0 0
      %1477 = vmatpush2.bf16.msra.mxu0 0
      %1478 = vmatprep.subr.bf16.mxu0 0
      %1479 = vmatpush2.bf16.msra.mxu0 0
      %1480 = vmatprep.mubr.bf16.mxu0 0
      %1481 = vmatmul.mubr.bf16.gmra.mxu0 %v1443
      %v1482 = vpop.f32.mrf.mxu0
      %v1483 = vadd.f32 %v430, %v1482
      %v1484 = vpop.f32.mrf.mxu0
      %v1485 = vpop.f32.mrf.mxu0
      %v1486 = vpop.f32.mrf.mxu0
      %1487 = vdwg.mxu0
      %v1488 = vsel %vm1302, %v1345, -inf
      %1489 = vmax.xlane.f32.xlu0 %v1488
      %v1490 = vpop.xlane.xlu0 %1489
      %v1491 = vsel %vm1302, %v1391, -inf
      %1492 = vmax.xlane.f32.xlu0 %v1491
      %v1493 = vpop.xlane.xlu0 %1492
      %v1494 = vsel %vm1302, %v1437, -inf
      %1495 = vmax.xlane.f32.xlu0 %v1494
      %v1496 = vpop.xlane.xlu0 %1495
      %v1497 = vsel %vm1302, %v1483, -inf
      %1498 = vmax.xlane.f32.xlu0 %v1497
      %v1499 = vpop.xlane.xlu0 %1498
      %v1500 = vsub.f32 %v1345, %v1490
      %v1501 = vsub.f32 %v1391, %v1493
      %v1502 = vsub.f32 %v1437, %v1496
      %v1503 = vsub.f32 %v1483, %v1499
      %v1504 = vmul.f32 %v1500, 1.442695
      %v1505 = vpow.pop %v1504
      %v1506 = vmul.f32 %v1501, 1.442695
      %v1507 = vpow.pop %v1506
      %v1508 = vmul.f32 %v1502, 1.442695
      %v1509 = vpow.pop %v1508
      %v1510 = vmul.f32 %v1503, 1.442695
      %v1511 = vpow.pop %v1510
      %v1512 = vsel %vm1302, %v1505, 0.0
      %1513 = vadd.xlane.f32.xlu0 %v1512
      %v1514 = vpop.xlane.xlu0 %1513
      %v1515 = vsel %vm1302, %v1507, 0.0
      %1516 = vadd.xlane.f32.xlu0 %v1515
      %v1517 = vpop.xlane.xlu0 %1516
      %v1518 = vsel %vm1302, %v1509, 0.0
      %1519 = vadd.xlane.f32.xlu0 %v1518
      %v1520 = vpop.xlane.xlu0 %1519
      %v1521 = vsel %vm1302, %v1511, 0.0
      %1522 = vadd.xlane.f32.xlu0 %v1521
      %v1523 = vpop.xlane.xlu0 %1522
      %v1524 = vrcp.pop %v1514
      %v1525 = vmul.f32 %v1505, %v1524
      %v1526 = vrcp.pop %v1517
      %v1527 = vmul.f32 %v1507, %v1526
      %v1528 = vrcp.pop %v1520
      %v1529 = vmul.f32 %v1509, %v1528
      %v1530 = vrcp.pop %v1523
      %v1531 = vmul.f32 %v1511, %v1530
      %v1532 = vpack.c.bf16 %v1525, %v1525
      %v1533 = vpack.c.bf16 %v1527, %v1527
      %v1534 = vpack.c.bf16 %v1529, %v1529
      %v1535 = vpack.c.bf16 %v1531, %v1531
      %v1536 = vpack.c.bf16 %v778, %v778
      %v1537 = vpack.c.bf16 %v802, %v802
      %v1538 = vpack.c.bf16 %v785, %v785
      %v1539 = vpack.c.bf16 %v803, %v803
      %v1540 = vpack.c.bf16 %v794, %v794
      %v1541 = vpack.c.bf16 %v804, %v804
      %v1542 = vpack.c.bf16 %v801, %v801
      %v1543 = vpack.c.bf16 %v805, %v805
      %1544 = vxpose.xlu0.c.b16.start [1/8] %v1536, 128
      %1545 = vxpose.xlu0.c.b16.cont [2/8] 0, 128
      %1546 = vxpose.xlu0.c.b16.cont [3/8] 0, 128
      %1547 = vxpose.xlu0.c.b16.cont [4/8] 0, 128
      %1548 = vxpose.xlu0.c.b16.cont [5/8] 0, 128
      %1549 = vxpose.xlu0.c.b16.cont [6/8] 0, 128
      %1550 = vxpose.xlu0.c.b16.cont [7/8] 0, 128
      %1551 = vxpose.xlu0.c.b16.end [8/8] 0, 128
      %v1552 = vpop.trf.xlu0
      %v1553 = vpop.trf.xlu0
      %v1554 = vpop.trf.xlu0
      %v1555 = vpop.trf.xlu0
      %v1556 = vpop.trf.xlu0
      %v1557 = vpop.trf.xlu0
      %v1558 = vpop.trf.xlu0
      %v1559 = vpop.trf.xlu0
      %1560 = vxpose.xlu0.c.b16.start [1/8] %v1537, 128
      %1561 = vxpose.xlu0.c.b16.cont [2/8] 0, 128
      %1562 = vxpose.xlu0.c.b16.cont [3/8] 0, 128
      %1563 = vxpose.xlu0.c.b16.cont [4/8] 0, 128
      %1564 = vxpose.xlu0.c.b16.cont [5/8] 0, 128
      %1565 = vxpose.xlu0.c.b16.cont [6/8] 0, 128
      %1566 = vxpose.xlu0.c.b16.cont [7/8] 0, 128
      %1567 = vxpose.xlu0.c.b16.end [8/8] 0, 128
      %v1568 = vpop.trf.xlu0
      %v1569 = vpop.trf.xlu0
      %v1570 = vpop.trf.xlu0
      %v1571 = vpop.trf.xlu0
      %v1572 = vpop.trf.xlu0
      %v1573 = vpop.trf.xlu0
      %v1574 = vpop.trf.xlu0
      %v1575 = vpop.trf.xlu0
      %1576 = vxpose.xlu0.c.b16.start [1/8] %v1538, 128
      %1577 = vxpose.xlu0.c.b16.cont [2/8] 0, 128
      %1578 = vxpose.xlu0.c.b16.cont [3/8] 0, 128
      %1579 = vxpose.xlu0.c.b16.cont [4/8] 0, 128
      %1580 = vxpose.xlu0.c.b16.cont [5/8] 0, 128
      %1581 = vxpose.xlu0.c.b16.cont [6/8] 0, 128
      %1582 = vxpose.xlu0.c.b16.cont [7/8] 0, 128
      %1583 = vxpose.xlu0.c.b16.end [8/8] 0, 128
      %v1584 = vpop.trf.xlu0
      %v1585 = vpop.trf.xlu0
      %v1586 = vpop.trf.xlu0
      %v1587 = vpop.trf.xlu0
      %v1588 = vpop.trf.xlu0
      %v1589 = vpop.trf.xlu0
      %v1590 = vpop.trf.xlu0
      %v1591 = vpop.trf.xlu0
      %1592 = vxpose.xlu0.c.b16.start [1/8] %v1539, 128
      %1593 = vxpose.xlu0.c.b16.cont [2/8] 0, 128
      %1594 = vxpose.xlu0.c.b16.cont [3/8] 0, 128
      %1595 = vxpose.xlu0.c.b16.cont [4/8] 0, 128
      %1596 = vxpose.xlu0.c.b16.cont [5/8] 0, 128
      %1597 = vxpose.xlu0.c.b16.cont [6/8] 0, 128
      %1598 = vxpose.xlu0.c.b16.cont [7/8] 0, 128
      %1599 = vxpose.xlu0.c.b16.end [8/8] 0, 128
      %v1600 = vpop.trf.xlu0
      %v1601 = vpop.trf.xlu0
      %v1602 = vpop.trf.xlu0
      %v1603 = vpop.trf.xlu0
      %v1604 = vpop.trf.xlu0
      %v1605 = vpop.trf.xlu0
      %v1606 = vpop.trf.xlu0
      %v1607 = vpop.trf.xlu0
      %1608 = vxpose.xlu0.c.b16.start [1/8] %v1540, 128
      %1609 = vxpose.xlu0.c.b16.cont [2/8] 0, 128
      %1610 = vxpose.xlu0.c.b16.cont [3/8] 0, 128
      %1611 = vxpose.xlu0.c.b16.cont [4/8] 0, 128
      %1612 = vxpose.xlu0.c.b16.cont [5/8] 0, 128
      %1613 = vxpose.xlu0.c.b16.cont [6/8] 0, 128
      %1614 = vxpose.xlu0.c.b16.cont [7/8] 0, 128
      %1615 = vxpose.xlu0.c.b16.end [8/8] 0, 128
      %v1616 = vpop.trf.xlu0
      %v1617 = vpop.trf.xlu0
      %v1618 = vpop.trf.xlu0
      %v1619 = vpop.trf.xlu0
      %v1620 = vpop.trf.xlu0
      %v1621 = vpop.trf.xlu0
      %v1622 = vpop.trf.xlu0
      %v1623 = vpop.trf.xlu0
      %1624 = vxpose.xlu0.c.b16.start [1/8] %v1541, 128
      %1625 = vxpose.xlu0.c.b16.cont [2/8] 0, 128
      %1626 = vxpose.xlu0.c.b16.cont [3/8] 0, 128
      %1627 = vxpose.xlu0.c.b16.cont [4/8] 0, 128
      %1628 = vxpose.xlu0.c.b16.cont [5/8] 0, 128
      %1629 = vxpose.xlu0.c.b16.cont [6/8] 0, 128
      %1630 = vxpose.xlu0.c.b16.cont [7/8] 0, 128
      %1631 = vxpose.xlu0.c.b16.end [8/8] 0, 128
      %v1632 = vpop.trf.xlu0
      %v1633 = vpop.trf.xlu0
      %v1634 = vpop.trf.xlu0
      %v1635 = vpop.trf.xlu0
      %v1636 = vpop.trf.xlu0
      %v1637 = vpop.trf.xlu0
      %v1638 = vpop.trf.xlu0
      %v1639 = vpop.trf.xlu0
      %1640 = vxpose.xlu0.c.b16.start [1/8] %v1542, 128
      %1641 = vxpose.xlu0.c.b16.cont [2/8] 0, 128
      %1642 = vxpose.xlu0.c.b16.cont [3/8] 0, 128
      %1643 = vxpose.xlu0.c.b16.cont [4/8] 0, 128
      %1644 = vxpose.xlu0.c.b16.cont [5/8] 0, 128
      %1645 = vxpose.xlu0.c.b16.cont [6/8] 0, 128
      %1646 = vxpose.xlu0.c.b16.cont [7/8] 0, 128
      %1647 = vxpose.xlu0.c.b16.end [8/8] 0, 128
      %v1648 = vpop.trf.xlu0
      %v1649 = vpop.trf.xlu0
      %v1650 = vpop.trf.xlu0
      %v1651 = vpop.trf.xlu0
      %v1652 = vpop.trf.xlu0
      %v1653 = vpop.trf.xlu0
      %v1654 = vpop.trf.xlu0
      %v1655 = vpop.trf.xlu0
      %1656 = vxpose.xlu0.c.b16.start [1/8] %v1543, 128
      %1657 = vxpose.xlu0.c.b16.cont [2/8] 0, 128
      %1658 = vxpose.xlu0.c.b16.cont [3/8] 0, 128
      %1659 = vxpose.xlu0.c.b16.cont [4/8] 0, 128
      %1660 = vxpose.xlu0.c.b16.cont [5/8] 0, 128
      %1661 = vxpose.xlu0.c.b16.cont [6/8] 0, 128
      %1662 = vxpose.xlu0.c.b16.cont [7/8] 0, 128
      %1663 = vxpose.xlu0.c.b16.end [8/8] 0, 128
      %v1664 = vpop.trf.xlu0
      %v1665 = vpop.trf.xlu0
      %v1666 = vpop.trf.xlu0
      %v1667 = vpop.trf.xlu0
      %v1668 = vpop.trf.xlu0
      %v1669 = vpop.trf.xlu0
      %v1670 = vpop.trf.xlu0
      %v1671 = vpop.trf.xlu0
      %v1672 = vcombine.low %v1552, %v1616
      %v1674 = vunpack.c.l.s4 1983009808
      %v1675 = vunpack.c.0.s8 %v1674
      %v1676 = vlaneseq
      %v1677 = vshrl.u32 %v1676, 7
      %v1678 = vsub.s32 %v1675, %v1677
      %v1679 = vrot.slane %v1672, %v1678
      %v1680 = vcombine.low %v1584, %v1648
      %v1682 = vunpack.c.l.s4 1983009808
      %v1683 = vunpack.c.0.s8 %v1682
      %v1684 = vlaneseq
      %v1685 = vshrl.u32 %v1684, 7
      %v1686 = vsub.s32 %v1683, %v1685
      %v1687 = vrot.slane %v1680, %v1686
      %v1688 = vcombine.low %v1679, %v1687
      %v1689 = vcombine.high %v1679, %v1687
      %v1691 = vunpack.c.l.s4 1934713408
      %v1692 = vunpack.c.0.s8 %v1691
      %v1693 = vlaneseq
      %v1694 = vshrl.u32 %v1693, 7
      %v1695 = vsub.s32 %v1692, %v1694
      %v1696 = vrot.slane %v1688, %v1695
      %v1698 = vunpack.c.l.s4 1934713408
      %v1699 = vunpack.c.0.s8 %v1698
      %v1700 = vlaneseq
      %v1701 = vshrl.u32 %v1700, 7
      %v1702 = vsub.s32 %v1699, %v1701
      %v1703 = vrot.slane %v1689, %v1702
      %v1704 = vcombine.high %v1696, 0
      %v1705 = vcombine.high %v1703, 0
      %v1706 = vcombine.low %v1568, %v1632
      %v1708 = vunpack.c.l.s4 1983009808
      %v1709 = vunpack.c.0.s8 %v1708
      %v1710 = vlaneseq
      %v1711 = vshrl.u32 %v1710, 7
      %v1712 = vsub.s32 %v1709, %v1711
      %v1713 = vrot.slane %v1706, %v1712
      %v1714 = vcombine.low %v1600, %v1664
      %v1716 = vunpack.c.l.s4 1983009808
      %v1717 = vunpack.c.0.s8 %v1716
      %v1718 = vlaneseq
      %v1719 = vshrl.u32 %v1718, 7
      %v1720 = vsub.s32 %v1717, %v1719
      %v1721 = vrot.slane %v1714, %v1720
      %v1722 = vcombine.low %v1713, %v1721
      %v1723 = vcombine.high %v1713, %v1721
      %v1725 = vunpack.c.l.s4 1934713408
      %v1726 = vunpack.c.0.s8 %v1725
      %v1727 = vlaneseq
      %v1728 = vshrl.u32 %v1727, 7
      %v1729 = vsub.s32 %v1726, %v1728
      %v1730 = vrot.slane %v1722, %v1729
      %v1732 = vunpack.c.l.s4 1934713408
      %v1733 = vunpack.c.0.s8 %v1732
      %v1734 = vlaneseq
      %v1735 = vshrl.u32 %v1734, 7
      %v1736 = vsub.s32 %v1733, %v1735
      %v1737 = vrot.slane %v1723, %v1736
      %v1738 = vcombine.high %v1730, 0
      %v1739 = vcombine.high %v1737, 0
      %v1742 = vpack.i.b16 %v1730, %v1696
      %v1744 = vshrl.u32 %v1696, 16
      %v1745 = vshrl.u32 %v1730, 16
      %v1746 = vpack.i.b16 %v1745, %v1744
      %v1750 = vpack.i.b16 %v1738, %v1704
      %v1752 = vshrl.u32 %v1704, 16
      %v1753 = vshrl.u32 %v1738, 16
      %v1754 = vpack.i.b16 %v1753, %v1752
      %v1758 = vpack.i.b16 %v1737, %v1703
      %v1760 = vshrl.u32 %v1703, 16
      %v1761 = vshrl.u32 %v1737, 16
      %v1762 = vpack.i.b16 %v1761, %v1760
      %v1766 = vpack.i.b16 %v1739, %v1705
      %v1768 = vshrl.u32 %v1705, 16
      %v1769 = vshrl.u32 %v1739, 16
      %v1770 = vpack.i.b16 %v1769, %v1768
      %1772 = vxpose.xlu0.c.b16.start [1/8] %v1742, 128
      %1773 = vxpose.xlu0.c.b16.cont [2/8] 0, 128
      %1774 = vxpose.xlu0.c.b16.cont [3/8] 0, 128
      %1775 = vxpose.xlu0.c.b16.cont [4/8] 0, 128
      %1776 = vxpose.xlu0.c.b16.cont [5/8] 0, 128
      %1777 = vxpose.xlu0.c.b16.cont [6/8] 0, 128
      %1778 = vxpose.xlu0.c.b16.cont [7/8] 0, 128
      %1779 = vxpose.xlu0.c.b16.end [8/8] 0, 128
      %v1780 = vpop.trf.xlu0
      %v1781 = vpop.trf.xlu0
      %v1782 = vpop.trf.xlu0
      %v1783 = vpop.trf.xlu0
      %v1784 = vpop.trf.xlu0
      %v1785 = vpop.trf.xlu0
      %v1786 = vpop.trf.xlu0
      %v1787 = vpop.trf.xlu0
      %1788 = vxpose.xlu0.c.b16.start [1/8] %v1746, 128
      %1789 = vxpose.xlu0.c.b16.cont [2/8] 0, 128
      %1790 = vxpose.xlu0.c.b16.cont [3/8] 0, 128
      %1791 = vxpose.xlu0.c.b16.cont [4/8] 0, 128
      %1792 = vxpose.xlu0.c.b16.cont [5/8] 0, 128
      %1793 = vxpose.xlu0.c.b16.cont [6/8] 0, 128
      %1794 = vxpose.xlu0.c.b16.cont [7/8] 0, 128
      %1795 = vxpose.xlu0.c.b16.end [8/8] 0, 128
      %v1796 = vpop.trf.xlu0
      %v1797 = vpop.trf.xlu0
      %v1798 = vpop.trf.xlu0
      %v1799 = vpop.trf.xlu0
      %v1800 = vpop.trf.xlu0
      %v1801 = vpop.trf.xlu0
      %v1802 = vpop.trf.xlu0
      %v1803 = vpop.trf.xlu0
      %1804 = vxpose.xlu0.c.b16.start [1/8] %v1750, 128
      %1805 = vxpose.xlu0.c.b16.cont [2/8] 0, 128
      %1806 = vxpose.xlu0.c.b16.cont [3/8] 0, 128
      %1807 = vxpose.xlu0.c.b16.cont [4/8] 0, 128
      %1808 = vxpose.xlu0.c.b16.cont [5/8] 0, 128
      %1809 = vxpose.xlu0.c.b16.cont [6/8] 0, 128
      %1810 = vxpose.xlu0.c.b16.cont [7/8] 0, 128
      %1811 = vxpose.xlu0.c.b16.end [8/8] 0, 128
      %v1812 = vpop.trf.xlu0
      %v1813 = vpop.trf.xlu0
      %v1814 = vpop.trf.xlu0
      %v1815 = vpop.trf.xlu0
      %v1816 = vpop.trf.xlu0
      %v1817 = vpop.trf.xlu0
      %v1818 = vpop.trf.xlu0
      %v1819 = vpop.trf.xlu0
      %1820 = vxpose.xlu0.c.b16.start [1/8] %v1754, 128
      %1821 = vxpose.xlu0.c.b16.cont [2/8] 0, 128
      %1822 = vxpose.xlu0.c.b16.cont [3/8] 0, 128
      %1823 = vxpose.xlu0.c.b16.cont [4/8] 0, 128
      %1824 = vxpose.xlu0.c.b16.cont [5/8] 0, 128
      %1825 = vxpose.xlu0.c.b16.cont [6/8] 0, 128
      %1826 = vxpose.xlu0.c.b16.cont [7/8] 0, 128
      %1827 = vxpose.xlu0.c.b16.end [8/8] 0, 128
      %v1828 = vpop.trf.xlu0
      %v1829 = vpop.trf.xlu0
      %v1830 = vpop.trf.xlu0
      %v1831 = vpop.trf.xlu0
      %v1832 = vpop.trf.xlu0
      %v1833 = vpop.trf.xlu0
      %v1834 = vpop.trf.xlu0
      %v1835 = vpop.trf.xlu0
      %1836 = vxpose.xlu0.c.b16.start [1/8] %v1758, 128
      %1837 = vxpose.xlu0.c.b16.cont [2/8] 0, 128
      %1838 = vxpose.xlu0.c.b16.cont [3/8] 0, 128
      %1839 = vxpose.xlu0.c.b16.cont [4/8] 0, 128
      %1840 = vxpose.xlu0.c.b16.cont [5/8] 0, 128
      %1841 = vxpose.xlu0.c.b16.cont [6/8] 0, 128
      %1842 = vxpose.xlu0.c.b16.cont [7/8] 0, 128
      %1843 = vxpose.xlu0.c.b16.end [8/8] 0, 128
      %v1844 = vpop.trf.xlu0
      %v1845 = vpop.trf.xlu0
      %v1846 = vpop.trf.xlu0
      %v1847 = vpop.trf.xlu0
      %v1848 = vpop.trf.xlu0
      %v1849 = vpop.trf.xlu0
      %v1850 = vpop.trf.xlu0
      %v1851 = vpop.trf.xlu0
      %1852 = vxpose.xlu0.c.b16.start [1/8] %v1762, 128
      %1853 = vxpose.xlu0.c.b16.cont [2/8] 0, 128
      %1854 = vxpose.xlu0.c.b16.cont [3/8] 0, 128
      %1855 = vxpose.xlu0.c.b16.cont [4/8] 0, 128
      %1856 = vxpose.xlu0.c.b16.cont [5/8] 0, 128
      %1857 = vxpose.xlu0.c.b16.cont [6/8] 0, 128
      %1858 = vxpose.xlu0.c.b16.cont [7/8] 0, 128
      %1859 = vxpose.xlu0.c.b16.end [8/8] 0, 128
      %v1860 = vpop.trf.xlu0
      %v1861 = vpop.trf.xlu0
      %v1862 = vpop.trf.xlu0
      %v1863 = vpop.trf.xlu0
      %v1864 = vpop.trf.xlu0
      %v1865 = vpop.trf.xlu0
      %v1866 = vpop.trf.xlu0
      %v1867 = vpop.trf.xlu0
      %1868 = vxpose.xlu0.c.b16.start [1/8] %v1766, 128
      %1869 = vxpose.xlu0.c.b16.cont [2/8] 0, 128
      %1870 = vxpose.xlu0.c.b16.cont [3/8] 0, 128
      %1871 = vxpose.xlu0.c.b16.cont [4/8] 0, 128
      %1872 = vxpose.xlu0.c.b16.cont [5/8] 0, 128
      %1873 = vxpose.xlu0.c.b16.cont [6/8] 0, 128
      %1874 = vxpose.xlu0.c.b16.cont [7/8] 0, 128
      %1875 = vxpose.xlu0.c.b16.end [8/8] 0, 128
      %v1876 = vpop.trf.xlu0
      %v1877 = vpop.trf.xlu0
      %v1878 = vpop.trf.xlu0
      %v1879 = vpop.trf.xlu0
      %v1880 = vpop.trf.xlu0
      %v1881 = vpop.trf.xlu0
      %v1882 = vpop.trf.xlu0
      %v1883 = vpop.trf.xlu0
      %1884 = vxpose.xlu0.c.b16.start [1/8] %v1770, 128
      %1885 = vxpose.xlu0.c.b16.cont [2/8] 0, 128
      %1886 = vxpose.xlu0.c.b16.cont [3/8] 0, 128
      %1887 = vxpose.xlu0.c.b16.cont [4/8] 0, 128
      %1888 = vxpose.xlu0.c.b16.cont [5/8] 0, 128
      %1889 = vxpose.xlu0.c.b16.cont [6/8] 0, 128
      %1890 = vxpose.xlu0.c.b16.cont [7/8] 0, 128
      %1891 = vxpose.xlu0.c.b16.end [8/8] 0, 128
      %v1892 = vpop.trf.xlu0
      %v1893 = vpop.trf.xlu0
      %v1894 = vpop.trf.xlu0
      %v1895 = vpop.trf.xlu0
      %v1896 = vpop.trf.xlu0
      %v1897 = vpop.trf.xlu0
      %v1898 = vpop.trf.xlu0
      %v1899 = vpop.trf.xlu0
      %v1900 = vcombine.low %v1780, %v1844
      %v1902 = vunpack.c.l.s4 1983009808
      %v1903 = vunpack.c.0.s8 %v1902
      %v1904 = vlaneseq
      %v1905 = vshrl.u32 %v1904, 7
      %v1906 = vsub.s32 %v1903, %v1905
      %v1907 = vrot.slane %v1900, %v1906
      %v1908 = vcombine.low %v1812, %v1876
      %v1910 = vunpack.c.l.s4 1983009808
      %v1911 = vunpack.c.0.s8 %v1910
      %v1912 = vlaneseq
      %v1913 = vshrl.u32 %v1912, 7
      %v1914 = vsub.s32 %v1911, %v1913
      %v1915 = vrot.slane %v1908, %v1914
      %v1916 = vcombine.low %v1907, %v1915
      %v1918 = vunpack.c.l.s4 1934713408
      %v1919 = vunpack.c.0.s8 %v1918
      %v1920 = vlaneseq
      %v1921 = vshrl.u32 %v1920, 7
      %v1922 = vsub.s32 %v1919, %v1921
      %v1923 = vrot.slane %v1916, %v1922
      %v1924 = vcombine.high %v1923, 0
      %v1925 = vcombine.low %v1796, %v1860
      %v1927 = vunpack.c.l.s4 1983009808
      %v1928 = vunpack.c.0.s8 %v1927
      %v1929 = vlaneseq
      %v1930 = vshrl.u32 %v1929, 7
      %v1931 = vsub.s32 %v1928, %v1930
      %v1932 = vrot.slane %v1925, %v1931
      %v1933 = vcombine.low %v1828, %v1892
      %v1935 = vunpack.c.l.s4 1983009808
      %v1936 = vunpack.c.0.s8 %v1935
      %v1937 = vlaneseq
      %v1938 = vshrl.u32 %v1937, 7
      %v1939 = vsub.s32 %v1936, %v1938
      %v1940 = vrot.slane %v1933, %v1939
      %v1941 = vcombine.low %v1932, %v1940
      %v1943 = vunpack.c.l.s4 1934713408
      %v1944 = vunpack.c.0.s8 %v1943
      %v1945 = vlaneseq
      %v1946 = vshrl.u32 %v1945, 7
      %v1947 = vsub.s32 %v1944, %v1946
      %v1948 = vrot.slane %v1941, %v1947
      %v1949 = vcombine.high %v1948, 0
      %v1952 = vpack.i.b16 %v1948, %v1923
      %v1953 = vshrl.u32 %v1923, 16
      %v1954 = vshrl.u32 %v1948, 16
      %v1955 = vpack.i.b16 %v1954, %v1953
      %v1958 = vpack.i.b16 %v1949, %v1924
      %v1959 = vshrl.u32 %v1924, 16
      %v1960 = vshrl.u32 %v1949, 16
      %v1961 = vpack.i.b16 %v1960, %v1959
      %v1963 = vsel %vm1302, %v1952, 0
      %v1966 = vsel %vm1302, %v1532, 0
      %1968 = vmatprep.subr.bf16.mxu0 0
      %1969 = vmatpush1.bf16.xpose.msra.mxu0 0
      %1970 = vmatprep.subr.bf16.mxu0 0
      %1971 = vmatpush1.bf16.xpose.msra.mxu0 0
      %1972 = vmatprep.subr.bf16.mxu0 0
      %1973 = vmatpush1.bf16.xpose.msra.mxu0 0
      %1974 = vmatprep.subr.bf16.mxu0 0
      %1975 = vmatpush1.bf16.xpose.msra.mxu0 0
      %1976 = vmatprep.subr.bf16.mxu0 0
      %1977 = vmatpush1.bf16.xpose.msra.mxu0 0
      %1978 = vmatprep.subr.bf16.mxu0 0
      %1979 = vmatpush1.bf16.xpose.msra.mxu0 0
      %1980 = vmatprep.subr.bf16.mxu0 0
      %1981 = vmatpush1.bf16.xpose.msra.mxu0 0
      %1982 = vmatprep.subr.bf16.mxu0 0
      %1983 = vmatpush1.bf16.xpose.msra.mxu0 %v1966
      %1984 = vmatprep.subr.bf16.mxu0 0
      %1985 = vmatpush2.bf16.xpose.msra.mxu0 0
      %1986 = vmatprep.subr.bf16.mxu0 0
      %1987 = vmatpush2.bf16.xpose.msra.mxu0 0
      %1988 = vmatprep.subr.bf16.mxu0 0
      %1989 = vmatpush2.bf16.xpose.msra.mxu0 0
      %1990 = vmatprep.subr.bf16.mxu0 0
      %1991 = vmatpush2.bf16.xpose.msra.mxu0 0
      %1992 = vmatprep.subr.bf16.mxu0 0
      %1993 = vmatpush2.bf16.xpose.msra.mxu0 0
      %1994 = vmatprep.subr.bf16.mxu0 0
      %1995 = vmatpush2.bf16.xpose.msra.mxu0 0
      %1996 = vmatprep.subr.bf16.mxu0 0
      %1997 = vmatpush2.bf16.xpose.msra.mxu0 0
      %1998 = vmatprep.subr.bf16.mxu0 0
      %1999 = vmatpush2.bf16.xpose.msra.mxu0 0
      %2000 = vmatprep.mubr.bf16.mxu0 0
      %2001 = vmatmul.mubr.bf16.gmra.mxu0 %v1963
      %v2002 = vpop.f32.mrf.mxu0
      %v2003 = vadd.f32 0.0, %v2002
      %v2004 = vpop.f32.mrf.mxu0
      %v2005 = vpop.f32.mrf.mxu0
      %v2006 = vpop.f32.mrf.mxu0
      %2007 = vdwg.mxu0
      %v2009 = vsel %vm1302, %v1955, 0
      %v2012 = vsel %vm1302, %v1533, 0
      %2014 = vmatprep.subr.bf16.mxu0 0
      %2015 = vmatpush1.bf16.xpose.msra.mxu0 0
      %2016 = vmatprep.subr.bf16.mxu0 0
      %2017 = vmatpush1.bf16.xpose.msra.mxu0 0
      %2018 = vmatprep.subr.bf16.mxu0 0
      %2019 = vmatpush1.bf16.xpose.msra.mxu0 0
      %2020 = vmatprep.subr.bf16.mxu0 0
      %2021 = vmatpush1.bf16.xpose.msra.mxu0 0
      %2022 = vmatprep.subr.bf16.mxu0 0
      %2023 = vmatpush1.bf16.xpose.msra.mxu0 0
      %2024 = vmatprep.subr.bf16.mxu0 0
      %2025 = vmatpush1.bf16.xpose.msra.mxu0 0
      %2026 = vmatprep.subr.bf16.mxu0 0
      %2027 = vmatpush1.bf16.xpose.msra.mxu0 0
      %2028 = vmatprep.subr.bf16.mxu0 0
      %2029 = vmatpush1.bf16.xpose.msra.mxu0 %v2012
      %2030 = vmatprep.subr.bf16.mxu0 0
      %2031 = vmatpush2.bf16.xpose.msra.mxu0 0
      %2032 = vmatprep.subr.bf16.mxu0 0
      %2033 = vmatpush2.bf16.xpose.msra.mxu0 0
      %2034 = vmatprep.subr.bf16.mxu0 0
      %2035 = vmatpush2.bf16.xpose.msra.mxu0 0
      %2036 = vmatprep.subr.bf16.mxu0 0
      %2037 = vmatpush2.bf16.xpose.msra.mxu0 0
      %2038 = vmatprep.subr.bf16.mxu0 0
      %2039 = vmatpush2.bf16.xpose.msra.mxu0 0
      %2040 = vmatprep.subr.bf16.mxu0 0
      %2041 = vmatpush2.bf16.xpose.msra.mxu0 0
      %2042 = vmatprep.subr.bf16.mxu0 0
      %2043 = vmatpush2.bf16.xpose.msra.mxu0 0
      %2044 = vmatprep.subr.bf16.mxu0 0
      %2045 = vmatpush2.bf16.xpose.msra.mxu0 0
      %2046 = vmatprep.mubr.bf16.mxu0 0
      %2047 = vmatmul.mubr.bf16.gmra.mxu0 %v2009
      %v2048 = vpop.f32.mrf.mxu0
      %v2049 = vadd.f32 0.0, %v2048
      %v2050 = vpop.f32.mrf.mxu0
      %v2051 = vpop.f32.mrf.mxu0
      %v2052 = vpop.f32.mrf.mxu0
      %2053 = vdwg.mxu0
      %v2055 = vsel %vm1302, %v1958, 0
      %v2058 = vsel %vm1302, %v1534, 0
      %2060 = vmatprep.subr.bf16.mxu0 0
      %2061 = vmatpush1.bf16.xpose.msra.mxu0 0
      %2062 = vmatprep.subr.bf16.mxu0 0
      %2063 = vmatpush1.bf16.xpose.msra.mxu0 0
      %2064 = vmatprep.subr.bf16.mxu0 0
      %2065 = vmatpush1.bf16.xpose.msra.mxu0 0
      %2066 = vmatprep.subr.bf16.mxu0 0
      %2067 = vmatpush1.bf16.xpose.msra.mxu0 0
      %2068 = vmatprep.subr.bf16.mxu0 0
      %2069 = vmatpush1.bf16.xpose.msra.mxu0 0
      %2070 = vmatprep.subr.bf16.mxu0 0
      %2071 = vmatpush1.bf16.xpose.msra.mxu0 0
      %2072 = vmatprep.subr.bf16.mxu0 0
      %2073 = vmatpush1.bf16.xpose.msra.mxu0 0
      %2074 = vmatprep.subr.bf16.mxu0 0
      %2075 = vmatpush1.bf16.xpose.msra.mxu0 %v2058
      %2076 = vmatprep.subr.bf16.mxu0 0
      %2077 = vmatpush2.bf16.xpose.msra.mxu0 0
      %2078 = vmatprep.subr.bf16.mxu0 0
      %2079 = vmatpush2.bf16.xpose.msra.mxu0 0
      %2080 = vmatprep.subr.bf16.mxu0 0
      %2081 = vmatpush2.bf16.xpose.msra.mxu0 0
      %2082 = vmatprep.subr.bf16.mxu0 0
      %2083 = vmatpush2.bf16.xpose.msra.mxu0 0
      %2084 = vmatprep.subr.bf16.mxu0 0
      %2085 = vmatpush2.bf16.xpose.msra.mxu0 0
      %2086 = vmatprep.subr.bf16.mxu0 0
      %2087 = vmatpush2.bf16.xpose.msra.mxu0 0
      %2088 = vmatprep.subr.bf16.mxu0 0
      %2089 = vmatpush2.bf16.xpose.msra.mxu0 0
      %2090 = vmatprep.subr.bf16.mxu0 0
      %2091 = vmatpush2.bf16.xpose.msra.mxu0 0
      %2092 = vmatprep.mubr.bf16.mxu0 0
      %2093 = vmatmul.mubr.bf16.gmra.mxu0 %v2055
      %v2094 = vpop.f32.mrf.mxu0
      %v2095 = vadd.f32 0.0, %v2094
      %v2096 = vpop.f32.mrf.mxu0
      %v2097 = vpop.f32.mrf.mxu0
      %v2098 = vpop.f32.mrf.mxu0
      %2099 = vdwg.mxu0
      %v2101 = vsel %vm1302, %v1961, 0
      %v2104 = vsel %vm1302, %v1535, 0
      %2106 = vmatprep.subr.bf16.mxu0 0
      %2107 = vmatpush1.bf16.xpose.msra.mxu0 0
      %2108 = vmatprep.subr.bf16.mxu0 0
      %2109 = vmatpush1.bf16.xpose.msra.mxu0 0
      %2110 = vmatprep.subr.bf16.mxu0 0
      %2111 = vmatpush1.bf16.xpose.msra.mxu0 0
      %2112 = vmatprep.subr.bf16.mxu0 0
      %2113 = vmatpush1.bf16.xpose.msra.mxu0 0
      %2114 = vmatprep.subr.bf16.mxu0 0
      %2115 = vmatpush1.bf16.xpose.msra.mxu0 0
      %2116 = vmatprep.subr.bf16.mxu0 0
      %2117 = vmatpush1.bf16.xpose.msra.mxu0 0
      %2118 = vmatprep.subr.bf16.mxu0 0
      %2119 = vmatpush1.bf16.xpose.msra.mxu0 0
      %2120 = vmatprep.subr.bf16.mxu0 0
      %2121 = vmatpush1.bf16.xpose.msra.mxu0 %v2104
      %2122 = vmatprep.subr.bf16.mxu0 0
      %2123 = vmatpush2.bf16.xpose.msra.mxu0 0
      %2124 = vmatprep.subr.bf16.mxu0 0
      %2125 = vmatpush2.bf16.xpose.msra.mxu0 0
      %2126 = vmatprep.subr.bf16.mxu0 0
      %2127 = vmatpush2.bf16.xpose.msra.mxu0 0
      %2128 = vmatprep.subr.bf16.mxu0 0
      %2129 = vmatpush2.bf16.xpose.msra.mxu0 0
      %2130 = vmatprep.subr.bf16.mxu0 0
      %2131 = vmatpush2.bf16.xpose.msra.mxu0 0
      %2132 = vmatprep.subr.bf16.mxu0 0
      %2133 = vmatpush2.bf16.xpose.msra.mxu0 0
      %2134 = vmatprep.subr.bf16.mxu0 0
      %2135 = vmatpush2.bf16.xpose.msra.mxu0 0
      %2136 = vmatprep.subr.bf16.mxu0 0
      %2137 = vmatpush2.bf16.xpose.msra.mxu0 0
      %2138 = vmatprep.mubr.bf16.mxu0 0
      %2139 = vmatmul.mubr.bf16.gmra.mxu0 %v2101
      %v2140 = vpop.f32.mrf.mxu0
      %v2141 = vadd.f32 0.0, %v2140
      %v2142 = vpop.f32.mrf.mxu0
      %v2143 = vpop.f32.mrf.mxu0
      %v2144 = vpop.f32.mrf.mxu0
      %2145 = vdwg.mxu0
      %2146 = vxpose.xlu0.b32.start [1/16] %v2003, 128
      %2147 = vxpose.xlu0.b32.cont [2/16] 0.0, 128
      %2148 = vxpose.xlu0.b32.cont [3/16] 0.0, 128
      %2149 = vxpose.xlu0.b32.cont [4/16] 0.0, 128
      %2150 = vxpose.xlu0.b32.cont [5/16] 0.0, 128
      %2151 = vxpose.xlu0.b32.cont [6/16] 0.0, 128
      %2152 = vxpose.xlu0.b32.cont [7/16] 0.0, 128
      %2153 = vxpose.xlu0.b32.cont [8/16] 0.0, 128
      %2154 = vxpose.xlu0.b32.cont [9/16] 0.0, 128
      %2155 = vxpose.xlu0.b32.cont [10/16] 0.0, 128
      %2156 = vxpose.xlu0.b32.cont [11/16] 0.0, 128
      %2157 = vxpose.xlu0.b32.cont [12/16] 0.0, 128
      %2158 = vxpose.xlu0.b32.cont [13/16] 0.0, 128
      %2159 = vxpose.xlu0.b32.cont [14/16] 0.0, 128
      %2160 = vxpose.xlu0.b32.cont [15/16] 0.0, 128
      %2161 = vxpose.xlu0.b32.end [16/16] 0.0, 128
      %v2162 = vpop.trf.xlu0
      %v2163 = vpop.trf.xlu0
      %v2164 = vpop.trf.xlu0
      %v2165 = vpop.trf.xlu0
      %v2166 = vpop.trf.xlu0
      %v2167 = vpop.trf.xlu0
      %v2168 = vpop.trf.xlu0
      %v2169 = vpop.trf.xlu0
      %v2170 = vpop.trf.xlu0
      %v2171 = vpop.trf.xlu0
      %v2172 = vpop.trf.xlu0
      %v2173 = vpop.trf.xlu0
      %v2174 = vpop.trf.xlu0
      %v2175 = vpop.trf.xlu0
      %v2176 = vpop.trf.xlu0
      %v2177 = vpop.trf.xlu0
      %2178 = vxpose.xlu0.b32.start [1/16] %v2049, 128
      %2179 = vxpose.xlu0.b32.cont [2/16] 0.0, 128
      %2180 = vxpose.xlu0.b32.cont [3/16] 0.0, 128
      %2181 = vxpose.xlu0.b32.cont [4/16] 0.0, 128
      %2182 = vxpose.xlu0.b32.cont [5/16] 0.0, 128
      %2183 = vxpose.xlu0.b32.cont [6/16] 0.0, 128
      %2184 = vxpose.xlu0.b32.cont [7/16] 0.0, 128
      %2185 = vxpose.xlu0.b32.cont [8/16] 0.0, 128
      %2186 = vxpose.xlu0.b32.cont [9/16] 0.0, 128
      %2187 = vxpose.xlu0.b32.cont [10/16] 0.0, 128
      %2188 = vxpose.xlu0.b32.cont [11/16] 0.0, 128
      %2189 = vxpose.xlu0.b32.cont [12/16] 0.0, 128
      %2190 = vxpose.xlu0.b32.cont [13/16] 0.0, 128
      %2191 = vxpose.xlu0.b32.cont [14/16] 0.0, 128
      %2192 = vxpose.xlu0.b32.cont [15/16] 0.0, 128
      %2193 = vxpose.xlu0.b32.end [16/16] 0.0, 128
      %v2194 = vpop.trf.xlu0
      %v2195 = vpop.trf.xlu0
      %v2196 = vpop.trf.xlu0
      %v2197 = vpop.trf.xlu0
      %v2198 = vpop.trf.xlu0
      %v2199 = vpop.trf.xlu0
      %v2200 = vpop.trf.xlu0
      %v2201 = vpop.trf.xlu0
      %v2202 = vpop.trf.xlu0
      %v2203 = vpop.trf.xlu0
      %v2204 = vpop.trf.xlu0
      %v2205 = vpop.trf.xlu0
      %v2206 = vpop.trf.xlu0
      %v2207 = vpop.trf.xlu0
      %v2208 = vpop.trf.xlu0
      %v2209 = vpop.trf.xlu0
      %2210 = vxpose.xlu0.b32.start [1/16] %v2095, 128
      %2211 = vxpose.xlu0.b32.cont [2/16] 0.0, 128
      %2212 = vxpose.xlu0.b32.cont [3/16] 0.0, 128
      %2213 = vxpose.xlu0.b32.cont [4/16] 0.0, 128
      %2214 = vxpose.xlu0.b32.cont [5/16] 0.0, 128
      %2215 = vxpose.xlu0.b32.cont [6/16] 0.0, 128
      %2216 = vxpose.xlu0.b32.cont [7/16] 0.0, 128
      %2217 = vxpose.xlu0.b32.cont [8/16] 0.0, 128
      %2218 = vxpose.xlu0.b32.cont [9/16] 0.0, 128
      %2219 = vxpose.xlu0.b32.cont [10/16] 0.0, 128
      %2220 = vxpose.xlu0.b32.cont [11/16] 0.0, 128
      %2221 = vxpose.xlu0.b32.cont [12/16] 0.0, 128
      %2222 = vxpose.xlu0.b32.cont [13/16] 0.0, 128
      %2223 = vxpose.xlu0.b32.cont [14/16] 0.0, 128
      %2224 = vxpose.xlu0.b32.cont [15/16] 0.0, 128
      %2225 = vxpose.xlu0.b32.end [16/16] 0.0, 128
      %v2226 = vpop.trf.xlu0
      %v2227 = vpop.trf.xlu0
      %v2228 = vpop.trf.xlu0
      %v2229 = vpop.trf.xlu0
      %v2230 = vpop.trf.xlu0
      %v2231 = vpop.trf.xlu0
      %v2232 = vpop.trf.xlu0
      %v2233 = vpop.trf.xlu0
      %v2234 = vpop.trf.xlu0
      %v2235 = vpop.trf.xlu0
      %v2236 = vpop.trf.xlu0
      %v2237 = vpop.trf.xlu0
      %v2238 = vpop.trf.xlu0
      %v2239 = vpop.trf.xlu0
      %v2240 = vpop.trf.xlu0
      %v2241 = vpop.trf.xlu0
      %2242 = vxpose.xlu0.b32.start [1/16] %v2141, 128
      %2243 = vxpose.xlu0.b32.cont [2/16] 0.0, 128
      %2244 = vxpose.xlu0.b32.cont [3/16] 0.0, 128
      %2245 = vxpose.xlu0.b32.cont [4/16] 0.0, 128
      %2246 = vxpose.xlu0.b32.cont [5/16] 0.0, 128
      %2247 = vxpose.xlu0.b32.cont [6/16] 0.0, 128
      %2248 = vxpose.xlu0.b32.cont [7/16] 0.0, 128
      %2249 = vxpose.xlu0.b32.cont [8/16] 0.0, 128
      %2250 = vxpose.xlu0.b32.cont [9/16] 0.0, 128
      %2251 = vxpose.xlu0.b32.cont [10/16] 0.0, 128
      %2252 = vxpose.xlu0.b32.cont [11/16] 0.0, 128
      %2253 = vxpose.xlu0.b32.cont [12/16] 0.0, 128
      %2254 = vxpose.xlu0.b32.cont [13/16] 0.0, 128
      %2255 = vxpose.xlu0.b32.cont [14/16] 0.0, 128
      %2256 = vxpose.xlu0.b32.cont [15/16] 0.0, 128
      %2257 = vxpose.xlu0.b32.end [16/16] 0.0, 128
      %v2258 = vpop.trf.xlu0
      %v2259 = vpop.trf.xlu0
      %v2260 = vpop.trf.xlu0
      %v2261 = vpop.trf.xlu0
      %v2262 = vpop.trf.xlu0
      %v2263 = vpop.trf.xlu0
      %v2264 = vpop.trf.xlu0
      %v2265 = vpop.trf.xlu0
      %v2266 = vpop.trf.xlu0
      %v2267 = vpop.trf.xlu0
      %v2268 = vpop.trf.xlu0
      %v2269 = vpop.trf.xlu0
      %v2270 = vpop.trf.xlu0
      %v2271 = vpop.trf.xlu0
      %v2272 = vpop.trf.xlu0
      %v2273 = vpop.trf.xlu0
      %v2274 = vcombine.low %v2162, %v2226
      %v2275 = vcombine.high %v2162, %v2226
      %v2277 = vunpack.c.l.s4 1983009808
      %v2278 = vunpack.c.0.s8 %v2277
      %v2279 = vlaneseq
      %v2280 = vshrl.u32 %v2279, 7
      %v2281 = vsub.s32 %v2278, %v2280
      %v2282 = vrot.slane %v2274, %v2281
      %v2284 = vunpack.c.l.s4 1983009808
      %v2285 = vunpack.c.0.s8 %v2284
      %v2286 = vlaneseq
      %v2287 = vshrl.u32 %v2286, 7
      %v2288 = vsub.s32 %v2285, %v2287
      %v2289 = vrot.slane %v2275, %v2288
      %v2290 = vcombine.low %v2194, %v2258
      %v2291 = vcombine.high %v2194, %v2258
      %v2293 = vunpack.c.l.s4 1983009808
      %v2294 = vunpack.c.0.s8 %v2293
      %v2295 = vlaneseq
      %v2296 = vshrl.u32 %v2295, 7
      %v2297 = vsub.s32 %v2294, %v2296
      %v2298 = vrot.slane %v2290, %v2297
      %v2300 = vunpack.c.l.s4 1983009808
      %v2301 = vunpack.c.0.s8 %v2300
      %v2302 = vlaneseq
      %v2303 = vshrl.u32 %v2302, 7
      %v2304 = vsub.s32 %v2301, %v2303
      %v2305 = vrot.slane %v2291, %v2304
      %v2306 = vcombine.low %v2282, %v2298
      %v2307 = vcombine.high %v2282, %v2298
      %v2309 = vunpack.c.l.s4 1934713408
      %v2310 = vunpack.c.0.s8 %v2309
      %v2311 = vlaneseq
      %v2312 = vshrl.u32 %v2311, 7
      %v2313 = vsub.s32 %v2310, %v2312
      %v2314 = vrot.slane %v2306, %v2313
      %v2316 = vunpack.c.l.s4 1934713408
      %v2317 = vunpack.c.0.s8 %v2316
      %v2318 = vlaneseq
      %v2319 = vshrl.u32 %v2318, 7
      %v2320 = vsub.s32 %v2317, %v2319
      %v2321 = vrot.slane %v2307, %v2320
      %v2322 = vcombine.low %v2289, %v2305
      %v2323 = vcombine.high %v2289, %v2305
      %v2325 = vunpack.c.l.s4 1934713408
      %v2326 = vunpack.c.0.s8 %v2325
      %v2327 = vlaneseq
      %v2328 = vshrl.u32 %v2327, 7
      %v2329 = vsub.s32 %v2326, %v2328
      %v2330 = vrot.slane %v2322, %v2329
      %v2332 = vunpack.c.l.s4 1934713408
      %v2333 = vunpack.c.0.s8 %v2332
      %v2334 = vlaneseq
      %v2335 = vshrl.u32 %v2334, 7
      %v2336 = vsub.s32 %v2333, %v2335
      %v2337 = vrot.slane %v2323, %v2336
      %v2338 = vcombine.high %v2314, 0.0
      %v2339 = vcombine.high %v2321, 0.0
      %v2340 = vcombine.high %v2330, 0.0
      %v2341 = vcombine.high %v2337, 0.0
      %v2342 = vcombine.low %v2314, %v2321
      %v2344 = vunpack.c.l.s4 1983009808
      %v2345 = vunpack.c.0.s8 %v2344
      %v2346 = vlaneseq
      %v2347 = vshrl.u32 %v2346, 7
      %v2348 = vsub.s32 %v2345, %v2347
      %v2349 = vrot.slane %v2342, %v2348
      %v2350 = vcombine.low %v2338, %v2339
      %v2352 = vunpack.c.l.s4 1983009808
      %v2353 = vunpack.c.0.s8 %v2352
      %v2354 = vlaneseq
      %v2355 = vshrl.u32 %v2354, 7
      %v2356 = vsub.s32 %v2353, %v2355
      %v2357 = vrot.slane %v2350, %v2356
      %v2358 = vcombine.low %v2330, %v2337
      %v2360 = vunpack.c.l.s4 1983009808
      %v2361 = vunpack.c.0.s8 %v2360
      %v2362 = vlaneseq
      %v2363 = vshrl.u32 %v2362, 7
      %v2364 = vsub.s32 %v2361, %v2363
      %v2365 = vrot.slane %v2358, %v2364
      %v2366 = vcombine.low %v2340, %v2341
      %v2368 = vunpack.c.l.s4 1983009808
      %v2369 = vunpack.c.0.s8 %v2368
      %v2370 = vlaneseq
      %v2371 = vshrl.u32 %v2370, 7
      %v2372 = vsub.s32 %v2369, %v2371
      %v2373 = vrot.slane %v2366, %v2372
      %v2374 = vcombine.low %v2349, %v2357
      %v2375 = vcombine.high %v2349, %v2357
      %v2377 = vunpack.c.l.s4 1934713408
      %v2378 = vunpack.c.0.s8 %v2377
      %v2379 = vlaneseq
      %v2380 = vshrl.u32 %v2379, 7
      %v2381 = vsub.s32 %v2378, %v2380
      %v2382 = vrot.slane %v2374, %v2381
      %v2384 = vunpack.c.l.s4 1934713408
      %v2385 = vunpack.c.0.s8 %v2384
      %v2386 = vlaneseq
      %v2387 = vshrl.u32 %v2386, 7
      %v2388 = vsub.s32 %v2385, %v2387
      %v2389 = vrot.slane %v2375, %v2388
      %v2390 = vcombine.low %v2365, %v2373
      %v2391 = vcombine.high %v2365, %v2373
      %v2393 = vunpack.c.l.s4 1934713408
      %v2394 = vunpack.c.0.s8 %v2393
      %v2395 = vlaneseq
      %v2396 = vshrl.u32 %v2395, 7
      %v2397 = vsub.s32 %v2394, %v2396
      %v2398 = vrot.slane %v2390, %v2397
      %v2400 = vunpack.c.l.s4 1934713408
      %v2401 = vunpack.c.0.s8 %v2400
      %v2402 = vlaneseq
      %v2403 = vshrl.u32 %v2402, 7
      %v2404 = vsub.s32 %v2401, %v2403
      %v2405 = vrot.slane %v2391, %v2404
      %v2406 = vcombine.low %v2382, %v2398
      %v2407 = vcombine.high %v2382, %v2398
      %v2408 = vcombine.low %v2389, %v2405
      %v2409 = vcombine.high %v2389, %v2405
      %2411 = vrot.lane.b32.xlu0 %v2407, 8
      %v2412 = vpop.permute.xlu0 %2411
      %2415 = vrot.lane.b32.xlu0 %v2408, 16
      %v2416 = vpop.permute.xlu0 %2415
      %2419 = vrot.lane.b32.xlu0 %v2409, 24
      %v2420 = vpop.permute.xlu0 %2419
      %v2422 = vsel %vm1302, %v2406, %v2412
      %vm2423 = vcmask 130048
      %v2424 = vsel %vm2423, %v2422, %v2416
      %vm2425 = vcmask 195584
      %v2426 = vsel %vm2425, %v2424, %v2420
      %v2427 = vpack.c.bf16 %v2426, %v2426
      %v2428 = vld [vmem:[%s6] sm:$0xf]
      %v2429 = vld [vmem:[%s6 + $0x4] sm:$0xf]
      %v2430 = vld [vmem:[%s6 + $0x8] sm:$0xf]
      %v2431 = vld [vmem:[%s6 + $0xc] sm:$0xf]
      %v2436 = vunpack.c.l.b16 %v2428
      %v2437 = vunpack.c.l.b16 %v2429
      %v2438 = vunpack.c.l.b16 %v2430
      %v2439 = vunpack.c.l.b16 %v2431
      %v2440 = vpack.c.b16 %v2437, %v2436
      %v2441 = vpack.c.b16 %v2439, %v2438
      %v2445 = vsel %vm433, %v2427, 0
      %2447 = vmatprep.subr.bf16.mxu0 0
      %2448 = vmatpush1.bf16.msra.mxu0 0
      %2449 = vmatprep.subr.bf16.mxu0 0
      %2450 = vmatpush1.bf16.msra.mxu0 0
      %2451 = vmatprep.subr.bf16.mxu0 0
      %2452 = vmatpush1.bf16.msra.mxu0 0
      %2453 = vmatprep.subr.bf16.mxu0 0
      %2454 = vmatpush1.bf16.msra.mxu0 0
      %2455 = vmatprep.subr.bf16.mxu0 0
      %2456 = vmatpush1.bf16.msra.mxu0 0
      %2457 = vmatprep.subr.bf16.mxu0 0
      %2458 = vmatpush1.bf16.msra.mxu0 0
      %2459 = vmatprep.subr.bf16.mxu0 0
      %2460 = vmatpush1.bf16.msra.mxu0 %v2441
      %2461 = vmatprep.subr.bf16.mxu0 0
      %2462 = vmatpush1.bf16.msra.mxu0 %v2440
      %2463 = vmatprep.subr.bf16.mxu0 0
      %2464 = vmatpush2.bf16.msra.mxu0 0
      %2465 = vmatprep.subr.bf16.mxu0 0
      %2466 = vmatpush2.bf16.msra.mxu0 0
      %2467 = vmatprep.subr.bf16.mxu0 0
      %2468 = vmatpush2.bf16.msra.mxu0 0
      %2469 = vmatprep.subr.bf16.mxu0 0
      %2470 = vmatpush2.bf16.msra.mxu0 0
      %2471 = vmatprep.subr.bf16.mxu0 0
      %2472 = vmatpush2.bf16.msra.mxu0 0
      %2473 = vmatprep.subr.bf16.mxu0 0
      %2474 = vmatpush2.bf16.msra.mxu0 0
      %2475 = vmatprep.subr.bf16.mxu0 0
      %2476 = vmatpush2.bf16.msra.mxu0 0
      %2477 = vmatprep.subr.bf16.mxu0 0
      %2478 = vmatpush2.bf16.msra.mxu0 0
      %2479 = vmatprep.mubr.bf16.mxu0 0
      %2480 = vmatmul.mubr.bf16.gmra.mxu0 %v2445
      %v2481 = vpop.f32.mrf.mxu0
      %v2482 = vadd.f32 0.0, %v2481
      %v2483 = vpop.f32.mrf.mxu0
      %v2484 = vpop.f32.mrf.mxu0
      %v2485 = vpop.f32.mrf.mxu0
      %2486 = vdwg.mxu0
      %v2487 = vadd.f32 %v427, %v2482
      %v2488 = vld [vmem:[%s2] sm:$0x1]
      %v2489 = vmul.f32 %v2487, %v2487
      %v2490 = vsel %vm433, %v2489, 0.0
      %2491 = vadd.xlane.f32.xlu0 %v2490
      %v2492 = vpop.xlane.xlu0 %2491
      %v2493 = vmul.f32 %v2492, %v437
      %v2494 = vadd.f32 %v2493, 1e-06
      %v2495 = vrsqrt.pop %v2494
      %v2496 = vmul.f32 %v2487, %v2495
      %v2498 = vlaneseq
      %v2499 = vshrl.u32 %v2498, 7
      %v2500 = vsub.s32 0, %v2499
      %v2501 = vrot.slane %v2488, %v2500
      %v2503 = vmul.f32 %v2496, %v2501
      %v2504 = vpack.c.bf16 %v2503, %v2503
      %v2505 = vld [vmem:[%s7] sm:$0xf]
      %v2506 = vld [vmem:[%s7 + $0x4] sm:$0xf]
      %v2507 = vld [vmem:[%s7 + $0x8] sm:$0xf]
      %v2508 = vld [vmem:[%s7 + $0xc] sm:$0xf]
      %v2513 = vunpack.c.l.b16 %v2505
      %v2514 = vunpack.c.l.b16 %v2506
      %v2515 = vunpack.c.l.b16 %v2507
      %v2516 = vunpack.c.l.b16 %v2508
      %v2517 = vpack.c.b16 %v2514, %v2513
      %v2518 = vpack.c.b16 %v2516, %v2515
      %v2522 = vsel %vm433, %v2504, 0
      %2524 = vmatprep.subr.bf16.mxu0 0
      %2525 = vmatpush1.bf16.msra.mxu0 0
      %2526 = vmatprep.subr.bf16.mxu0 0
      %2527 = vmatpush1.bf16.msra.mxu0 0
      %2528 = vmatprep.subr.bf16.mxu0 0
      %2529 = vmatpush1.bf16.msra.mxu0 0
      %2530 = vmatprep.subr.bf16.mxu0 0
      %2531 = vmatpush1.bf16.msra.mxu0 0
      %2532 = vmatprep.subr.bf16.mxu0 0
      %2533 = vmatpush1.bf16.msra.mxu0 0
      %2534 = vmatprep.subr.bf16.mxu0 0
      %2535 = vmatpush1.bf16.msra.mxu0 0
      %2536 = vmatprep.subr.bf16.mxu0 0
      %2537 = vmatpush1.bf16.msra.mxu0 %v2518
      %2538 = vmatprep.subr.bf16.mxu0 0
      %2539 = vmatpush1.bf16.msra.mxu0 %v2517
      %2540 = vmatprep.subr.bf16.mxu0 0
      %2541 = vmatpush2.bf16.msra.mxu0 0
      %2542 = vmatprep.subr.bf16.mxu0 0
      %2543 = vmatpush2.bf16.msra.mxu0 0
      %2544 = vmatprep.subr.bf16.mxu0 0
      %2545 = vmatpush2.bf16.msra.mxu0 0
      %2546 = vmatprep.subr.bf16.mxu0 0
      %2547 = vmatpush2.bf16.msra.mxu0 0
      %2548 = vmatprep.subr.bf16.mxu0 0
      %2549 = vmatpush2.bf16.msra.mxu0 0
      %2550 = vmatprep.subr.bf16.mxu0 0
      %2551 = vmatpush2.bf16.msra.mxu0 0
      %2552 = vmatprep.subr.bf16.mxu0 0
      %2553 = vmatpush2.bf16.msra.mxu0 0
      %2554 = vmatprep.subr.bf16.mxu0 0
      %2555 = vmatpush2.bf16.msra.mxu0 0
      %2556 = vmatprep.mubr.bf16.mxu0 0
      %2557 = vmatmul.mubr.bf16.gmra.mxu0 %v2522
      %v2558 = vpop.f32.mrf.mxu0
      %v2559 = vadd.f32 0.0, %v2558
      %v2560 = vpop.f32.mrf.mxu0
      %v2561 = vpop.f32.mrf.mxu0
      %v2562 = vpop.f32.mrf.mxu0
      %2563 = vdwg.mxu0
      %v2564 = vxor.u32 %v2559, 2147483648
      %v2565 = vmul.f32 %v2564, 1.442695
      %v2566 = vpow.pop %v2565
      %v2567 = vadd.f32 %v2566, 1.0
      %v2568 = vrcp.pop %v2567
      %v2569 = vmul.f32 1.0, %v2568
      %v2570 = vmul.f32 %v2559, %v2569
      %2571 = vrot.lane.b32.xlu0 %v2559, 64
      %v2572 = vpop.permute.xlu0 %2571
      %v2573 = vmul.f32 %v2570, %v2572
      %v2574 = vpack.c.bf16 %v2573, %v2573
      %v2575 = vld [vmem:[%s8] sm:$0xf]
      %v2576 = vld [vmem:[%s8 + $0x4] sm:$0xf]
      %v2577 = vld [vmem:[%s8 + $0x8] sm:$0xf]
      %v2578 = vld [vmem:[%s8 + $0xc] sm:$0xf]
      %v2579 = vld [vmem:[%s8 + $0x10] sm:$0xf]
      %v2580 = vld [vmem:[%s8 + $0x14] sm:$0xf]
      %v2581 = vld [vmem:[%s8 + $0x18] sm:$0xf]
      %v2582 = vld [vmem:[%s8 + $0x1c] sm:$0xf]
      %v2583 = vld [vmem:[%s8 + $0x20] sm:$0xf]
      %v2584 = vld [vmem:[%s8 + $0x24] sm:$0xf]
      %v2585 = vld [vmem:[%s8 + $0x28] sm:$0xf]
      %v2586 = vld [vmem:[%s8 + $0x2c] sm:$0xf]
      %v2587 = vld [vmem:[%s8 + $0x30] sm:$0xf]
      %v2588 = vld [vmem:[%s8 + $0x34] sm:$0xf]
      %v2589 = vld [vmem:[%s8 + $0x38] sm:$0xf]
      %v2590 = vld [vmem:[%s8 + $0x3c] sm:$0xf]
      %v2607 = vunpack.c.l.b16 %v2575
      %v2608 = vunpack.c.l.b16 %v2576
      %v2609 = vunpack.c.l.b16 %v2577
      %v2610 = vunpack.c.l.b16 %v2578
      %v2611 = vunpack.c.l.b16 %v2579
      %v2612 = vunpack.c.l.b16 %v2580
      %v2613 = vunpack.c.l.b16 %v2581
      %v2614 = vunpack.c.l.b16 %v2582
      %v2615 = vunpack.c.l.b16 %v2583
      %v2616 = vunpack.c.l.b16 %v2584
      %v2617 = vunpack.c.l.b16 %v2585
      %v2618 = vunpack.c.l.b16 %v2586
      %v2619 = vunpack.c.l.b16 %v2587
      %v2620 = vunpack.c.l.b16 %v2588
      %v2621 = vunpack.c.l.b16 %v2589
      %v2622 = vunpack.c.l.b16 %v2590
      %v2623 = vpack.c.b16 %v2608, %v2607
      %v2624 = vpack.c.b16 %v2610, %v2609
      %v2625 = vpack.c.b16 %v2612, %v2611
      %v2626 = vpack.c.b16 %v2614, %v2613
      %v2627 = vpack.c.b16 %v2616, %v2615
      %v2628 = vpack.c.b16 %v2618, %v2617
      %v2629 = vpack.c.b16 %v2620, %v2619
      %v2630 = vpack.c.b16 %v2622, %v2621
      %2639 = vmatprep.subr.bf16.mxu0 0
      %2640 = vmatpush1.bf16.msra.mxu0 %v2630
      %2641 = vmatprep.subr.bf16.mxu0 0
      %2642 = vmatpush1.bf16.msra.mxu0 %v2629
      %2643 = vmatprep.subr.bf16.mxu0 0
      %2644 = vmatpush1.bf16.msra.mxu0 %v2628
      %2645 = vmatprep.subr.bf16.mxu0 0
      %2646 = vmatpush1.bf16.msra.mxu0 %v2627
      %2647 = vmatprep.subr.bf16.mxu0 0
      %2648 = vmatpush1.bf16.msra.mxu0 %v2626
      %2649 = vmatprep.subr.bf16.mxu0 0
      %2650 = vmatpush1.bf16.msra.mxu0 %v2625
      %2651 = vmatprep.subr.bf16.mxu0 0
      %2652 = vmatpush1.bf16.msra.mxu0 %v2624
      %2653 = vmatprep.subr.bf16.mxu0 0
      %2654 = vmatpush1.bf16.msra.mxu0 %v2623
      %2655 = vmatprep.subr.bf16.mxu0 0
      %2656 = vmatpush2.bf16.msra.mxu0 0
      %2657 = vmatprep.subr.bf16.mxu0 0
      %2658 = vmatpush2.bf16.msra.mxu0 0
      %2659 = vmatprep.subr.bf16.mxu0 0
      %2660 = vmatpush2.bf16.msra.mxu0 0
      %2661 = vmatprep.subr.bf16.mxu0 0
      %2662 = vmatpush2.bf16.msra.mxu0 0
      %2663 = vmatprep.subr.bf16.mxu0 0
      %2664 = vmatpush2.bf16.msra.mxu0 0
      %2665 = vmatprep.subr.bf16.mxu0 0
      %2666 = vmatpush2.bf16.msra.mxu0 0
      %2667 = vmatprep.subr.bf16.mxu0 0
      %2668 = vmatpush2.bf16.msra.mxu0 0
      %2669 = vmatprep.subr.bf16.mxu0 0
      %2670 = vmatpush2.bf16.msra.mxu0 0
      %2671 = vmatprep.mubr.bf16.mxu0 0
      %2672 = vmatmul.mubr.bf16.gmra.mxu0 %v2574
      %v2673 = vpop.f32.mrf.mxu0
      %v2674 = vadd.f32 0.0, %v2673
      %v2675 = vpop.f32.mrf.mxu0
      %v2676 = vpop.f32.mrf.mxu0
      %v2677 = vpop.f32.mrf.mxu0
      %2678 = vdwg.mxu0
      %v2679 = vadd.f32 %v2487, %v2674
      %s2680 = scalar_lea.vmem %s1, 1
      %v2681 = vld [vmem:[%s2680] sm:$0x1]
      %v2682 = vmul.f32 %v2679, %v2679
      %v2683 = vsel %vm433, %v2682, 0.0
      %2684 = vadd.xlane.f32.xlu0 %v2683
      %v2685 = vpop.xlane.xlu0 %2684
      %v2686 = vmul.f32 %v2685, %v437
      %v2687 = vadd.f32 %v2686, 1e-06
      %v2688 = vrsqrt.pop %v2687
      %v2689 = vmul.f32 %v2679, %v2688
      %v2691 = vlaneseq
      %v2692 = vshrl.u32 %v2691, 7
      %v2693 = vsub.s32 0, %v2692
      %v2694 = vrot.slane %v2681, %v2693
      %v2696 = vmul.f32 %v2689, %v2694
      %v2697 = vpack.c.bf16 %v2696, %v2696
      %s2698 = scalar_lea.vmem %s4, 16
      %v2699 = vld [vmem:[%s2698] sm:$0xf]
      %v2700 = vld [vmem:[%s2698 + $0x4] sm:$0xf]
      %v2701 = vld [vmem:[%s2698 + $0x8] sm:$0xf]
      %v2702 = vld [vmem:[%s2698 + $0xc] sm:$0xf]
      %v2707 = vunpack.c.l.b16 %v2699
      %v2708 = vunpack.c.l.b16 %v2700
      %v2709 = vunpack.c.l.b16 %v2701
      %v2710 = vunpack.c.l.b16 %v2702
      %v2711 = vpack.c.b16 %v2708, %v2707
      %v2712 = vpack.c.b16 %v2710, %v2709
      %v2716 = vsel %vm433, %v2697, 0
      %2718 = vmatprep.subr.bf16.mxu0 0
      %2719 = vmatpush1.bf16.msra.mxu0 0
      %2720 = vmatprep.subr.bf16.mxu0 0
      %2721 = vmatpush1.bf16.msra.mxu0 0
      %2722 = vmatprep.subr.bf16.mxu0 0
      %2723 = vmatpush1.bf16.msra.mxu0 0
      %2724 = vmatprep.subr.bf16.mxu0 0
      %2725 = vmatpush1.bf16.msra.mxu0 0
      %2726 = vmatprep.subr.bf16.mxu0 0
      %2727 = vmatpush1.bf16.msra.mxu0 0
      %2728 = vmatprep.subr.bf16.mxu0 0
      %2729 = vmatpush1.bf16.msra.mxu0 0
      %2730 = vmatprep.subr.bf16.mxu0 0
      %2731 = vmatpush1.bf16.msra.mxu0 %v2712
      %2732 = vmatprep.subr.bf16.mxu0 0
      %2733 = vmatpush1.bf16.msra.mxu0 %v2711
      %2734 = vmatprep.subr.bf16.mxu0 0
      %2735 = vmatpush2.bf16.msra.mxu0 0
      %2736 = vmatprep.subr.bf16.mxu0 0
      %2737 = vmatpush2.bf16.msra.mxu0 0
      %2738 = vmatprep.subr.bf16.mxu0 0
      %2739 = vmatpush2.bf16.msra.mxu0 0
      %2740 = vmatprep.subr.bf16.mxu0 0
      %2741 = vmatpush2.bf16.msra.mxu0 0
      %2742 = vmatprep.subr.bf16.mxu0 0
      %2743 = vmatpush2.bf16.msra.mxu0 0
      %2744 = vmatprep.subr.bf16.mxu0 0
      %2745 = vmatpush2.bf16.msra.mxu0 0
      %2746 = vmatprep.subr.bf16.mxu0 0
      %2747 = vmatpush2.bf16.msra.mxu0 0
      %2748 = vmatprep.subr.bf16.mxu0 0
      %2749 = vmatpush2.bf16.msra.mxu0 0
      %2750 = vmatprep.mubr.bf16.mxu0 0
      %2751 = vmatmul.mubr.bf16.gmra.mxu0 %v2716
      %v2752 = vpop.f32.mrf.mxu0
      %v2753 = vadd.f32 0.0, %v2752
      %v2754 = vpop.f32.mrf.mxu0
      %v2755 = vpop.f32.mrf.mxu0
      %v2756 = vpop.f32.mrf.mxu0
      %2757 = vdwg.mxu0
      %s2758 = scalar_lea.vmem %s5, 16
      %v2759 = vld [vmem:[%s2758] sm:$0xf]
      %v2760 = vld [vmem:[%s2758 + $0x4] sm:$0xf]
      %v2761 = vld [vmem:[%s2758 + $0x8] sm:$0xf]
      %v2762 = vld [vmem:[%s2758 + $0xc] sm:$0xf]
      %v2767 = vunpack.c.l.b16 %v2759
      %v2768 = vunpack.c.l.b16 %v2760
      %v2769 = vunpack.c.l.b16 %v2761
      %v2770 = vunpack.c.l.b16 %v2762
      %v2771 = vpack.c.b16 %v2768, %v2767
      %v2772 = vpack.c.b16 %v2770, %v2769
      %2775 = vmatprep.subr.bf16.mxu0 0
      %2776 = vmatpush1.bf16.msra.mxu0 0
      %2777 = vmatprep.subr.bf16.mxu0 0
      %2778 = vmatpush1.bf16.msra.mxu0 0
      %2779 = vmatprep.subr.bf16.mxu0 0
      %2780 = vmatpush1.bf16.msra.mxu0 0
      %2781 = vmatprep.subr.bf16.mxu0 0
      %2782 = vmatpush1.bf16.msra.mxu0 0
      %2783 = vmatprep.subr.bf16.mxu0 0
      %2784 = vmatpush1.bf16.msra.mxu0 0
      %2785 = vmatprep.subr.bf16.mxu0 0
      %2786 = vmatpush1.bf16.msra.mxu0 0
      %2787 = vmatprep.subr.bf16.mxu0 0
      %2788 = vmatpush1.bf16.msra.mxu0 %v2772
      %2789 = vmatprep.subr.bf16.mxu0 0
      %2790 = vmatpush1.bf16.msra.mxu0 %v2771
      %2791 = vmatprep.subr.bf16.mxu0 0
      %2792 = vmatpush2.bf16.msra.mxu0 0
      %2793 = vmatprep.subr.bf16.mxu0 0
      %2794 = vmatpush2.bf16.msra.mxu0 0
      %2795 = vmatprep.subr.bf16.mxu0 0
      %2796 = vmatpush2.bf16.msra.mxu0 0
      %2797 = vmatprep.subr.bf16.mxu0 0
      %2798 = vmatpush2.bf16.msra.mxu0 0
      %2799 = vmatprep.subr.bf16.mxu0 0
      %2800 = vmatpush2.bf16.msra.mxu0 0
      %2801 = vmatprep.subr.bf16.mxu0 0
      %2802 = vmatpush2.bf16.msra.mxu0 0
      %2803 = vmatprep.subr.bf16.mxu0 0
      %2804 = vmatpush2.bf16.msra.mxu0 0
      %2805 = vmatprep.subr.bf16.mxu0 0
      %2806 = vmatpush2.bf16.msra.mxu0 0
      %2807 = vmatprep.mubr.bf16.mxu0 0
      %2808 = vmatmul.mubr.bf16.gmra.mxu0 %v2716
      %v2809 = vpop.f32.mrf.mxu0
      %v2810 = vadd.f32 0.0, %v2809
      %v2811 = vpop.f32.mrf.mxu0
      %v2812 = vpop.f32.mrf.mxu0
      %v2813 = vpop.f32.mrf.mxu0
      %2814 = vdwg.mxu0
      %v2815 = vmul.f32 %v2753, %v428
      %v2816 = vmul.f32 %v2810, %v429
      %v2817 = vadd.f32 %v2815, %v2816
      %2819 = vrot.lane.b32.xlu0 %v2817, 120
      %v2820 = vpop.permute.xlu0 %2819
      %2822 = vrot.lane.b32.xlu0 %v2817, 112
      %v2823 = vpop.permute.xlu0 %2822
      %2825 = vrot.lane.b32.xlu0 %v2817, 104
      %v2826 = vpop.permute.xlu0 %2825
      %v2828 = vcombine.low %v2817, %v2823
      %v2829 = vcombine.high %v2817, %v2823
      %v2831 = vunpack.c.l.s4 1983009808
      %v2832 = vunpack.c.0.s8 %v2831
      %v2833 = vlaneseq
      %v2834 = vshrl.u32 %v2833, 7
      %v2835 = vsub.s32 %v2832, %v2834
      %v2836 = vrot.slane %v2828, %v2835
      %v2838 = vunpack.c.l.s4 1983009808
      %v2839 = vunpack.c.0.s8 %v2838
      %v2840 = vlaneseq
      %v2841 = vshrl.u32 %v2840, 7
      %v2842 = vsub.s32 %v2839, %v2841
      %v2843 = vrot.slane %v2829, %v2842
      %v2844 = vcombine.low %v2820, %v2826
      %v2845 = vcombine.high %v2820, %v2826
      %v2847 = vunpack.c.l.s4 1983009808
      %v2848 = vunpack.c.0.s8 %v2847
      %v2849 = vlaneseq
      %v2850 = vshrl.u32 %v2849, 7
      %v2851 = vsub.s32 %v2848, %v2850
      %v2852 = vrot.slane %v2844, %v2851
      %v2854 = vunpack.c.l.s4 1983009808
      %v2855 = vunpack.c.0.s8 %v2854
      %v2856 = vlaneseq
      %v2857 = vshrl.u32 %v2856, 7
      %v2858 = vsub.s32 %v2855, %v2857
      %v2859 = vrot.slane %v2845, %v2858
      %v2860 = vcombine.low %v2836, %v2852
      %v2861 = vcombine.high %v2836, %v2852
      %v2863 = vunpack.c.l.s4 1934713408
      %v2864 = vunpack.c.0.s8 %v2863
      %v2865 = vlaneseq
      %v2866 = vshrl.u32 %v2865, 7
      %v2867 = vsub.s32 %v2864, %v2866
      %v2868 = vrot.slane %v2860, %v2867
      %v2870 = vunpack.c.l.s4 1934713408
      %v2871 = vunpack.c.0.s8 %v2870
      %v2872 = vlaneseq
      %v2873 = vshrl.u32 %v2872, 7
      %v2874 = vsub.s32 %v2871, %v2873
      %v2875 = vrot.slane %v2861, %v2874
      %v2876 = vcombine.low %v2843, %v2859
      %v2877 = vcombine.high %v2843, %v2859
      %v2879 = vunpack.c.l.s4 1934713408
      %v2880 = vunpack.c.0.s8 %v2879
      %v2881 = vlaneseq
      %v2882 = vshrl.u32 %v2881, 7
      %v2883 = vsub.s32 %v2880, %v2882
      %v2884 = vrot.slane %v2876, %v2883
      %v2886 = vunpack.c.l.s4 1934713408
      %v2887 = vunpack.c.0.s8 %v2886
      %v2888 = vlaneseq
      %v2889 = vshrl.u32 %v2888, 7
      %v2890 = vsub.s32 %v2887, %v2889
      %v2891 = vrot.slane %v2877, %v2890
      %v2892 = vcombine.high %v2868, 0.0
      %v2893 = vcombine.high %v2875, 0.0
      %v2894 = vcombine.high %v2884, 0.0
      %v2895 = vcombine.high %v2891, 0.0
      %2896 = vrot.lane.b32.xlu0 %v2817, 96
      %v2897 = vpop.permute.xlu0 %2896
      %2898 = vrot.lane.b32.xlu0 %v2820, 96
      %v2899 = vpop.permute.xlu0 %2898
      %2900 = vrot.lane.b32.xlu0 %v2823, 96
      %v2901 = vpop.permute.xlu0 %2900
      %2902 = vrot.lane.b32.xlu0 %v2826, 96
      %v2903 = vpop.permute.xlu0 %2902
      %v2908 = vcombine.low %v2897, %v2901
      %v2909 = vcombine.high %v2897, %v2901
      %v2911 = vunpack.c.l.s4 1983009808
      %v2912 = vunpack.c.0.s8 %v2911
      %v2913 = vlaneseq
      %v2914 = vshrl.u32 %v2913, 7
      %v2915 = vsub.s32 %v2912, %v2914
      %v2916 = vrot.slane %v2908, %v2915
      %v2918 = vunpack.c.l.s4 1983009808
      %v2919 = vunpack.c.0.s8 %v2918
      %v2920 = vlaneseq
      %v2921 = vshrl.u32 %v2920, 7
      %v2922 = vsub.s32 %v2919, %v2921
      %v2923 = vrot.slane %v2909, %v2922
      %v2924 = vcombine.low %v2899, %v2903
      %v2925 = vcombine.high %v2899, %v2903
      %v2927 = vunpack.c.l.s4 1983009808
      %v2928 = vunpack.c.0.s8 %v2927
      %v2929 = vlaneseq
      %v2930 = vshrl.u32 %v2929, 7
      %v2931 = vsub.s32 %v2928, %v2930
      %v2932 = vrot.slane %v2924, %v2931
      %v2934 = vunpack.c.l.s4 1983009808
      %v2935 = vunpack.c.0.s8 %v2934
      %v2936 = vlaneseq
      %v2937 = vshrl.u32 %v2936, 7
      %v2938 = vsub.s32 %v2935, %v2937
      %v2939 = vrot.slane %v2925, %v2938
      %v2940 = vcombine.low %v2916, %v2932
      %v2941 = vcombine.high %v2916, %v2932
      %v2943 = vunpack.c.l.s4 1934713408
      %v2944 = vunpack.c.0.s8 %v2943
      %v2945 = vlaneseq
      %v2946 = vshrl.u32 %v2945, 7
      %v2947 = vsub.s32 %v2944, %v2946
      %v2948 = vrot.slane %v2940, %v2947
      %v2950 = vunpack.c.l.s4 1934713408
      %v2951 = vunpack.c.0.s8 %v2950
      %v2952 = vlaneseq
      %v2953 = vshrl.u32 %v2952, 7
      %v2954 = vsub.s32 %v2951, %v2953
      %v2955 = vrot.slane %v2941, %v2954
      %v2956 = vcombine.low %v2923, %v2939
      %v2957 = vcombine.high %v2923, %v2939
      %v2959 = vunpack.c.l.s4 1934713408
      %v2960 = vunpack.c.0.s8 %v2959
      %v2961 = vlaneseq
      %v2962 = vshrl.u32 %v2961, 7
      %v2963 = vsub.s32 %v2960, %v2962
      %v2964 = vrot.slane %v2956, %v2963
      %v2966 = vunpack.c.l.s4 1934713408
      %v2967 = vunpack.c.0.s8 %v2966
      %v2968 = vlaneseq
      %v2969 = vshrl.u32 %v2968, 7
      %v2970 = vsub.s32 %v2967, %v2969
      %v2971 = vrot.slane %v2957, %v2970
      %v2972 = vcombine.high %v2948, 0.0
      %v2973 = vcombine.high %v2955, 0.0
      %v2974 = vcombine.high %v2964, 0.0
      %v2975 = vcombine.high %v2971, 0.0
      %2976 = vrot.lane.b32.xlu0 %v2817, 64
      %v2977 = vpop.permute.xlu0 %2976
      %2978 = vrot.lane.b32.xlu0 %v2820, 64
      %v2979 = vpop.permute.xlu0 %2978
      %2980 = vrot.lane.b32.xlu0 %v2823, 64
      %v2981 = vpop.permute.xlu0 %2980
      %2982 = vrot.lane.b32.xlu0 %v2826, 64
      %v2983 = vpop.permute.xlu0 %2982
      %v2988 = vcombine.low %v2977, %v2981
      %v2989 = vcombine.high %v2977, %v2981
      %v2991 = vunpack.c.l.s4 1983009808
      %v2992 = vunpack.c.0.s8 %v2991
      %v2993 = vlaneseq
      %v2994 = vshrl.u32 %v2993, 7
      %v2995 = vsub.s32 %v2992, %v2994
      %v2996 = vrot.slane %v2988, %v2995
      %v2998 = vunpack.c.l.s4 1983009808
      %v2999 = vunpack.c.0.s8 %v2998
      %v3000 = vlaneseq
      %v3001 = vshrl.u32 %v3000, 7
      %v3002 = vsub.s32 %v2999, %v3001
      %v3003 = vrot.slane %v2989, %v3002
      %v3004 = vcombine.low %v2979, %v2983
      %v3005 = vcombine.high %v2979, %v2983
      %v3007 = vunpack.c.l.s4 1983009808
      %v3008 = vunpack.c.0.s8 %v3007
      %v3009 = vlaneseq
      %v3010 = vshrl.u32 %v3009, 7
      %v3011 = vsub.s32 %v3008, %v3010
      %v3012 = vrot.slane %v3004, %v3011
      %v3014 = vunpack.c.l.s4 1983009808
      %v3015 = vunpack.c.0.s8 %v3014
      %v3016 = vlaneseq
      %v3017 = vshrl.u32 %v3016, 7
      %v3018 = vsub.s32 %v3015, %v3017
      %v3019 = vrot.slane %v3005, %v3018
      %v3020 = vcombine.low %v2996, %v3012
      %v3021 = vcombine.high %v2996, %v3012
      %v3023 = vunpack.c.l.s4 1934713408
      %v3024 = vunpack.c.0.s8 %v3023
      %v3025 = vlaneseq
      %v3026 = vshrl.u32 %v3025, 7
      %v3027 = vsub.s32 %v3024, %v3026
      %v3028 = vrot.slane %v3020, %v3027
      %v3030 = vunpack.c.l.s4 1934713408
      %v3031 = vunpack.c.0.s8 %v3030
      %v3032 = vlaneseq
      %v3033 = vshrl.u32 %v3032, 7
      %v3034 = vsub.s32 %v3031, %v3033
      %v3035 = vrot.slane %v3021, %v3034
      %v3036 = vcombine.low %v3003, %v3019
      %v3037 = vcombine.high %v3003, %v3019
      %v3039 = vunpack.c.l.s4 1934713408
      %v3040 = vunpack.c.0.s8 %v3039
      %v3041 = vlaneseq
      %v3042 = vshrl.u32 %v3041, 7
      %v3043 = vsub.s32 %v3040, %v3042
      %v3044 = vrot.slane %v3036, %v3043
      %v3046 = vunpack.c.l.s4 1934713408
      %v3047 = vunpack.c.0.s8 %v3046
      %v3048 = vlaneseq
      %v3049 = vshrl.u32 %v3048, 7
      %v3050 = vsub.s32 %v3047, %v3049
      %v3051 = vrot.slane %v3037, %v3050
      %v3052 = vcombine.high %v3028, 0.0
      %v3053 = vcombine.high %v3035, 0.0
      %v3054 = vcombine.high %v3044, 0.0
      %v3055 = vcombine.high %v3051, 0.0
      %v3056 = vpack.c.bf16 %v2868, %v2868
      %v3057 = vpack.c.bf16 %v2892, %v2892
      %v3058 = vpack.c.bf16 %v2875, %v2875
      %v3059 = vpack.c.bf16 %v2893, %v2893
      %v3060 = vpack.c.bf16 %v2884, %v2884
      %v3061 = vpack.c.bf16 %v2894, %v2894
      %v3062 = vpack.c.bf16 %v2891, %v2891
      %v3063 = vpack.c.bf16 %v2895, %v2895
      %v3064 = vpack.c.bf16 %v2948, %v2948
      %v3065 = vpack.c.bf16 %v2972, %v2972
      %v3066 = vpack.c.bf16 %v2955, %v2955
      %v3067 = vpack.c.bf16 %v2973, %v2973
      %v3068 = vpack.c.bf16 %v2964, %v2964
      %v3069 = vpack.c.bf16 %v2974, %v2974
      %v3070 = vpack.c.bf16 %v2971, %v2971
      %v3071 = vpack.c.bf16 %v2975, %v2975
      %v3072 = vcombine.low %v3056, %v3060
      %v3074 = vunpack.c.l.s4 1983009808
      %v3075 = vunpack.c.0.s8 %v3074
      %v3076 = vlaneseq
      %v3077 = vshrl.u32 %v3076, 7
      %v3078 = vsub.s32 %v3075, %v3077
      %v3079 = vrot.slane %v3072, %v3078
      %v3080 = vcombine.low %v3058, %v3062
      %v3082 = vunpack.c.l.s4 1983009808
      %v3083 = vunpack.c.0.s8 %v3082
      %v3084 = vlaneseq
      %v3085 = vshrl.u32 %v3084, 7
      %v3086 = vsub.s32 %v3083, %v3085
      %v3087 = vrot.slane %v3080, %v3086
      %v3088 = vcombine.low %v3079, %v3087
      %v3090 = vunpack.c.l.s4 1934713408
      %v3091 = vunpack.c.0.s8 %v3090
      %v3092 = vlaneseq
      %v3093 = vshrl.u32 %v3092, 7
      %v3094 = vsub.s32 %v3091, %v3093
      %v3095 = vrot.slane %v3088, %v3094
      %v3096 = vcombine.high %v3095, 0
      %v3097 = vcombine.low %v3057, %v3061
      %v3099 = vunpack.c.l.s4 1983009808
      %v3100 = vunpack.c.0.s8 %v3099
      %v3101 = vlaneseq
      %v3102 = vshrl.u32 %v3101, 7
      %v3103 = vsub.s32 %v3100, %v3102
      %v3104 = vrot.slane %v3097, %v3103
      %v3105 = vcombine.low %v3059, %v3063
      %v3107 = vunpack.c.l.s4 1983009808
      %v3108 = vunpack.c.0.s8 %v3107
      %v3109 = vlaneseq
      %v3110 = vshrl.u32 %v3109, 7
      %v3111 = vsub.s32 %v3108, %v3110
      %v3112 = vrot.slane %v3105, %v3111
      %v3113 = vcombine.low %v3104, %v3112
      %v3115 = vunpack.c.l.s4 1934713408
      %v3116 = vunpack.c.0.s8 %v3115
      %v3117 = vlaneseq
      %v3118 = vshrl.u32 %v3117, 7
      %v3119 = vsub.s32 %v3116, %v3118
      %v3120 = vrot.slane %v3113, %v3119
      %v3121 = vcombine.high %v3120, 0
      %v3124 = vpack.i.b16 %v3120, %v3095
      %v3125 = vshrl.u32 %v3095, 16
      %v3126 = vshrl.u32 %v3120, 16
      %v3127 = vpack.i.b16 %v3126, %v3125
      %v3130 = vpack.i.b16 %v3121, %v3096
      %v3131 = vshrl.u32 %v3096, 16
      %v3132 = vshrl.u32 %v3121, 16
      %v3133 = vpack.i.b16 %v3132, %v3131
      %3134 = vxpose.xlu0.c.b16.start [1/8] %v3064, 128
      %3135 = vxpose.xlu0.c.b16.cont [2/8] 0, 128
      %3136 = vxpose.xlu0.c.b16.cont [3/8] 0, 128
      %3137 = vxpose.xlu0.c.b16.cont [4/8] 0, 128
      %3138 = vxpose.xlu0.c.b16.cont [5/8] 0, 128
      %3139 = vxpose.xlu0.c.b16.cont [6/8] 0, 128
      %3140 = vxpose.xlu0.c.b16.cont [7/8] 0, 128
      %3141 = vxpose.xlu0.c.b16.end [8/8] 0, 128
      %v3142 = vpop.trf.xlu0
      %v3143 = vpop.trf.xlu0
      %v3144 = vpop.trf.xlu0
      %v3145 = vpop.trf.xlu0
      %v3146 = vpop.trf.xlu0
      %v3147 = vpop.trf.xlu0
      %v3148 = vpop.trf.xlu0
      %v3149 = vpop.trf.xlu0
      %3150 = vxpose.xlu0.c.b16.start [1/8] %v3065, 128
      %3151 = vxpose.xlu0.c.b16.cont [2/8] 0, 128
      %3152 = vxpose.xlu0.c.b16.cont [3/8] 0, 128
      %3153 = vxpose.xlu0.c.b16.cont [4/8] 0, 128
      %3154 = vxpose.xlu0.c.b16.cont [5/8] 0, 128
      %3155 = vxpose.xlu0.c.b16.cont [6/8] 0, 128
      %3156 = vxpose.xlu0.c.b16.cont [7/8] 0, 128
      %3157 = vxpose.xlu0.c.b16.end [8/8] 0, 128
      %v3158 = vpop.trf.xlu0
      %v3159 = vpop.trf.xlu0
      %v3160 = vpop.trf.xlu0
      %v3161 = vpop.trf.xlu0
      %v3162 = vpop.trf.xlu0
      %v3163 = vpop.trf.xlu0
      %v3164 = vpop.trf.xlu0
      %v3165 = vpop.trf.xlu0
      %3166 = vxpose.xlu0.c.b16.start [1/8] %v3066, 128
      %3167 = vxpose.xlu0.c.b16.cont [2/8] 0, 128
      %3168 = vxpose.xlu0.c.b16.cont [3/8] 0, 128
      %3169 = vxpose.xlu0.c.b16.cont [4/8] 0, 128
      %3170 = vxpose.xlu0.c.b16.cont [5/8] 0, 128
      %3171 = vxpose.xlu0.c.b16.cont [6/8] 0, 128
      %3172 = vxpose.xlu0.c.b16.cont [7/8] 0, 128
      %3173 = vxpose.xlu0.c.b16.end [8/8] 0, 128
      %v3174 = vpop.trf.xlu0
      %v3175 = vpop.trf.xlu0
      %v3176 = vpop.trf.xlu0
      %v3177 = vpop.trf.xlu0
      %v3178 = vpop.trf.xlu0
      %v3179 = vpop.trf.xlu0
      %v3180 = vpop.trf.xlu0
      %v3181 = vpop.trf.xlu0
      %3182 = vxpose.xlu0.c.b16.start [1/8] %v3067, 128
      %3183 = vxpose.xlu0.c.b16.cont [2/8] 0, 128
      %3184 = vxpose.xlu0.c.b16.cont [3/8] 0, 128
      %3185 = vxpose.xlu0.c.b16.cont [4/8] 0, 128
      %3186 = vxpose.xlu0.c.b16.cont [5/8] 0, 128
      %3187 = vxpose.xlu0.c.b16.cont [6/8] 0, 128
      %3188 = vxpose.xlu0.c.b16.cont [7/8] 0, 128
      %3189 = vxpose.xlu0.c.b16.end [8/8] 0, 128
      %v3190 = vpop.trf.xlu0
      %v3191 = vpop.trf.xlu0
      %v3192 = vpop.trf.xlu0
      %v3193 = vpop.trf.xlu0
      %v3194 = vpop.trf.xlu0
      %v3195 = vpop.trf.xlu0
      %v3196 = vpop.trf.xlu0
      %v3197 = vpop.trf.xlu0
      %3198 = vxpose.xlu0.c.b16.start [1/8] %v3068, 128
      %3199 = vxpose.xlu0.c.b16.cont [2/8] 0, 128
      %3200 = vxpose.xlu0.c.b16.cont [3/8] 0, 128
      %3201 = vxpose.xlu0.c.b16.cont [4/8] 0, 128
      %3202 = vxpose.xlu0.c.b16.cont [5/8] 0, 128
      %3203 = vxpose.xlu0.c.b16.cont [6/8] 0, 128
      %3204 = vxpose.xlu0.c.b16.cont [7/8] 0, 128
      %3205 = vxpose.xlu0.c.b16.end [8/8] 0, 128
      %v3206 = vpop.trf.xlu0
      %v3207 = vpop.trf.xlu0
      %v3208 = vpop.trf.xlu0
      %v3209 = vpop.trf.xlu0
      %v3210 = vpop.trf.xlu0
      %v3211 = vpop.trf.xlu0
      %v3212 = vpop.trf.xlu0
      %v3213 = vpop.trf.xlu0
      %3214 = vxpose.xlu0.c.b16.start [1/8] %v3069, 128
      %3215 = vxpose.xlu0.c.b16.cont [2/8] 0, 128
      %3216 = vxpose.xlu0.c.b16.cont [3/8] 0, 128
      %3217 = vxpose.xlu0.c.b16.cont [4/8] 0, 128
      %3218 = vxpose.xlu0.c.b16.cont [5/8] 0, 128
      %3219 = vxpose.xlu0.c.b16.cont [6/8] 0, 128
      %3220 = vxpose.xlu0.c.b16.cont [7/8] 0, 128
      %3221 = vxpose.xlu0.c.b16.end [8/8] 0, 128
      %v3222 = vpop.trf.xlu0
      %v3223 = vpop.trf.xlu0
      %v3224 = vpop.trf.xlu0
      %v3225 = vpop.trf.xlu0
      %v3226 = vpop.trf.xlu0
      %v3227 = vpop.trf.xlu0
      %v3228 = vpop.trf.xlu0
      %v3229 = vpop.trf.xlu0
      %3230 = vxpose.xlu0.c.b16.start [1/8] %v3070, 128
      %3231 = vxpose.xlu0.c.b16.cont [2/8] 0, 128
      %3232 = vxpose.xlu0.c.b16.cont [3/8] 0, 128
      %3233 = vxpose.xlu0.c.b16.cont [4/8] 0, 128
      %3234 = vxpose.xlu0.c.b16.cont [5/8] 0, 128
      %3235 = vxpose.xlu0.c.b16.cont [6/8] 0, 128
      %3236 = vxpose.xlu0.c.b16.cont [7/8] 0, 128
      %3237 = vxpose.xlu0.c.b16.end [8/8] 0, 128
      %v3238 = vpop.trf.xlu0
      %v3239 = vpop.trf.xlu0
      %v3240 = vpop.trf.xlu0
      %v3241 = vpop.trf.xlu0
      %v3242 = vpop.trf.xlu0
      %v3243 = vpop.trf.xlu0
      %v3244 = vpop.trf.xlu0
      %v3245 = vpop.trf.xlu0
      %3246 = vxpose.xlu0.c.b16.start [1/8] %v3071, 128
      %3247 = vxpose.xlu0.c.b16.cont [2/8] 0, 128
      %3248 = vxpose.xlu0.c.b16.cont [3/8] 0, 128
      %3249 = vxpose.xlu0.c.b16.cont [4/8] 0, 128
      %3250 = vxpose.xlu0.c.b16.cont [5/8] 0, 128
      %3251 = vxpose.xlu0.c.b16.cont [6/8] 0, 128
      %3252 = vxpose.xlu0.c.b16.cont [7/8] 0, 128
      %3253 = vxpose.xlu0.c.b16.end [8/8] 0, 128
      %v3254 = vpop.trf.xlu0
      %v3255 = vpop.trf.xlu0
      %v3256 = vpop.trf.xlu0
      %v3257 = vpop.trf.xlu0
      %v3258 = vpop.trf.xlu0
      %v3259 = vpop.trf.xlu0
      %v3260 = vpop.trf.xlu0
      %v3261 = vpop.trf.xlu0
      %v3262 = vcombine.low %v3142, %v3206
      %v3264 = vunpack.c.l.s4 1983009808
      %v3265 = vunpack.c.0.s8 %v3264
      %v3266 = vlaneseq
      %v3267 = vshrl.u32 %v3266, 7
      %v3268 = vsub.s32 %v3265, %v3267
      %v3269 = vrot.slane %v3262, %v3268
      %v3270 = vcombine.low %v3174, %v3238
      %v3272 = vunpack.c.l.s4 1983009808
      %v3273 = vunpack.c.0.s8 %v3272
      %v3274 = vlaneseq
      %v3275 = vshrl.u32 %v3274, 7
      %v3276 = vsub.s32 %v3273, %v3275
      %v3277 = vrot.slane %v3270, %v3276
      %v3278 = vcombine.low %v3269, %v3277
      %v3279 = vcombine.high %v3269, %v3277
      %v3281 = vunpack.c.l.s4 1934713408
      %v3282 = vunpack.c.0.s8 %v3281
      %v3283 = vlaneseq
      %v3284 = vshrl.u32 %v3283, 7
      %v3285 = vsub.s32 %v3282, %v3284
      %v3286 = vrot.slane %v3278, %v3285
      %v3288 = vunpack.c.l.s4 1934713408
      %v3289 = vunpack.c.0.s8 %v3288
      %v3290 = vlaneseq
      %v3291 = vshrl.u32 %v3290, 7
      %v3292 = vsub.s32 %v3289, %v3291
      %v3293 = vrot.slane %v3279, %v3292
      %v3294 = vcombine.high %v3286, 0
      %v3295 = vcombine.high %v3293, 0
      %v3296 = vcombine.low %v3158, %v3222
      %v3298 = vunpack.c.l.s4 1983009808
      %v3299 = vunpack.c.0.s8 %v3298
      %v3300 = vlaneseq
      %v3301 = vshrl.u32 %v3300, 7
      %v3302 = vsub.s32 %v3299, %v3301
      %v3303 = vrot.slane %v3296, %v3302
      %v3304 = vcombine.low %v3190, %v3254
      %v3306 = vunpack.c.l.s4 1983009808
      %v3307 = vunpack.c.0.s8 %v3306
      %v3308 = vlaneseq
      %v3309 = vshrl.u32 %v3308, 7
      %v3310 = vsub.s32 %v3307, %v3309
      %v3311 = vrot.slane %v3304, %v3310
      %v3312 = vcombine.low %v3303, %v3311
      %v3313 = vcombine.high %v3303, %v3311
      %v3315 = vunpack.c.l.s4 1934713408
      %v3316 = vunpack.c.0.s8 %v3315
      %v3317 = vlaneseq
      %v3318 = vshrl.u32 %v3317, 7
      %v3319 = vsub.s32 %v3316, %v3318
      %v3320 = vrot.slane %v3312, %v3319
      %v3322 = vunpack.c.l.s4 1934713408
      %v3323 = vunpack.c.0.s8 %v3322
      %v3324 = vlaneseq
      %v3325 = vshrl.u32 %v3324, 7
      %v3326 = vsub.s32 %v3323, %v3325
      %v3327 = vrot.slane %v3313, %v3326
      %v3328 = vcombine.high %v3320, 0
      %v3329 = vcombine.high %v3327, 0
      %v3332 = vpack.i.b16 %v3320, %v3286
      %v3334 = vshrl.u32 %v3286, 16
      %v3335 = vshrl.u32 %v3320, 16
      %v3336 = vpack.i.b16 %v3335, %v3334
      %v3340 = vpack.i.b16 %v3328, %v3294
      %v3342 = vshrl.u32 %v3294, 16
      %v3343 = vshrl.u32 %v3328, 16
      %v3344 = vpack.i.b16 %v3343, %v3342
      %v3348 = vpack.i.b16 %v3327, %v3293
      %v3350 = vshrl.u32 %v3293, 16
      %v3351 = vshrl.u32 %v3327, 16
      %v3352 = vpack.i.b16 %v3351, %v3350
      %v3356 = vpack.i.b16 %v3329, %v3295
      %v3358 = vshrl.u32 %v3295, 16
      %v3359 = vshrl.u32 %v3329, 16
      %v3360 = vpack.i.b16 %v3359, %v3358
      %3362 = vxpose.xlu0.c.b16.start [1/8] %v3332, 128
      %3363 = vxpose.xlu0.c.b16.cont [2/8] 0, 128
      %3364 = vxpose.xlu0.c.b16.cont [3/8] 0, 128
      %3365 = vxpose.xlu0.c.b16.cont [4/8] 0, 128
      %3366 = vxpose.xlu0.c.b16.cont [5/8] 0, 128
      %3367 = vxpose.xlu0.c.b16.cont [6/8] 0, 128
      %3368 = vxpose.xlu0.c.b16.cont [7/8] 0, 128
      %3369 = vxpose.xlu0.c.b16.end [8/8] 0, 128
      %v3370 = vpop.trf.xlu0
      %v3371 = vpop.trf.xlu0
      %v3372 = vpop.trf.xlu0
      %v3373 = vpop.trf.xlu0
      %v3374 = vpop.trf.xlu0
      %v3375 = vpop.trf.xlu0
      %v3376 = vpop.trf.xlu0
      %v3377 = vpop.trf.xlu0
      %3378 = vxpose.xlu0.c.b16.start [1/8] %v3336, 128
      %3379 = vxpose.xlu0.c.b16.cont [2/8] 0, 128
      %3380 = vxpose.xlu0.c.b16.cont [3/8] 0, 128
      %3381 = vxpose.xlu0.c.b16.cont [4/8] 0, 128
      %3382 = vxpose.xlu0.c.b16.cont [5/8] 0, 128
      %3383 = vxpose.xlu0.c.b16.cont [6/8] 0, 128
      %3384 = vxpose.xlu0.c.b16.cont [7/8] 0, 128
      %3385 = vxpose.xlu0.c.b16.end [8/8] 0, 128
      %v3386 = vpop.trf.xlu0
      %v3387 = vpop.trf.xlu0
      %v3388 = vpop.trf.xlu0
      %v3389 = vpop.trf.xlu0
      %v3390 = vpop.trf.xlu0
      %v3391 = vpop.trf.xlu0
      %v3392 = vpop.trf.xlu0
      %v3393 = vpop.trf.xlu0
      %3394 = vxpose.xlu0.c.b16.start [1/8] %v3340, 128
      %3395 = vxpose.xlu0.c.b16.cont [2/8] 0, 128
      %3396 = vxpose.xlu0.c.b16.cont [3/8] 0, 128
      %3397 = vxpose.xlu0.c.b16.cont [4/8] 0, 128
      %3398 = vxpose.xlu0.c.b16.cont [5/8] 0, 128
      %3399 = vxpose.xlu0.c.b16.cont [6/8] 0, 128
      %3400 = vxpose.xlu0.c.b16.cont [7/8] 0, 128
      %3401 = vxpose.xlu0.c.b16.end [8/8] 0, 128
      %v3402 = vpop.trf.xlu0
      %v3403 = vpop.trf.xlu0
      %v3404 = vpop.trf.xlu0
      %v3405 = vpop.trf.xlu0
      %v3406 = vpop.trf.xlu0
      %v3407 = vpop.trf.xlu0
      %v3408 = vpop.trf.xlu0
      %v3409 = vpop.trf.xlu0
      %3410 = vxpose.xlu0.c.b16.start [1/8] %v3344, 128
      %3411 = vxpose.xlu0.c.b16.cont [2/8] 0, 128
      %3412 = vxpose.xlu0.c.b16.cont [3/8] 0, 128
      %3413 = vxpose.xlu0.c.b16.cont [4/8] 0, 128
      %3414 = vxpose.xlu0.c.b16.cont [5/8] 0, 128
      %3415 = vxpose.xlu0.c.b16.cont [6/8] 0, 128
      %3416 = vxpose.xlu0.c.b16.cont [7/8] 0, 128
      %3417 = vxpose.xlu0.c.b16.end [8/8] 0, 128
      %v3418 = vpop.trf.xlu0
      %v3419 = vpop.trf.xlu0
      %v3420 = vpop.trf.xlu0
      %v3421 = vpop.trf.xlu0
      %v3422 = vpop.trf.xlu0
      %v3423 = vpop.trf.xlu0
      %v3424 = vpop.trf.xlu0
      %v3425 = vpop.trf.xlu0
      %3426 = vxpose.xlu0.c.b16.start [1/8] %v3348, 128
      %3427 = vxpose.xlu0.c.b16.cont [2/8] 0, 128
      %3428 = vxpose.xlu0.c.b16.cont [3/8] 0, 128
      %3429 = vxpose.xlu0.c.b16.cont [4/8] 0, 128
      %3430 = vxpose.xlu0.c.b16.cont [5/8] 0, 128
      %3431 = vxpose.xlu0.c.b16.cont [6/8] 0, 128
      %3432 = vxpose.xlu0.c.b16.cont [7/8] 0, 128
      %3433 = vxpose.xlu0.c.b16.end [8/8] 0, 128
      %v3434 = vpop.trf.xlu0
      %v3435 = vpop.trf.xlu0
      %v3436 = vpop.trf.xlu0
      %v3437 = vpop.trf.xlu0
      %v3438 = vpop.trf.xlu0
      %v3439 = vpop.trf.xlu0
      %v3440 = vpop.trf.xlu0
      %v3441 = vpop.trf.xlu0
      %3442 = vxpose.xlu0.c.b16.start [1/8] %v3352, 128
      %3443 = vxpose.xlu0.c.b16.cont [2/8] 0, 128
      %3444 = vxpose.xlu0.c.b16.cont [3/8] 0, 128
      %3445 = vxpose.xlu0.c.b16.cont [4/8] 0, 128
      %3446 = vxpose.xlu0.c.b16.cont [5/8] 0, 128
      %3447 = vxpose.xlu0.c.b16.cont [6/8] 0, 128
      %3448 = vxpose.xlu0.c.b16.cont [7/8] 0, 128
      %3449 = vxpose.xlu0.c.b16.end [8/8] 0, 128
      %v3450 = vpop.trf.xlu0
      %v3451 = vpop.trf.xlu0
      %v3452 = vpop.trf.xlu0
      %v3453 = vpop.trf.xlu0
      %v3454 = vpop.trf.xlu0
      %v3455 = vpop.trf.xlu0
      %v3456 = vpop.trf.xlu0
      %v3457 = vpop.trf.xlu0
      %3458 = vxpose.xlu0.c.b16.start [1/8] %v3356, 128
      %3459 = vxpose.xlu0.c.b16.cont [2/8] 0, 128
      %3460 = vxpose.xlu0.c.b16.cont [3/8] 0, 128
      %3461 = vxpose.xlu0.c.b16.cont [4/8] 0, 128
      %3462 = vxpose.xlu0.c.b16.cont [5/8] 0, 128
      %3463 = vxpose.xlu0.c.b16.cont [6/8] 0, 128
      %3464 = vxpose.xlu0.c.b16.cont [7/8] 0, 128
      %3465 = vxpose.xlu0.c.b16.end [8/8] 0, 128
      %v3466 = vpop.trf.xlu0
      %v3467 = vpop.trf.xlu0
      %v3468 = vpop.trf.xlu0
      %v3469 = vpop.trf.xlu0
      %v3470 = vpop.trf.xlu0
      %v3471 = vpop.trf.xlu0
      %v3472 = vpop.trf.xlu0
      %v3473 = vpop.trf.xlu0
      %3474 = vxpose.xlu0.c.b16.start [1/8] %v3360, 128
      %3475 = vxpose.xlu0.c.b16.cont [2/8] 0, 128
      %3476 = vxpose.xlu0.c.b16.cont [3/8] 0, 128
      %3477 = vxpose.xlu0.c.b16.cont [4/8] 0, 128
      %3478 = vxpose.xlu0.c.b16.cont [5/8] 0, 128
      %3479 = vxpose.xlu0.c.b16.cont [6/8] 0, 128
      %3480 = vxpose.xlu0.c.b16.cont [7/8] 0, 128
      %3481 = vxpose.xlu0.c.b16.end [8/8] 0, 128
      %v3482 = vpop.trf.xlu0
      %v3483 = vpop.trf.xlu0
      %v3484 = vpop.trf.xlu0
      %v3485 = vpop.trf.xlu0
      %v3486 = vpop.trf.xlu0
      %v3487 = vpop.trf.xlu0
      %v3488 = vpop.trf.xlu0
      %v3489 = vpop.trf.xlu0
      %v3490 = vcombine.low %v3370, %v3434
      %v3492 = vunpack.c.l.s4 1983009808
      %v3493 = vunpack.c.0.s8 %v3492
      %v3494 = vlaneseq
      %v3495 = vshrl.u32 %v3494, 7
      %v3496 = vsub.s32 %v3493, %v3495
      %v3497 = vrot.slane %v3490, %v3496
      %v3498 = vcombine.low %v3402, %v3466
      %v3500 = vunpack.c.l.s4 1983009808
      %v3501 = vunpack.c.0.s8 %v3500
      %v3502 = vlaneseq
      %v3503 = vshrl.u32 %v3502, 7
      %v3504 = vsub.s32 %v3501, %v3503
      %v3505 = vrot.slane %v3498, %v3504
      %v3506 = vcombine.low %v3497, %v3505
      %v3508 = vunpack.c.l.s4 1934713408
      %v3509 = vunpack.c.0.s8 %v3508
      %v3510 = vlaneseq
      %v3511 = vshrl.u32 %v3510, 7
      %v3512 = vsub.s32 %v3509, %v3511
      %v3513 = vrot.slane %v3506, %v3512
      %v3514 = vcombine.high %v3513, 0
      %v3515 = vcombine.low %v3386, %v3450
      %v3517 = vunpack.c.l.s4 1983009808
      %v3518 = vunpack.c.0.s8 %v3517
      %v3519 = vlaneseq
      %v3520 = vshrl.u32 %v3519, 7
      %v3521 = vsub.s32 %v3518, %v3520
      %v3522 = vrot.slane %v3515, %v3521
      %v3523 = vcombine.low %v3418, %v3482
      %v3525 = vunpack.c.l.s4 1983009808
      %v3526 = vunpack.c.0.s8 %v3525
      %v3527 = vlaneseq
      %v3528 = vshrl.u32 %v3527, 7
      %v3529 = vsub.s32 %v3526, %v3528
      %v3530 = vrot.slane %v3523, %v3529
      %v3531 = vcombine.low %v3522, %v3530
      %v3533 = vunpack.c.l.s4 1934713408
      %v3534 = vunpack.c.0.s8 %v3533
      %v3535 = vlaneseq
      %v3536 = vshrl.u32 %v3535, 7
      %v3537 = vsub.s32 %v3534, %v3536
      %v3538 = vrot.slane %v3531, %v3537
      %v3539 = vcombine.high %v3538, 0
      %v3542 = vpack.i.b16 %v3538, %v3513
      %v3543 = vshrl.u32 %v3513, 16
      %v3544 = vshrl.u32 %v3538, 16
      %v3545 = vpack.i.b16 %v3544, %v3543
      %v3548 = vpack.i.b16 %v3539, %v3514
      %v3549 = vshrl.u32 %v3514, 16
      %v3550 = vshrl.u32 %v3539, 16
      %v3551 = vpack.i.b16 %v3550, %v3549
      %v3553 = vsel %vm1302, %v3124, 0
      %v3556 = vsel %vm1306, %v3542, 0
      %3558 = vmatprep.subr.bf16.mxu0 0
      %3559 = vmatpush1.bf16.msra.mxu0 0
      %3560 = vmatprep.subr.bf16.mxu0 0
      %3561 = vmatpush1.bf16.msra.mxu0 0
      %3562 = vmatprep.subr.bf16.mxu0 0
      %3563 = vmatpush1.bf16.msra.mxu0 0
      %3564 = vmatprep.subr.bf16.mxu0 0
      %3565 = vmatpush1.bf16.msra.mxu0 0
      %3566 = vmatprep.subr.bf16.mxu0 0
      %3567 = vmatpush1.bf16.msra.mxu0 0
      %3568 = vmatprep.subr.bf16.mxu0 0
      %3569 = vmatpush1.bf16.msra.mxu0 0
      %3570 = vmatprep.subr.bf16.mxu0 0
      %3571 = vmatpush1.bf16.msra.mxu0 0
      %3572 = vmatprep.subr.bf16.mxu0 0
      %3573 = vmatpush1.bf16.msra.mxu0 %v3556
      %3574 = vmatprep.subr.bf16.mxu0 0
      %3575 = vmatpush2.bf16.msra.mxu0 0
      %3576 = vmatprep.subr.bf16.mxu0 0
      %3577 = vmatpush2.bf16.msra.mxu0 0
      %3578 = vmatprep.subr.bf16.mxu0 0
      %3579 = vmatpush2.bf16.msra.mxu0 0
      %3580 = vmatprep.subr.bf16.mxu0 0
      %3581 = vmatpush2.bf16.msra.mxu0 0
      %3582 = vmatprep.subr.bf16.mxu0 0
      %3583 = vmatpush2.bf16.msra.mxu0 0
      %3584 = vmatprep.subr.bf16.mxu0 0
      %3585 = vmatpush2.bf16.msra.mxu0 0
      %3586 = vmatprep.subr.bf16.mxu0 0
      %3587 = vmatpush2.bf16.msra.mxu0 0
      %3588 = vmatprep.subr.bf16.mxu0 0
      %3589 = vmatpush2.bf16.msra.mxu0 0
      %3590 = vmatprep.mubr.bf16.mxu0 0
      %3591 = vmatmul.mubr.bf16.gmra.mxu0 %v3553
      %v3592 = vpop.f32.mrf.mxu0
      %v3593 = vadd.f32 %v430, %v3592
      %v3594 = vpop.f32.mrf.mxu0
      %v3595 = vpop.f32.mrf.mxu0
      %v3596 = vpop.f32.mrf.mxu0
      %3597 = vdwg.mxu0
      %v3599 = vsel %vm1302, %v3127, 0
      %v3602 = vsel %vm1306, %v3545, 0
      %3604 = vmatprep.subr.bf16.mxu0 0
      %3605 = vmatpush1.bf16.msra.mxu0 0
      %3606 = vmatprep.subr.bf16.mxu0 0
      %3607 = vmatpush1.bf16.msra.mxu0 0
      %3608 = vmatprep.subr.bf16.mxu0 0
      %3609 = vmatpush1.bf16.msra.mxu0 0
      %3610 = vmatprep.subr.bf16.mxu0 0
      %3611 = vmatpush1.bf16.msra.mxu0 0
      %3612 = vmatprep.subr.bf16.mxu0 0
      %3613 = vmatpush1.bf16.msra.mxu0 0
      %3614 = vmatprep.subr.bf16.mxu0 0
      %3615 = vmatpush1.bf16.msra.mxu0 0
      %3616 = vmatprep.subr.bf16.mxu0 0
      %3617 = vmatpush1.bf16.msra.mxu0 0
      %3618 = vmatprep.subr.bf16.mxu0 0
      %3619 = vmatpush1.bf16.msra.mxu0 %v3602
      %3620 = vmatprep.subr.bf16.mxu0 0
      %3621 = vmatpush2.bf16.msra.mxu0 0
      %3622 = vmatprep.subr.bf16.mxu0 0
      %3623 = vmatpush2.bf16.msra.mxu0 0
      %3624 = vmatprep.subr.bf16.mxu0 0
      %3625 = vmatpush2.bf16.msra.mxu0 0
      %3626 = vmatprep.subr.bf16.mxu0 0
      %3627 = vmatpush2.bf16.msra.mxu0 0
      %3628 = vmatprep.subr.bf16.mxu0 0
      %3629 = vmatpush2.bf16.msra.mxu0 0
      %3630 = vmatprep.subr.bf16.mxu0 0
      %3631 = vmatpush2.bf16.msra.mxu0 0
      %3632 = vmatprep.subr.bf16.mxu0 0
      %3633 = vmatpush2.bf16.msra.mxu0 0
      %3634 = vmatprep.subr.bf16.mxu0 0
      %3635 = vmatpush2.bf16.msra.mxu0 0
      %3636 = vmatprep.mubr.bf16.mxu0 0
      %3637 = vmatmul.mubr.bf16.gmra.mxu0 %v3599
      %v3638 = vpop.f32.mrf.mxu0
      %v3639 = vadd.f32 %v430, %v3638
      %v3640 = vpop.f32.mrf.mxu0
      %v3641 = vpop.f32.mrf.mxu0
      %v3642 = vpop.f32.mrf.mxu0
      %3643 = vdwg.mxu0
      %v3645 = vsel %vm1302, %v3130, 0
      %v3648 = vsel %vm1306, %v3548, 0
      %3650 = vmatprep.subr.bf16.mxu0 0
      %3651 = vmatpush1.bf16.msra.mxu0 0
      %3652 = vmatprep.subr.bf16.mxu0 0
      %3653 = vmatpush1.bf16.msra.mxu0 0
      %3654 = vmatprep.subr.bf16.mxu0 0
      %3655 = vmatpush1.bf16.msra.mxu0 0
      %3656 = vmatprep.subr.bf16.mxu0 0
      %3657 = vmatpush1.bf16.msra.mxu0 0
      %3658 = vmatprep.subr.bf16.mxu0 0
      %3659 = vmatpush1.bf16.msra.mxu0 0
      %3660 = vmatprep.subr.bf16.mxu0 0
      %3661 = vmatpush1.bf16.msra.mxu0 0
      %3662 = vmatprep.subr.bf16.mxu0 0
      %3663 = vmatpush1.bf16.msra.mxu0 0
      %3664 = vmatprep.subr.bf16.mxu0 0
      %3665 = vmatpush1.bf16.msra.mxu0 %v3648
      %3666 = vmatprep.subr.bf16.mxu0 0
      %3667 = vmatpush2.bf16.msra.mxu0 0
      %3668 = vmatprep.subr.bf16.mxu0 0
      %3669 = vmatpush2.bf16.msra.mxu0 0
      %3670 = vmatprep.subr.bf16.mxu0 0
      %3671 = vmatpush2.bf16.msra.mxu0 0
      %3672 = vmatprep.subr.bf16.mxu0 0
      %3673 = vmatpush2.bf16.msra.mxu0 0
      %3674 = vmatprep.subr.bf16.mxu0 0
      %3675 = vmatpush2.bf16.msra.mxu0 0
      %3676 = vmatprep.subr.bf16.mxu0 0
      %3677 = vmatpush2.bf16.msra.mxu0 0
      %3678 = vmatprep.subr.bf16.mxu0 0
      %3679 = vmatpush2.bf16.msra.mxu0 0
      %3680 = vmatprep.subr.bf16.mxu0 0
      %3681 = vmatpush2.bf16.msra.mxu0 0
      %3682 = vmatprep.mubr.bf16.mxu0 0
      %3683 = vmatmul.mubr.bf16.gmra.mxu0 %v3645
      %v3684 = vpop.f32.mrf.mxu0
      %v3685 = vadd.f32 %v430, %v3684
      %v3686 = vpop.f32.mrf.mxu0
      %v3687 = vpop.f32.mrf.mxu0
      %v3688 = vpop.f32.mrf.mxu0
      %3689 = vdwg.mxu0
      %v3691 = vsel %vm1302, %v3133, 0
      %v3694 = vsel %vm1306, %v3551, 0
      %3696 = vmatprep.subr.bf16.mxu0 0
      %3697 = vmatpush1.bf16.msra.mxu0 0
      %3698 = vmatprep.subr.bf16.mxu0 0
      %3699 = vmatpush1.bf16.msra.mxu0 0
      %3700 = vmatprep.subr.bf16.mxu0 0
      %3701 = vmatpush1.bf16.msra.mxu0 0
      %3702 = vmatprep.subr.bf16.mxu0 0
      %3703 = vmatpush1.bf16.msra.mxu0 0
      %3704 = vmatprep.subr.bf16.mxu0 0
      %3705 = vmatpush1.bf16.msra.mxu0 0
      %3706 = vmatprep.subr.bf16.mxu0 0
      %3707 = vmatpush1.bf16.msra.mxu0 0
      %3708 = vmatprep.subr.bf16.mxu0 0
      %3709 = vmatpush1.bf16.msra.mxu0 0
      %3710 = vmatprep.subr.bf16.mxu0 0
      %3711 = vmatpush1.bf16.msra.mxu0 %v3694
      %3712 = vmatprep.subr.bf16.mxu0 0
      %3713 = vmatpush2.bf16.msra.mxu0 0
      %3714 = vmatprep.subr.bf16.mxu0 0
      %3715 = vmatpush2.bf16.msra.mxu0 0
      %3716 = vmatprep.subr.bf16.mxu0 0
      %3717 = vmatpush2.bf16.msra.mxu0 0
      %3718 = vmatprep.subr.bf16.mxu0 0
      %3719 = vmatpush2.bf16.msra.mxu0 0
      %3720 = vmatprep.subr.bf16.mxu0 0
      %3721 = vmatpush2.bf16.msra.mxu0 0
      %3722 = vmatprep.subr.bf16.mxu0 0
      %3723 = vmatpush2.bf16.msra.mxu0 0
      %3724 = vmatprep.subr.bf16.mxu0 0
      %3725 = vmatpush2.bf16.msra.mxu0 0
      %3726 = vmatprep.subr.bf16.mxu0 0
      %3727 = vmatpush2.bf16.msra.mxu0 0
      %3728 = vmatprep.mubr.bf16.mxu0 0
      %3729 = vmatmul.mubr.bf16.gmra.mxu0 %v3691
      %v3730 = vpop.f32.mrf.mxu0
      %v3731 = vadd.f32 %v430, %v3730
      %v3732 = vpop.f32.mrf.mxu0
      %v3733 = vpop.f32.mrf.mxu0
      %v3734 = vpop.f32.mrf.mxu0
      %3735 = vdwg.mxu0
      %v3736 = vsel %vm1302, %v3593, -inf
      %3737 = vmax.xlane.f32.xlu0 %v3736
      %v3738 = vpop.xlane.xlu0 %3737
      %v3739 = vsel %vm1302, %v3639, -inf
      %3740 = vmax.xlane.f32.xlu0 %v3739
      %v3741 = vpop.xlane.xlu0 %3740
      %v3742 = vsel %vm1302, %v3685, -inf
      %3743 = vmax.xlane.f32.xlu0 %v3742
      %v3744 = vpop.xlane.xlu0 %3743
      %v3745 = vsel %vm1302, %v3731, -inf
      %3746 = vmax.xlane.f32.xlu0 %v3745
      %v3747 = vpop.xlane.xlu0 %3746
      %v3748 = vsub.f32 %v3593, %v3738
      %v3749 = vsub.f32 %v3639, %v3741
      %v3750 = vsub.f32 %v3685, %v3744
      %v3751 = vsub.f32 %v3731, %v3747
      %v3752 = vmul.f32 %v3748, 1.442695
      %v3753 = vpow.pop %v3752
      %v3754 = vmul.f32 %v3749, 1.442695
      %v3755 = vpow.pop %v3754
      %v3756 = vmul.f32 %v3750, 1.442695
      %v3757 = vpow.pop %v3756
      %v3758 = vmul.f32 %v3751, 1.442695
      %v3759 = vpow.pop %v3758
      %v3760 = vsel %vm1302, %v3753, 0.0
      %3761 = vadd.xlane.f32.xlu0 %v3760
      %v3762 = vpop.xlane.xlu0 %3761
      %v3763 = vsel %vm1302, %v3755, 0.0
      %3764 = vadd.xlane.f32.xlu0 %v3763
      %v3765 = vpop.xlane.xlu0 %3764
      %v3766 = vsel %vm1302, %v3757, 0.0
      %3767 = vadd.xlane.f32.xlu0 %v3766
      %v3768 = vpop.xlane.xlu0 %3767
      %v3769 = vsel %vm1302, %v3759, 0.0
      %3770 = vadd.xlane.f32.xlu0 %v3769
      %v3771 = vpop.xlane.xlu0 %3770
      %v3772 = vrcp.pop %v3762
      %v3773 = vmul.f32 %v3753, %v3772
      %v3774 = vrcp.pop %v3765
      %v3775 = vmul.f32 %v3755, %v3774
      %v3776 = vrcp.pop %v3768
      %v3777 = vmul.f32 %v3757, %v3776
      %v3778 = vrcp.pop %v3771
      %v3779 = vmul.f32 %v3759, %v3778
      %v3780 = vpack.c.bf16 %v3773, %v3773
      %v3781 = vpack.c.bf16 %v3775, %v3775
      %v3782 = vpack.c.bf16 %v3777, %v3777
      %v3783 = vpack.c.bf16 %v3779, %v3779
      %v3784 = vpack.c.bf16 %v3028, %v3028
      %v3785 = vpack.c.bf16 %v3052, %v3052
      %v3786 = vpack.c.bf16 %v3035, %v3035
      %v3787 = vpack.c.bf16 %v3053, %v3053
      %v3788 = vpack.c.bf16 %v3044, %v3044
      %v3789 = vpack.c.bf16 %v3054, %v3054
      %v3790 = vpack.c.bf16 %v3051, %v3051
      %v3791 = vpack.c.bf16 %v3055, %v3055
      %3792 = vxpose.xlu0.c.b16.start [1/8] %v3784, 128
      %3793 = vxpose.xlu0.c.b16.cont [2/8] 0, 128
      %3794 = vxpose.xlu0.c.b16.cont [3/8] 0, 128
      %3795 = vxpose.xlu0.c.b16.cont [4/8] 0, 128
      %3796 = vxpose.xlu0.c.b16.cont [5/8] 0, 128
      %3797 = vxpose.xlu0.c.b16.cont [6/8] 0, 128
      %3798 = vxpose.xlu0.c.b16.cont [7/8] 0, 128
      %3799 = vxpose.xlu0.c.b16.end [8/8] 0, 128
      %v3800 = vpop.trf.xlu0
      %v3801 = vpop.trf.xlu0
      %v3802 = vpop.trf.xlu0
      %v3803 = vpop.trf.xlu0
      %v3804 = vpop.trf.xlu0
      %v3805 = vpop.trf.xlu0
      %v3806 = vpop.trf.xlu0
      %v3807 = vpop.trf.xlu0
      %3808 = vxpose.xlu0.c.b16.start [1/8] %v3785, 128
      %3809 = vxpose.xlu0.c.b16.cont [2/8] 0, 128
      %3810 = vxpose.xlu0.c.b16.cont [3/8] 0, 128
      %3811 = vxpose.xlu0.c.b16.cont [4/8] 0, 128
      %3812 = vxpose.xlu0.c.b16.cont [5/8] 0, 128
      %3813 = vxpose.xlu0.c.b16.cont [6/8] 0, 128
      %3814 = vxpose.xlu0.c.b16.cont [7/8] 0, 128
      %3815 = vxpose.xlu0.c.b16.end [8/8] 0, 128
      %v3816 = vpop.trf.xlu0
      %v3817 = vpop.trf.xlu0
      %v3818 = vpop.trf.xlu0
      %v3819 = vpop.trf.xlu0
      %v3820 = vpop.trf.xlu0
      %v3821 = vpop.trf.xlu0
      %v3822 = vpop.trf.xlu0
      %v3823 = vpop.trf.xlu0
      %3824 = vxpose.xlu0.c.b16.start [1/8] %v3786, 128
      %3825 = vxpose.xlu0.c.b16.cont [2/8] 0, 128
      %3826 = vxpose.xlu0.c.b16.cont [3/8] 0, 128
      %3827 = vxpose.xlu0.c.b16.cont [4/8] 0, 128
      %3828 = vxpose.xlu0.c.b16.cont [5/8] 0, 128
      %3829 = vxpose.xlu0.c.b16.cont [6/8] 0, 128
      %3830 = vxpose.xlu0.c.b16.cont [7/8] 0, 128
      %3831 = vxpose.xlu0.c.b16.end [8/8] 0, 128
      %v3832 = vpop.trf.xlu0
      %v3833 = vpop.trf.xlu0
      %v3834 = vpop.trf.xlu0
      %v3835 = vpop.trf.xlu0
      %v3836 = vpop.trf.xlu0
      %v3837 = vpop.trf.xlu0
      %v3838 = vpop.trf.xlu0
      %v3839 = vpop.trf.xlu0
      %3840 = vxpose.xlu0.c.b16.start [1/8] %v3787, 128
      %3841 = vxpose.xlu0.c.b16.cont [2/8] 0, 128
      %3842 = vxpose.xlu0.c.b16.cont [3/8] 0, 128
      %3843 = vxpose.xlu0.c.b16.cont [4/8] 0, 128
      %3844 = vxpose.xlu0.c.b16.cont [5/8] 0, 128
      %3845 = vxpose.xlu0.c.b16.cont [6/8] 0, 128
      %3846 = vxpose.xlu0.c.b16.cont [7/8] 0, 128
      %3847 = vxpose.xlu0.c.b16.end [8/8] 0, 128
      %v3848 = vpop.trf.xlu0
      %v3849 = vpop.trf.xlu0
      %v3850 = vpop.trf.xlu0
      %v3851 = vpop.trf.xlu0
      %v3852 = vpop.trf.xlu0
      %v3853 = vpop.trf.xlu0
      %v3854 = vpop.trf.xlu0
      %v3855 = vpop.trf.xlu0
      %3856 = vxpose.xlu0.c.b16.start [1/8] %v3788, 128
      %3857 = vxpose.xlu0.c.b16.cont [2/8] 0, 128
      %3858 = vxpose.xlu0.c.b16.cont [3/8] 0, 128
      %3859 = vxpose.xlu0.c.b16.cont [4/8] 0, 128
      %3860 = vxpose.xlu0.c.b16.cont [5/8] 0, 128
      %3861 = vxpose.xlu0.c.b16.cont [6/8] 0, 128
      %3862 = vxpose.xlu0.c.b16.cont [7/8] 0, 128
      %3863 = vxpose.xlu0.c.b16.end [8/8] 0, 128
      %v3864 = vpop.trf.xlu0
      %v3865 = vpop.trf.xlu0
      %v3866 = vpop.trf.xlu0
      %v3867 = vpop.trf.xlu0
      %v3868 = vpop.trf.xlu0
      %v3869 = vpop.trf.xlu0
      %v3870 = vpop.trf.xlu0
      %v3871 = vpop.trf.xlu0
      %3872 = vxpose.xlu0.c.b16.start [1/8] %v3789, 128
      %3873 = vxpose.xlu0.c.b16.cont [2/8] 0, 128
      %3874 = vxpose.xlu0.c.b16.cont [3/8] 0, 128
      %3875 = vxpose.xlu0.c.b16.cont [4/8] 0, 128
      %3876 = vxpose.xlu0.c.b16.cont [5/8] 0, 128
      %3877 = vxpose.xlu0.c.b16.cont [6/8] 0, 128
      %3878 = vxpose.xlu0.c.b16.cont [7/8] 0, 128
      %3879 = vxpose.xlu0.c.b16.end [8/8] 0, 128
      %v3880 = vpop.trf.xlu0
      %v3881 = vpop.trf.xlu0
      %v3882 = vpop.trf.xlu0
      %v3883 = vpop.trf.xlu0
      %v3884 = vpop.trf.xlu0
      %v3885 = vpop.trf.xlu0
      %v3886 = vpop.trf.xlu0
      %v3887 = vpop.trf.xlu0
      %3888 = vxpose.xlu0.c.b16.start [1/8] %v3790, 128
      %3889 = vxpose.xlu0.c.b16.cont [2/8] 0, 128
      %3890 = vxpose.xlu0.c.b16.cont [3/8] 0, 128
      %3891 = vxpose.xlu0.c.b16.cont [4/8] 0, 128
      %3892 = vxpose.xlu0.c.b16.cont [5/8] 0, 128
      %3893 = vxpose.xlu0.c.b16.cont [6/8] 0, 128
      %3894 = vxpose.xlu0.c.b16.cont [7/8] 0, 128
      %3895 = vxpose.xlu0.c.b16.end [8/8] 0, 128
      %v3896 = vpop.trf.xlu0
      %v3897 = vpop.trf.xlu0
      %v3898 = vpop.trf.xlu0
      %v3899 = vpop.trf.xlu0
      %v3900 = vpop.trf.xlu0
      %v3901 = vpop.trf.xlu0
      %v3902 = vpop.trf.xlu0
      %v3903 = vpop.trf.xlu0
      %3904 = vxpose.xlu0.c.b16.start [1/8] %v3791, 128
      %3905 = vxpose.xlu0.c.b16.cont [2/8] 0, 128
      %3906 = vxpose.xlu0.c.b16.cont [3/8] 0, 128
      %3907 = vxpose.xlu0.c.b16.cont [4/8] 0, 128
      %3908 = vxpose.xlu0.c.b16.cont [5/8] 0, 128
      %3909 = vxpose.xlu0.c.b16.cont [6/8] 0, 128
      %3910 = vxpose.xlu0.c.b16.cont [7/8] 0, 128
      %3911 = vxpose.xlu0.c.b16.end [8/8] 0, 128
      %v3912 = vpop.trf.xlu0
      %v3913 = vpop.trf.xlu0
      %v3914 = vpop.trf.xlu0
      %v3915 = vpop.trf.xlu0
      %v3916 = vpop.trf.xlu0
      %v3917 = vpop.trf.xlu0
      %v3918 = vpop.trf.xlu0
      %v3919 = vpop.trf.xlu0
      %v3920 = vcombine.low %v3800, %v3864
      %v3922 = vunpack.c.l.s4 1983009808
      %v3923 = vunpack.c.0.s8 %v3922
      %v3924 = vlaneseq
      %v3925 = vshrl.u32 %v3924, 7
      %v3926 = vsub.s32 %v3923, %v3925
      %v3927 = vrot.slane %v3920, %v3926
      %v3928 = vcombine.low %v3832, %v3896
      %v3930 = vunpack.c.l.s4 1983009808
      %v3931 = vunpack.c.0.s8 %v3930
      %v3932 = vlaneseq
      %v3933 = vshrl.u32 %v3932, 7
      %v3934 = vsub.s32 %v3931, %v3933
      %v3935 = vrot.slane %v3928, %v3934
      %v3936 = vcombine.low %v3927, %v3935
      %v3937 = vcombine.high %v3927, %v3935
      %v3939 = vunpack.c.l.s4 1934713408
      %v3940 = vunpack.c.0.s8 %v3939
      %v3941 = vlaneseq
      %v3942 = vshrl.u32 %v3941, 7
      %v3943 = vsub.s32 %v3940, %v3942
      %v3944 = vrot.slane %v3936, %v3943
      %v3946 = vunpack.c.l.s4 1934713408
      %v3947 = vunpack.c.0.s8 %v3946
      %v3948 = vlaneseq
      %v3949 = vshrl.u32 %v3948, 7
      %v3950 = vsub.s32 %v3947, %v3949
      %v3951 = vrot.slane %v3937, %v3950
      %v3952 = vcombine.high %v3944, 0
      %v3953 = vcombine.high %v3951, 0
      %v3954 = vcombine.low %v3816, %v3880
      %v3956 = vunpack.c.l.s4 1983009808
      %v3957 = vunpack.c.0.s8 %v3956
      %v3958 = vlaneseq
      %v3959 = vshrl.u32 %v3958, 7
      %v3960 = vsub.s32 %v3957, %v3959
      %v3961 = vrot.slane %v3954, %v3960
      %v3962 = vcombine.low %v3848, %v3912
      %v3964 = vunpack.c.l.s4 1983009808
      %v3965 = vunpack.c.0.s8 %v3964
      %v3966 = vlaneseq
      %v3967 = vshrl.u32 %v3966, 7
      %v3968 = vsub.s32 %v3965, %v3967
      %v3969 = vrot.slane %v3962, %v3968
      %v3970 = vcombine.low %v3961, %v3969
      %v3971 = vcombine.high %v3961, %v3969
      %v3973 = vunpack.c.l.s4 1934713408
      %v3974 = vunpack.c.0.s8 %v3973
      %v3975 = vlaneseq
      %v3976 = vshrl.u32 %v3975, 7
      %v3977 = vsub.s32 %v3974, %v3976
      %v3978 = vrot.slane %v3970, %v3977
      %v3980 = vunpack.c.l.s4 1934713408
      %v3981 = vunpack.c.0.s8 %v3980
      %v3982 = vlaneseq
      %v3983 = vshrl.u32 %v3982, 7
      %v3984 = vsub.s32 %v3981, %v3983
      %v3985 = vrot.slane %v3971, %v3984
      %v3986 = vcombine.high %v3978, 0
      %v3987 = vcombine.high %v3985, 0
      %v3990 = vpack.i.b16 %v3978, %v3944
      %v3992 = vshrl.u32 %v3944, 16
      %v3993 = vshrl.u32 %v3978, 16
      %v3994 = vpack.i.b16 %v3993, %v3992
      %v3998 = vpack.i.b16 %v3986, %v3952
      %v4000 = vshrl.u32 %v3952, 16
      %v4001 = vshrl.u32 %v3986, 16
      %v4002 = vpack.i.b16 %v4001, %v4000
      %v4006 = vpack.i.b16 %v3985, %v3951
      %v4008 = vshrl.u32 %v3951, 16
      %v4009 = vshrl.u32 %v3985, 16
      %v4010 = vpack.i.b16 %v4009, %v4008
      %v4014 = vpack.i.b16 %v3987, %v3953
      %v4016 = vshrl.u32 %v3953, 16
      %v4017 = vshrl.u32 %v3987, 16
      %v4018 = vpack.i.b16 %v4017, %v4016
      %4020 = vxpose.xlu0.c.b16.start [1/8] %v3990, 128
      %4021 = vxpose.xlu0.c.b16.cont [2/8] 0, 128
      %4022 = vxpose.xlu0.c.b16.cont [3/8] 0, 128
      %4023 = vxpose.xlu0.c.b16.cont [4/8] 0, 128
      %4024 = vxpose.xlu0.c.b16.cont [5/8] 0, 128
      %4025 = vxpose.xlu0.c.b16.cont [6/8] 0, 128
      %4026 = vxpose.xlu0.c.b16.cont [7/8] 0, 128
      %4027 = vxpose.xlu0.c.b16.end [8/8] 0, 128
      %v4028 = vpop.trf.xlu0
      %v4029 = vpop.trf.xlu0
      %v4030 = vpop.trf.xlu0
      %v4031 = vpop.trf.xlu0
      %v4032 = vpop.trf.xlu0
      %v4033 = vpop.trf.xlu0
      %v4034 = vpop.trf.xlu0
      %v4035 = vpop.trf.xlu0
      %4036 = vxpose.xlu0.c.b16.start [1/8] %v3994, 128
      %4037 = vxpose.xlu0.c.b16.cont [2/8] 0, 128
      %4038 = vxpose.xlu0.c.b16.cont [3/8] 0, 128
      %4039 = vxpose.xlu0.c.b16.cont [4/8] 0, 128
      %4040 = vxpose.xlu0.c.b16.cont [5/8] 0, 128
      %4041 = vxpose.xlu0.c.b16.cont [6/8] 0, 128
      %4042 = vxpose.xlu0.c.b16.cont [7/8] 0, 128
      %4043 = vxpose.xlu0.c.b16.end [8/8] 0, 128
      %v4044 = vpop.trf.xlu0
      %v4045 = vpop.trf.xlu0
      %v4046 = vpop.trf.xlu0
      %v4047 = vpop.trf.xlu0
      %v4048 = vpop.trf.xlu0
      %v4049 = vpop.trf.xlu0
      %v4050 = vpop.trf.xlu0
      %v4051 = vpop.trf.xlu0
      %4052 = vxpose.xlu0.c.b16.start [1/8] %v3998, 128
      %4053 = vxpose.xlu0.c.b16.cont [2/8] 0, 128
      %4054 = vxpose.xlu0.c.b16.cont [3/8] 0, 128
      %4055 = vxpose.xlu0.c.b16.cont [4/8] 0, 128
      %4056 = vxpose.xlu0.c.b16.cont [5/8] 0, 128
      %4057 = vxpose.xlu0.c.b16.cont [6/8] 0, 128
      %4058 = vxpose.xlu0.c.b16.cont [7/8] 0, 128
      %4059 = vxpose.xlu0.c.b16.end [8/8] 0, 128
      %v4060 = vpop.trf.xlu0
      %v4061 = vpop.trf.xlu0
      %v4062 = vpop.trf.xlu0
      %v4063 = vpop.trf.xlu0
      %v4064 = vpop.trf.xlu0
      %v4065 = vpop.trf.xlu0
      %v4066 = vpop.trf.xlu0
      %v4067 = vpop.trf.xlu0
      %4068 = vxpose.xlu0.c.b16.start [1/8] %v4002, 128
      %4069 = vxpose.xlu0.c.b16.cont [2/8] 0, 128
      %4070 = vxpose.xlu0.c.b16.cont [3/8] 0, 128
      %4071 = vxpose.xlu0.c.b16.cont [4/8] 0, 128
      %4072 = vxpose.xlu0.c.b16.cont [5/8] 0, 128
      %4073 = vxpose.xlu0.c.b16.cont [6/8] 0, 128
      %4074 = vxpose.xlu0.c.b16.cont [7/8] 0, 128
      %4075 = vxpose.xlu0.c.b16.end [8/8] 0, 128
      %v4076 = vpop.trf.xlu0
      %v4077 = vpop.trf.xlu0
      %v4078 = vpop.trf.xlu0
      %v4079 = vpop.trf.xlu0
      %v4080 = vpop.trf.xlu0
      %v4081 = vpop.trf.xlu0
      %v4082 = vpop.trf.xlu0
      %v4083 = vpop.trf.xlu0
      %4084 = vxpose.xlu0.c.b16.start [1/8] %v4006, 128
      %4085 = vxpose.xlu0.c.b16.cont [2/8] 0, 128
      %4086 = vxpose.xlu0.c.b16.cont [3/8] 0, 128
      %4087 = vxpose.xlu0.c.b16.cont [4/8] 0, 128
      %4088 = vxpose.xlu0.c.b16.cont [5/8] 0, 128
      %4089 = vxpose.xlu0.c.b16.cont [6/8] 0, 128
      %4090 = vxpose.xlu0.c.b16.cont [7/8] 0, 128
      %4091 = vxpose.xlu0.c.b16.end [8/8] 0, 128
      %v4092 = vpop.trf.xlu0
      %v4093 = vpop.trf.xlu0
      %v4094 = vpop.trf.xlu0
      %v4095 = vpop.trf.xlu0
      %v4096 = vpop.trf.xlu0
      %v4097 = vpop.trf.xlu0
      %v4098 = vpop.trf.xlu0
      %v4099 = vpop.trf.xlu0
      %4100 = vxpose.xlu0.c.b16.start [1/8] %v4010, 128
      %4101 = vxpose.xlu0.c.b16.cont [2/8] 0, 128
      %4102 = vxpose.xlu0.c.b16.cont [3/8] 0, 128
      %4103 = vxpose.xlu0.c.b16.cont [4/8] 0, 128
      %4104 = vxpose.xlu0.c.b16.cont [5/8] 0, 128
      %4105 = vxpose.xlu0.c.b16.cont [6/8] 0, 128
      %4106 = vxpose.xlu0.c.b16.cont [7/8] 0, 128
      %4107 = vxpose.xlu0.c.b16.end [8/8] 0, 128
      %v4108 = vpop.trf.xlu0
      %v4109 = vpop.trf.xlu0
      %v4110 = vpop.trf.xlu0
      %v4111 = vpop.trf.xlu0
      %v4112 = vpop.trf.xlu0
      %v4113 = vpop.trf.xlu0
      %v4114 = vpop.trf.xlu0
      %v4115 = vpop.trf.xlu0
      %4116 = vxpose.xlu0.c.b16.start [1/8] %v4014, 128
      %4117 = vxpose.xlu0.c.b16.cont [2/8] 0, 128
      %4118 = vxpose.xlu0.c.b16.cont [3/8] 0, 128
      %4119 = vxpose.xlu0.c.b16.cont [4/8] 0, 128
      %4120 = vxpose.xlu0.c.b16.cont [5/8] 0, 128
      %4121 = vxpose.xlu0.c.b16.cont [6/8] 0, 128
      %4122 = vxpose.xlu0.c.b16.cont [7/8] 0, 128
      %4123 = vxpose.xlu0.c.b16.end [8/8] 0, 128
      %v4124 = vpop.trf.xlu0
      %v4125 = vpop.trf.xlu0
      %v4126 = vpop.trf.xlu0
      %v4127 = vpop.trf.xlu0
      %v4128 = vpop.trf.xlu0
      %v4129 = vpop.trf.xlu0
      %v4130 = vpop.trf.xlu0
      %v4131 = vpop.trf.xlu0
      %4132 = vxpose.xlu0.c.b16.start [1/8] %v4018, 128
      %4133 = vxpose.xlu0.c.b16.cont [2/8] 0, 128
      %4134 = vxpose.xlu0.c.b16.cont [3/8] 0, 128
      %4135 = vxpose.xlu0.c.b16.cont [4/8] 0, 128
      %4136 = vxpose.xlu0.c.b16.cont [5/8] 0, 128
      %4137 = vxpose.xlu0.c.b16.cont [6/8] 0, 128
      %4138 = vxpose.xlu0.c.b16.cont [7/8] 0, 128
      %4139 = vxpose.xlu0.c.b16.end [8/8] 0, 128
      %v4140 = vpop.trf.xlu0
      %v4141 = vpop.trf.xlu0
      %v4142 = vpop.trf.xlu0
      %v4143 = vpop.trf.xlu0
      %v4144 = vpop.trf.xlu0
      %v4145 = vpop.trf.xlu0
      %v4146 = vpop.trf.xlu0
      %v4147 = vpop.trf.xlu0
      %v4148 = vcombine.low %v4028, %v4092
      %v4150 = vunpack.c.l.s4 1983009808
      %v4151 = vunpack.c.0.s8 %v4150
      %v4152 = vlaneseq
      %v4153 = vshrl.u32 %v4152, 7
      %v4154 = vsub.s32 %v4151, %v4153
      %v4155 = vrot.slane %v4148, %v4154
      %v4156 = vcombine.low %v4060, %v4124
      %v4158 = vunpack.c.l.s4 1983009808
      %v4159 = vunpack.c.0.s8 %v4158
      %v4160 = vlaneseq
      %v4161 = vshrl.u32 %v4160, 7
      %v4162 = vsub.s32 %v4159, %v4161
      %v4163 = vrot.slane %v4156, %v4162
      %v4164 = vcombine.low %v4155, %v4163
      %v4166 = vunpack.c.l.s4 1934713408
      %v4167 = vunpack.c.0.s8 %v4166
      %v4168 = vlaneseq
      %v4169 = vshrl.u32 %v4168, 7
      %v4170 = vsub.s32 %v4167, %v4169
      %v4171 = vrot.slane %v4164, %v4170
      %v4172 = vcombine.high %v4171, 0
      %v4173 = vcombine.low %v4044, %v4108
      %v4175 = vunpack.c.l.s4 1983009808
      %v4176 = vunpack.c.0.s8 %v4175
      %v4177 = vlaneseq
      %v4178 = vshrl.u32 %v4177, 7
      %v4179 = vsub.s32 %v4176, %v4178
      %v4180 = vrot.slane %v4173, %v4179
      %v4181 = vcombine.low %v4076, %v4140
      %v4183 = vunpack.c.l.s4 1983009808
      %v4184 = vunpack.c.0.s8 %v4183
      %v4185 = vlaneseq
      %v4186 = vshrl.u32 %v4185, 7
      %v4187 = vsub.s32 %v4184, %v4186
      %v4188 = vrot.slane %v4181, %v4187
      %v4189 = vcombine.low %v4180, %v4188
      %v4191 = vunpack.c.l.s4 1934713408
      %v4192 = vunpack.c.0.s8 %v4191
      %v4193 = vlaneseq
      %v4194 = vshrl.u32 %v4193, 7
      %v4195 = vsub.s32 %v4192, %v4194
      %v4196 = vrot.slane %v4189, %v4195
      %v4197 = vcombine.high %v4196, 0
      %v4200 = vpack.i.b16 %v4196, %v4171
      %v4201 = vshrl.u32 %v4171, 16
      %v4202 = vshrl.u32 %v4196, 16
      %v4203 = vpack.i.b16 %v4202, %v4201
      %v4206 = vpack.i.b16 %v4197, %v4172
      %v4207 = vshrl.u32 %v4172, 16
      %v4208 = vshrl.u32 %v4197, 16
      %v4209 = vpack.i.b16 %v4208, %v4207
      %v4211 = vsel %vm1302, %v4200, 0
      %v4214 = vsel %vm1302, %v3780, 0
      %4216 = vmatprep.subr.bf16.mxu0 0
      %4217 = vmatpush1.bf16.xpose.msra.mxu0 0
      %4218 = vmatprep.subr.bf16.mxu0 0
      %4219 = vmatpush1.bf16.xpose.msra.mxu0 0
      %4220 = vmatprep.subr.bf16.mxu0 0
      %4221 = vmatpush1.bf16.xpose.msra.mxu0 0
      %4222 = vmatprep.subr.bf16.mxu0 0
      %4223 = vmatpush1.bf16.xpose.msra.mxu0 0
      %4224 = vmatprep.subr.bf16.mxu0 0
      %4225 = vmatpush1.bf16.xpose.msra.mxu0 0
      %4226 = vmatprep.subr.bf16.mxu0 0
      %4227 = vmatpush1.bf16.xpose.msra.mxu0 0
      %4228 = vmatprep.subr.bf16.mxu0 0
      %4229 = vmatpush1.bf16.xpose.msra.mxu0 0
      %4230 = vmatprep.subr.bf16.mxu0 0
      %4231 = vmatpush1.bf16.xpose.msra.mxu0 %v4214
      %4232 = vmatprep.subr.bf16.mxu0 0
      %4233 = vmatpush2.bf16.xpose.msra.mxu0 0
      %4234 = vmatprep.subr.bf16.mxu0 0
      %4235 = vmatpush2.bf16.xpose.msra.mxu0 0
      %4236 = vmatprep.subr.bf16.mxu0 0
      %4237 = vmatpush2.bf16.xpose.msra.mxu0 0
      %4238 = vmatprep.subr.bf16.mxu0 0
      %4239 = vmatpush2.bf16.xpose.msra.mxu0 0
      %4240 = vmatprep.subr.bf16.mxu0 0
      %4241 = vmatpush2.bf16.xpose.msra.mxu0 0
      %4242 = vmatprep.subr.bf16.mxu0 0
      %4243 = vmatpush2.bf16.xpose.msra.mxu0 0
      %4244 = vmatprep.subr.bf16.mxu0 0
      %4245 = vmatpush2.bf16.xpose.msra.mxu0 0
      %4246 = vmatprep.subr.bf16.mxu0 0
      %4247 = vmatpush2.bf16.xpose.msra.mxu0 0
      %4248 = vmatprep.mubr.bf16.mxu0 0
      %4249 = vmatmul.mubr.bf16.gmra.mxu0 %v4211
      %v4250 = vpop.f32.mrf.mxu0
      %v4251 = vadd.f32 0.0, %v4250
      %v4252 = vpop.f32.mrf.mxu0
      %v4253 = vpop.f32.mrf.mxu0
      %v4254 = vpop.f32.mrf.mxu0
      %4255 = vdwg.mxu0
      %v4257 = vsel %vm1302, %v4203, 0
      %v4260 = vsel %vm1302, %v3781, 0
      %4262 = vmatprep.subr.bf16.mxu0 0
      %4263 = vmatpush1.bf16.xpose.msra.mxu0 0
      %4264 = vmatprep.subr.bf16.mxu0 0
      %4265 = vmatpush1.bf16.xpose.msra.mxu0 0
      %4266 = vmatprep.subr.bf16.mxu0 0
      %4267 = vmatpush1.bf16.xpose.msra.mxu0 0
      %4268 = vmatprep.subr.bf16.mxu0 0
      %4269 = vmatpush1.bf16.xpose.msra.mxu0 0
      %4270 = vmatprep.subr.bf16.mxu0 0
      %4271 = vmatpush1.bf16.xpose.msra.mxu0 0
      %4272 = vmatprep.subr.bf16.mxu0 0
      %4273 = vmatpush1.bf16.xpose.msra.mxu0 0
      %4274 = vmatprep.subr.bf16.mxu0 0
      %4275 = vmatpush1.bf16.xpose.msra.mxu0 0
      %4276 = vmatprep.subr.bf16.mxu0 0
      %4277 = vmatpush1.bf16.xpose.msra.mxu0 %v4260
      %4278 = vmatprep.subr.bf16.mxu0 0
      %4279 = vmatpush2.bf16.xpose.msra.mxu0 0
      %4280 = vmatprep.subr.bf16.mxu0 0
      %4281 = vmatpush2.bf16.xpose.msra.mxu0 0
      %4282 = vmatprep.subr.bf16.mxu0 0
      %4283 = vmatpush2.bf16.xpose.msra.mxu0 0
      %4284 = vmatprep.subr.bf16.mxu0 0
      %4285 = vmatpush2.bf16.xpose.msra.mxu0 0
      %4286 = vmatprep.subr.bf16.mxu0 0
      %4287 = vmatpush2.bf16.xpose.msra.mxu0 0
      %4288 = vmatprep.subr.bf16.mxu0 0
      %4289 = vmatpush2.bf16.xpose.msra.mxu0 0
      %4290 = vmatprep.subr.bf16.mxu0 0
      %4291 = vmatpush2.bf16.xpose.msra.mxu0 0
      %4292 = vmatprep.subr.bf16.mxu0 0
      %4293 = vmatpush2.bf16.xpose.msra.mxu0 0
      %4294 = vmatprep.mubr.bf16.mxu0 0
      %4295 = vmatmul.mubr.bf16.gmra.mxu0 %v4257
      %v4296 = vpop.f32.mrf.mxu0
      %v4297 = vadd.f32 0.0, %v4296
      %v4298 = vpop.f32.mrf.mxu0
      %v4299 = vpop.f32.mrf.mxu0
      %v4300 = vpop.f32.mrf.mxu0
      %4301 = vdwg.mxu0
      %v4303 = vsel %vm1302, %v4206, 0
      %v4306 = vsel %vm1302, %v3782, 0
      %4308 = vmatprep.subr.bf16.mxu0 0
      %4309 = vmatpush1.bf16.xpose.msra.mxu0 0
      %4310 = vmatprep.subr.bf16.mxu0 0
      %4311 = vmatpush1.bf16.xpose.msra.mxu0 0
      %4312 = vmatprep.subr.bf16.mxu0 0
      %4313 = vmatpush1.bf16.xpose.msra.mxu0 0
      %4314 = vmatprep.subr.bf16.mxu0 0
      %4315 = vmatpush1.bf16.xpose.msra.mxu0 0
      %4316 = vmatprep.subr.bf16.mxu0 0
      %4317 = vmatpush1.bf16.xpose.msra.mxu0 0
      %4318 = vmatprep.subr.bf16.mxu0 0
      %4319 = vmatpush1.bf16.xpose.msra.mxu0 0
      %4320 = vmatprep.subr.bf16.mxu0 0
      %4321 = vmatpush1.bf16.xpose.msra.mxu0 0
      %4322 = vmatprep.subr.bf16.mxu0 0
      %4323 = vmatpush1.bf16.xpose.msra.mxu0 %v4306
      %4324 = vmatprep.subr.bf16.mxu0 0
      %4325 = vmatpush2.bf16.xpose.msra.mxu0 0
      %4326 = vmatprep.subr.bf16.mxu0 0
      %4327 = vmatpush2.bf16.xpose.msra.mxu0 0
      %4328 = vmatprep.subr.bf16.mxu0 0
      %4329 = vmatpush2.bf16.xpose.msra.mxu0 0
      %4330 = vmatprep.subr.bf16.mxu0 0
      %4331 = vmatpush2.bf16.xpose.msra.mxu0 0
      %4332 = vmatprep.subr.bf16.mxu0 0
      %4333 = vmatpush2.bf16.xpose.msra.mxu0 0
      %4334 = vmatprep.subr.bf16.mxu0 0
      %4335 = vmatpush2.bf16.xpose.msra.mxu0 0
      %4336 = vmatprep.subr.bf16.mxu0 0
      %4337 = vmatpush2.bf16.xpose.msra.mxu0 0
      %4338 = vmatprep.subr.bf16.mxu0 0
      %4339 = vmatpush2.bf16.xpose.msra.mxu0 0
      %4340 = vmatprep.mubr.bf16.mxu0 0
      %4341 = vmatmul.mubr.bf16.gmra.mxu0 %v4303
      %v4342 = vpop.f32.mrf.mxu0
      %v4343 = vadd.f32 0.0, %v4342
      %v4344 = vpop.f32.mrf.mxu0
      %v4345 = vpop.f32.mrf.mxu0
      %v4346 = vpop.f32.mrf.mxu0
      %4347 = vdwg.mxu0
      %v4349 = vsel %vm1302, %v4209, 0
      %v4352 = vsel %vm1302, %v3783, 0
      %4354 = vmatprep.subr.bf16.mxu0 0
      %4355 = vmatpush1.bf16.xpose.msra.mxu0 0
      %4356 = vmatprep.subr.bf16.mxu0 0
      %4357 = vmatpush1.bf16.xpose.msra.mxu0 0
      %4358 = vmatprep.subr.bf16.mxu0 0
      %4359 = vmatpush1.bf16.xpose.msra.mxu0 0
      %4360 = vmatprep.subr.bf16.mxu0 0
      %4361 = vmatpush1.bf16.xpose.msra.mxu0 0
      %4362 = vmatprep.subr.bf16.mxu0 0
      %4363 = vmatpush1.bf16.xpose.msra.mxu0 0
      %4364 = vmatprep.subr.bf16.mxu0 0
      %4365 = vmatpush1.bf16.xpose.msra.mxu0 0
      %4366 = vmatprep.subr.bf16.mxu0 0
      %4367 = vmatpush1.bf16.xpose.msra.mxu0 0
      %4368 = vmatprep.subr.bf16.mxu0 0
      %4369 = vmatpush1.bf16.xpose.msra.mxu0 %v4352
      %4370 = vmatprep.subr.bf16.mxu0 0
      %4371 = vmatpush2.bf16.xpose.msra.mxu0 0
      %4372 = vmatprep.subr.bf16.mxu0 0
      %4373 = vmatpush2.bf16.xpose.msra.mxu0 0
      %4374 = vmatprep.subr.bf16.mxu0 0
      %4375 = vmatpush2.bf16.xpose.msra.mxu0 0
      %4376 = vmatprep.subr.bf16.mxu0 0
      %4377 = vmatpush2.bf16.xpose.msra.mxu0 0
      %4378 = vmatprep.subr.bf16.mxu0 0
      %4379 = vmatpush2.bf16.xpose.msra.mxu0 0
      %4380 = vmatprep.subr.bf16.mxu0 0
      %4381 = vmatpush2.bf16.xpose.msra.mxu0 0
      %4382 = vmatprep.subr.bf16.mxu0 0
      %4383 = vmatpush2.bf16.xpose.msra.mxu0 0
      %4384 = vmatprep.subr.bf16.mxu0 0
      %4385 = vmatpush2.bf16.xpose.msra.mxu0 0
      %4386 = vmatprep.mubr.bf16.mxu0 0
      %4387 = vmatmul.mubr.bf16.gmra.mxu0 %v4349
      %v4388 = vpop.f32.mrf.mxu0
      %v4389 = vadd.f32 0.0, %v4388
      %v4390 = vpop.f32.mrf.mxu0
      %v4391 = vpop.f32.mrf.mxu0
      %v4392 = vpop.f32.mrf.mxu0
      %4393 = vdwg.mxu0
      %4394 = vxpose.xlu0.b32.start [1/16] %v4251, 128
      %4395 = vxpose.xlu0.b32.cont [2/16] 0.0, 128
      %4396 = vxpose.xlu0.b32.cont [3/16] 0.0, 128
      %4397 = vxpose.xlu0.b32.cont [4/16] 0.0, 128
      %4398 = vxpose.xlu0.b32.cont [5/16] 0.0, 128
      %4399 = vxpose.xlu0.b32.cont [6/16] 0.0, 128
      %4400 = vxpose.xlu0.b32.cont [7/16] 0.0, 128
      %4401 = vxpose.xlu0.b32.cont [8/16] 0.0, 128
      %4402 = vxpose.xlu0.b32.cont [9/16] 0.0, 128
      %4403 = vxpose.xlu0.b32.cont [10/16] 0.0, 128
      %4404 = vxpose.xlu0.b32.cont [11/16] 0.0, 128
      %4405 = vxpose.xlu0.b32.cont [12/16] 0.0, 128
      %4406 = vxpose.xlu0.b32.cont [13/16] 0.0, 128
      %4407 = vxpose.xlu0.b32.cont [14/16] 0.0, 128
      %4408 = vxpose.xlu0.b32.cont [15/16] 0.0, 128
      %4409 = vxpose.xlu0.b32.end [16/16] 0.0, 128
      %v4410 = vpop.trf.xlu0
      %v4411 = vpop.trf.xlu0
      %v4412 = vpop.trf.xlu0
      %v4413 = vpop.trf.xlu0
      %v4414 = vpop.trf.xlu0
      %v4415 = vpop.trf.xlu0
      %v4416 = vpop.trf.xlu0
      %v4417 = vpop.trf.xlu0
      %v4418 = vpop.trf.xlu0
      %v4419 = vpop.trf.xlu0
      %v4420 = vpop.trf.xlu0
      %v4421 = vpop.trf.xlu0
      %v4422 = vpop.trf.xlu0
      %v4423 = vpop.trf.xlu0
      %v4424 = vpop.trf.xlu0
      %v4425 = vpop.trf.xlu0
      %4426 = vxpose.xlu0.b32.start [1/16] %v4297, 128
      %4427 = vxpose.xlu0.b32.cont [2/16] 0.0, 128
      %4428 = vxpose.xlu0.b32.cont [3/16] 0.0, 128
      %4429 = vxpose.xlu0.b32.cont [4/16] 0.0, 128
      %4430 = vxpose.xlu0.b32.cont [5/16] 0.0, 128
      %4431 = vxpose.xlu0.b32.cont [6/16] 0.0, 128
      %4432 = vxpose.xlu0.b32.cont [7/16] 0.0, 128
      %4433 = vxpose.xlu0.b32.cont [8/16] 0.0, 128
      %4434 = vxpose.xlu0.b32.cont [9/16] 0.0, 128
      %4435 = vxpose.xlu0.b32.cont [10/16] 0.0, 128
      %4436 = vxpose.xlu0.b32.cont [11/16] 0.0, 128
      %4437 = vxpose.xlu0.b32.cont [12/16] 0.0, 128
      %4438 = vxpose.xlu0.b32.cont [13/16] 0.0, 128
      %4439 = vxpose.xlu0.b32.cont [14/16] 0.0, 128
      %4440 = vxpose.xlu0.b32.cont [15/16] 0.0, 128
      %4441 = vxpose.xlu0.b32.end [16/16] 0.0, 128
      %v4442 = vpop.trf.xlu0
      %v4443 = vpop.trf.xlu0
      %v4444 = vpop.trf.xlu0
      %v4445 = vpop.trf.xlu0
      %v4446 = vpop.trf.xlu0
      %v4447 = vpop.trf.xlu0
      %v4448 = vpop.trf.xlu0
      %v4449 = vpop.trf.xlu0
      %v4450 = vpop.trf.xlu0
      %v4451 = vpop.trf.xlu0
      %v4452 = vpop.trf.xlu0
      %v4453 = vpop.trf.xlu0
      %v4454 = vpop.trf.xlu0
      %v4455 = vpop.trf.xlu0
      %v4456 = vpop.trf.xlu0
      %v4457 = vpop.trf.xlu0
      %4458 = vxpose.xlu0.b32.start [1/16] %v4343, 128
      %4459 = vxpose.xlu0.b32.cont [2/16] 0.0, 128
      %4460 = vxpose.xlu0.b32.cont [3/16] 0.0, 128
      %4461 = vxpose.xlu0.b32.cont [4/16] 0.0, 128
      %4462 = vxpose.xlu0.b32.cont [5/16] 0.0, 128
      %4463 = vxpose.xlu0.b32.cont [6/16] 0.0, 128
      %4464 = vxpose.xlu0.b32.cont [7/16] 0.0, 128
      %4465 = vxpose.xlu0.b32.cont [8/16] 0.0, 128
      %4466 = vxpose.xlu0.b32.cont [9/16] 0.0, 128
      %4467 = vxpose.xlu0.b32.cont [10/16] 0.0, 128
      %4468 = vxpose.xlu0.b32.cont [11/16] 0.0, 128
      %4469 = vxpose.xlu0.b32.cont [12/16] 0.0, 128
      %4470 = vxpose.xlu0.b32.cont [13/16] 0.0, 128
      %4471 = vxpose.xlu0.b32.cont [14/16] 0.0, 128
      %4472 = vxpose.xlu0.b32.cont [15/16] 0.0, 128
      %4473 = vxpose.xlu0.b32.end [16/16] 0.0, 128
      %v4474 = vpop.trf.xlu0
      %v4475 = vpop.trf.xlu0
      %v4476 = vpop.trf.xlu0
      %v4477 = vpop.trf.xlu0
      %v4478 = vpop.trf.xlu0
      %v4479 = vpop.trf.xlu0
      %v4480 = vpop.trf.xlu0
      %v4481 = vpop.trf.xlu0
      %v4482 = vpop.trf.xlu0
      %v4483 = vpop.trf.xlu0
      %v4484 = vpop.trf.xlu0
      %v4485 = vpop.trf.xlu0
      %v4486 = vpop.trf.xlu0
      %v4487 = vpop.trf.xlu0
      %v4488 = vpop.trf.xlu0
      %v4489 = vpop.trf.xlu0
      %4490 = vxpose.xlu0.b32.start [1/16] %v4389, 128
      %4491 = vxpose.xlu0.b32.cont [2/16] 0.0, 128
      %4492 = vxpose.xlu0.b32.cont [3/16] 0.0, 128
      %4493 = vxpose.xlu0.b32.cont [4/16] 0.0, 128
      %4494 = vxpose.xlu0.b32.cont [5/16] 0.0, 128
      %4495 = vxpose.xlu0.b32.cont [6/16] 0.0, 128
      %4496 = vxpose.xlu0.b32.cont [7/16] 0.0, 128
      %4497 = vxpose.xlu0.b32.cont [8/16] 0.0, 128
      %4498 = vxpose.xlu0.b32.cont [9/16] 0.0, 128
      %4499 = vxpose.xlu0.b32.cont [10/16] 0.0, 128
      %4500 = vxpose.xlu0.b32.cont [11/16] 0.0, 128
      %4501 = vxpose.xlu0.b32.cont [12/16] 0.0, 128
      %4502 = vxpose.xlu0.b32.cont [13/16] 0.0, 128
      %4503 = vxpose.xlu0.b32.cont [14/16] 0.0, 128
      %4504 = vxpose.xlu0.b32.cont [15/16] 0.0, 128
      %4505 = vxpose.xlu0.b32.end [16/16] 0.0, 128
      %v4506 = vpop.trf.xlu0
      %v4507 = vpop.trf.xlu0
      %v4508 = vpop.trf.xlu0
      %v4509 = vpop.trf.xlu0
      %v4510 = vpop.trf.xlu0
      %v4511 = vpop.trf.xlu0
      %v4512 = vpop.trf.xlu0
      %v4513 = vpop.trf.xlu0
      %v4514 = vpop.trf.xlu0
      %v4515 = vpop.trf.xlu0
      %v4516 = vpop.trf.xlu0
      %v4517 = vpop.trf.xlu0
      %v4518 = vpop.trf.xlu0
      %v4519 = vpop.trf.xlu0
      %v4520 = vpop.trf.xlu0
      %v4521 = vpop.trf.xlu0
      %v4522 = vcombine.low %v4410, %v4474
      %v4523 = vcombine.high %v4410, %v4474
      %v4525 = vunpack.c.l.s4 1983009808
      %v4526 = vunpack.c.0.s8 %v4525
      %v4527 = vlaneseq
      %v4528 = vshrl.u32 %v4527, 7
      %v4529 = vsub.s32 %v4526, %v4528
      %v4530 = vrot.slane %v4522, %v4529
      %v4532 = vunpack.c.l.s4 1983009808
      %v4533 = vunpack.c.0.s8 %v4532
      %v4534 = vlaneseq
      %v4535 = vshrl.u32 %v4534, 7
      %v4536 = vsub.s32 %v4533, %v4535
      %v4537 = vrot.slane %v4523, %v4536
      %v4538 = vcombine.low %v4442, %v4506
      %v4539 = vcombine.high %v4442, %v4506
      %v4541 = vunpack.c.l.s4 1983009808
      %v4542 = vunpack.c.0.s8 %v4541
      %v4543 = vlaneseq
      %v4544 = vshrl.u32 %v4543, 7
      %v4545 = vsub.s32 %v4542, %v4544
      %v4546 = vrot.slane %v4538, %v4545
      %v4548 = vunpack.c.l.s4 1983009808
      %v4549 = vunpack.c.0.s8 %v4548
      %v4550 = vlaneseq
      %v4551 = vshrl.u32 %v4550, 7
      %v4552 = vsub.s32 %v4549, %v4551
      %v4553 = vrot.slane %v4539, %v4552
      %v4554 = vcombine.low %v4530, %v4546
      %v4555 = vcombine.high %v4530, %v4546
      %v4557 = vunpack.c.l.s4 1934713408
      %v4558 = vunpack.c.0.s8 %v4557
      %v4559 = vlaneseq
      %v4560 = vshrl.u32 %v4559, 7
      %v4561 = vsub.s32 %v4558, %v4560
      %v4562 = vrot.slane %v4554, %v4561
      %v4564 = vunpack.c.l.s4 1934713408
      %v4565 = vunpack.c.0.s8 %v4564
      %v4566 = vlaneseq
      %v4567 = vshrl.u32 %v4566, 7
      %v4568 = vsub.s32 %v4565, %v4567
      %v4569 = vrot.slane %v4555, %v4568
      %v4570 = vcombine.low %v4537, %v4553
      %v4571 = vcombine.high %v4537, %v4553
      %v4573 = vunpack.c.l.s4 1934713408
      %v4574 = vunpack.c.0.s8 %v4573
      %v4575 = vlaneseq
      %v4576 = vshrl.u32 %v4575, 7
      %v4577 = vsub.s32 %v4574, %v4576
      %v4578 = vrot.slane %v4570, %v4577
      %v4580 = vunpack.c.l.s4 1934713408
      %v4581 = vunpack.c.0.s8 %v4580
      %v4582 = vlaneseq
      %v4583 = vshrl.u32 %v4582, 7
      %v4584 = vsub.s32 %v4581, %v4583
      %v4585 = vrot.slane %v4571, %v4584
      %v4586 = vcombine.high %v4562, 0.0
      %v4587 = vcombine.high %v4569, 0.0
      %v4588 = vcombine.high %v4578, 0.0
      %v4589 = vcombine.high %v4585, 0.0
      %v4590 = vcombine.low %v4562, %v4569
      %v4592 = vunpack.c.l.s4 1983009808
      %v4593 = vunpack.c.0.s8 %v4592
      %v4594 = vlaneseq
      %v4595 = vshrl.u32 %v4594, 7
      %v4596 = vsub.s32 %v4593, %v4595
      %v4597 = vrot.slane %v4590, %v4596
      %v4598 = vcombine.low %v4586, %v4587
      %v4600 = vunpack.c.l.s4 1983009808
      %v4601 = vunpack.c.0.s8 %v4600
      %v4602 = vlaneseq
      %v4603 = vshrl.u32 %v4602, 7
      %v4604 = vsub.s32 %v4601, %v4603
      %v4605 = vrot.slane %v4598, %v4604
      %v4606 = vcombine.low %v4578, %v4585
      %v4608 = vunpack.c.l.s4 1983009808
      %v4609 = vunpack.c.0.s8 %v4608
      %v4610 = vlaneseq
      %v4611 = vshrl.u32 %v4610, 7
      %v4612 = vsub.s32 %v4609, %v4611
      %v4613 = vrot.slane %v4606, %v4612
      %v4614 = vcombine.low %v4588, %v4589
      %v4616 = vunpack.c.l.s4 1983009808
      %v4617 = vunpack.c.0.s8 %v4616
      %v4618 = vlaneseq
      %v4619 = vshrl.u32 %v4618, 7
      %v4620 = vsub.s32 %v4617, %v4619
      %v4621 = vrot.slane %v4614, %v4620
      %v4622 = vcombine.low %v4597, %v4605
      %v4623 = vcombine.high %v4597, %v4605
      %v4625 = vunpack.c.l.s4 1934713408
      %v4626 = vunpack.c.0.s8 %v4625
      %v4627 = vlaneseq
      %v4628 = vshrl.u32 %v4627, 7
      %v4629 = vsub.s32 %v4626, %v4628
      %v4630 = vrot.slane %v4622, %v4629
      %v4632 = vunpack.c.l.s4 1934713408
      %v4633 = vunpack.c.0.s8 %v4632
      %v4634 = vlaneseq
      %v4635 = vshrl.u32 %v4634, 7
      %v4636 = vsub.s32 %v4633, %v4635
      %v4637 = vrot.slane %v4623, %v4636
      %v4638 = vcombine.low %v4613, %v4621
      %v4639 = vcombine.high %v4613, %v4621
      %v4641 = vunpack.c.l.s4 1934713408
      %v4642 = vunpack.c.0.s8 %v4641
      %v4643 = vlaneseq
      %v4644 = vshrl.u32 %v4643, 7
      %v4645 = vsub.s32 %v4642, %v4644
      %v4646 = vrot.slane %v4638, %v4645
      %v4648 = vunpack.c.l.s4 1934713408
      %v4649 = vunpack.c.0.s8 %v4648
      %v4650 = vlaneseq
      %v4651 = vshrl.u32 %v4650, 7
      %v4652 = vsub.s32 %v4649, %v4651
      %v4653 = vrot.slane %v4639, %v4652
      %v4654 = vcombine.low %v4630, %v4646
      %v4655 = vcombine.high %v4630, %v4646
      %v4656 = vcombine.low %v4637, %v4653
      %v4657 = vcombine.high %v4637, %v4653
      %4659 = vrot.lane.b32.xlu0 %v4655, 8
      %v4660 = vpop.permute.xlu0 %4659
      %4663 = vrot.lane.b32.xlu0 %v4656, 16
      %v4664 = vpop.permute.xlu0 %4663
      %4667 = vrot.lane.b32.xlu0 %v4657, 24
      %v4668 = vpop.permute.xlu0 %4667
      %v4670 = vsel %vm1302, %v4654, %v4660
      %v4671 = vsel %vm2423, %v4670, %v4664
      %v4672 = vsel %vm2425, %v4671, %v4668
      %v4673 = vpack.c.bf16 %v4672, %v4672
      %s4674 = scalar_lea.vmem %s6, 16
      %v4675 = vld [vmem:[%s4674] sm:$0xf]
      %v4676 = vld [vmem:[%s4674 + $0x4] sm:$0xf]
      %v4677 = vld [vmem:[%s4674 + $0x8] sm:$0xf]
      %v4678 = vld [vmem:[%s4674 + $0xc] sm:$0xf]
      %v4683 = vunpack.c.l.b16 %v4675
      %v4684 = vunpack.c.l.b16 %v4676
      %v4685 = vunpack.c.l.b16 %v4677
      %v4686 = vunpack.c.l.b16 %v4678
      %v4687 = vpack.c.b16 %v4684, %v4683
      %v4688 = vpack.c.b16 %v4686, %v4685
      %v4692 = vsel %vm433, %v4673, 0
      %4694 = vmatprep.subr.bf16.mxu0 0
      %4695 = vmatpush1.bf16.msra.mxu0 0
      %4696 = vmatprep.subr.bf16.mxu0 0
      %4697 = vmatpush1.bf16.msra.mxu0 0
      %4698 = vmatprep.subr.bf16.mxu0 0
      %4699 = vmatpush1.bf16.msra.mxu0 0
      %4700 = vmatprep.subr.bf16.mxu0 0
      %4701 = vmatpush1.bf16.msra.mxu0 0
      %4702 = vmatprep.subr.bf16.mxu0 0
      %4703 = vmatpush1.bf16.msra.mxu0 0
      %4704 = vmatprep.subr.bf16.mxu0 0
      %4705 = vmatpush1.bf16.msra.mxu0 0
      %4706 = vmatprep.subr.bf16.mxu0 0
      %4707 = vmatpush1.bf16.msra.mxu0 %v4688
      %4708 = vmatprep.subr.bf16.mxu0 0
      %4709 = vmatpush1.bf16.msra.mxu0 %v4687
      %4710 = vmatprep.subr.bf16.mxu0 0
      %4711 = vmatpush2.bf16.msra.mxu0 0
      %4712 = vmatprep.subr.bf16.mxu0 0
      %4713 = vmatpush2.bf16.msra.mxu0 0
      %4714 = vmatprep.subr.bf16.mxu0 0
      %4715 = vmatpush2.bf16.msra.mxu0 0
      %4716 = vmatprep.subr.bf16.mxu0 0
      %4717 = vmatpush2.bf16.msra.mxu0 0
      %4718 = vmatprep.subr.bf16.mxu0 0
      %4719 = vmatpush2.bf16.msra.mxu0 0
      %4720 = vmatprep.subr.bf16.mxu0 0
      %4721 = vmatpush2.bf16.msra.mxu0 0
      %4722 = vmatprep.subr.bf16.mxu0 0
      %4723 = vmatpush2.bf16.msra.mxu0 0
      %4724 = vmatprep.subr.bf16.mxu0 0
      %4725 = vmatpush2.bf16.msra.mxu0 0
      %4726 = vmatprep.mubr.bf16.mxu0 0
      %4727 = vmatmul.mubr.bf16.gmra.mxu0 %v4692
      %v4728 = vpop.f32.mrf.mxu0
      %v4729 = vadd.f32 0.0, %v4728
      %v4730 = vpop.f32.mrf.mxu0
      %v4731 = vpop.f32.mrf.mxu0
      %v4732 = vpop.f32.mrf.mxu0
      %4733 = vdwg.mxu0
      %v4734 = vadd.f32 %v2679, %v4729
      %s4735 = scalar_lea.vmem %s2, 1
      %v4736 = vld [vmem:[%s4735] sm:$0x1]
      %v4737 = vmul.f32 %v4734, %v4734
      %v4738 = vsel %vm433, %v4737, 0.0
      %4739 = vadd.xlane.f32.xlu0 %v4738
      %v4740 = vpop.xlane.xlu0 %4739
      %v4741 = vmul.f32 %v4740, %v437
      %v4742 = vadd.f32 %v4741, 1e-06
      %v4743 = vrsqrt.pop %v4742
      %v4744 = vmul.f32 %v4734, %v4743
      %v4746 = vlaneseq
      %v4747 = vshrl.u32 %v4746, 7
      %v4748 = vsub.s32 0, %v4747
      %v4749 = vrot.slane %v4736, %v4748
      %v4751 = vmul.f32 %v4744, %v4749
      %v4752 = vpack.c.bf16 %v4751, %v4751
      %s4753 = scalar_lea.vmem %s7, 16
      %v4754 = vld [vmem:[%s4753] sm:$0xf]
      %v4755 = vld [vmem:[%s4753 + $0x4] sm:$0xf]
      %v4756 = vld [vmem:[%s4753 + $0x8] sm:$0xf]
      %v4757 = vld [vmem:[%s4753 + $0xc] sm:$0xf]
      %v4762 = vunpack.c.l.b16 %v4754
      %v4763 = vunpack.c.l.b16 %v4755
      %v4764 = vunpack.c.l.b16 %v4756
      %v4765 = vunpack.c.l.b16 %v4757
      %v4766 = vpack.c.b16 %v4763, %v4762
      %v4767 = vpack.c.b16 %v4765, %v4764
      %v4771 = vsel %vm433, %v4752, 0
      %4773 = vmatprep.subr.bf16.mxu0 0
      %4774 = vmatpush1.bf16.msra.mxu0 0
      %4775 = vmatprep.subr.bf16.mxu0 0
      %4776 = vmatpush1.bf16.msra.mxu0 0
      %4777 = vmatprep.subr.bf16.mxu0 0
      %4778 = vmatpush1.bf16.msra.mxu0 0
      %4779 = vmatprep.subr.bf16.mxu0 0
      %4780 = vmatpush1.bf16.msra.mxu0 0
      %4781 = vmatprep.subr.bf16.mxu0 0
      %4782 = vmatpush1.bf16.msra.mxu0 0
      %4783 = vmatprep.subr.bf16.mxu0 0
      %4784 = vmatpush1.bf16.msra.mxu0 0
      %4785 = vmatprep.subr.bf16.mxu0 0
      %4786 = vmatpush1.bf16.msra.mxu0 %v4767
      %4787 = vmatprep.subr.bf16.mxu0 0
      %4788 = vmatpush1.bf16.msra.mxu0 %v4766
      %4789 = vmatprep.subr.bf16.mxu0 0
      %4790 = vmatpush2.bf16.msra.mxu0 0
      %4791 = vmatprep.subr.bf16.mxu0 0
      %4792 = vmatpush2.bf16.msra.mxu0 0
      %4793 = vmatprep.subr.bf16.mxu0 0
      %4794 = vmatpush2.bf16.msra.mxu0 0
      %4795 = vmatprep.subr.bf16.mxu0 0
      %4796 = vmatpush2.bf16.msra.mxu0 0
      %4797 = vmatprep.subr.bf16.mxu0 0
      %4798 = vmatpush2.bf16.msra.mxu0 0
      %4799 = vmatprep.subr.bf16.mxu0 0
      %4800 = vmatpush2.bf16.msra.mxu0 0
      %4801 = vmatprep.subr.bf16.mxu0 0
      %4802 = vmatpush2.bf16.msra.mxu0 0
      %4803 = vmatprep.subr.bf16.mxu0 0
      %4804 = vmatpush2.bf16.msra.mxu0 0
      %4805 = vmatprep.mubr.bf16.mxu0 0
      %4806 = vmatmul.mubr.bf16.gmra.mxu0 %v4771
      %v4807 = vpop.f32.mrf.mxu0
      %v4808 = vadd.f32 0.0, %v4807
      %v4809 = vpop.f32.mrf.mxu0
      %v4810 = vpop.f32.mrf.mxu0
      %v4811 = vpop.f32.mrf.mxu0
      %4812 = vdwg.mxu0
      %v4813 = vxor.u32 %v4808, 2147483648
      %v4814 = vmul.f32 %v4813, 1.442695
      %v4815 = vpow.pop %v4814
      %v4816 = vadd.f32 %v4815, 1.0
      %v4817 = vrcp.pop %v4816
      %v4818 = vmul.f32 1.0, %v4817
      %v4819 = vmul.f32 %v4808, %v4818
      %4820 = vrot.lane.b32.xlu0 %v4808, 64
      %v4821 = vpop.permute.xlu0 %4820
      %v4822 = vmul.f32 %v4819, %v4821
      %v4823 = vpack.c.bf16 %v4822, %v4822
      %s4824 = scalar_lea.vmem %s8, 64
      %v4825 = vld [vmem:[%s4824] sm:$0xf]
      %v4826 = vld [vmem:[%s4824 + $0x4] sm:$0xf]
      %v4827 = vld [vmem:[%s4824 + $0x8] sm:$0xf]
      %v4828 = vld [vmem:[%s4824 + $0xc] sm:$0xf]
      %v4829 = vld [vmem:[%s4824 + $0x10] sm:$0xf]
      %v4830 = vld [vmem:[%s4824 + $0x14] sm:$0xf]
      %v4831 = vld [vmem:[%s4824 + $0x18] sm:$0xf]
      %v4832 = vld [vmem:[%s4824 + $0x1c] sm:$0xf]
      %v4833 = vld [vmem:[%s4824 + $0x20] sm:$0xf]
      %v4834 = vld [vmem:[%s4824 + $0x24] sm:$0xf]
      %v4835 = vld [vmem:[%s4824 + $0x28] sm:$0xf]
      %v4836 = vld [vmem:[%s4824 + $0x2c] sm:$0xf]
      %v4837 = vld [vmem:[%s4824 + $0x30] sm:$0xf]
      %v4838 = vld [vmem:[%s4824 + $0x34] sm:$0xf]
      %v4839 = vld [vmem:[%s4824 + $0x38] sm:$0xf]
      %v4840 = vld [vmem:[%s4824 + $0x3c] sm:$0xf]
      %v4857 = vunpack.c.l.b16 %v4825
      %v4858 = vunpack.c.l.b16 %v4826
      %v4859 = vunpack.c.l.b16 %v4827
      %v4860 = vunpack.c.l.b16 %v4828
      %v4861 = vunpack.c.l.b16 %v4829
      %v4862 = vunpack.c.l.b16 %v4830
      %v4863 = vunpack.c.l.b16 %v4831
      %v4864 = vunpack.c.l.b16 %v4832
      %v4865 = vunpack.c.l.b16 %v4833
      %v4866 = vunpack.c.l.b16 %v4834
      %v4867 = vunpack.c.l.b16 %v4835
      %v4868 = vunpack.c.l.b16 %v4836
      %v4869 = vunpack.c.l.b16 %v4837
      %v4870 = vunpack.c.l.b16 %v4838
      %v4871 = vunpack.c.l.b16 %v4839
      %v4872 = vunpack.c.l.b16 %v4840
      %v4873 = vpack.c.b16 %v4858, %v4857
      %v4874 = vpack.c.b16 %v4860, %v4859
      %v4875 = vpack.c.b16 %v4862, %v4861
      %v4876 = vpack.c.b16 %v4864, %v4863
      %v4877 = vpack.c.b16 %v4866, %v4865
      %v4878 = vpack.c.b16 %v4868, %v4867
      %v4879 = vpack.c.b16 %v4870, %v4869
      %v4880 = vpack.c.b16 %v4872, %v4871
      %4889 = vmatprep.subr.bf16.mxu0 0
      %4890 = vmatpush1.bf16.msra.mxu0 %v4880
      %4891 = vmatprep.subr.bf16.mxu0 0
      %4892 = vmatpush1.bf16.msra.mxu0 %v4879
      %4893 = vmatprep.subr.bf16.mxu0 0
      %4894 = vmatpush1.bf16.msra.mxu0 %v4878
      %4895 = vmatprep.subr.bf16.mxu0 0
      %4896 = vmatpush1.bf16.msra.mxu0 %v4877
      %4897 = vmatprep.subr.bf16.mxu0 0
      %4898 = vmatpush1.bf16.msra.mxu0 %v4876
      %4899 = vmatprep.subr.bf16.mxu0 0
      %4900 = vmatpush1.bf16.msra.mxu0 %v4875
      %4901 = vmatprep.subr.bf16.mxu0 0
      %4902 = vmatpush1.bf16.msra.mxu0 %v4874
      %4903 = vmatprep.subr.bf16.mxu0 0
      %4904 = vmatpush1.bf16.msra.mxu0 %v4873
      %4905 = vmatprep.subr.bf16.mxu0 0
      %4906 = vmatpush2.bf16.msra.mxu0 0
      %4907 = vmatprep.subr.bf16.mxu0 0
      %4908 = vmatpush2.bf16.msra.mxu0 0
      %4909 = vmatprep.subr.bf16.mxu0 0
      %4910 = vmatpush2.bf16.msra.mxu0 0
      %4911 = vmatprep.subr.bf16.mxu0 0
      %4912 = vmatpush2.bf16.msra.mxu0 0
      %4913 = vmatprep.subr.bf16.mxu0 0
      %4914 = vmatpush2.bf16.msra.mxu0 0
      %4915 = vmatprep.subr.bf16.mxu0 0
      %4916 = vmatpush2.bf16.msra.mxu0 0
      %4917 = vmatprep.subr.bf16.mxu0 0
      %4918 = vmatpush2.bf16.msra.mxu0 0
      %4919 = vmatprep.subr.bf16.mxu0 0
      %4920 = vmatpush2.bf16.msra.mxu0 0
      %4921 = vmatprep.mubr.bf16.mxu0 0
      %4922 = vmatmul.mubr.bf16.gmra.mxu0 %v4823
      %v4923 = vpop.f32.mrf.mxu0
      %v4924 = vadd.f32 0.0, %v4923
      %v4925 = vpop.f32.mrf.mxu0
      %v4926 = vpop.f32.mrf.mxu0
      %v4927 = vpop.f32.mrf.mxu0
      %4928 = vdwg.mxu0
      %v4929 = vadd.f32 %v4734, %v4924
      %s4930 = scalar_lea.vmem %s1, 2
      %v4931 = vld [vmem:[%s4930] sm:$0x1]
      %v4932 = vmul.f32 %v4929, %v4929
      %v4933 = vsel %vm433, %v4932, 0.0
      %4934 = vadd.xlane.f32.xlu0 %v4933
      %v4935 = vpop.xlane.xlu0 %4934
      %v4936 = vmul.f32 %v4935, %v437
      %v4937 = vadd.f32 %v4936, 1e-06
      %v4938 = vrsqrt.pop %v4937
      %v4939 = vmul.f32 %v4929, %v4938
      %v4941 = vlaneseq
      %v4942 = vshrl.u32 %v4941, 7
      %v4943 = vsub.s32 0, %v4942
      %v4944 = vrot.slane %v4931, %v4943
      %v4946 = vmul.f32 %v4939, %v4944
      %v4947 = vpack.c.bf16 %v4946, %v4946
      %s4948 = scalar_lea.vmem %s4, 32
      %v4949 = vld [vmem:[%s4948] sm:$0xf]
      %v4950 = vld [vmem:[%s4948 + $0x4] sm:$0xf]
      %v4951 = vld [vmem:[%s4948 + $0x8] sm:$0xf]
      %v4952 = vld [vmem:[%s4948 + $0xc] sm:$0xf]
      %v4957 = vunpack.c.l.b16 %v4949
      %v4958 = vunpack.c.l.b16 %v4950
      %v4959 = vunpack.c.l.b16 %v4951
      %v4960 = vunpack.c.l.b16 %v4952
      %v4961 = vpack.c.b16 %v4958, %v4957
      %v4962 = vpack.c.b16 %v4960, %v4959
      %v4966 = vsel %vm433, %v4947, 0
      %4968 = vmatprep.subr.bf16.mxu0 0
      %4969 = vmatpush1.bf16.msra.mxu0 0
      %4970 = vmatprep.subr.bf16.mxu0 0
      %4971 = vmatpush1.bf16.msra.mxu0 0
      %4972 = vmatprep.subr.bf16.mxu0 0
      %4973 = vmatpush1.bf16.msra.mxu0 0
      %4974 = vmatprep.subr.bf16.mxu0 0
      %4975 = vmatpush1.bf16.msra.mxu0 0
      %4976 = vmatprep.subr.bf16.mxu0 0
      %4977 = vmatpush1.bf16.msra.mxu0 0
      %4978 = vmatprep.subr.bf16.mxu0 0
      %4979 = vmatpush1.bf16.msra.mxu0 0
      %4980 = vmatprep.subr.bf16.mxu0 0
      %4981 = vmatpush1.bf16.msra.mxu0 %v4962
      %4982 = vmatprep.subr.bf16.mxu0 0
      %4983 = vmatpush1.bf16.msra.mxu0 %v4961
      %4984 = vmatprep.subr.bf16.mxu0 0
      %4985 = vmatpush2.bf16.msra.mxu0 0
      %4986 = vmatprep.subr.bf16.mxu0 0
      %4987 = vmatpush2.bf16.msra.mxu0 0
      %4988 = vmatprep.subr.bf16.mxu0 0
      %4989 = vmatpush2.bf16.msra.mxu0 0
      %4990 = vmatprep.subr.bf16.mxu0 0
      %4991 = vmatpush2.bf16.msra.mxu0 0
      %4992 = vmatprep.subr.bf16.mxu0 0
      %4993 = vmatpush2.bf16.msra.mxu0 0
      %4994 = vmatprep.subr.bf16.mxu0 0
      %4995 = vmatpush2.bf16.msra.mxu0 0
      %4996 = vmatprep.subr.bf16.mxu0 0
      %4997 = vmatpush2.bf16.msra.mxu0 0
      %4998 = vmatprep.subr.bf16.mxu0 0
      %4999 = vmatpush2.bf16.msra.mxu0 0
      %5000 = vmatprep.mubr.bf16.mxu0 0
      %5001 = vmatmul.mubr.bf16.gmra.mxu0 %v4966
      %v5002 = vpop.f32.mrf.mxu0
      %v5003 = vadd.f32 0.0, %v5002
      %v5004 = vpop.f32.mrf.mxu0
      %v5005 = vpop.f32.mrf.mxu0
      %v5006 = vpop.f32.mrf.mxu0
      %5007 = vdwg.mxu0
      %s5008 = scalar_lea.vmem %s5, 32
      %v5009 = vld [vmem:[%s5008] sm:$0xf]
      %v5010 = vld [vmem:[%s5008 + $0x4] sm:$0xf]
      %v5011 = vld [vmem:[%s5008 + $0x8] sm:$0xf]
      %v5012 = vld [vmem:[%s5008 + $0xc] sm:$0xf]
      %v5017 = vunpack.c.l.b16 %v5009
      %v5018 = vunpack.c.l.b16 %v5010
      %v5019 = vunpack.c.l.b16 %v5011
      %v5020 = vunpack.c.l.b16 %v5012
      %v5021 = vpack.c.b16 %v5018, %v5017
      %v5022 = vpack.c.b16 %v5020, %v5019
      %5025 = vmatprep.subr.bf16.mxu0 0
      %5026 = vmatpush1.bf16.msra.mxu0 0
      %5027 = vmatprep.subr.bf16.mxu0 0
      %5028 = vmatpush1.bf16.msra.mxu0 0
      %5029 = vmatprep.subr.bf16.mxu0 0
      %5030 = vmatpush1.bf16.msra.mxu0 0
      %5031 = vmatprep.subr.bf16.mxu0 0
      %5032 = vmatpush1.bf16.msra.mxu0 0
      %5033 = vmatprep.subr.bf16.mxu0 0
      %5034 = vmatpush1.bf16.msra.mxu0 0
      %5035 = vmatprep.subr.bf16.mxu0 0
      %5036 = vmatpush1.bf16.msra.mxu0 0
      %5037 = vmatprep.subr.bf16.mxu0 0
      %5038 = vmatpush1.bf16.msra.mxu0 %v5022
      %5039 = vmatprep.subr.bf16.mxu0 0
      %5040 = vmatpush1.bf16.msra.mxu0 %v5021
      %5041 = vmatprep.subr.bf16.mxu0 0
      %5042 = vmatpush2.bf16.msra.mxu0 0
      %5043 = vmatprep.subr.bf16.mxu0 0
      %5044 = vmatpush2.bf16.msra.mxu0 0
      %5045 = vmatprep.subr.bf16.mxu0 0
      %5046 = vmatpush2.bf16.msra.mxu0 0
      %5047 = vmatprep.subr.bf16.mxu0 0
      %5048 = vmatpush2.bf16.msra.mxu0 0
      %5049 = vmatprep.subr.bf16.mxu0 0
      %5050 = vmatpush2.bf16.msra.mxu0 0
      %5051 = vmatprep.subr.bf16.mxu0 0
      %5052 = vmatpush2.bf16.msra.mxu0 0
      %5053 = vmatprep.subr.bf16.mxu0 0
      %5054 = vmatpush2.bf16.msra.mxu0 0
      %5055 = vmatprep.subr.bf16.mxu0 0
      %5056 = vmatpush2.bf16.msra.mxu0 0
      %5057 = vmatprep.mubr.bf16.mxu0 0
      %5058 = vmatmul.mubr.bf16.gmra.mxu0 %v4966
      %v5059 = vpop.f32.mrf.mxu0
      %v5060 = vadd.f32 0.0, %v5059
      %v5061 = vpop.f32.mrf.mxu0
      %v5062 = vpop.f32.mrf.mxu0
      %v5063 = vpop.f32.mrf.mxu0
      %5064 = vdwg.mxu0
      %v5065 = vmul.f32 %v5003, %v428
      %v5066 = vmul.f32 %v5060, %v429
      %v5067 = vadd.f32 %v5065, %v5066
      %5069 = vrot.lane.b32.xlu0 %v5067, 120
      %v5070 = vpop.permute.xlu0 %5069
      %5072 = vrot.lane.b32.xlu0 %v5067, 112
      %v5073 = vpop.permute.xlu0 %5072
      %5075 = vrot.lane.b32.xlu0 %v5067, 104
      %v5076 = vpop.permute.xlu0 %5075
      %v5078 = vcombine.low %v5067, %v5073
      %v5079 = vcombine.high %v5067, %v5073
      %v5081 = vunpack.c.l.s4 1983009808
      %v5082 = vunpack.c.0.s8 %v5081
      %v5083 = vlaneseq
      %v5084 = vshrl.u32 %v5083, 7
      %v5085 = vsub.s32 %v5082, %v5084
      %v5086 = vrot.slane %v5078, %v5085
      %v5088 = vunpack.c.l.s4 1983009808
      %v5089 = vunpack.c.0.s8 %v5088
      %v5090 = vlaneseq
      %v5091 = vshrl.u32 %v5090, 7
      %v5092 = vsub.s32 %v5089, %v5091
      %v5093 = vrot.slane %v5079, %v5092
      %v5094 = vcombine.low %v5070, %v5076
      %v5095 = vcombine.high %v5070, %v5076
      %v5097 = vunpack.c.l.s4 1983009808
      %v5098 = vunpack.c.0.s8 %v5097
      %v5099 = vlaneseq
      %v5100 = vshrl.u32 %v5099, 7
      %v5101 = vsub.s32 %v5098, %v5100
      %v5102 = vrot.slane %v5094, %v5101
      %v5104 = vunpack.c.l.s4 1983009808
      %v5105 = vunpack.c.0.s8 %v5104
      %v5106 = vlaneseq
      %v5107 = vshrl.u32 %v5106, 7
      %v5108 = vsub.s32 %v5105, %v5107
      %v5109 = vrot.slane %v5095, %v5108
      %v5110 = vcombine.low %v5086, %v5102
      %v5111 = vcombine.high %v5086, %v5102
      %v5113 = vunpack.c.l.s4 1934713408
      %v5114 = vunpack.c.0.s8 %v5113
      %v5115 = vlaneseq
      %v5116 = vshrl.u32 %v5115, 7
      %v5117 = vsub.s32 %v5114, %v5116
      %v5118 = vrot.slane %v5110, %v5117
      %v5120 = vunpack.c.l.s4 1934713408
      %v5121 = vunpack.c.0.s8 %v5120
      %v5122 = vlaneseq
      %v5123 = vshrl.u32 %v5122, 7
      %v5124 = vsub.s32 %v5121, %v5123
      %v5125 = vrot.slane %v5111, %v5124
      %v5126 = vcombine.low %v5093, %v5109
      %v5127 = vcombine.high %v5093, %v5109
      %v5129 = vunpack.c.l.s4 1934713408
      %v5130 = vunpack.c.0.s8 %v5129
      %v5131 = vlaneseq
      %v5132 = vshrl.u32 %v5131, 7
      %v5133 = vsub.s32 %v5130, %v5132
      %v5134 = vrot.slane %v5126, %v5133
      %v5136 = vunpack.c.l.s4 1934713408
      %v5137 = vunpack.c.0.s8 %v5136
      %v5138 = vlaneseq
      %v5139 = vshrl.u32 %v5138, 7
      %v5140 = vsub.s32 %v5137, %v5139
      %v5141 = vrot.slane %v5127, %v5140
      %v5142 = vcombine.high %v5118, 0.0
      %v5143 = vcombine.high %v5125, 0.0
      %v5144 = vcombine.high %v5134, 0.0
      %v5145 = vcombine.high %v5141, 0.0
      %5146 = vrot.lane.b32.xlu0 %v5067, 96
      %v5147 = vpop.permute.xlu0 %5146
      %5148 = vrot.lane.b32.xlu0 %v5070, 96
      %v5149 = vpop.permute.xlu0 %5148
      %5150 = vrot.lane.b32.xlu0 %v5073, 96
      %v5151 = vpop.permute.xlu0 %5150
      %5152 = vrot.lane.b32.xlu0 %v5076, 96
      %v5153 = vpop.permute.xlu0 %5152
      %v5158 = vcombine.low %v5147, %v5151
      %v5159 = vcombine.high %v5147, %v5151
      %v5161 = vunpack.c.l.s4 1983009808
      %v5162 = vunpack.c.0.s8 %v5161
      %v5163 = vlaneseq
      %v5164 = vshrl.u32 %v5163, 7
      %v5165 = vsub.s32 %v5162, %v5164
      %v5166 = vrot.slane %v5158, %v5165
      %v5168 = vunpack.c.l.s4 1983009808
      %v5169 = vunpack.c.0.s8 %v5168
      %v5170 = vlaneseq
      %v5171 = vshrl.u32 %v5170, 7
      %v5172 = vsub.s32 %v5169, %v5171
      %v5173 = vrot.slane %v5159, %v5172
      %v5174 = vcombine.low %v5149, %v5153
      %v5175 = vcombine.high %v5149, %v5153
      %v5177 = vunpack.c.l.s4 1983009808
      %v5178 = vunpack.c.0.s8 %v5177
      %v5179 = vlaneseq
      %v5180 = vshrl.u32 %v5179, 7
      %v5181 = vsub.s32 %v5178, %v5180
      %v5182 = vrot.slane %v5174, %v5181
      %v5184 = vunpack.c.l.s4 1983009808
      %v5185 = vunpack.c.0.s8 %v5184
      %v5186 = vlaneseq
      %v5187 = vshrl.u32 %v5186, 7
      %v5188 = vsub.s32 %v5185, %v5187
      %v5189 = vrot.slane %v5175, %v5188
      %v5190 = vcombine.low %v5166, %v5182
      %v5191 = vcombine.high %v5166, %v5182
      %v5193 = vunpack.c.l.s4 1934713408
      %v5194 = vunpack.c.0.s8 %v5193
      %v5195 = vlaneseq
      %v5196 = vshrl.u32 %v5195, 7
      %v5197 = vsub.s32 %v5194, %v5196
      %v5198 = vrot.slane %v5190, %v5197
      %v5200 = vunpack.c.l.s4 1934713408
      %v5201 = vunpack.c.0.s8 %v5200
      %v5202 = vlaneseq
      %v5203 = vshrl.u32 %v5202, 7
      %v5204 = vsub.s32 %v5201, %v5203
      %v5205 = vrot.slane %v5191, %v5204
      %v5206 = vcombine.low %v5173, %v5189
      %v5207 = vcombine.high %v5173, %v5189
      %v5209 = vunpack.c.l.s4 1934713408
      %v5210 = vunpack.c.0.s8 %v5209
      %v5211 = vlaneseq
      %v5212 = vshrl.u32 %v5211, 7
      %v5213 = vsub.s32 %v5210, %v5212
      %v5214 = vrot.slane %v5206, %v5213
      %v5216 = vunpack.c.l.s4 1934713408
      %v5217 = vunpack.c.0.s8 %v5216
      %v5218 = vlaneseq
      %v5219 = vshrl.u32 %v5218, 7
      %v5220 = vsub.s32 %v5217, %v5219
      %v5221 = vrot.slane %v5207, %v5220
      %v5222 = vcombine.high %v5198, 0.0
      %v5223 = vcombine.high %v5205, 0.0
      %v5224 = vcombine.high %v5214, 0.0
      %v5225 = vcombine.high %v5221, 0.0
      %5226 = vrot.lane.b32.xlu0 %v5067, 64
      %v5227 = vpop.permute.xlu0 %5226
      %5228 = vrot.lane.b32.xlu0 %v5070, 64
      %v5229 = vpop.permute.xlu0 %5228
      %5230 = vrot.lane.b32.xlu0 %v5073, 64
      %v5231 = vpop.permute.xlu0 %5230
      %5232 = vrot.lane.b32.xlu0 %v5076, 64
      %v5233 = vpop.permute.xlu0 %5232
      %v5238 = vcombine.low %v5227, %v5231
      %v5239 = vcombine.high %v5227, %v5231
      %v5241 = vunpack.c.l.s4 1983009808
      %v5242 = vunpack.c.0.s8 %v5241
      %v5243 = vlaneseq
      %v5244 = vshrl.u32 %v5243, 7
      %v5245 = vsub.s32 %v5242, %v5244
      %v5246 = vrot.slane %v5238, %v5245
      %v5248 = vunpack.c.l.s4 1983009808
      %v5249 = vunpack.c.0.s8 %v5248
      %v5250 = vlaneseq
      %v5251 = vshrl.u32 %v5250, 7
      %v5252 = vsub.s32 %v5249, %v5251
      %v5253 = vrot.slane %v5239, %v5252
      %v5254 = vcombine.low %v5229, %v5233
      %v5255 = vcombine.high %v5229, %v5233
      %v5257 = vunpack.c.l.s4 1983009808
      %v5258 = vunpack.c.0.s8 %v5257
      %v5259 = vlaneseq
      %v5260 = vshrl.u32 %v5259, 7
      %v5261 = vsub.s32 %v5258, %v5260
      %v5262 = vrot.slane %v5254, %v5261
      %v5264 = vunpack.c.l.s4 1983009808
      %v5265 = vunpack.c.0.s8 %v5264
      %v5266 = vlaneseq
      %v5267 = vshrl.u32 %v5266, 7
      %v5268 = vsub.s32 %v5265, %v5267
      %v5269 = vrot.slane %v5255, %v5268
      %v5270 = vcombine.low %v5246, %v5262
      %v5271 = vcombine.high %v5246, %v5262
      %v5273 = vunpack.c.l.s4 1934713408
      %v5274 = vunpack.c.0.s8 %v5273
      %v5275 = vlaneseq
      %v5276 = vshrl.u32 %v5275, 7
      %v5277 = vsub.s32 %v5274, %v5276
      %v5278 = vrot.slane %v5270, %v5277
      %v5280 = vunpack.c.l.s4 1934713408
      %v5281 = vunpack.c.0.s8 %v5280
      %v5282 = vlaneseq
      %v5283 = vshrl.u32 %v5282, 7
      %v5284 = vsub.s32 %v5281, %v5283
      %v5285 = vrot.slane %v5271, %v5284
      %v5286 = vcombine.low %v5253, %v5269
      %v5287 = vcombine.high %v5253, %v5269
      %v5289 = vunpack.c.l.s4 1934713408
      %v5290 = vunpack.c.0.s8 %v5289
      %v5291 = vlaneseq
      %v5292 = vshrl.u32 %v5291, 7
      %v5293 = vsub.s32 %v5290, %v5292
      %v5294 = vrot.slane %v5286, %v5293
      %v5296 = vunpack.c.l.s4 1934713408
      %v5297 = vunpack.c.0.s8 %v5296
      %v5298 = vlaneseq
      %v5299 = vshrl.u32 %v5298, 7
      %v5300 = vsub.s32 %v5297, %v5299
      %v5301 = vrot.slane %v5287, %v5300
      %v5302 = vcombine.high %v5278, 0.0
      %v5303 = vcombine.high %v5285, 0.0
      %v5304 = vcombine.high %v5294, 0.0
      %v5305 = vcombine.high %v5301, 0.0
      %v5306 = vpack.c.bf16 %v5118, %v5118
      %v5307 = vpack.c.bf16 %v5142, %v5142
      %v5308 = vpack.c.bf16 %v5125, %v5125
      %v5309 = vpack.c.bf16 %v5143, %v5143
      %v5310 = vpack.c.bf16 %v5134, %v5134
      %v5311 = vpack.c.bf16 %v5144, %v5144
      %v5312 = vpack.c.bf16 %v5141, %v5141
      %v5313 = vpack.c.bf16 %v5145, %v5145
      %v5314 = vpack.c.bf16 %v5198, %v5198
      %v5315 = vpack.c.bf16 %v5222, %v5222
      %v5316 = vpack.c.bf16 %v5205, %v5205
      %v5317 = vpack.c.bf16 %v5223, %v5223
      %v5318 = vpack.c.bf16 %v5214, %v5214
      %v5319 = vpack.c.bf16 %v5224, %v5224
      %v5320 = vpack.c.bf16 %v5221, %v5221
      %v5321 = vpack.c.bf16 %v5225, %v5225
      %v5322 = vcombine.low %v5306, %v5310
      %v5324 = vunpack.c.l.s4 1983009808
      %v5325 = vunpack.c.0.s8 %v5324
      %v5326 = vlaneseq
      %v5327 = vshrl.u32 %v5326, 7
      %v5328 = vsub.s32 %v5325, %v5327
      %v5329 = vrot.slane %v5322, %v5328
      %v5330 = vcombine.low %v5308, %v5312
      %v5332 = vunpack.c.l.s4 1983009808
      %v5333 = vunpack.c.0.s8 %v5332
      %v5334 = vlaneseq
      %v5335 = vshrl.u32 %v5334, 7
      %v5336 = vsub.s32 %v5333, %v5335
      %v5337 = vrot.slane %v5330, %v5336
      %v5338 = vcombine.low %v5329, %v5337
      %v5340 = vunpack.c.l.s4 1934713408
      %v5341 = vunpack.c.0.s8 %v5340
      %v5342 = vlaneseq
      %v5343 = vshrl.u32 %v5342, 7
      %v5344 = vsub.s32 %v5341, %v5343
      %v5345 = vrot.slane %v5338, %v5344
      %v5346 = vcombine.high %v5345, 0
      %v5347 = vcombine.low %v5307, %v5311
      %v5349 = vunpack.c.l.s4 1983009808
      %v5350 = vunpack.c.0.s8 %v5349
      %v5351 = vlaneseq
      %v5352 = vshrl.u32 %v5351, 7
      %v5353 = vsub.s32 %v5350, %v5352
      %v5354 = vrot.slane %v5347, %v5353
      %v5355 = vcombine.low %v5309, %v5313
      %v5357 = vunpack.c.l.s4 1983009808
      %v5358 = vunpack.c.0.s8 %v5357
      %v5359 = vlaneseq
      %v5360 = vshrl.u32 %v5359, 7
      %v5361 = vsub.s32 %v5358, %v5360
      %v5362 = vrot.slane %v5355, %v5361
      %v5363 = vcombine.low %v5354, %v5362
      %v5365 = vunpack.c.l.s4 1934713408
      %v5366 = vunpack.c.0.s8 %v5365
      %v5367 = vlaneseq
      %v5368 = vshrl.u32 %v5367, 7
      %v5369 = vsub.s32 %v5366, %v5368
      %v5370 = vrot.slane %v5363, %v5369
      %v5371 = vcombine.high %v5370, 0
      %v5374 = vpack.i.b16 %v5370, %v5345
      %v5375 = vshrl.u32 %v5345, 16
      %v5376 = vshrl.u32 %v5370, 16
      %v5377 = vpack.i.b16 %v5376, %v5375
      %v5380 = vpack.i.b16 %v5371, %v5346
      %v5381 = vshrl.u32 %v5346, 16
      %v5382 = vshrl.u32 %v5371, 16
      %v5383 = vpack.i.b16 %v5382, %v5381
      %5384 = vxpose.xlu0.c.b16.start [1/8] %v5314, 128
      %5385 = vxpose.xlu0.c.b16.cont [2/8] 0, 128
      %5386 = vxpose.xlu0.c.b16.cont [3/8] 0, 128
      %5387 = vxpose.xlu0.c.b16.cont [4/8] 0, 128
      %5388 = vxpose.xlu0.c.b16.cont [5/8] 0, 128
      %5389 = vxpose.xlu0.c.b16.cont [6/8] 0, 128
      %5390 = vxpose.xlu0.c.b16.cont [7/8] 0, 128
      %5391 = vxpose.xlu0.c.b16.end [8/8] 0, 128
      %v5392 = vpop.trf.xlu0
      %v5393 = vpop.trf.xlu0
      %v5394 = vpop.trf.xlu0
      %v5395 = vpop.trf.xlu0
      %v5396 = vpop.trf.xlu0
      %v5397 = vpop.trf.xlu0
      %v5398 = vpop.trf.xlu0
      %v5399 = vpop.trf.xlu0
      %5400 = vxpose.xlu0.c.b16.start [1/8] %v5315, 128
      %5401 = vxpose.xlu0.c.b16.cont [2/8] 0, 128
      %5402 = vxpose.xlu0.c.b16.cont [3/8] 0, 128
      %5403 = vxpose.xlu0.c.b16.cont [4/8] 0, 128
      %5404 = vxpose.xlu0.c.b16.cont [5/8] 0, 128
      %5405 = vxpose.xlu0.c.b16.cont [6/8] 0, 128
      %5406 = vxpose.xlu0.c.b16.cont [7/8] 0, 128
      %5407 = vxpose.xlu0.c.b16.end [8/8] 0, 128
      %v5408 = vpop.trf.xlu0
      %v5409 = vpop.trf.xlu0
      %v5410 = vpop.trf.xlu0
      %v5411 = vpop.trf.xlu0
      %v5412 = vpop.trf.xlu0
      %v5413 = vpop.trf.xlu0
      %v5414 = vpop.trf.xlu0
      %v5415 = vpop.trf.xlu0
      %5416 = vxpose.xlu0.c.b16.start [1/8] %v5316, 128
      %5417 = vxpose.xlu0.c.b16.cont [2/8] 0, 128
      %5418 = vxpose.xlu0.c.b16.cont [3/8] 0, 128
      %5419 = vxpose.xlu0.c.b16.cont [4/8] 0, 128
      %5420 = vxpose.xlu0.c.b16.cont [5/8] 0, 128
      %5421 = vxpose.xlu0.c.b16.cont [6/8] 0, 128
      %5422 = vxpose.xlu0.c.b16.cont [7/8] 0, 128
      %5423 = vxpose.xlu0.c.b16.end [8/8] 0, 128
      %v5424 = vpop.trf.xlu0
      %v5425 = vpop.trf.xlu0
      %v5426 = vpop.trf.xlu0
      %v5427 = vpop.trf.xlu0
      %v5428 = vpop.trf.xlu0
      %v5429 = vpop.trf.xlu0
      %v5430 = vpop.trf.xlu0
      %v5431 = vpop.trf.xlu0
      %5432 = vxpose.xlu0.c.b16.start [1/8] %v5317, 128
      %5433 = vxpose.xlu0.c.b16.cont [2/8] 0, 128
      %5434 = vxpose.xlu0.c.b16.cont [3/8] 0, 128
      %5435 = vxpose.xlu0.c.b16.cont [4/8] 0, 128
      %5436 = vxpose.xlu0.c.b16.cont [5/8] 0, 128
      %5437 = vxpose.xlu0.c.b16.cont [6/8] 0, 128
      %5438 = vxpose.xlu0.c.b16.cont [7/8] 0, 128
      %5439 = vxpose.xlu0.c.b16.end [8/8] 0, 128
      %v5440 = vpop.trf.xlu0
      %v5441 = vpop.trf.xlu0
      %v5442 = vpop.trf.xlu0
      %v5443 = vpop.trf.xlu0
      %v5444 = vpop.trf.xlu0
      %v5445 = vpop.trf.xlu0
      %v5446 = vpop.trf.xlu0
      %v5447 = vpop.trf.xlu0
      %5448 = vxpose.xlu0.c.b16.start [1/8] %v5318, 128
      %5449 = vxpose.xlu0.c.b16.cont [2/8] 0, 128
      %5450 = vxpose.xlu0.c.b16.cont [3/8] 0, 128
      %5451 = vxpose.xlu0.c.b16.cont [4/8] 0, 128
      %5452 = vxpose.xlu0.c.b16.cont [5/8] 0, 128
      %5453 = vxpose.xlu0.c.b16.cont [6/8] 0, 128
      %5454 = vxpose.xlu0.c.b16.cont [7/8] 0, 128
      %5455 = vxpose.xlu0.c.b16.end [8/8] 0, 128
      %v5456 = vpop.trf.xlu0
      %v5457 = vpop.trf.xlu0
      %v5458 = vpop.trf.xlu0
      %v5459 = vpop.trf.xlu0
      %v5460 = vpop.trf.xlu0
      %v5461 = vpop.trf.xlu0
      %v5462 = vpop.trf.xlu0
      %v5463 = vpop.trf.xlu0
      %5464 = vxpose.xlu0.c.b16.start [1/8] %v5319, 128
      %5465 = vxpose.xlu0.c.b16.cont [2/8] 0, 128
      %5466 = vxpose.xlu0.c.b16.cont [3/8] 0, 128
      %5467 = vxpose.xlu0.c.b16.cont [4/8] 0, 128
      %5468 = vxpose.xlu0.c.b16.cont [5/8] 0, 128
      %5469 = vxpose.xlu0.c.b16.cont [6/8] 0, 128
      %5470 = vxpose.xlu0.c.b16.cont [7/8] 0, 128
      %5471 = vxpose.xlu0.c.b16.end [8/8] 0, 128
      %v5472 = vpop.trf.xlu0
      %v5473 = vpop.trf.xlu0
      %v5474 = vpop.trf.xlu0
      %v5475 = vpop.trf.xlu0
      %v5476 = vpop.trf.xlu0
      %v5477 = vpop.trf.xlu0
      %v5478 = vpop.trf.xlu0
      %v5479 = vpop.trf.xlu0
      %5480 = vxpose.xlu0.c.b16.start [1/8] %v5320, 128
      %5481 = vxpose.xlu0.c.b16.cont [2/8] 0, 128
      %5482 = vxpose.xlu0.c.b16.cont [3/8] 0, 128
      %5483 = vxpose.xlu0.c.b16.cont [4/8] 0, 128
      %5484 = vxpose.xlu0.c.b16.cont [5/8] 0, 128
      %5485 = vxpose.xlu0.c.b16.cont [6/8] 0, 128
      %5486 = vxpose.xlu0.c.b16.cont [7/8] 0, 128
      %5487 = vxpose.xlu0.c.b16.end [8/8] 0, 128
      %v5488 = vpop.trf.xlu0
      %v5489 = vpop.trf.xlu0
      %v5490 = vpop.trf.xlu0
      %v5491 = vpop.trf.xlu0
      %v5492 = vpop.trf.xlu0
      %v5493 = vpop.trf.xlu0
      %v5494 = vpop.trf.xlu0
      %v5495 = vpop.trf.xlu0
      %5496 = vxpose.xlu0.c.b16.start [1/8] %v5321, 128
      %5497 = vxpose.xlu0.c.b16.cont [2/8] 0, 128
      %5498 = vxpose.xlu0.c.b16.cont [3/8] 0, 128
      %5499 = vxpose.xlu0.c.b16.cont [4/8] 0, 128
      %5500 = vxpose.xlu0.c.b16.cont [5/8] 0, 128
      %5501 = vxpose.xlu0.c.b16.cont [6/8] 0, 128
      %5502 = vxpose.xlu0.c.b16.cont [7/8] 0, 128
      %5503 = vxpose.xlu0.c.b16.end [8/8] 0, 128
      %v5504 = vpop.trf.xlu0
      %v5505 = vpop.trf.xlu0
      %v5506 = vpop.trf.xlu0
      %v5507 = vpop.trf.xlu0
      %v5508 = vpop.trf.xlu0
      %v5509 = vpop.trf.xlu0
      %v5510 = vpop.trf.xlu0
      %v5511 = vpop.trf.xlu0
      %v5512 = vcombine.low %v5392, %v5456
      %v5514 = vunpack.c.l.s4 1983009808
      %v5515 = vunpack.c.0.s8 %v5514
      %v5516 = vlaneseq
      %v5517 = vshrl.u32 %v5516, 7
      %v5518 = vsub.s32 %v5515, %v5517
      %v5519 = vrot.slane %v5512, %v5518
      %v5520 = vcombine.low %v5424, %v5488
      %v5522 = vunpack.c.l.s4 1983009808
      %v5523 = vunpack.c.0.s8 %v5522
      %v5524 = vlaneseq
      %v5525 = vshrl.u32 %v5524, 7
      %v5526 = vsub.s32 %v5523, %v5525
      %v5527 = vrot.slane %v5520, %v5526
      %v5528 = vcombine.low %v5519, %v5527
      %v5529 = vcombine.high %v5519, %v5527
      %v5531 = vunpack.c.l.s4 1934713408
      %v5532 = vunpack.c.0.s8 %v5531
      %v5533 = vlaneseq
      %v5534 = vshrl.u32 %v5533, 7
      %v5535 = vsub.s32 %v5532, %v5534
      %v5536 = vrot.slane %v5528, %v5535
      %v5538 = vunpack.c.l.s4 1934713408
      %v5539 = vunpack.c.0.s8 %v5538
      %v5540 = vlaneseq
      %v5541 = vshrl.u32 %v5540, 7
      %v5542 = vsub.s32 %v5539, %v5541
      %v5543 = vrot.slane %v5529, %v5542
      %v5544 = vcombine.high %v5536, 0
      %v5545 = vcombine.high %v5543, 0
      %v5546 = vcombine.low %v5408, %v5472
      %v5548 = vunpack.c.l.s4 1983009808
      %v5549 = vunpack.c.0.s8 %v5548
      %v5550 = vlaneseq
      %v5551 = vshrl.u32 %v5550, 7
      %v5552 = vsub.s32 %v5549, %v5551
      %v5553 = vrot.slane %v5546, %v5552
      %v5554 = vcombine.low %v5440, %v5504
      %v5556 = vunpack.c.l.s4 1983009808
      %v5557 = vunpack.c.0.s8 %v5556
      %v5558 = vlaneseq
      %v5559 = vshrl.u32 %v5558, 7
      %v5560 = vsub.s32 %v5557, %v5559
      %v5561 = vrot.slane %v5554, %v5560
      %v5562 = vcombine.low %v5553, %v5561
      %v5563 = vcombine.high %v5553, %v5561
      %v5565 = vunpack.c.l.s4 1934713408
      %v5566 = vunpack.c.0.s8 %v5565
      %v5567 = vlaneseq
      %v5568 = vshrl.u32 %v5567, 7
      %v5569 = vsub.s32 %v5566, %v5568
      %v5570 = vrot.slane %v5562, %v5569
      %v5572 = vunpack.c.l.s4 1934713408
      %v5573 = vunpack.c.0.s8 %v5572
      %v5574 = vlaneseq
      %v5575 = vshrl.u32 %v5574, 7
      %v5576 = vsub.s32 %v5573, %v5575
      %v5577 = vrot.slane %v5563, %v5576
      %v5578 = vcombine.high %v5570, 0
      %v5579 = vcombine.high %v5577, 0
      %v5582 = vpack.i.b16 %v5570, %v5536
      %v5584 = vshrl.u32 %v5536, 16
      %v5585 = vshrl.u32 %v5570, 16
      %v5586 = vpack.i.b16 %v5585, %v5584
      %v5590 = vpack.i.b16 %v5578, %v5544
      %v5592 = vshrl.u32 %v5544, 16
      %v5593 = vshrl.u32 %v5578, 16
      %v5594 = vpack.i.b16 %v5593, %v5592
      %v5598 = vpack.i.b16 %v5577, %v5543
      %v5600 = vshrl.u32 %v5543, 16
      %v5601 = vshrl.u32 %v5577, 16
      %v5602 = vpack.i.b16 %v5601, %v5600
      %v5606 = vpack.i.b16 %v5579, %v5545
      %v5608 = vshrl.u32 %v5545, 16
      %v5609 = vshrl.u32 %v5579, 16
      %v5610 = vpack.i.b16 %v5609, %v5608
      %5612 = vxpose.xlu0.c.b16.start [1/8] %v5582, 128
      %5613 = vxpose.xlu0.c.b16.cont [2/8] 0, 128
      %5614 = vxpose.xlu0.c.b16.cont [3/8] 0, 128
      %5615 = vxpose.xlu0.c.b16.cont [4/8] 0, 128
      %5616 = vxpose.xlu0.c.b16.cont [5/8] 0, 128
      %5617 = vxpose.xlu0.c.b16.cont [6/8] 0, 128
      %5618 = vxpose.xlu0.c.b16.cont [7/8] 0, 128
      %5619 = vxpose.xlu0.c.b16.end [8/8] 0, 128
      %v5620 = vpop.trf.xlu0
      %v5621 = vpop.trf.xlu0
      %v5622 = vpop.trf.xlu0
      %v5623 = vpop.trf.xlu0
      %v5624 = vpop.trf.xlu0
      %v5625 = vpop.trf.xlu0
      %v5626 = vpop.trf.xlu0
      %v5627 = vpop.trf.xlu0
      %5628 = vxpose.xlu0.c.b16.start [1/8] %v5586, 128
      %5629 = vxpose.xlu0.c.b16.cont [2/8] 0, 128
      %5630 = vxpose.xlu0.c.b16.cont [3/8] 0, 128
      %5631 = vxpose.xlu0.c.b16.cont [4/8] 0, 128
      %5632 = vxpose.xlu0.c.b16.cont [5/8] 0, 128
      %5633 = vxpose.xlu0.c.b16.cont [6/8] 0, 128
      %5634 = vxpose.xlu0.c.b16.cont [7/8] 0, 128
      %5635 = vxpose.xlu0.c.b16.end [8/8] 0, 128
      %v5636 = vpop.trf.xlu0
      %v5637 = vpop.trf.xlu0
      %v5638 = vpop.trf.xlu0
      %v5639 = vpop.trf.xlu0
      %v5640 = vpop.trf.xlu0
      %v5641 = vpop.trf.xlu0
      %v5642 = vpop.trf.xlu0
      %v5643 = vpop.trf.xlu0
      %5644 = vxpose.xlu0.c.b16.start [1/8] %v5590, 128
      %5645 = vxpose.xlu0.c.b16.cont [2/8] 0, 128
      %5646 = vxpose.xlu0.c.b16.cont [3/8] 0, 128
      %5647 = vxpose.xlu0.c.b16.cont [4/8] 0, 128
      %5648 = vxpose.xlu0.c.b16.cont [5/8] 0, 128
      %5649 = vxpose.xlu0.c.b16.cont [6/8] 0, 128
      %5650 = vxpose.xlu0.c.b16.cont [7/8] 0, 128
      %5651 = vxpose.xlu0.c.b16.end [8/8] 0, 128
      %v5652 = vpop.trf.xlu0
      %v5653 = vpop.trf.xlu0
      %v5654 = vpop.trf.xlu0
      %v5655 = vpop.trf.xlu0
      %v5656 = vpop.trf.xlu0
      %v5657 = vpop.trf.xlu0
      %v5658 = vpop.trf.xlu0
      %v5659 = vpop.trf.xlu0
      %5660 = vxpose.xlu0.c.b16.start [1/8] %v5594, 128
      %5661 = vxpose.xlu0.c.b16.cont [2/8] 0, 128
      %5662 = vxpose.xlu0.c.b16.cont [3/8] 0, 128
      %5663 = vxpose.xlu0.c.b16.cont [4/8] 0, 128
      %5664 = vxpose.xlu0.c.b16.cont [5/8] 0, 128
      %5665 = vxpose.xlu0.c.b16.cont [6/8] 0, 128
      %5666 = vxpose.xlu0.c.b16.cont [7/8] 0, 128
      %5667 = vxpose.xlu0.c.b16.end [8/8] 0, 128
      %v5668 = vpop.trf.xlu0
      %v5669 = vpop.trf.xlu0
      %v5670 = vpop.trf.xlu0
      %v5671 = vpop.trf.xlu0
      %v5672 = vpop.trf.xlu0
      %v5673 = vpop.trf.xlu0
      %v5674 = vpop.trf.xlu0
      %v5675 = vpop.trf.xlu0
      %5676 = vxpose.xlu0.c.b16.start [1/8] %v5598, 128
      %5677 = vxpose.xlu0.c.b16.cont [2/8] 0, 128
      %5678 = vxpose.xlu0.c.b16.cont [3/8] 0, 128
      %5679 = vxpose.xlu0.c.b16.cont [4/8] 0, 128
      %5680 = vxpose.xlu0.c.b16.cont [5/8] 0, 128
      %5681 = vxpose.xlu0.c.b16.cont [6/8] 0, 128
      %5682 = vxpose.xlu0.c.b16.cont [7/8] 0, 128
      %5683 = vxpose.xlu0.c.b16.end [8/8] 0, 128
      %v5684 = vpop.trf.xlu0
      %v5685 = vpop.trf.xlu0
      %v5686 = vpop.trf.xlu0
      %v5687 = vpop.trf.xlu0
      %v5688 = vpop.trf.xlu0
      %v5689 = vpop.trf.xlu0
      %v5690 = vpop.trf.xlu0
      %v5691 = vpop.trf.xlu0
      %5692 = vxpose.xlu0.c.b16.start [1/8] %v5602, 128
      %5693 = vxpose.xlu0.c.b16.cont [2/8] 0, 128
      %5694 = vxpose.xlu0.c.b16.cont [3/8] 0, 128
      %5695 = vxpose.xlu0.c.b16.cont [4/8] 0, 128
      %5696 = vxpose.xlu0.c.b16.cont [5/8] 0, 128
      %5697 = vxpose.xlu0.c.b16.cont [6/8] 0, 128
      %5698 = vxpose.xlu0.c.b16.cont [7/8] 0, 128
      %5699 = vxpose.xlu0.c.b16.end [8/8] 0, 128
      %v5700 = vpop.trf.xlu0
      %v5701 = vpop.trf.xlu0
      %v5702 = vpop.trf.xlu0
      %v5703 = vpop.trf.xlu0
      %v5704 = vpop.trf.xlu0
      %v5705 = vpop.trf.xlu0
      %v5706 = vpop.trf.xlu0
      %v5707 = vpop.trf.xlu0
      %5708 = vxpose.xlu0.c.b16.start [1/8] %v5606, 128
      %5709 = vxpose.xlu0.c.b16.cont [2/8] 0, 128
      %5710 = vxpose.xlu0.c.b16.cont [3/8] 0, 128
      %5711 = vxpose.xlu0.c.b16.cont [4/8] 0, 128
      %5712 = vxpose.xlu0.c.b16.cont [5/8] 0, 128
      %5713 = vxpose.xlu0.c.b16.cont [6/8] 0, 128
      %5714 = vxpose.xlu0.c.b16.cont [7/8] 0, 128
      %5715 = vxpose.xlu0.c.b16.end [8/8] 0, 128
      %v5716 = vpop.trf.xlu0
      %v5717 = vpop.trf.xlu0
      %v5718 = vpop.trf.xlu0
      %v5719 = vpop.trf.xlu0
      %v5720 = vpop.trf.xlu0
      %v5721 = vpop.trf.xlu0
      %v5722 = vpop.trf.xlu0
      %v5723 = vpop.trf.xlu0
      %5724 = vxpose.xlu0.c.b16.start [1/8] %v5610, 128
      %5725 = vxpose.xlu0.c.b16.cont [2/8] 0, 128
      %5726 = vxpose.xlu0.c.b16.cont [3/8] 0, 128
      %5727 = vxpose.xlu0.c.b16.cont [4/8] 0, 128
      %5728 = vxpose.xlu0.c.b16.cont [5/8] 0, 128
      %5729 = vxpose.xlu0.c.b16.cont [6/8] 0, 128
      %5730 = vxpose.xlu0.c.b16.cont [7/8] 0, 128
      %5731 = vxpose.xlu0.c.b16.end [8/8] 0, 128
      %v5732 = vpop.trf.xlu0
      %v5733 = vpop.trf.xlu0
      %v5734 = vpop.trf.xlu0
      %v5735 = vpop.trf.xlu0
      %v5736 = vpop.trf.xlu0
      %v5737 = vpop.trf.xlu0
      %v5738 = vpop.trf.xlu0
      %v5739 = vpop.trf.xlu0
      %v5740 = vcombine.low %v5620, %v5684
      %v5742 = vunpack.c.l.s4 1983009808
      %v5743 = vunpack.c.0.s8 %v5742
      %v5744 = vlaneseq
      %v5745 = vshrl.u32 %v5744, 7
      %v5746 = vsub.s32 %v5743, %v5745
      %v5747 = vrot.slane %v5740, %v5746
      %v5748 = vcombine.low %v5652, %v5716
      %v5750 = vunpack.c.l.s4 1983009808
      %v5751 = vunpack.c.0.s8 %v5750
      %v5752 = vlaneseq
      %v5753 = vshrl.u32 %v5752, 7
      %v5754 = vsub.s32 %v5751, %v5753
      %v5755 = vrot.slane %v5748, %v5754
      %v5756 = vcombine.low %v5747, %v5755
      %v5758 = vunpack.c.l.s4 1934713408
      %v5759 = vunpack.c.0.s8 %v5758
      %v5760 = vlaneseq
      %v5761 = vshrl.u32 %v5760, 7
      %v5762 = vsub.s32 %v5759, %v5761
      %v5763 = vrot.slane %v5756, %v5762
      %v5764 = vcombine.high %v5763, 0
      %v5765 = vcombine.low %v5636, %v5700
      %v5767 = vunpack.c.l.s4 1983009808
      %v5768 = vunpack.c.0.s8 %v5767
      %v5769 = vlaneseq
      %v5770 = vshrl.u32 %v5769, 7
      %v5771 = vsub.s32 %v5768, %v5770
      %v5772 = vrot.slane %v5765, %v5771
      %v5773 = vcombine.low %v5668, %v5732
      %v5775 = vunpack.c.l.s4 1983009808
      %v5776 = vunpack.c.0.s8 %v5775
      %v5777 = vlaneseq
      %v5778 = vshrl.u32 %v5777, 7
      %v5779 = vsub.s32 %v5776, %v5778
      %v5780 = vrot.slane %v5773, %v5779
      %v5781 = vcombine.low %v5772, %v5780
      %v5783 = vunpack.c.l.s4 1934713408
      %v5784 = vunpack.c.0.s8 %v5783
      %v5785 = vlaneseq
      %v5786 = vshrl.u32 %v5785, 7
      %v5787 = vsub.s32 %v5784, %v5786
      %v5788 = vrot.slane %v5781, %v5787
      %v5789 = vcombine.high %v5788, 0
      %v5792 = vpack.i.b16 %v5788, %v5763
      %v5793 = vshrl.u32 %v5763, 16
      %v5794 = vshrl.u32 %v5788, 16
      %v5795 = vpack.i.b16 %v5794, %v5793
      %v5798 = vpack.i.b16 %v5789, %v5764
      %v5799 = vshrl.u32 %v5764, 16
      %v5800 = vshrl.u32 %v5789, 16
      %v5801 = vpack.i.b16 %v5800, %v5799
      %v5803 = vsel %vm1302, %v5374, 0
      %v5806 = vsel %vm1306, %v5792, 0
      %5808 = vmatprep.subr.bf16.mxu0 0
      %5809 = vmatpush1.bf16.msra.mxu0 0
      %5810 = vmatprep.subr.bf16.mxu0 0
      %5811 = vmatpush1.bf16.msra.mxu0 0
      %5812 = vmatprep.subr.bf16.mxu0 0
      %5813 = vmatpush1.bf16.msra.mxu0 0
      %5814 = vmatprep.subr.bf16.mxu0 0
      %5815 = vmatpush1.bf16.msra.mxu0 0
      %5816 = vmatprep.subr.bf16.mxu0 0
      %5817 = vmatpush1.bf16.msra.mxu0 0
      %5818 = vmatprep.subr.bf16.mxu0 0
      %5819 = vmatpush1.bf16.msra.mxu0 0
      %5820 = vmatprep.subr.bf16.mxu0 0
      %5821 = vmatpush1.bf16.msra.mxu0 0
      %5822 = vmatprep.subr.bf16.mxu0 0
      %5823 = vmatpush1.bf16.msra.mxu0 %v5806
      %5824 = vmatprep.subr.bf16.mxu0 0
      %5825 = vmatpush2.bf16.msra.mxu0 0
      %5826 = vmatprep.subr.bf16.mxu0 0
      %5827 = vmatpush2.bf16.msra.mxu0 0
      %5828 = vmatprep.subr.bf16.mxu0 0
      %5829 = vmatpush2.bf16.msra.mxu0 0
      %5830 = vmatprep.subr.bf16.mxu0 0
      %5831 = vmatpush2.bf16.msra.mxu0 0
      %5832 = vmatprep.subr.bf16.mxu0 0
      %5833 = vmatpush2.bf16.msra.mxu0 0
      %5834 = vmatprep.subr.bf16.mxu0 0
      %5835 = vmatpush2.bf16.msra.mxu0 0
      %5836 = vmatprep.subr.bf16.mxu0 0
      %5837 = vmatpush2.bf16.msra.mxu0 0
      %5838 = vmatprep.subr.bf16.mxu0 0
      %5839 = vmatpush2.bf16.msra.mxu0 0
      %5840 = vmatprep.mubr.bf16.mxu0 0
      %5841 = vmatmul.mubr.bf16.gmra.mxu0 %v5803
      %v5842 = vpop.f32.mrf.mxu0
      %v5843 = vadd.f32 %v430, %v5842
      %v5844 = vpop.f32.mrf.mxu0
      %v5845 = vpop.f32.mrf.mxu0
      %v5846 = vpop.f32.mrf.mxu0
      %5847 = vdwg.mxu0
      %v5849 = vsel %vm1302, %v5377, 0
      %v5852 = vsel %vm1306, %v5795, 0
      %5854 = vmatprep.subr.bf16.mxu0 0
      %5855 = vmatpush1.bf16.msra.mxu0 0
      %5856 = vmatprep.subr.bf16.mxu0 0
      %5857 = vmatpush1.bf16.msra.mxu0 0
      %5858 = vmatprep.subr.bf16.mxu0 0
      %5859 = vmatpush1.bf16.msra.mxu0 0
      %5860 = vmatprep.subr.bf16.mxu0 0
      %5861 = vmatpush1.bf16.msra.mxu0 0
      %5862 = vmatprep.subr.bf16.mxu0 0
      %5863 = vmatpush1.bf16.msra.mxu0 0
      %5864 = vmatprep.subr.bf16.mxu0 0
      %5865 = vmatpush1.bf16.msra.mxu0 0
      %5866 = vmatprep.subr.bf16.mxu0 0
      %5867 = vmatpush1.bf16.msra.mxu0 0
      %5868 = vmatprep.subr.bf16.mxu0 0
      %5869 = vmatpush1.bf16.msra.mxu0 %v5852
      %5870 = vmatprep.subr.bf16.mxu0 0
      %5871 = vmatpush2.bf16.msra.mxu0 0
      %5872 = vmatprep.subr.bf16.mxu0 0
      %5873 = vmatpush2.bf16.msra.mxu0 0
      %5874 = vmatprep.subr.bf16.mxu0 0
      %5875 = vmatpush2.bf16.msra.mxu0 0
      %5876 = vmatprep.subr.bf16.mxu0 0
      %5877 = vmatpush2.bf16.msra.mxu0 0
      %5878 = vmatprep.subr.bf16.mxu0 0
      %5879 = vmatpush2.bf16.msra.mxu0 0
      %5880 = vmatprep.subr.bf16.mxu0 0
      %5881 = vmatpush2.bf16.msra.mxu0 0
      %5882 = vmatprep.subr.bf16.mxu0 0
      %5883 = vmatpush2.bf16.msra.mxu0 0
      %5884 = vmatprep.subr.bf16.mxu0 0
      %5885 = vmatpush2.bf16.msra.mxu0 0
      %5886 = vmatprep.mubr.bf16.mxu0 0
      %5887 = vmatmul.mubr.bf16.gmra.mxu0 %v5849
      %v5888 = vpop.f32.mrf.mxu0
      %v5889 = vadd.f32 %v430, %v5888
      %v5890 = vpop.f32.mrf.mxu0
      %v5891 = vpop.f32.mrf.mxu0
      %v5892 = vpop.f32.mrf.mxu0
      %5893 = vdwg.mxu0
      %v5895 = vsel %vm1302, %v5380, 0
      %v5898 = vsel %vm1306, %v5798, 0
      %5900 = vmatprep.subr.bf16.mxu0 0
      %5901 = vmatpush1.bf16.msra.mxu0 0
      %5902 = vmatprep.subr.bf16.mxu0 0
      %5903 = vmatpush1.bf16.msra.mxu0 0
      %5904 = vmatprep.subr.bf16.mxu0 0
      %5905 = vmatpush1.bf16.msra.mxu0 0
      %5906 = vmatprep.subr.bf16.mxu0 0
      %5907 = vmatpush1.bf16.msra.mxu0 0
      %5908 = vmatprep.subr.bf16.mxu0 0
      %5909 = vmatpush1.bf16.msra.mxu0 0
      %5910 = vmatprep.subr.bf16.mxu0 0
      %5911 = vmatpush1.bf16.msra.mxu0 0
      %5912 = vmatprep.subr.bf16.mxu0 0
      %5913 = vmatpush1.bf16.msra.mxu0 0
      %5914 = vmatprep.subr.bf16.mxu0 0
      %5915 = vmatpush1.bf16.msra.mxu0 %v5898
      %5916 = vmatprep.subr.bf16.mxu0 0
      %5917 = vmatpush2.bf16.msra.mxu0 0
      %5918 = vmatprep.subr.bf16.mxu0 0
      %5919 = vmatpush2.bf16.msra.mxu0 0
      %5920 = vmatprep.subr.bf16.mxu0 0
      %5921 = vmatpush2.bf16.msra.mxu0 0
      %5922 = vmatprep.subr.bf16.mxu0 0
      %5923 = vmatpush2.bf16.msra.mxu0 0
      %5924 = vmatprep.subr.bf16.mxu0 0
      %5925 = vmatpush2.bf16.msra.mxu0 0
      %5926 = vmatprep.subr.bf16.mxu0 0
      %5927 = vmatpush2.bf16.msra.mxu0 0
      %5928 = vmatprep.subr.bf16.mxu0 0
      %5929 = vmatpush2.bf16.msra.mxu0 0
      %5930 = vmatprep.subr.bf16.mxu0 0
      %5931 = vmatpush2.bf16.msra.mxu0 0
      %5932 = vmatprep.mubr.bf16.mxu0 0
      %5933 = vmatmul.mubr.bf16.gmra.mxu0 %v5895
      %v5934 = vpop.f32.mrf.mxu0
      %v5935 = vadd.f32 %v430, %v5934
      %v5936 = vpop.f32.mrf.mxu0
      %v5937 = vpop.f32.mrf.mxu0
      %v5938 = vpop.f32.mrf.mxu0
      %5939 = vdwg.mxu0
      %v5941 = vsel %vm1302, %v5383, 0
      %v5944 = vsel %vm1306, %v5801, 0
      %5946 = vmatprep.subr.bf16.mxu0 0
      %5947 = vmatpush1.bf16.msra.mxu0 0
      %5948 = vmatprep.subr.bf16.mxu0 0
      %5949 = vmatpush1.bf16.msra.mxu0 0
      %5950 = vmatprep.subr.bf16.mxu0 0
      %5951 = vmatpush1.bf16.msra.mxu0 0
      %5952 = vmatprep.subr.bf16.mxu0 0
      %5953 = vmatpush1.bf16.msra.mxu0 0
      %5954 = vmatprep.subr.bf16.mxu0 0
      %5955 = vmatpush1.bf16.msra.mxu0 0
      %5956 = vmatprep.subr.bf16.mxu0 0
      %5957 = vmatpush1.bf16.msra.mxu0 0
      %5958 = vmatprep.subr.bf16.mxu0 0
      %5959 = vmatpush1.bf16.msra.mxu0 0
      %5960 = vmatprep.subr.bf16.mxu0 0
      %5961 = vmatpush1.bf16.msra.mxu0 %v5944
      %5962 = vmatprep.subr.bf16.mxu0 0
      %5963 = vmatpush2.bf16.msra.mxu0 0
      %5964 = vmatprep.subr.bf16.mxu0 0
      %5965 = vmatpush2.bf16.msra.mxu0 0
      %5966 = vmatprep.subr.bf16.mxu0 0
      %5967 = vmatpush2.bf16.msra.mxu0 0
      %5968 = vmatprep.subr.bf16.mxu0 0
      %5969 = vmatpush2.bf16.msra.mxu0 0
      %5970 = vmatprep.subr.bf16.mxu0 0
      %5971 = vmatpush2.bf16.msra.mxu0 0
      %5972 = vmatprep.subr.bf16.mxu0 0
      %5973 = vmatpush2.bf16.msra.mxu0 0
      %5974 = vmatprep.subr.bf16.mxu0 0
      %5975 = vmatpush2.bf16.msra.mxu0 0
      %5976 = vmatprep.subr.bf16.mxu0 0
      %5977 = vmatpush2.bf16.msra.mxu0 0
      %5978 = vmatprep.mubr.bf16.mxu0 0
      %5979 = vmatmul.mubr.bf16.gmra.mxu0 %v5941
      %v5980 = vpop.f32.mrf.mxu0
      %v5981 = vadd.f32 %v430, %v5980
      %v5982 = vpop.f32.mrf.mxu0
      %v5983 = vpop.f32.mrf.mxu0
      %v5984 = vpop.f32.mrf.mxu0
      %5985 = vdwg.mxu0
      %v5986 = vsel %vm1302, %v5843, -inf
      %5987 = vmax.xlane.f32.xlu0 %v5986
      %v5988 = vpop.xlane.xlu0 %5987
      %v5989 = vsel %vm1302, %v5889, -inf
      %5990 = vmax.xlane.f32.xlu0 %v5989
      %v5991 = vpop.xlane.xlu0 %5990
      %v5992 = vsel %vm1302, %v5935, -inf
      %5993 = vmax.xlane.f32.xlu0 %v5992
      %v5994 = vpop.xlane.xlu0 %5993
      %v5995 = vsel %vm1302, %v5981, -inf
      %5996 = vmax.xlane.f32.xlu0 %v5995
      %v5997 = vpop.xlane.xlu0 %5996
      %v5998 = vsub.f32 %v5843, %v5988
      %v5999 = vsub.f32 %v5889, %v5991
      %v6000 = vsub.f32 %v5935, %v5994
      %v6001 = vsub.f32 %v5981, %v5997
      %v6002 = vmul.f32 %v5998, 1.442695
      %v6003 = vpow.pop %v6002
      %v6004 = vmul.f32 %v5999, 1.442695
      %v6005 = vpow.pop %v6004
      %v6006 = vmul.f32 %v6000, 1.442695
      %v6007 = vpow.pop %v6006
      %v6008 = vmul.f32 %v6001, 1.442695
      %v6009 = vpow.pop %v6008
      %v6010 = vsel %vm1302, %v6003, 0.0
      %6011 = vadd.xlane.f32.xlu0 %v6010
      %v6012 = vpop.xlane.xlu0 %6011
      %v6013 = vsel %vm1302, %v6005, 0.0
      %6014 = vadd.xlane.f32.xlu0 %v6013
      %v6015 = vpop.xlane.xlu0 %6014
      %v6016 = vsel %vm1302, %v6007, 0.0
      %6017 = vadd.xlane.f32.xlu0 %v6016
      %v6018 = vpop.xlane.xlu0 %6017
      %v6019 = vsel %vm1302, %v6009, 0.0
      %6020 = vadd.xlane.f32.xlu0 %v6019
      %v6021 = vpop.xlane.xlu0 %6020
      %v6022 = vrcp.pop %v6012
      %v6023 = vmul.f32 %v6003, %v6022
      %v6024 = vrcp.pop %v6015
      %v6025 = vmul.f32 %v6005, %v6024
      %v6026 = vrcp.pop %v6018
      %v6027 = vmul.f32 %v6007, %v6026
      %v6028 = vrcp.pop %v6021
      %v6029 = vmul.f32 %v6009, %v6028
      %v6030 = vpack.c.bf16 %v6023, %v6023
      %v6031 = vpack.c.bf16 %v6025, %v6025
      %v6032 = vpack.c.bf16 %v6027, %v6027
      %v6033 = vpack.c.bf16 %v6029, %v6029
      %v6034 = vpack.c.bf16 %v5278, %v5278
      %v6035 = vpack.c.bf16 %v5302, %v5302
      %v6036 = vpack.c.bf16 %v5285, %v5285
      %v6037 = vpack.c.bf16 %v5303, %v5303
      %v6038 = vpack.c.bf16 %v5294, %v5294
      %v6039 = vpack.c.bf16 %v5304, %v5304
      %v6040 = vpack.c.bf16 %v5301, %v5301
      %v6041 = vpack.c.bf16 %v5305, %v5305
      %6042 = vxpose.xlu0.c.b16.start [1/8] %v6034, 128
      %6043 = vxpose.xlu0.c.b16.cont [2/8] 0, 128
      %6044 = vxpose.xlu0.c.b16.cont [3/8] 0, 128
      %6045 = vxpose.xlu0.c.b16.cont [4/8] 0, 128
      %6046 = vxpose.xlu0.c.b16.cont [5/8] 0, 128
      %6047 = vxpose.xlu0.c.b16.cont [6/8] 0, 128
      %6048 = vxpose.xlu0.c.b16.cont [7/8] 0, 128
      %6049 = vxpose.xlu0.c.b16.end [8/8] 0, 128
      %v6050 = vpop.trf.xlu0
      %v6051 = vpop.trf.xlu0
      %v6052 = vpop.trf.xlu0
      %v6053 = vpop.trf.xlu0
      %v6054 = vpop.trf.xlu0
      %v6055 = vpop.trf.xlu0
      %v6056 = vpop.trf.xlu0
      %v6057 = vpop.trf.xlu0
      %6058 = vxpose.xlu0.c.b16.start [1/8] %v6035, 128
      %6059 = vxpose.xlu0.c.b16.cont [2/8] 0, 128
      %6060 = vxpose.xlu0.c.b16.cont [3/8] 0, 128
      %6061 = vxpose.xlu0.c.b16.cont [4/8] 0, 128
      %6062 = vxpose.xlu0.c.b16.cont [5/8] 0, 128
      %6063 = vxpose.xlu0.c.b16.cont [6/8] 0, 128
      %6064 = vxpose.xlu0.c.b16.cont [7/8] 0, 128
      %6065 = vxpose.xlu0.c.b16.end [8/8] 0, 128
      %v6066 = vpop.trf.xlu0
      %v6067 = vpop.trf.xlu0
      %v6068 = vpop.trf.xlu0
      %v6069 = vpop.trf.xlu0
      %v6070 = vpop.trf.xlu0
      %v6071 = vpop.trf.xlu0
      %v6072 = vpop.trf.xlu0
      %v6073 = vpop.trf.xlu0
      %6074 = vxpose.xlu0.c.b16.start [1/8] %v6036, 128
      %6075 = vxpose.xlu0.c.b16.cont [2/8] 0, 128
      %6076 = vxpose.xlu0.c.b16.cont [3/8] 0, 128
      %6077 = vxpose.xlu0.c.b16.cont [4/8] 0, 128
      %6078 = vxpose.xlu0.c.b16.cont [5/8] 0, 128
      %6079 = vxpose.xlu0.c.b16.cont [6/8] 0, 128
      %6080 = vxpose.xlu0.c.b16.cont [7/8] 0, 128
      %6081 = vxpose.xlu0.c.b16.end [8/8] 0, 128
      %v6082 = vpop.trf.xlu0
      %v6083 = vpop.trf.xlu0
      %v6084 = vpop.trf.xlu0
      %v6085 = vpop.trf.xlu0
      %v6086 = vpop.trf.xlu0
      %v6087 = vpop.trf.xlu0
      %v6088 = vpop.trf.xlu0
      %v6089 = vpop.trf.xlu0
      %6090 = vxpose.xlu0.c.b16.start [1/8] %v6037, 128
      %6091 = vxpose.xlu0.c.b16.cont [2/8] 0, 128
      %6092 = vxpose.xlu0.c.b16.cont [3/8] 0, 128
      %6093 = vxpose.xlu0.c.b16.cont [4/8] 0, 128
      %6094 = vxpose.xlu0.c.b16.cont [5/8] 0, 128
      %6095 = vxpose.xlu0.c.b16.cont [6/8] 0, 128
      %6096 = vxpose.xlu0.c.b16.cont [7/8] 0, 128
      %6097 = vxpose.xlu0.c.b16.end [8/8] 0, 128
      %v6098 = vpop.trf.xlu0
      %v6099 = vpop.trf.xlu0
      %v6100 = vpop.trf.xlu0
      %v6101 = vpop.trf.xlu0
      %v6102 = vpop.trf.xlu0
      %v6103 = vpop.trf.xlu0
      %v6104 = vpop.trf.xlu0
      %v6105 = vpop.trf.xlu0
      %6106 = vxpose.xlu0.c.b16.start [1/8] %v6038, 128
      %6107 = vxpose.xlu0.c.b16.cont [2/8] 0, 128
      %6108 = vxpose.xlu0.c.b16.cont [3/8] 0, 128
      %6109 = vxpose.xlu0.c.b16.cont [4/8] 0, 128
      %6110 = vxpose.xlu0.c.b16.cont [5/8] 0, 128
      %6111 = vxpose.xlu0.c.b16.cont [6/8] 0, 128
      %6112 = vxpose.xlu0.c.b16.cont [7/8] 0, 128
      %6113 = vxpose.xlu0.c.b16.end [8/8] 0, 128
      %v6114 = vpop.trf.xlu0
      %v6115 = vpop.trf.xlu0
      %v6116 = vpop.trf.xlu0
      %v6117 = vpop.trf.xlu0
      %v6118 = vpop.trf.xlu0
      %v6119 = vpop.trf.xlu0
      %v6120 = vpop.trf.xlu0
      %v6121 = vpop.trf.xlu0
      %6122 = vxpose.xlu0.c.b16.start [1/8] %v6039, 128
      %6123 = vxpose.xlu0.c.b16.cont [2/8] 0, 128
      %6124 = vxpose.xlu0.c.b16.cont [3/8] 0, 128
      %6125 = vxpose.xlu0.c.b16.cont [4/8] 0, 128
      %6126 = vxpose.xlu0.c.b16.cont [5/8] 0, 128
      %6127 = vxpose.xlu0.c.b16.cont [6/8] 0, 128
      %6128 = vxpose.xlu0.c.b16.cont [7/8] 0, 128
      %6129 = vxpose.xlu0.c.b16.end [8/8] 0, 128
      %v6130 = vpop.trf.xlu0
      %v6131 = vpop.trf.xlu0
      %v6132 = vpop.trf.xlu0
      %v6133 = vpop.trf.xlu0
      %v6134 = vpop.trf.xlu0
      %v6135 = vpop.trf.xlu0
      %v6136 = vpop.trf.xlu0
      %v6137 = vpop.trf.xlu0
      %6138 = vxpose.xlu0.c.b16.start [1/8] %v6040, 128
      %6139 = vxpose.xlu0.c.b16.cont [2/8] 0, 128
      %6140 = vxpose.xlu0.c.b16.cont [3/8] 0, 128
      %6141 = vxpose.xlu0.c.b16.cont [4/8] 0, 128
      %6142 = vxpose.xlu0.c.b16.cont [5/8] 0, 128
      %6143 = vxpose.xlu0.c.b16.cont [6/8] 0, 128
      %6144 = vxpose.xlu0.c.b16.cont [7/8] 0, 128
      %6145 = vxpose.xlu0.c.b16.end [8/8] 0, 128
      %v6146 = vpop.trf.xlu0
      %v6147 = vpop.trf.xlu0
      %v6148 = vpop.trf.xlu0
      %v6149 = vpop.trf.xlu0
      %v6150 = vpop.trf.xlu0
      %v6151 = vpop.trf.xlu0
      %v6152 = vpop.trf.xlu0
      %v6153 = vpop.trf.xlu0
      %6154 = vxpose.xlu0.c.b16.start [1/8] %v6041, 128
      %6155 = vxpose.xlu0.c.b16.cont [2/8] 0, 128
      %6156 = vxpose.xlu0.c.b16.cont [3/8] 0, 128
      %6157 = vxpose.xlu0.c.b16.cont [4/8] 0, 128
      %6158 = vxpose.xlu0.c.b16.cont [5/8] 0, 128
      %6159 = vxpose.xlu0.c.b16.cont [6/8] 0, 128
      %6160 = vxpose.xlu0.c.b16.cont [7/8] 0, 128
      %6161 = vxpose.xlu0.c.b16.end [8/8] 0, 128
      %v6162 = vpop.trf.xlu0
      %v6163 = vpop.trf.xlu0
      %v6164 = vpop.trf.xlu0
      %v6165 = vpop.trf.xlu0
      %v6166 = vpop.trf.xlu0
      %v6167 = vpop.trf.xlu0
      %v6168 = vpop.trf.xlu0
      %v6169 = vpop.trf.xlu0
      %v6170 = vcombine.low %v6050, %v6114
      %v6172 = vunpack.c.l.s4 1983009808
      %v6173 = vunpack.c.0.s8 %v6172
      %v6174 = vlaneseq
      %v6175 = vshrl.u32 %v6174, 7
      %v6176 = vsub.s32 %v6173, %v6175
      %v6177 = vrot.slane %v6170, %v6176
      %v6178 = vcombine.low %v6082, %v6146
      %v6180 = vunpack.c.l.s4 1983009808
      %v6181 = vunpack.c.0.s8 %v6180
      %v6182 = vlaneseq
      %v6183 = vshrl.u32 %v6182, 7
      %v6184 = vsub.s32 %v6181, %v6183
      %v6185 = vrot.slane %v6178, %v6184
      %v6186 = vcombine.low %v6177, %v6185
      %v6187 = vcombine.high %v6177, %v6185
      %v6189 = vunpack.c.l.s4 1934713408
      %v6190 = vunpack.c.0.s8 %v6189
      %v6191 = vlaneseq
      %v6192 = vshrl.u32 %v6191, 7
      %v6193 = vsub.s32 %v6190, %v6192
      %v6194 = vrot.slane %v6186, %v6193
      %v6196 = vunpack.c.l.s4 1934713408
      %v6197 = vunpack.c.0.s8 %v6196
      %v6198 = vlaneseq
      %v6199 = vshrl.u32 %v6198, 7
      %v6200 = vsub.s32 %v6197, %v6199
      %v6201 = vrot.slane %v6187, %v6200
      %v6202 = vcombine.high %v6194, 0
      %v6203 = vcombine.high %v6201, 0
      %v6204 = vcombine.low %v6066, %v6130
      %v6206 = vunpack.c.l.s4 1983009808
      %v6207 = vunpack.c.0.s8 %v6206
      %v6208 = vlaneseq
      %v6209 = vshrl.u32 %v6208, 7
      %v6210 = vsub.s32 %v6207, %v6209
      %v6211 = vrot.slane %v6204, %v6210
      %v6212 = vcombine.low %v6098, %v6162
      %v6214 = vunpack.c.l.s4 1983009808
      %v6215 = vunpack.c.0.s8 %v6214
      %v6216 = vlaneseq
      %v6217 = vshrl.u32 %v6216, 7
      %v6218 = vsub.s32 %v6215, %v6217
      %v6219 = vrot.slane %v6212, %v6218
      %v6220 = vcombine.low %v6211, %v6219
      %v6221 = vcombine.high %v6211, %v6219
      %v6223 = vunpack.c.l.s4 1934713408
      %v6224 = vunpack.c.0.s8 %v6223
      %v6225 = vlaneseq
      %v6226 = vshrl.u32 %v6225, 7
      %v6227 = vsub.s32 %v6224, %v6226
      %v6228 = vrot.slane %v6220, %v6227
      %v6230 = vunpack.c.l.s4 1934713408
      %v6231 = vunpack.c.0.s8 %v6230
      %v6232 = vlaneseq
      %v6233 = vshrl.u32 %v6232, 7
      %v6234 = vsub.s32 %v6231, %v6233
      %v6235 = vrot.slane %v6221, %v6234
      %v6236 = vcombine.high %v6228, 0
      %v6237 = vcombine.high %v6235, 0
      %v6240 = vpack.i.b16 %v6228, %v6194
      %v6242 = vshrl.u32 %v6194, 16
      %v6243 = vshrl.u32 %v6228, 16
      %v6244 = vpack.i.b16 %v6243, %v6242
      %v6248 = vpack.i.b16 %v6236, %v6202
      %v6250 = vshrl.u32 %v6202, 16
      %v6251 = vshrl.u32 %v6236, 16
      %v6252 = vpack.i.b16 %v6251, %v6250
      %v6256 = vpack.i.b16 %v6235, %v6201
      %v6258 = vshrl.u32 %v6201, 16
      %v6259 = vshrl.u32 %v6235, 16
      %v6260 = vpack.i.b16 %v6259, %v6258
      %v6264 = vpack.i.b16 %v6237, %v6203
      %v6266 = vshrl.u32 %v6203, 16
      %v6267 = vshrl.u32 %v6237, 16
      %v6268 = vpack.i.b16 %v6267, %v6266
      %6270 = vxpose.xlu0.c.b16.start [1/8] %v6240, 128
      %6271 = vxpose.xlu0.c.b16.cont [2/8] 0, 128
      %6272 = vxpose.xlu0.c.b16.cont [3/8] 0, 128
      %6273 = vxpose.xlu0.c.b16.cont [4/8] 0, 128
      %6274 = vxpose.xlu0.c.b16.cont [5/8] 0, 128
      %6275 = vxpose.xlu0.c.b16.cont [6/8] 0, 128
      %6276 = vxpose.xlu0.c.b16.cont [7/8] 0, 128
      %6277 = vxpose.xlu0.c.b16.end [8/8] 0, 128
      %v6278 = vpop.trf.xlu0
      %v6279 = vpop.trf.xlu0
      %v6280 = vpop.trf.xlu0
      %v6281 = vpop.trf.xlu0
      %v6282 = vpop.trf.xlu0
      %v6283 = vpop.trf.xlu0
      %v6284 = vpop.trf.xlu0
      %v6285 = vpop.trf.xlu0
      %6286 = vxpose.xlu0.c.b16.start [1/8] %v6244, 128
      %6287 = vxpose.xlu0.c.b16.cont [2/8] 0, 128
      %6288 = vxpose.xlu0.c.b16.cont [3/8] 0, 128
      %6289 = vxpose.xlu0.c.b16.cont [4/8] 0, 128
      %6290 = vxpose.xlu0.c.b16.cont [5/8] 0, 128
      %6291 = vxpose.xlu0.c.b16.cont [6/8] 0, 128
      %6292 = vxpose.xlu0.c.b16.cont [7/8] 0, 128
      %6293 = vxpose.xlu0.c.b16.end [8/8] 0, 128
      %v6294 = vpop.trf.xlu0
      %v6295 = vpop.trf.xlu0
      %v6296 = vpop.trf.xlu0
      %v6297 = vpop.trf.xlu0
      %v6298 = vpop.trf.xlu0
      %v6299 = vpop.trf.xlu0
      %v6300 = vpop.trf.xlu0
      %v6301 = vpop.trf.xlu0
      %6302 = vxpose.xlu0.c.b16.start [1/8] %v6248, 128
      %6303 = vxpose.xlu0.c.b16.cont [2/8] 0, 128
      %6304 = vxpose.xlu0.c.b16.cont [3/8] 0, 128
      %6305 = vxpose.xlu0.c.b16.cont [4/8] 0, 128
      %6306 = vxpose.xlu0.c.b16.cont [5/8] 0, 128
      %6307 = vxpose.xlu0.c.b16.cont [6/8] 0, 128
      %6308 = vxpose.xlu0.c.b16.cont [7/8] 0, 128
      %6309 = vxpose.xlu0.c.b16.end [8/8] 0, 128
      %v6310 = vpop.trf.xlu0
      %v6311 = vpop.trf.xlu0
      %v6312 = vpop.trf.xlu0
      %v6313 = vpop.trf.xlu0
      %v6314 = vpop.trf.xlu0
      %v6315 = vpop.trf.xlu0
      %v6316 = vpop.trf.xlu0
      %v6317 = vpop.trf.xlu0
      %6318 = vxpose.xlu0.c.b16.start [1/8] %v6252, 128
      %6319 = vxpose.xlu0.c.b16.cont [2/8] 0, 128
      %6320 = vxpose.xlu0.c.b16.cont [3/8] 0, 128
      %6321 = vxpose.xlu0.c.b16.cont [4/8] 0, 128
      %6322 = vxpose.xlu0.c.b16.cont [5/8] 0, 128
      %6323 = vxpose.xlu0.c.b16.cont [6/8] 0, 128
      %6324 = vxpose.xlu0.c.b16.cont [7/8] 0, 128
      %6325 = vxpose.xlu0.c.b16.end [8/8] 0, 128
      %v6326 = vpop.trf.xlu0
      %v6327 = vpop.trf.xlu0
      %v6328 = vpop.trf.xlu0
      %v6329 = vpop.trf.xlu0
      %v6330 = vpop.trf.xlu0
      %v6331 = vpop.trf.xlu0
      %v6332 = vpop.trf.xlu0
      %v6333 = vpop.trf.xlu0
      %6334 = vxpose.xlu0.c.b16.start [1/8] %v6256, 128
      %6335 = vxpose.xlu0.c.b16.cont [2/8] 0, 128
      %6336 = vxpose.xlu0.c.b16.cont [3/8] 0, 128
      %6337 = vxpose.xlu0.c.b16.cont [4/8] 0, 128
      %6338 = vxpose.xlu0.c.b16.cont [5/8] 0, 128
      %6339 = vxpose.xlu0.c.b16.cont [6/8] 0, 128
      %6340 = vxpose.xlu0.c.b16.cont [7/8] 0, 128
      %6341 = vxpose.xlu0.c.b16.end [8/8] 0, 128
      %v6342 = vpop.trf.xlu0
      %v6343 = vpop.trf.xlu0
      %v6344 = vpop.trf.xlu0
      %v6345 = vpop.trf.xlu0
      %v6346 = vpop.trf.xlu0
      %v6347 = vpop.trf.xlu0
      %v6348 = vpop.trf.xlu0
      %v6349 = vpop.trf.xlu0
      %6350 = vxpose.xlu0.c.b16.start [1/8] %v6260, 128
      %6351 = vxpose.xlu0.c.b16.cont [2/8] 0, 128
      %6352 = vxpose.xlu0.c.b16.cont [3/8] 0, 128
      %6353 = vxpose.xlu0.c.b16.cont [4/8] 0, 128
      %6354 = vxpose.xlu0.c.b16.cont [5/8] 0, 128
      %6355 = vxpose.xlu0.c.b16.cont [6/8] 0, 128
      %6356 = vxpose.xlu0.c.b16.cont [7/8] 0, 128
      %6357 = vxpose.xlu0.c.b16.end [8/8] 0, 128
      %v6358 = vpop.trf.xlu0
      %v6359 = vpop.trf.xlu0
      %v6360 = vpop.trf.xlu0
      %v6361 = vpop.trf.xlu0
      %v6362 = vpop.trf.xlu0
      %v6363 = vpop.trf.xlu0
      %v6364 = vpop.trf.xlu0
      %v6365 = vpop.trf.xlu0
      %6366 = vxpose.xlu0.c.b16.start [1/8] %v6264, 128
      %6367 = vxpose.xlu0.c.b16.cont [2/8] 0, 128
      %6368 = vxpose.xlu0.c.b16.cont [3/8] 0, 128
      %6369 = vxpose.xlu0.c.b16.cont [4/8] 0, 128
      %6370 = vxpose.xlu0.c.b16.cont [5/8] 0, 128
      %6371 = vxpose.xlu0.c.b16.cont [6/8] 0, 128
      %6372 = vxpose.xlu0.c.b16.cont [7/8] 0, 128
      %6373 = vxpose.xlu0.c.b16.end [8/8] 0, 128
      %v6374 = vpop.trf.xlu0
      %v6375 = vpop.trf.xlu0
      %v6376 = vpop.trf.xlu0
      %v6377 = vpop.trf.xlu0
      %v6378 = vpop.trf.xlu0
      %v6379 = vpop.trf.xlu0
      %v6380 = vpop.trf.xlu0
      %v6381 = vpop.trf.xlu0
      %6382 = vxpose.xlu0.c.b16.start [1/8] %v6268, 128
      %6383 = vxpose.xlu0.c.b16.cont [2/8] 0, 128
      %6384 = vxpose.xlu0.c.b16.cont [3/8] 0, 128
      %6385 = vxpose.xlu0.c.b16.cont [4/8] 0, 128
      %6386 = vxpose.xlu0.c.b16.cont [5/8] 0, 128
      %6387 = vxpose.xlu0.c.b16.cont [6/8] 0, 128
      %6388 = vxpose.xlu0.c.b16.cont [7/8] 0, 128
      %6389 = vxpose.xlu0.c.b16.end [8/8] 0, 128
      %v6390 = vpop.trf.xlu0
      %v6391 = vpop.trf.xlu0
      %v6392 = vpop.trf.xlu0
      %v6393 = vpop.trf.xlu0
      %v6394 = vpop.trf.xlu0
      %v6395 = vpop.trf.xlu0
      %v6396 = vpop.trf.xlu0
      %v6397 = vpop.trf.xlu0
      %v6398 = vcombine.low %v6278, %v6342
      %v6400 = vunpack.c.l.s4 1983009808
      %v6401 = vunpack.c.0.s8 %v6400
      %v6402 = vlaneseq
      %v6403 = vshrl.u32 %v6402, 7
      %v6404 = vsub.s32 %v6401, %v6403
      %v6405 = vrot.slane %v6398, %v6404
      %v6406 = vcombine.low %v6310, %v6374
      %v6408 = vunpack.c.l.s4 1983009808
      %v6409 = vunpack.c.0.s8 %v6408
      %v6410 = vlaneseq
      %v6411 = vshrl.u32 %v6410, 7
      %v6412 = vsub.s32 %v6409, %v6411
      %v6413 = vrot.slane %v6406, %v6412
      %v6414 = vcombine.low %v6405, %v6413
      %v6416 = vunpack.c.l.s4 1934713408
      %v6417 = vunpack.c.0.s8 %v6416
      %v6418 = vlaneseq
      %v6419 = vshrl.u32 %v6418, 7
      %v6420 = vsub.s32 %v6417, %v6419
      %v6421 = vrot.slane %v6414, %v6420
      %v6422 = vcombine.high %v6421, 0
      %v6423 = vcombine.low %v6294, %v6358
      %v6425 = vunpack.c.l.s4 1983009808
      %v6426 = vunpack.c.0.s8 %v6425
      %v6427 = vlaneseq
      %v6428 = vshrl.u32 %v6427, 7
      %v6429 = vsub.s32 %v6426, %v6428
      %v6430 = vrot.slane %v6423, %v6429
      %v6431 = vcombine.low %v6326, %v6390
      %v6433 = vunpack.c.l.s4 1983009808
      %v6434 = vunpack.c.0.s8 %v6433
      %v6435 = vlaneseq
      %v6436 = vshrl.u32 %v6435, 7
      %v6437 = vsub.s32 %v6434, %v6436
      %v6438 = vrot.slane %v6431, %v6437
      %v6439 = vcombine.low %v6430, %v6438
      %v6441 = vunpack.c.l.s4 1934713408
      %v6442 = vunpack.c.0.s8 %v6441
      %v6443 = vlaneseq
      %v6444 = vshrl.u32 %v6443, 7
      %v6445 = vsub.s32 %v6442, %v6444
      %v6446 = vrot.slane %v6439, %v6445
      %v6447 = vcombine.high %v6446, 0
      %v6450 = vpack.i.b16 %v6446, %v6421
      %v6451 = vshrl.u32 %v6421, 16
      %v6452 = vshrl.u32 %v6446, 16
      %v6453 = vpack.i.b16 %v6452, %v6451
      %v6456 = vpack.i.b16 %v6447, %v6422
      %v6457 = vshrl.u32 %v6422, 16
      %v6458 = vshrl.u32 %v6447, 16
      %v6459 = vpack.i.b16 %v6458, %v6457
      %v6461 = vsel %vm1302, %v6450, 0
      %v6464 = vsel %vm1302, %v6030, 0
      %6466 = vmatprep.subr.bf16.mxu0 0
      %6467 = vmatpush1.bf16.xpose.msra.mxu0 0
      %6468 = vmatprep.subr.bf16.mxu0 0
      %6469 = vmatpush1.bf16.xpose.msra.mxu0 0
      %6470 = vmatprep.subr.bf16.mxu0 0
      %6471 = vmatpush1.bf16.xpose.msra.mxu0 0
      %6472 = vmatprep.subr.bf16.mxu0 0
      %6473 = vmatpush1.bf16.xpose.msra.mxu0 0
      %6474 = vmatprep.subr.bf16.mxu0 0
      %6475 = vmatpush1.bf16.xpose.msra.mxu0 0
      %6476 = vmatprep.subr.bf16.mxu0 0
      %6477 = vmatpush1.bf16.xpose.msra.mxu0 0
      %6478 = vmatprep.subr.bf16.mxu0 0
      %6479 = vmatpush1.bf16.xpose.msra.mxu0 0
      %6480 = vmatprep.subr.bf16.mxu0 0
      %6481 = vmatpush1.bf16.xpose.msra.mxu0 %v6464
      %6482 = vmatprep.subr.bf16.mxu0 0
      %6483 = vmatpush2.bf16.xpose.msra.mxu0 0
      %6484 = vmatprep.subr.bf16.mxu0 0
      %6485 = vmatpush2.bf16.xpose.msra.mxu0 0
      %6486 = vmatprep.subr.bf16.mxu0 0
      %6487 = vmatpush2.bf16.xpose.msra.mxu0 0
      %6488 = vmatprep.subr.bf16.mxu0 0
      %6489 = vmatpush2.bf16.xpose.msra.mxu0 0
      %6490 = vmatprep.subr.bf16.mxu0 0
      %6491 = vmatpush2.bf16.xpose.msra.mxu0 0
      %6492 = vmatprep.subr.bf16.mxu0 0
      %6493 = vmatpush2.bf16.xpose.msra.mxu0 0
      %6494 = vmatprep.subr.bf16.mxu0 0
      %6495 = vmatpush2.bf16.xpose.msra.mxu0 0
      %6496 = vmatprep.subr.bf16.mxu0 0
      %6497 = vmatpush2.bf16.xpose.msra.mxu0 0
      %6498 = vmatprep.mubr.bf16.mxu0 0
      %6499 = vmatmul.mubr.bf16.gmra.mxu0 %v6461
      %v6500 = vpop.f32.mrf.mxu0
      %v6501 = vadd.f32 0.0, %v6500
      %v6502 = vpop.f32.mrf.mxu0
      %v6503 = vpop.f32.mrf.mxu0
      %v6504 = vpop.f32.mrf.mxu0
      %6505 = vdwg.mxu0
      %v6507 = vsel %vm1302, %v6453, 0
      %v6510 = vsel %vm1302, %v6031, 0
      %6512 = vmatprep.subr.bf16.mxu0 0
      %6513 = vmatpush1.bf16.xpose.msra.mxu0 0
      %6514 = vmatprep.subr.bf16.mxu0 0
      %6515 = vmatpush1.bf16.xpose.msra.mxu0 0
      %6516 = vmatprep.subr.bf16.mxu0 0
      %6517 = vmatpush1.bf16.xpose.msra.mxu0 0
      %6518 = vmatprep.subr.bf16.mxu0 0
      %6519 = vmatpush1.bf16.xpose.msra.mxu0 0
      %6520 = vmatprep.subr.bf16.mxu0 0
      %6521 = vmatpush1.bf16.xpose.msra.mxu0 0
      %6522 = vmatprep.subr.bf16.mxu0 0
      %6523 = vmatpush1.bf16.xpose.msra.mxu0 0
      %6524 = vmatprep.subr.bf16.mxu0 0
      %6525 = vmatpush1.bf16.xpose.msra.mxu0 0
      %6526 = vmatprep.subr.bf16.mxu0 0
      %6527 = vmatpush1.bf16.xpose.msra.mxu0 %v6510
      %6528 = vmatprep.subr.bf16.mxu0 0
      %6529 = vmatpush2.bf16.xpose.msra.mxu0 0
      %6530 = vmatprep.subr.bf16.mxu0 0
      %6531 = vmatpush2.bf16.xpose.msra.mxu0 0
      %6532 = vmatprep.subr.bf16.mxu0 0
      %6533 = vmatpush2.bf16.xpose.msra.mxu0 0
      %6534 = vmatprep.subr.bf16.mxu0 0
      %6535 = vmatpush2.bf16.xpose.msra.mxu0 0
      %6536 = vmatprep.subr.bf16.mxu0 0
      %6537 = vmatpush2.bf16.xpose.msra.mxu0 0
      %6538 = vmatprep.subr.bf16.mxu0 0
      %6539 = vmatpush2.bf16.xpose.msra.mxu0 0
      %6540 = vmatprep.subr.bf16.mxu0 0
      %6541 = vmatpush2.bf16.xpose.msra.mxu0 0
      %6542 = vmatprep.subr.bf16.mxu0 0
      %6543 = vmatpush2.bf16.xpose.msra.mxu0 0
      %6544 = vmatprep.mubr.bf16.mxu0 0
      %6545 = vmatmul.mubr.bf16.gmra.mxu0 %v6507
      %v6546 = vpop.f32.mrf.mxu0
      %v6547 = vadd.f32 0.0, %v6546
      %v6548 = vpop.f32.mrf.mxu0
      %v6549 = vpop.f32.mrf.mxu0
      %v6550 = vpop.f32.mrf.mxu0
      %6551 = vdwg.mxu0
      %v6553 = vsel %vm1302, %v6456, 0
      %v6556 = vsel %vm1302, %v6032, 0
      %6558 = vmatprep.subr.bf16.mxu0 0
      %6559 = vmatpush1.bf16.xpose.msra.mxu0 0
      %6560 = vmatprep.subr.bf16.mxu0 0
      %6561 = vmatpush1.bf16.xpose.msra.mxu0 0
      %6562 = vmatprep.subr.bf16.mxu0 0
      %6563 = vmatpush1.bf16.xpose.msra.mxu0 0
      %6564 = vmatprep.subr.bf16.mxu0 0
      %6565 = vmatpush1.bf16.xpose.msra.mxu0 0
      %6566 = vmatprep.subr.bf16.mxu0 0
      %6567 = vmatpush1.bf16.xpose.msra.mxu0 0
      %6568 = vmatprep.subr.bf16.mxu0 0
      %6569 = vmatpush1.bf16.xpose.msra.mxu0 0
      %6570 = vmatprep.subr.bf16.mxu0 0
      %6571 = vmatpush1.bf16.xpose.msra.mxu0 0
      %6572 = vmatprep.subr.bf16.mxu0 0
      %6573 = vmatpush1.bf16.xpose.msra.mxu0 %v6556
      %6574 = vmatprep.subr.bf16.mxu0 0
      %6575 = vmatpush2.bf16.xpose.msra.mxu0 0
      %6576 = vmatprep.subr.bf16.mxu0 0
      %6577 = vmatpush2.bf16.xpose.msra.mxu0 0
      %6578 = vmatprep.subr.bf16.mxu0 0
      %6579 = vmatpush2.bf16.xpose.msra.mxu0 0
      %6580 = vmatprep.subr.bf16.mxu0 0
      %6581 = vmatpush2.bf16.xpose.msra.mxu0 0
      %6582 = vmatprep.subr.bf16.mxu0 0
      %6583 = vmatpush2.bf16.xpose.msra.mxu0 0
      %6584 = vmatprep.subr.bf16.mxu0 0
      %6585 = vmatpush2.bf16.xpose.msra.mxu0 0
      %6586 = vmatprep.subr.bf16.mxu0 0
      %6587 = vmatpush2.bf16.xpose.msra.mxu0 0
      %6588 = vmatprep.subr.bf16.mxu0 0
      %6589 = vmatpush2.bf16.xpose.msra.mxu0 0
      %6590 = vmatprep.mubr.bf16.mxu0 0
      %6591 = vmatmul.mubr.bf16.gmra.mxu0 %v6553
      %v6592 = vpop.f32.mrf.mxu0
      %v6593 = vadd.f32 0.0, %v6592
      %v6594 = vpop.f32.mrf.mxu0
      %v6595 = vpop.f32.mrf.mxu0
      %v6596 = vpop.f32.mrf.mxu0
      %6597 = vdwg.mxu0
      %v6599 = vsel %vm1302, %v6459, 0
      %v6602 = vsel %vm1302, %v6033, 0
      %6604 = vmatprep.subr.bf16.mxu0 0
      %6605 = vmatpush1.bf16.xpose.msra.mxu0 0
      %6606 = vmatprep.subr.bf16.mxu0 0
      %6607 = vmatpush1.bf16.xpose.msra.mxu0 0
      %6608 = vmatprep.subr.bf16.mxu0 0
      %6609 = vmatpush1.bf16.xpose.msra.mxu0 0
      %6610 = vmatprep.subr.bf16.mxu0 0
      %6611 = vmatpush1.bf16.xpose.msra.mxu0 0
      %6612 = vmatprep.subr.bf16.mxu0 0
      %6613 = vmatpush1.bf16.xpose.msra.mxu0 0
      %6614 = vmatprep.subr.bf16.mxu0 0
      %6615 = vmatpush1.bf16.xpose.msra.mxu0 0
      %6616 = vmatprep.subr.bf16.mxu0 0
      %6617 = vmatpush1.bf16.xpose.msra.mxu0 0
      %6618 = vmatprep.subr.bf16.mxu0 0
      %6619 = vmatpush1.bf16.xpose.msra.mxu0 %v6602
      %6620 = vmatprep.subr.bf16.mxu0 0
      %6621 = vmatpush2.bf16.xpose.msra.mxu0 0
      %6622 = vmatprep.subr.bf16.mxu0 0
      %6623 = vmatpush2.bf16.xpose.msra.mxu0 0
      %6624 = vmatprep.subr.bf16.mxu0 0
      %6625 = vmatpush2.bf16.xpose.msra.mxu0 0
      %6626 = vmatprep.subr.bf16.mxu0 0
      %6627 = vmatpush2.bf16.xpose.msra.mxu0 0
      %6628 = vmatprep.subr.bf16.mxu0 0
      %6629 = vmatpush2.bf16.xpose.msra.mxu0 0
      %6630 = vmatprep.subr.bf16.mxu0 0
      %6631 = vmatpush2.bf16.xpose.msra.mxu0 0
      %6632 = vmatprep.subr.bf16.mxu0 0
      %6633 = vmatpush2.bf16.xpose.msra.mxu0 0
      %6634 = vmatprep.subr.bf16.mxu0 0
      %6635 = vmatpush2.bf16.xpose.msra.mxu0 0
      %6636 = vmatprep.mubr.bf16.mxu0 0
      %6637 = vmatmul.mubr.bf16.gmra.mxu0 %v6599
      %v6638 = vpop.f32.mrf.mxu0
      %v6639 = vadd.f32 0.0, %v6638
      %v6640 = vpop.f32.mrf.mxu0
      %v6641 = vpop.f32.mrf.mxu0
      %v6642 = vpop.f32.mrf.mxu0
      %6643 = vdwg.mxu0
      %6644 = vxpose.xlu0.b32.start [1/16] %v6501, 128
      %6645 = vxpose.xlu0.b32.cont [2/16] 0.0, 128
      %6646 = vxpose.xlu0.b32.cont [3/16] 0.0, 128
      %6647 = vxpose.xlu0.b32.cont [4/16] 0.0, 128
      %6648 = vxpose.xlu0.b32.cont [5/16] 0.0, 128
      %6649 = vxpose.xlu0.b32.cont [6/16] 0.0, 128
      %6650 = vxpose.xlu0.b32.cont [7/16] 0.0, 128
      %6651 = vxpose.xlu0.b32.cont [8/16] 0.0, 128
      %6652 = vxpose.xlu0.b32.cont [9/16] 0.0, 128
      %6653 = vxpose.xlu0.b32.cont [10/16] 0.0, 128
      %6654 = vxpose.xlu0.b32.cont [11/16] 0.0, 128
      %6655 = vxpose.xlu0.b32.cont [12/16] 0.0, 128
      %6656 = vxpose.xlu0.b32.cont [13/16] 0.0, 128
      %6657 = vxpose.xlu0.b32.cont [14/16] 0.0, 128
      %6658 = vxpose.xlu0.b32.cont [15/16] 0.0, 128
      %6659 = vxpose.xlu0.b32.end [16/16] 0.0, 128
      %v6660 = vpop.trf.xlu0
      %v6661 = vpop.trf.xlu0
      %v6662 = vpop.trf.xlu0
      %v6663 = vpop.trf.xlu0
      %v6664 = vpop.trf.xlu0
      %v6665 = vpop.trf.xlu0
      %v6666 = vpop.trf.xlu0
      %v6667 = vpop.trf.xlu0
      %v6668 = vpop.trf.xlu0
      %v6669 = vpop.trf.xlu0
      %v6670 = vpop.trf.xlu0
      %v6671 = vpop.trf.xlu0
      %v6672 = vpop.trf.xlu0
      %v6673 = vpop.trf.xlu0
      %v6674 = vpop.trf.xlu0
      %v6675 = vpop.trf.xlu0
      %6676 = vxpose.xlu0.b32.start [1/16] %v6547, 128
      %6677 = vxpose.xlu0.b32.cont [2/16] 0.0, 128
      %6678 = vxpose.xlu0.b32.cont [3/16] 0.0, 128
      %6679 = vxpose.xlu0.b32.cont [4/16] 0.0, 128
      %6680 = vxpose.xlu0.b32.cont [5/16] 0.0, 128
      %6681 = vxpose.xlu0.b32.cont [6/16] 0.0, 128
      %6682 = vxpose.xlu0.b32.cont [7/16] 0.0, 128
      %6683 = vxpose.xlu0.b32.cont [8/16] 0.0, 128
      %6684 = vxpose.xlu0.b32.cont [9/16] 0.0, 128
      %6685 = vxpose.xlu0.b32.cont [10/16] 0.0, 128
      %6686 = vxpose.xlu0.b32.cont [11/16] 0.0, 128
      %6687 = vxpose.xlu0.b32.cont [12/16] 0.0, 128
      %6688 = vxpose.xlu0.b32.cont [13/16] 0.0, 128
      %6689 = vxpose.xlu0.b32.cont [14/16] 0.0, 128
      %6690 = vxpose.xlu0.b32.cont [15/16] 0.0, 128
      %6691 = vxpose.xlu0.b32.end [16/16] 0.0, 128
      %v6692 = vpop.trf.xlu0
      %v6693 = vpop.trf.xlu0
      %v6694 = vpop.trf.xlu0
      %v6695 = vpop.trf.xlu0
      %v6696 = vpop.trf.xlu0
      %v6697 = vpop.trf.xlu0
      %v6698 = vpop.trf.xlu0
      %v6699 = vpop.trf.xlu0
      %v6700 = vpop.trf.xlu0
      %v6701 = vpop.trf.xlu0
      %v6702 = vpop.trf.xlu0
      %v6703 = vpop.trf.xlu0
      %v6704 = vpop.trf.xlu0
      %v6705 = vpop.trf.xlu0
      %v6706 = vpop.trf.xlu0
      %v6707 = vpop.trf.xlu0
      %6708 = vxpose.xlu0.b32.start [1/16] %v6593, 128
      %6709 = vxpose.xlu0.b32.cont [2/16] 0.0, 128
      %6710 = vxpose.xlu0.b32.cont [3/16] 0.0, 128
      %6711 = vxpose.xlu0.b32.cont [4/16] 0.0, 128
      %6712 = vxpose.xlu0.b32.cont [5/16] 0.0, 128
      %6713 = vxpose.xlu0.b32.cont [6/16] 0.0, 128
      %6714 = vxpose.xlu0.b32.cont [7/16] 0.0, 128
      %6715 = vxpose.xlu0.b32.cont [8/16] 0.0, 128
      %6716 = vxpose.xlu0.b32.cont [9/16] 0.0, 128
      %6717 = vxpose.xlu0.b32.cont [10/16] 0.0, 128
      %6718 = vxpose.xlu0.b32.cont [11/16] 0.0, 128
      %6719 = vxpose.xlu0.b32.cont [12/16] 0.0, 128
      %6720 = vxpose.xlu0.b32.cont [13/16] 0.0, 128
      %6721 = vxpose.xlu0.b32.cont [14/16] 0.0, 128
      %6722 = vxpose.xlu0.b32.cont [15/16] 0.0, 128
      %6723 = vxpose.xlu0.b32.end [16/16] 0.0, 128
      %v6724 = vpop.trf.xlu0
      %v6725 = vpop.trf.xlu0
      %v6726 = vpop.trf.xlu0
      %v6727 = vpop.trf.xlu0
      %v6728 = vpop.trf.xlu0
      %v6729 = vpop.trf.xlu0
      %v6730 = vpop.trf.xlu0
      %v6731 = vpop.trf.xlu0
      %v6732 = vpop.trf.xlu0
      %v6733 = vpop.trf.xlu0
      %v6734 = vpop.trf.xlu0
      %v6735 = vpop.trf.xlu0
      %v6736 = vpop.trf.xlu0
      %v6737 = vpop.trf.xlu0
      %v6738 = vpop.trf.xlu0
      %v6739 = vpop.trf.xlu0
      %6740 = vxpose.xlu0.b32.start [1/16] %v6639, 128
      %6741 = vxpose.xlu0.b32.cont [2/16] 0.0, 128
      %6742 = vxpose.xlu0.b32.cont [3/16] 0.0, 128
      %6743 = vxpose.xlu0.b32.cont [4/16] 0.0, 128
      %6744 = vxpose.xlu0.b32.cont [5/16] 0.0, 128
      %6745 = vxpose.xlu0.b32.cont [6/16] 0.0, 128
      %6746 = vxpose.xlu0.b32.cont [7/16] 0.0, 128
      %6747 = vxpose.xlu0.b32.cont [8/16] 0.0, 128
      %6748 = vxpose.xlu0.b32.cont [9/16] 0.0, 128
      %6749 = vxpose.xlu0.b32.cont [10/16] 0.0, 128
      %6750 = vxpose.xlu0.b32.cont [11/16] 0.0, 128
      %6751 = vxpose.xlu0.b32.cont [12/16] 0.0, 128
      %6752 = vxpose.xlu0.b32.cont [13/16] 0.0, 128
      %6753 = vxpose.xlu0.b32.cont [14/16] 0.0, 128
      %6754 = vxpose.xlu0.b32.cont [15/16] 0.0, 128
      %6755 = vxpose.xlu0.b32.end [16/16] 0.0, 128
      %v6756 = vpop.trf.xlu0
      %v6757 = vpop.trf.xlu0
      %v6758 = vpop.trf.xlu0
      %v6759 = vpop.trf.xlu0
      %v6760 = vpop.trf.xlu0
      %v6761 = vpop.trf.xlu0
      %v6762 = vpop.trf.xlu0
      %v6763 = vpop.trf.xlu0
      %v6764 = vpop.trf.xlu0
      %v6765 = vpop.trf.xlu0
      %v6766 = vpop.trf.xlu0
      %v6767 = vpop.trf.xlu0
      %v6768 = vpop.trf.xlu0
      %v6769 = vpop.trf.xlu0
      %v6770 = vpop.trf.xlu0
      %v6771 = vpop.trf.xlu0
      %v6772 = vcombine.low %v6660, %v6724
      %v6773 = vcombine.high %v6660, %v6724
      %v6775 = vunpack.c.l.s4 1983009808
      %v6776 = vunpack.c.0.s8 %v6775
      %v6777 = vlaneseq
      %v6778 = vshrl.u32 %v6777, 7
      %v6779 = vsub.s32 %v6776, %v6778
      %v6780 = vrot.slane %v6772, %v6779
      %v6782 = vunpack.c.l.s4 1983009808
      %v6783 = vunpack.c.0.s8 %v6782
      %v6784 = vlaneseq
      %v6785 = vshrl.u32 %v6784, 7
      %v6786 = vsub.s32 %v6783, %v6785
      %v6787 = vrot.slane %v6773, %v6786
      %v6788 = vcombine.low %v6692, %v6756
      %v6789 = vcombine.high %v6692, %v6756
      %v6791 = vunpack.c.l.s4 1983009808
      %v6792 = vunpack.c.0.s8 %v6791
      %v6793 = vlaneseq
      %v6794 = vshrl.u32 %v6793, 7
      %v6795 = vsub.s32 %v6792, %v6794
      %v6796 = vrot.slane %v6788, %v6795
      %v6798 = vunpack.c.l.s4 1983009808
      %v6799 = vunpack.c.0.s8 %v6798
      %v6800 = vlaneseq
      %v6801 = vshrl.u32 %v6800, 7
      %v6802 = vsub.s32 %v6799, %v6801
      %v6803 = vrot.slane %v6789, %v6802
      %v6804 = vcombine.low %v6780, %v6796
      %v6805 = vcombine.high %v6780, %v6796
      %v6807 = vunpack.c.l.s4 1934713408
      %v6808 = vunpack.c.0.s8 %v6807
      %v6809 = vlaneseq
      %v6810 = vshrl.u32 %v6809, 7
      %v6811 = vsub.s32 %v6808, %v6810
      %v6812 = vrot.slane %v6804, %v6811
      %v6814 = vunpack.c.l.s4 1934713408
      %v6815 = vunpack.c.0.s8 %v6814
      %v6816 = vlaneseq
      %v6817 = vshrl.u32 %v6816, 7
      %v6818 = vsub.s32 %v6815, %v6817
      %v6819 = vrot.slane %v6805, %v6818
      %v6820 = vcombine.low %v6787, %v6803
      %v6821 = vcombine.high %v6787, %v6803
      %v6823 = vunpack.c.l.s4 1934713408
      %v6824 = vunpack.c.0.s8 %v6823
      %v6825 = vlaneseq
      %v6826 = vshrl.u32 %v6825, 7
      %v6827 = vsub.s32 %v6824, %v6826
      %v6828 = vrot.slane %v6820, %v6827
      %v6830 = vunpack.c.l.s4 1934713408
      %v6831 = vunpack.c.0.s8 %v6830
      %v6832 = vlaneseq
      %v6833 = vshrl.u32 %v6832, 7
      %v6834 = vsub.s32 %v6831, %v6833
      %v6835 = vrot.slane %v6821, %v6834
      %v6836 = vcombine.high %v6812, 0.0
      %v6837 = vcombine.high %v6819, 0.0
      %v6838 = vcombine.high %v6828, 0.0
      %v6839 = vcombine.high %v6835, 0.0
      %v6840 = vcombine.low %v6812, %v6819
      %v6842 = vunpack.c.l.s4 1983009808
      %v6843 = vunpack.c.0.s8 %v6842
      %v6844 = vlaneseq
      %v6845 = vshrl.u32 %v6844, 7
      %v6846 = vsub.s32 %v6843, %v6845
      %v6847 = vrot.slane %v6840, %v6846
      %v6848 = vcombine.low %v6836, %v6837
      %v6850 = vunpack.c.l.s4 1983009808
      %v6851 = vunpack.c.0.s8 %v6850
      %v6852 = vlaneseq
      %v6853 = vshrl.u32 %v6852, 7
      %v6854 = vsub.s32 %v6851, %v6853
      %v6855 = vrot.slane %v6848, %v6854
      %v6856 = vcombine.low %v6828, %v6835
      %v6858 = vunpack.c.l.s4 1983009808
      %v6859 = vunpack.c.0.s8 %v6858
      %v6860 = vlaneseq
      %v6861 = vshrl.u32 %v6860, 7
      %v6862 = vsub.s32 %v6859, %v6861
      %v6863 = vrot.slane %v6856, %v6862
      %v6864 = vcombine.low %v6838, %v6839
      %v6866 = vunpack.c.l.s4 1983009808
      %v6867 = vunpack.c.0.s8 %v6866
      %v6868 = vlaneseq
      %v6869 = vshrl.u32 %v6868, 7
      %v6870 = vsub.s32 %v6867, %v6869
      %v6871 = vrot.slane %v6864, %v6870
      %v6872 = vcombine.low %v6847, %v6855
      %v6873 = vcombine.high %v6847, %v6855
      %v6875 = vunpack.c.l.s4 1934713408
      %v6876 = vunpack.c.0.s8 %v6875
      %v6877 = vlaneseq
      %v6878 = vshrl.u32 %v6877, 7
      %v6879 = vsub.s32 %v6876, %v6878
      %v6880 = vrot.slane %v6872, %v6879
      %v6882 = vunpack.c.l.s4 1934713408
      %v6883 = vunpack.c.0.s8 %v6882
      %v6884 = vlaneseq
      %v6885 = vshrl.u32 %v6884, 7
      %v6886 = vsub.s32 %v6883, %v6885
      %v6887 = vrot.slane %v6873, %v6886
      %v6888 = vcombine.low %v6863, %v6871
      %v6889 = vcombine.high %v6863, %v6871
      %v6891 = vunpack.c.l.s4 1934713408
      %v6892 = vunpack.c.0.s8 %v6891
      %v6893 = vlaneseq
      %v6894 = vshrl.u32 %v6893, 7
      %v6895 = vsub.s32 %v6892, %v6894
      %v6896 = vrot.slane %v6888, %v6895
      %v6898 = vunpack.c.l.s4 1934713408
      %v6899 = vunpack.c.0.s8 %v6898
      %v6900 = vlaneseq
      %v6901 = vshrl.u32 %v6900, 7
      %v6902 = vsub.s32 %v6899, %v6901
      %v6903 = vrot.slane %v6889, %v6902
      %v6904 = vcombine.low %v6880, %v6896
      %v6905 = vcombine.high %v6880, %v6896
      %v6906 = vcombine.low %v6887, %v6903
      %v6907 = vcombine.high %v6887, %v6903
      %6909 = vrot.lane.b32.xlu0 %v6905, 8
      %v6910 = vpop.permute.xlu0 %6909
      %6913 = vrot.lane.b32.xlu0 %v6906, 16
      %v6914 = vpop.permute.xlu0 %6913
      %6917 = vrot.lane.b32.xlu0 %v6907, 24
      %v6918 = vpop.permute.xlu0 %6917
      %v6920 = vsel %vm1302, %v6904, %v6910
      %v6921 = vsel %vm2423, %v6920, %v6914
      %v6922 = vsel %vm2425, %v6921, %v6918
      %v6923 = vpack.c.bf16 %v6922, %v6922
      %s6924 = scalar_lea.vmem %s6, 32
      %v6925 = vld [vmem:[%s6924] sm:$0xf]
      %v6926 = vld [vmem:[%s6924 + $0x4] sm:$0xf]
      %v6927 = vld [vmem:[%s6924 + $0x8] sm:$0xf]
      %v6928 = vld [vmem:[%s6924 + $0xc] sm:$0xf]
      %v6933 = vunpack.c.l.b16 %v6925
      %v6934 = vunpack.c.l.b16 %v6926
      %v6935 = vunpack.c.l.b16 %v6927
      %v6936 = vunpack.c.l.b16 %v6928
      %v6937 = vpack.c.b16 %v6934, %v6933
      %v6938 = vpack.c.b16 %v6936, %v6935
      %v6942 = vsel %vm433, %v6923, 0
      %6944 = vmatprep.subr.bf16.mxu0 0
      %6945 = vmatpush1.bf16.msra.mxu0 0
      %6946 = vmatprep.subr.bf16.mxu0 0
      %6947 = vmatpush1.bf16.msra.mxu0 0
      %6948 = vmatprep.subr.bf16.mxu0 0
      %6949 = vmatpush1.bf16.msra.mxu0 0
      %6950 = vmatprep.subr.bf16.mxu0 0
      %6951 = vmatpush1.bf16.msra.mxu0 0
      %6952 = vmatprep.subr.bf16.mxu0 0
      %6953 = vmatpush1.bf16.msra.mxu0 0
      %6954 = vmatprep.subr.bf16.mxu0 0
      %6955 = vmatpush1.bf16.msra.mxu0 0
      %6956 = vmatprep.subr.bf16.mxu0 0
      %6957 = vmatpush1.bf16.msra.mxu0 %v6938
      %6958 = vmatprep.subr.bf16.mxu0 0
      %6959 = vmatpush1.bf16.msra.mxu0 %v6937
      %6960 = vmatprep.subr.bf16.mxu0 0
      %6961 = vmatpush2.bf16.msra.mxu0 0
      %6962 = vmatprep.subr.bf16.mxu0 0
      %6963 = vmatpush2.bf16.msra.mxu0 0
      %6964 = vmatprep.subr.bf16.mxu0 0
      %6965 = vmatpush2.bf16.msra.mxu0 0
      %6966 = vmatprep.subr.bf16.mxu0 0
      %6967 = vmatpush2.bf16.msra.mxu0 0
      %6968 = vmatprep.subr.bf16.mxu0 0
      %6969 = vmatpush2.bf16.msra.mxu0 0
      %6970 = vmatprep.subr.bf16.mxu0 0
      %6971 = vmatpush2.bf16.msra.mxu0 0
      %6972 = vmatprep.subr.bf16.mxu0 0
      %6973 = vmatpush2.bf16.msra.mxu0 0
      %6974 = vmatprep.subr.bf16.mxu0 0
      %6975 = vmatpush2.bf16.msra.mxu0 0
      %6976 = vmatprep.mubr.bf16.mxu0 0
      %6977 = vmatmul.mubr.bf16.gmra.mxu0 %v6942
      %v6978 = vpop.f32.mrf.mxu0
      %v6979 = vadd.f32 0.0, %v6978
      %v6980 = vpop.f32.mrf.mxu0
      %v6981 = vpop.f32.mrf.mxu0
      %v6982 = vpop.f32.mrf.mxu0
      %6983 = vdwg.mxu0
      %v6984 = vadd.f32 %v4929, %v6979
      %s6985 = scalar_lea.vmem %s2, 2
      %v6986 = vld [vmem:[%s6985] sm:$0x1]
      %v6987 = vmul.f32 %v6984, %v6984
      %v6988 = vsel %vm433, %v6987, 0.0
      %6989 = vadd.xlane.f32.xlu0 %v6988
      %v6990 = vpop.xlane.xlu0 %6989
      %v6991 = vmul.f32 %v6990, %v437
      %v6992 = vadd.f32 %v6991, 1e-06
      %v6993 = vrsqrt.pop %v6992
      %v6994 = vmul.f32 %v6984, %v6993
      %v6996 = vlaneseq
      %v6997 = vshrl.u32 %v6996, 7
      %v6998 = vsub.s32 0, %v6997
      %v6999 = vrot.slane %v6986, %v6998
      %v7001 = vmul.f32 %v6994, %v6999
      %v7002 = vpack.c.bf16 %v7001, %v7001
      %s7003 = scalar_lea.vmem %s7, 32
      %v7004 = vld [vmem:[%s7003] sm:$0xf]
      %v7005 = vld [vmem:[%s7003 + $0x4] sm:$0xf]
      %v7006 = vld [vmem:[%s7003 + $0x8] sm:$0xf]
      %v7007 = vld [vmem:[%s7003 + $0xc] sm:$0xf]
      %v7012 = vunpack.c.l.b16 %v7004
      %v7013 = vunpack.c.l.b16 %v7005
      %v7014 = vunpack.c.l.b16 %v7006
      %v7015 = vunpack.c.l.b16 %v7007
      %v7016 = vpack.c.b16 %v7013, %v7012
      %v7017 = vpack.c.b16 %v7015, %v7014
      %v7021 = vsel %vm433, %v7002, 0
      %7023 = vmatprep.subr.bf16.mxu0 0
      %7024 = vmatpush1.bf16.msra.mxu0 0
      %7025 = vmatprep.subr.bf16.mxu0 0
      %7026 = vmatpush1.bf16.msra.mxu0 0
      %7027 = vmatprep.subr.bf16.mxu0 0
      %7028 = vmatpush1.bf16.msra.mxu0 0
      %7029 = vmatprep.subr.bf16.mxu0 0
      %7030 = vmatpush1.bf16.msra.mxu0 0
      %7031 = vmatprep.subr.bf16.mxu0 0
      %7032 = vmatpush1.bf16.msra.mxu0 0
      %7033 = vmatprep.subr.bf16.mxu0 0
      %7034 = vmatpush1.bf16.msra.mxu0 0
      %7035 = vmatprep.subr.bf16.mxu0 0
      %7036 = vmatpush1.bf16.msra.mxu0 %v7017
      %7037 = vmatprep.subr.bf16.mxu0 0
      %7038 = vmatpush1.bf16.msra.mxu0 %v7016
      %7039 = vmatprep.subr.bf16.mxu0 0
      %7040 = vmatpush2.bf16.msra.mxu0 0
      %7041 = vmatprep.subr.bf16.mxu0 0
      %7042 = vmatpush2.bf16.msra.mxu0 0
      %7043 = vmatprep.subr.bf16.mxu0 0
      %7044 = vmatpush2.bf16.msra.mxu0 0
      %7045 = vmatprep.subr.bf16.mxu0 0
      %7046 = vmatpush2.bf16.msra.mxu0 0
      %7047 = vmatprep.subr.bf16.mxu0 0
      %7048 = vmatpush2.bf16.msra.mxu0 0
      %7049 = vmatprep.subr.bf16.mxu0 0
      %7050 = vmatpush2.bf16.msra.mxu0 0
      %7051 = vmatprep.subr.bf16.mxu0 0
      %7052 = vmatpush2.bf16.msra.mxu0 0
      %7053 = vmatprep.subr.bf16.mxu0 0
      %7054 = vmatpush2.bf16.msra.mxu0 0
      %7055 = vmatprep.mubr.bf16.mxu0 0
      %7056 = vmatmul.mubr.bf16.gmra.mxu0 %v7021
      %v7057 = vpop.f32.mrf.mxu0
      %v7058 = vadd.f32 0.0, %v7057
      %v7059 = vpop.f32.mrf.mxu0
      %v7060 = vpop.f32.mrf.mxu0
      %v7061 = vpop.f32.mrf.mxu0
      %7062 = vdwg.mxu0
      %v7063 = vxor.u32 %v7058, 2147483648
      %v7064 = vmul.f32 %v7063, 1.442695
      %v7065 = vpow.pop %v7064
      %v7066 = vadd.f32 %v7065, 1.0
      %v7067 = vrcp.pop %v7066
      %v7068 = vmul.f32 1.0, %v7067
      %v7069 = vmul.f32 %v7058, %v7068
      %7070 = vrot.lane.b32.xlu0 %v7058, 64
      %v7071 = vpop.permute.xlu0 %7070
      %v7072 = vmul.f32 %v7069, %v7071
      %v7073 = vpack.c.bf16 %v7072, %v7072
      %s7074 = scalar_lea.vmem %s8, 128
      %v7075 = vld [vmem:[%s7074] sm:$0xf]
      %v7076 = vld [vmem:[%s7074 + $0x4] sm:$0xf]
      %v7077 = vld [vmem:[%s7074 + $0x8] sm:$0xf]
      %v7078 = vld [vmem:[%s7074 + $0xc] sm:$0xf]
      %v7079 = vld [vmem:[%s7074 + $0x10] sm:$0xf]
      %v7080 = vld [vmem:[%s7074 + $0x14] sm:$0xf]
      %v7081 = vld [vmem:[%s7074 + $0x18] sm:$0xf]
      %v7082 = vld [vmem:[%s7074 + $0x1c] sm:$0xf]
      %v7083 = vld [vmem:[%s7074 + $0x20] sm:$0xf]
      %v7084 = vld [vmem:[%s7074 + $0x24] sm:$0xf]
      %v7085 = vld [vmem:[%s7074 + $0x28] sm:$0xf]
      %v7086 = vld [vmem:[%s7074 + $0x2c] sm:$0xf]
      %v7087 = vld [vmem:[%s7074 + $0x30] sm:$0xf]
      %v7088 = vld [vmem:[%s7074 + $0x34] sm:$0xf]
      %v7089 = vld [vmem:[%s7074 + $0x38] sm:$0xf]
      %v7090 = vld [vmem:[%s7074 + $0x3c] sm:$0xf]
      %v7107 = vunpack.c.l.b16 %v7075
      %v7108 = vunpack.c.l.b16 %v7076
      %v7109 = vunpack.c.l.b16 %v7077
      %v7110 = vunpack.c.l.b16 %v7078
      %v7111 = vunpack.c.l.b16 %v7079
      %v7112 = vunpack.c.l.b16 %v7080
      %v7113 = vunpack.c.l.b16 %v7081
      %v7114 = vunpack.c.l.b16 %v7082
      %v7115 = vunpack.c.l.b16 %v7083
      %v7116 = vunpack.c.l.b16 %v7084
      %v7117 = vunpack.c.l.b16 %v7085
      %v7118 = vunpack.c.l.b16 %v7086
      %v7119 = vunpack.c.l.b16 %v7087
      %v7120 = vunpack.c.l.b16 %v7088
      %v7121 = vunpack.c.l.b16 %v7089
      %v7122 = vunpack.c.l.b16 %v7090
      %v7123 = vpack.c.b16 %v7108, %v7107
      %v7124 = vpack.c.b16 %v7110, %v7109
      %v7125 = vpack.c.b16 %v7112, %v7111
      %v7126 = vpack.c.b16 %v7114, %v7113
      %v7127 = vpack.c.b16 %v7116, %v7115
      %v7128 = vpack.c.b16 %v7118, %v7117
      %v7129 = vpack.c.b16 %v7120, %v7119
      %v7130 = vpack.c.b16 %v7122, %v7121
      %7139 = vmatprep.subr.bf16.mxu0 0
      %7140 = vmatpush1.bf16.msra.mxu0 %v7130
      %7141 = vmatprep.subr.bf16.mxu0 0
      %7142 = vmatpush1.bf16.msra.mxu0 %v7129
      %7143 = vmatprep.subr.bf16.mxu0 0
      %7144 = vmatpush1.bf16.msra.mxu0 %v7128
      %7145 = vmatprep.subr.bf16.mxu0 0
      %7146 = vmatpush1.bf16.msra.mxu0 %v7127
      %7147 = vmatprep.subr.bf16.mxu0 0
      %7148 = vmatpush1.bf16.msra.mxu0 %v7126
      %7149 = vmatprep.subr.bf16.mxu0 0
      %7150 = vmatpush1.bf16.msra.mxu0 %v7125
      %7151 = vmatprep.subr.bf16.mxu0 0
      %7152 = vmatpush1.bf16.msra.mxu0 %v7124
      %7153 = vmatprep.subr.bf16.mxu0 0
      %7154 = vmatpush1.bf16.msra.mxu0 %v7123
      %7155 = vmatprep.subr.bf16.mxu0 0
      %7156 = vmatpush2.bf16.msra.mxu0 0
      %7157 = vmatprep.subr.bf16.mxu0 0
      %7158 = vmatpush2.bf16.msra.mxu0 0
      %7159 = vmatprep.subr.bf16.mxu0 0
      %7160 = vmatpush2.bf16.msra.mxu0 0
      %7161 = vmatprep.subr.bf16.mxu0 0
      %7162 = vmatpush2.bf16.msra.mxu0 0
      %7163 = vmatprep.subr.bf16.mxu0 0
      %7164 = vmatpush2.bf16.msra.mxu0 0
      %7165 = vmatprep.subr.bf16.mxu0 0
      %7166 = vmatpush2.bf16.msra.mxu0 0
      %7167 = vmatprep.subr.bf16.mxu0 0
      %7168 = vmatpush2.bf16.msra.mxu0 0
      %7169 = vmatprep.subr.bf16.mxu0 0
      %7170 = vmatpush2.bf16.msra.mxu0 0
      %7171 = vmatprep.mubr.bf16.mxu0 0
      %7172 = vmatmul.mubr.bf16.gmra.mxu0 %v7073
      %v7173 = vpop.f32.mrf.mxu0
      %v7174 = vadd.f32 0.0, %v7173
      %v7175 = vpop.f32.mrf.mxu0
      %v7176 = vpop.f32.mrf.mxu0
      %v7177 = vpop.f32.mrf.mxu0
      %7178 = vdwg.mxu0
      %v7179 = vadd.f32 %v6984, %v7174
      %s7180 = scalar_lea.vmem %s1, 3
      %v7181 = vld [vmem:[%s7180] sm:$0x1]
      %v7182 = vmul.f32 %v7179, %v7179
      %v7183 = vsel %vm433, %v7182, 0.0
      %7184 = vadd.xlane.f32.xlu0 %v7183
      %v7185 = vpop.xlane.xlu0 %7184
      %v7186 = vmul.f32 %v7185, %v437
      %v7187 = vadd.f32 %v7186, 1e-06
      %v7188 = vrsqrt.pop %v7187
      %v7189 = vmul.f32 %v7179, %v7188
      %v7191 = vlaneseq
      %v7192 = vshrl.u32 %v7191, 7
      %v7193 = vsub.s32 0, %v7192
      %v7194 = vrot.slane %v7181, %v7193
      %v7196 = vmul.f32 %v7189, %v7194
      %v7197 = vpack.c.bf16 %v7196, %v7196
      %s7198 = scalar_lea.vmem %s4, 48
      %v7199 = vld [vmem:[%s7198] sm:$0xf]
      %v7200 = vld [vmem:[%s7198 + $0x4] sm:$0xf]
      %v7201 = vld [vmem:[%s7198 + $0x8] sm:$0xf]
      %v7202 = vld [vmem:[%s7198 + $0xc] sm:$0xf]
      %v7207 = vunpack.c.l.b16 %v7199
      %v7208 = vunpack.c.l.b16 %v7200
      %v7209 = vunpack.c.l.b16 %v7201
      %v7210 = vunpack.c.l.b16 %v7202
      %v7211 = vpack.c.b16 %v7208, %v7207
      %v7212 = vpack.c.b16 %v7210, %v7209
      %v7216 = vsel %vm433, %v7197, 0
      %7218 = vmatprep.subr.bf16.mxu0 0
      %7219 = vmatpush1.bf16.msra.mxu0 0
      %7220 = vmatprep.subr.bf16.mxu0 0
      %7221 = vmatpush1.bf16.msra.mxu0 0
      %7222 = vmatprep.subr.bf16.mxu0 0
      %7223 = vmatpush1.bf16.msra.mxu0 0
      %7224 = vmatprep.subr.bf16.mxu0 0
      %7225 = vmatpush1.bf16.msra.mxu0 0
      %7226 = vmatprep.subr.bf16.mxu0 0
      %7227 = vmatpush1.bf16.msra.mxu0 0
      %7228 = vmatprep.subr.bf16.mxu0 0
      %7229 = vmatpush1.bf16.msra.mxu0 0
      %7230 = vmatprep.subr.bf16.mxu0 0
      %7231 = vmatpush1.bf16.msra.mxu0 %v7212
      %7232 = vmatprep.subr.bf16.mxu0 0
      %7233 = vmatpush1.bf16.msra.mxu0 %v7211
      %7234 = vmatprep.subr.bf16.mxu0 0
      %7235 = vmatpush2.bf16.msra.mxu0 0
      %7236 = vmatprep.subr.bf16.mxu0 0
      %7237 = vmatpush2.bf16.msra.mxu0 0
      %7238 = vmatprep.subr.bf16.mxu0 0
      %7239 = vmatpush2.bf16.msra.mxu0 0
      %7240 = vmatprep.subr.bf16.mxu0 0
      %7241 = vmatpush2.bf16.msra.mxu0 0
      %7242 = vmatprep.subr.bf16.mxu0 0
      %7243 = vmatpush2.bf16.msra.mxu0 0
      %7244 = vmatprep.subr.bf16.mxu0 0
      %7245 = vmatpush2.bf16.msra.mxu0 0
      %7246 = vmatprep.subr.bf16.mxu0 0
      %7247 = vmatpush2.bf16.msra.mxu0 0
      %7248 = vmatprep.subr.bf16.mxu0 0
      %7249 = vmatpush2.bf16.msra.mxu0 0
      %7250 = vmatprep.mubr.bf16.mxu0 0
      %7251 = vmatmul.mubr.bf16.gmra.mxu0 %v7216
      %v7252 = vpop.f32.mrf.mxu0
      %v7253 = vadd.f32 0.0, %v7252
      %v7254 = vpop.f32.mrf.mxu0
      %v7255 = vpop.f32.mrf.mxu0
      %v7256 = vpop.f32.mrf.mxu0
      %7257 = vdwg.mxu0
      %s7258 = scalar_lea.vmem %s5, 48
      %v7259 = vld [vmem:[%s7258] sm:$0xf]
      %v7260 = vld [vmem:[%s7258 + $0x4] sm:$0xf]
      %v7261 = vld [vmem:[%s7258 + $0x8] sm:$0xf]
      %v7262 = vld [vmem:[%s7258 + $0xc] sm:$0xf]
      %v7267 = vunpack.c.l.b16 %v7259
      %v7268 = vunpack.c.l.b16 %v7260
      %v7269 = vunpack.c.l.b16 %v7261
      %v7270 = vunpack.c.l.b16 %v7262
      %v7271 = vpack.c.b16 %v7268, %v7267
      %v7272 = vpack.c.b16 %v7270, %v7269
      %7275 = vmatprep.subr.bf16.mxu0 0
      %7276 = vmatpush1.bf16.msra.mxu0 0
      %7277 = vmatprep.subr.bf16.mxu0 0
      %7278 = vmatpush1.bf16.msra.mxu0 0
      %7279 = vmatprep.subr.bf16.mxu0 0
      %7280 = vmatpush1.bf16.msra.mxu0 0
      %7281 = vmatprep.subr.bf16.mxu0 0
      %7282 = vmatpush1.bf16.msra.mxu0 0
      %7283 = vmatprep.subr.bf16.mxu0 0
      %7284 = vmatpush1.bf16.msra.mxu0 0
      %7285 = vmatprep.subr.bf16.mxu0 0
      %7286 = vmatpush1.bf16.msra.mxu0 0
      %7287 = vmatprep.subr.bf16.mxu0 0
      %7288 = vmatpush1.bf16.msra.mxu0 %v7272
      %7289 = vmatprep.subr.bf16.mxu0 0
      %7290 = vmatpush1.bf16.msra.mxu0 %v7271
      %7291 = vmatprep.subr.bf16.mxu0 0
      %7292 = vmatpush2.bf16.msra.mxu0 0
      %7293 = vmatprep.subr.bf16.mxu0 0
      %7294 = vmatpush2.bf16.msra.mxu0 0
      %7295 = vmatprep.subr.bf16.mxu0 0
      %7296 = vmatpush2.bf16.msra.mxu0 0
      %7297 = vmatprep.subr.bf16.mxu0 0
      %7298 = vmatpush2.bf16.msra.mxu0 0
      %7299 = vmatprep.subr.bf16.mxu0 0
      %7300 = vmatpush2.bf16.msra.mxu0 0
      %7301 = vmatprep.subr.bf16.mxu0 0
      %7302 = vmatpush2.bf16.msra.mxu0 0
      %7303 = vmatprep.subr.bf16.mxu0 0
      %7304 = vmatpush2.bf16.msra.mxu0 0
      %7305 = vmatprep.subr.bf16.mxu0 0
      %7306 = vmatpush2.bf16.msra.mxu0 0
      %7307 = vmatprep.mubr.bf16.mxu0 0
      %7308 = vmatmul.mubr.bf16.gmra.mxu0 %v7216
      %v7309 = vpop.f32.mrf.mxu0
      %v7310 = vadd.f32 0.0, %v7309
      %v7311 = vpop.f32.mrf.mxu0
      %v7312 = vpop.f32.mrf.mxu0
      %v7313 = vpop.f32.mrf.mxu0
      %7314 = vdwg.mxu0
      %v7315 = vmul.f32 %v7253, %v428
      %v7316 = vmul.f32 %v7310, %v429
      %v7317 = vadd.f32 %v7315, %v7316
      %7319 = vrot.lane.b32.xlu0 %v7317, 120
      %v7320 = vpop.permute.xlu0 %7319
      %7322 = vrot.lane.b32.xlu0 %v7317, 112
      %v7323 = vpop.permute.xlu0 %7322
      %7325 = vrot.lane.b32.xlu0 %v7317, 104
      %v7326 = vpop.permute.xlu0 %7325
      %v7328 = vcombine.low %v7317, %v7323
      %v7329 = vcombine.high %v7317, %v7323
      %v7331 = vunpack.c.l.s4 1983009808
      %v7332 = vunpack.c.0.s8 %v7331
      %v7333 = vlaneseq
      %v7334 = vshrl.u32 %v7333, 7
      %v7335 = vsub.s32 %v7332, %v7334
      %v7336 = vrot.slane %v7328, %v7335
      %v7338 = vunpack.c.l.s4 1983009808
      %v7339 = vunpack.c.0.s8 %v7338
      %v7340 = vlaneseq
      %v7341 = vshrl.u32 %v7340, 7
      %v7342 = vsub.s32 %v7339, %v7341
      %v7343 = vrot.slane %v7329, %v7342
      %v7344 = vcombine.low %v7320, %v7326
      %v7345 = vcombine.high %v7320, %v7326
      %v7347 = vunpack.c.l.s4 1983009808
      %v7348 = vunpack.c.0.s8 %v7347
      %v7349 = vlaneseq
      %v7350 = vshrl.u32 %v7349, 7
      %v7351 = vsub.s32 %v7348, %v7350
      %v7352 = vrot.slane %v7344, %v7351
      %v7354 = vunpack.c.l.s4 1983009808
      %v7355 = vunpack.c.0.s8 %v7354
      %v7356 = vlaneseq
      %v7357 = vshrl.u32 %v7356, 7
      %v7358 = vsub.s32 %v7355, %v7357
      %v7359 = vrot.slane %v7345, %v7358
      %v7360 = vcombine.low %v7336, %v7352
      %v7361 = vcombine.high %v7336, %v7352
      %v7363 = vunpack.c.l.s4 1934713408
      %v7364 = vunpack.c.0.s8 %v7363
      %v7365 = vlaneseq
      %v7366 = vshrl.u32 %v7365, 7
      %v7367 = vsub.s32 %v7364, %v7366
      %v7368 = vrot.slane %v7360, %v7367
      %v7370 = vunpack.c.l.s4 1934713408
      %v7371 = vunpack.c.0.s8 %v7370
      %v7372 = vlaneseq
      %v7373 = vshrl.u32 %v7372, 7
      %v7374 = vsub.s32 %v7371, %v7373
      %v7375 = vrot.slane %v7361, %v7374
      %v7376 = vcombine.low %v7343, %v7359
      %v7377 = vcombine.high %v7343, %v7359
      %v7379 = vunpack.c.l.s4 1934713408
      %v7380 = vunpack.c.0.s8 %v7379
      %v7381 = vlaneseq
      %v7382 = vshrl.u32 %v7381, 7
      %v7383 = vsub.s32 %v7380, %v7382
      %v7384 = vrot.slane %v7376, %v7383
      %v7386 = vunpack.c.l.s4 1934713408
      %v7387 = vunpack.c.0.s8 %v7386
      %v7388 = vlaneseq
      %v7389 = vshrl.u32 %v7388, 7
      %v7390 = vsub.s32 %v7387, %v7389
      %v7391 = vrot.slane %v7377, %v7390
      %v7392 = vcombine.high %v7368, 0.0
      %v7393 = vcombine.high %v7375, 0.0
      %v7394 = vcombine.high %v7384, 0.0
      %v7395 = vcombine.high %v7391, 0.0
      %7396 = vrot.lane.b32.xlu0 %v7317, 96
      %v7397 = vpop.permute.xlu0 %7396
      %7398 = vrot.lane.b32.xlu0 %v7320, 96
      %v7399 = vpop.permute.xlu0 %7398
      %7400 = vrot.lane.b32.xlu0 %v7323, 96
      %v7401 = vpop.permute.xlu0 %7400
      %7402 = vrot.lane.b32.xlu0 %v7326, 96
      %v7403 = vpop.permute.xlu0 %7402
      %v7408 = vcombine.low %v7397, %v7401
      %v7409 = vcombine.high %v7397, %v7401
      %v7411 = vunpack.c.l.s4 1983009808
      %v7412 = vunpack.c.0.s8 %v7411
      %v7413 = vlaneseq
      %v7414 = vshrl.u32 %v7413, 7
      %v7415 = vsub.s32 %v7412, %v7414
      %v7416 = vrot.slane %v7408, %v7415
      %v7418 = vunpack.c.l.s4 1983009808
      %v7419 = vunpack.c.0.s8 %v7418
      %v7420 = vlaneseq
      %v7421 = vshrl.u32 %v7420, 7
      %v7422 = vsub.s32 %v7419, %v7421
      %v7423 = vrot.slane %v7409, %v7422
      %v7424 = vcombine.low %v7399, %v7403
      %v7425 = vcombine.high %v7399, %v7403
      %v7427 = vunpack.c.l.s4 1983009808
      %v7428 = vunpack.c.0.s8 %v7427
      %v7429 = vlaneseq
      %v7430 = vshrl.u32 %v7429, 7
      %v7431 = vsub.s32 %v7428, %v7430
      %v7432 = vrot.slane %v7424, %v7431
      %v7434 = vunpack.c.l.s4 1983009808
      %v7435 = vunpack.c.0.s8 %v7434
      %v7436 = vlaneseq
      %v7437 = vshrl.u32 %v7436, 7
      %v7438 = vsub.s32 %v7435, %v7437
      %v7439 = vrot.slane %v7425, %v7438
      %v7440 = vcombine.low %v7416, %v7432
      %v7441 = vcombine.high %v7416, %v7432
      %v7443 = vunpack.c.l.s4 1934713408
      %v7444 = vunpack.c.0.s8 %v7443
      %v7445 = vlaneseq
      %v7446 = vshrl.u32 %v7445, 7
      %v7447 = vsub.s32 %v7444, %v7446
      %v7448 = vrot.slane %v7440, %v7447
      %v7450 = vunpack.c.l.s4 1934713408
      %v7451 = vunpack.c.0.s8 %v7450
      %v7452 = vlaneseq
      %v7453 = vshrl.u32 %v7452, 7
      %v7454 = vsub.s32 %v7451, %v7453
      %v7455 = vrot.slane %v7441, %v7454
      %v7456 = vcombine.low %v7423, %v7439
      %v7457 = vcombine.high %v7423, %v7439
      %v7459 = vunpack.c.l.s4 1934713408
      %v7460 = vunpack.c.0.s8 %v7459
      %v7461 = vlaneseq
      %v7462 = vshrl.u32 %v7461, 7
      %v7463 = vsub.s32 %v7460, %v7462
      %v7464 = vrot.slane %v7456, %v7463
      %v7466 = vunpack.c.l.s4 1934713408
      %v7467 = vunpack.c.0.s8 %v7466
      %v7468 = vlaneseq
      %v7469 = vshrl.u32 %v7468, 7
      %v7470 = vsub.s32 %v7467, %v7469
      %v7471 = vrot.slane %v7457, %v7470
      %v7472 = vcombine.high %v7448, 0.0
      %v7473 = vcombine.high %v7455, 0.0
      %v7474 = vcombine.high %v7464, 0.0
      %v7475 = vcombine.high %v7471, 0.0
      %7476 = vrot.lane.b32.xlu0 %v7317, 64
      %v7477 = vpop.permute.xlu0 %7476
      %7478 = vrot.lane.b32.xlu0 %v7320, 64
      %v7479 = vpop.permute.xlu0 %7478
      %7480 = vrot.lane.b32.xlu0 %v7323, 64
      %v7481 = vpop.permute.xlu0 %7480
      %7482 = vrot.lane.b32.xlu0 %v7326, 64
      %v7483 = vpop.permute.xlu0 %7482
      %v7488 = vcombine.low %v7477, %v7481
      %v7489 = vcombine.high %v7477, %v7481
      %v7491 = vunpack.c.l.s4 1983009808
      %v7492 = vunpack.c.0.s8 %v7491
      %v7493 = vlaneseq
      %v7494 = vshrl.u32 %v7493, 7
      %v7495 = vsub.s32 %v7492, %v7494
      %v7496 = vrot.slane %v7488, %v7495
      %v7498 = vunpack.c.l.s4 1983009808
      %v7499 = vunpack.c.0.s8 %v7498
      %v7500 = vlaneseq
      %v7501 = vshrl.u32 %v7500, 7
      %v7502 = vsub.s32 %v7499, %v7501
      %v7503 = vrot.slane %v7489, %v7502
      %v7504 = vcombine.low %v7479, %v7483
      %v7505 = vcombine.high %v7479, %v7483
      %v7507 = vunpack.c.l.s4 1983009808
      %v7508 = vunpack.c.0.s8 %v7507
      %v7509 = vlaneseq
      %v7510 = vshrl.u32 %v7509, 7
      %v7511 = vsub.s32 %v7508, %v7510
      %v7512 = vrot.slane %v7504, %v7511
      %v7514 = vunpack.c.l.s4 1983009808
      %v7515 = vunpack.c.0.s8 %v7514
      %v7516 = vlaneseq
      %v7517 = vshrl.u32 %v7516, 7
      %v7518 = vsub.s32 %v7515, %v7517
      %v7519 = vrot.slane %v7505, %v7518
      %v7520 = vcombine.low %v7496, %v7512
      %v7521 = vcombine.high %v7496, %v7512
      %v7523 = vunpack.c.l.s4 1934713408
      %v7524 = vunpack.c.0.s8 %v7523
      %v7525 = vlaneseq
      %v7526 = vshrl.u32 %v7525, 7
      %v7527 = vsub.s32 %v7524, %v7526
      %v7528 = vrot.slane %v7520, %v7527
      %v7530 = vunpack.c.l.s4 1934713408
      %v7531 = vunpack.c.0.s8 %v7530
      %v7532 = vlaneseq
      %v7533 = vshrl.u32 %v7532, 7
      %v7534 = vsub.s32 %v7531, %v7533
      %v7535 = vrot.slane %v7521, %v7534
      %v7536 = vcombine.low %v7503, %v7519
      %v7537 = vcombine.high %v7503, %v7519
      %v7539 = vunpack.c.l.s4 1934713408
      %v7540 = vunpack.c.0.s8 %v7539
      %v7541 = vlaneseq
      %v7542 = vshrl.u32 %v7541, 7
      %v7543 = vsub.s32 %v7540, %v7542
      %v7544 = vrot.slane %v7536, %v7543
      %v7546 = vunpack.c.l.s4 1934713408
      %v7547 = vunpack.c.0.s8 %v7546
      %v7548 = vlaneseq
      %v7549 = vshrl.u32 %v7548, 7
      %v7550 = vsub.s32 %v7547, %v7549
      %v7551 = vrot.slane %v7537, %v7550
      %v7552 = vcombine.high %v7528, 0.0
      %v7553 = vcombine.high %v7535, 0.0
      %v7554 = vcombine.high %v7544, 0.0
      %v7555 = vcombine.high %v7551, 0.0
      %v7556 = vpack.c.bf16 %v7368, %v7368
      %v7557 = vpack.c.bf16 %v7392, %v7392
      %v7558 = vpack.c.bf16 %v7375, %v7375
      %v7559 = vpack.c.bf16 %v7393, %v7393
      %v7560 = vpack.c.bf16 %v7384, %v7384
      %v7561 = vpack.c.bf16 %v7394, %v7394
      %v7562 = vpack.c.bf16 %v7391, %v7391
      %v7563 = vpack.c.bf16 %v7395, %v7395
      %v7564 = vpack.c.bf16 %v7448, %v7448
      %v7565 = vpack.c.bf16 %v7472, %v7472
      %v7566 = vpack.c.bf16 %v7455, %v7455
      %v7567 = vpack.c.bf16 %v7473, %v7473
      %v7568 = vpack.c.bf16 %v7464, %v7464
      %v7569 = vpack.c.bf16 %v7474, %v7474
      %v7570 = vpack.c.bf16 %v7471, %v7471
      %v7571 = vpack.c.bf16 %v7475, %v7475
      %v7572 = vcombine.low %v7556, %v7560
      %v7574 = vunpack.c.l.s4 1983009808
      %v7575 = vunpack.c.0.s8 %v7574
      %v7576 = vlaneseq
      %v7577 = vshrl.u32 %v7576, 7
      %v7578 = vsub.s32 %v7575, %v7577
      %v7579 = vrot.slane %v7572, %v7578
      %v7580 = vcombine.low %v7558, %v7562
      %v7582 = vunpack.c.l.s4 1983009808
      %v7583 = vunpack.c.0.s8 %v7582
      %v7584 = vlaneseq
      %v7585 = vshrl.u32 %v7584, 7
      %v7586 = vsub.s32 %v7583, %v7585
      %v7587 = vrot.slane %v7580, %v7586
      %v7588 = vcombine.low %v7579, %v7587
      %v7590 = vunpack.c.l.s4 1934713408
      %v7591 = vunpack.c.0.s8 %v7590
      %v7592 = vlaneseq
      %v7593 = vshrl.u32 %v7592, 7
      %v7594 = vsub.s32 %v7591, %v7593
      %v7595 = vrot.slane %v7588, %v7594
      %v7596 = vcombine.high %v7595, 0
      %v7597 = vcombine.low %v7557, %v7561
      %v7599 = vunpack.c.l.s4 1983009808
      %v7600 = vunpack.c.0.s8 %v7599
      %v7601 = vlaneseq
      %v7602 = vshrl.u32 %v7601, 7
      %v7603 = vsub.s32 %v7600, %v7602
      %v7604 = vrot.slane %v7597, %v7603
      %v7605 = vcombine.low %v7559, %v7563
      %v7607 = vunpack.c.l.s4 1983009808
      %v7608 = vunpack.c.0.s8 %v7607
      %v7609 = vlaneseq
      %v7610 = vshrl.u32 %v7609, 7
      %v7611 = vsub.s32 %v7608, %v7610
      %v7612 = vrot.slane %v7605, %v7611
      %v7613 = vcombine.low %v7604, %v7612
      %v7615 = vunpack.c.l.s4 1934713408
      %v7616 = vunpack.c.0.s8 %v7615
      %v7617 = vlaneseq
      %v7618 = vshrl.u32 %v7617, 7
      %v7619 = vsub.s32 %v7616, %v7618
      %v7620 = vrot.slane %v7613, %v7619
      %v7621 = vcombine.high %v7620, 0
      %v7624 = vpack.i.b16 %v7620, %v7595
      %v7625 = vshrl.u32 %v7595, 16
      %v7626 = vshrl.u32 %v7620, 16
      %v7627 = vpack.i.b16 %v7626, %v7625
      %v7630 = vpack.i.b16 %v7621, %v7596
      %v7631 = vshrl.u32 %v7596, 16
      %v7632 = vshrl.u32 %v7621, 16
      %v7633 = vpack.i.b16 %v7632, %v7631
      %7634 = vxpose.xlu0.c.b16.start [1/8] %v7564, 128
      %7635 = vxpose.xlu0.c.b16.cont [2/8] 0, 128
      %7636 = vxpose.xlu0.c.b16.cont [3/8] 0, 128
      %7637 = vxpose.xlu0.c.b16.cont [4/8] 0, 128
      %7638 = vxpose.xlu0.c.b16.cont [5/8] 0, 128
      %7639 = vxpose.xlu0.c.b16.cont [6/8] 0, 128
      %7640 = vxpose.xlu0.c.b16.cont [7/8] 0, 128
      %7641 = vxpose.xlu0.c.b16.end [8/8] 0, 128
      %v7642 = vpop.trf.xlu0
      %v7643 = vpop.trf.xlu0
      %v7644 = vpop.trf.xlu0
      %v7645 = vpop.trf.xlu0
      %v7646 = vpop.trf.xlu0
      %v7647 = vpop.trf.xlu0
      %v7648 = vpop.trf.xlu0
      %v7649 = vpop.trf.xlu0
      %7650 = vxpose.xlu0.c.b16.start [1/8] %v7565, 128
      %7651 = vxpose.xlu0.c.b16.cont [2/8] 0, 128
      %7652 = vxpose.xlu0.c.b16.cont [3/8] 0, 128
      %7653 = vxpose.xlu0.c.b16.cont [4/8] 0, 128
      %7654 = vxpose.xlu0.c.b16.cont [5/8] 0, 128
      %7655 = vxpose.xlu0.c.b16.cont [6/8] 0, 128
      %7656 = vxpose.xlu0.c.b16.cont [7/8] 0, 128
      %7657 = vxpose.xlu0.c.b16.end [8/8] 0, 128
      %v7658 = vpop.trf.xlu0
      %v7659 = vpop.trf.xlu0
      %v7660 = vpop.trf.xlu0
      %v7661 = vpop.trf.xlu0
      %v7662 = vpop.trf.xlu0
      %v7663 = vpop.trf.xlu0
      %v7664 = vpop.trf.xlu0
      %v7665 = vpop.trf.xlu0
      %7666 = vxpose.xlu0.c.b16.start [1/8] %v7566, 128
      %7667 = vxpose.xlu0.c.b16.cont [2/8] 0, 128
      %7668 = vxpose.xlu0.c.b16.cont [3/8] 0, 128
      %7669 = vxpose.xlu0.c.b16.cont [4/8] 0, 128
      %7670 = vxpose.xlu0.c.b16.cont [5/8] 0, 128
      %7671 = vxpose.xlu0.c.b16.cont [6/8] 0, 128
      %7672 = vxpose.xlu0.c.b16.cont [7/8] 0, 128
      %7673 = vxpose.xlu0.c.b16.end [8/8] 0, 128
      %v7674 = vpop.trf.xlu0
      %v7675 = vpop.trf.xlu0
      %v7676 = vpop.trf.xlu0
      %v7677 = vpop.trf.xlu0
      %v7678 = vpop.trf.xlu0
      %v7679 = vpop.trf.xlu0
      %v7680 = vpop.trf.xlu0
      %v7681 = vpop.trf.xlu0
      %7682 = vxpose.xlu0.c.b16.start [1/8] %v7567, 128
      %7683 = vxpose.xlu0.c.b16.cont [2/8] 0, 128
      %7684 = vxpose.xlu0.c.b16.cont [3/8] 0, 128
      %7685 = vxpose.xlu0.c.b16.cont [4/8] 0, 128
      %7686 = vxpose.xlu0.c.b16.cont [5/8] 0, 128
      %7687 = vxpose.xlu0.c.b16.cont [6/8] 0, 128
      %7688 = vxpose.xlu0.c.b16.cont [7/8] 0, 128
      %7689 = vxpose.xlu0.c.b16.end [8/8] 0, 128
      %v7690 = vpop.trf.xlu0
      %v7691 = vpop.trf.xlu0
      %v7692 = vpop.trf.xlu0
      %v7693 = vpop.trf.xlu0
      %v7694 = vpop.trf.xlu0
      %v7695 = vpop.trf.xlu0
      %v7696 = vpop.trf.xlu0
      %v7697 = vpop.trf.xlu0
      %7698 = vxpose.xlu0.c.b16.start [1/8] %v7568, 128
      %7699 = vxpose.xlu0.c.b16.cont [2/8] 0, 128
      %7700 = vxpose.xlu0.c.b16.cont [3/8] 0, 128
      %7701 = vxpose.xlu0.c.b16.cont [4/8] 0, 128
      %7702 = vxpose.xlu0.c.b16.cont [5/8] 0, 128
      %7703 = vxpose.xlu0.c.b16.cont [6/8] 0, 128
      %7704 = vxpose.xlu0.c.b16.cont [7/8] 0, 128
      %7705 = vxpose.xlu0.c.b16.end [8/8] 0, 128
      %v7706 = vpop.trf.xlu0
      %v7707 = vpop.trf.xlu0
      %v7708 = vpop.trf.xlu0
      %v7709 = vpop.trf.xlu0
      %v7710 = vpop.trf.xlu0
      %v7711 = vpop.trf.xlu0
      %v7712 = vpop.trf.xlu0
      %v7713 = vpop.trf.xlu0
      %7714 = vxpose.xlu0.c.b16.start [1/8] %v7569, 128
      %7715 = vxpose.xlu0.c.b16.cont [2/8] 0, 128
      %7716 = vxpose.xlu0.c.b16.cont [3/8] 0, 128
      %7717 = vxpose.xlu0.c.b16.cont [4/8] 0, 128
      %7718 = vxpose.xlu0.c.b16.cont [5/8] 0, 128
      %7719 = vxpose.xlu0.c.b16.cont [6/8] 0, 128
      %7720 = vxpose.xlu0.c.b16.cont [7/8] 0, 128
      %7721 = vxpose.xlu0.c.b16.end [8/8] 0, 128
      %v7722 = vpop.trf.xlu0
      %v7723 = vpop.trf.xlu0
      %v7724 = vpop.trf.xlu0
      %v7725 = vpop.trf.xlu0
      %v7726 = vpop.trf.xlu0
      %v7727 = vpop.trf.xlu0
      %v7728 = vpop.trf.xlu0
      %v7729 = vpop.trf.xlu0
      %7730 = vxpose.xlu0.c.b16.start [1/8] %v7570, 128
      %7731 = vxpose.xlu0.c.b16.cont [2/8] 0, 128
      %7732 = vxpose.xlu0.c.b16.cont [3/8] 0, 128
      %7733 = vxpose.xlu0.c.b16.cont [4/8] 0, 128
      %7734 = vxpose.xlu0.c.b16.cont [5/8] 0, 128
      %7735 = vxpose.xlu0.c.b16.cont [6/8] 0, 128
      %7736 = vxpose.xlu0.c.b16.cont [7/8] 0, 128
      %7737 = vxpose.xlu0.c.b16.end [8/8] 0, 128
      %v7738 = vpop.trf.xlu0
      %v7739 = vpop.trf.xlu0
      %v7740 = vpop.trf.xlu0
      %v7741 = vpop.trf.xlu0
      %v7742 = vpop.trf.xlu0
      %v7743 = vpop.trf.xlu0
      %v7744 = vpop.trf.xlu0
      %v7745 = vpop.trf.xlu0
      %7746 = vxpose.xlu0.c.b16.start [1/8] %v7571, 128
      %7747 = vxpose.xlu0.c.b16.cont [2/8] 0, 128
      %7748 = vxpose.xlu0.c.b16.cont [3/8] 0, 128
      %7749 = vxpose.xlu0.c.b16.cont [4/8] 0, 128
      %7750 = vxpose.xlu0.c.b16.cont [5/8] 0, 128
      %7751 = vxpose.xlu0.c.b16.cont [6/8] 0, 128
      %7752 = vxpose.xlu0.c.b16.cont [7/8] 0, 128
      %7753 = vxpose.xlu0.c.b16.end [8/8] 0, 128
      %v7754 = vpop.trf.xlu0
      %v7755 = vpop.trf.xlu0
      %v7756 = vpop.trf.xlu0
      %v7757 = vpop.trf.xlu0
      %v7758 = vpop.trf.xlu0
      %v7759 = vpop.trf.xlu0
      %v7760 = vpop.trf.xlu0
      %v7761 = vpop.trf.xlu0
      %v7762 = vcombine.low %v7642, %v7706
      %v7764 = vunpack.c.l.s4 1983009808
      %v7765 = vunpack.c.0.s8 %v7764
      %v7766 = vlaneseq
      %v7767 = vshrl.u32 %v7766, 7
      %v7768 = vsub.s32 %v7765, %v7767
      %v7769 = vrot.slane %v7762, %v7768
      %v7770 = vcombine.low %v7674, %v7738
      %v7772 = vunpack.c.l.s4 1983009808
      %v7773 = vunpack.c.0.s8 %v7772
      %v7774 = vlaneseq
      %v7775 = vshrl.u32 %v7774, 7
      %v7776 = vsub.s32 %v7773, %v7775
      %v7777 = vrot.slane %v7770, %v7776
      %v7778 = vcombine.low %v7769, %v7777
      %v7779 = vcombine.high %v7769, %v7777
      %v7781 = vunpack.c.l.s4 1934713408
      %v7782 = vunpack.c.0.s8 %v7781
      %v7783 = vlaneseq
      %v7784 = vshrl.u32 %v7783, 7
      %v7785 = vsub.s32 %v7782, %v7784
      %v7786 = vrot.slane %v7778, %v7785
      %v7788 = vunpack.c.l.s4 1934713408
      %v7789 = vunpack.c.0.s8 %v7788
      %v7790 = vlaneseq
      %v7791 = vshrl.u32 %v7790, 7
      %v7792 = vsub.s32 %v7789, %v7791
      %v7793 = vrot.slane %v7779, %v7792
      %v7794 = vcombine.high %v7786, 0
      %v7795 = vcombine.high %v7793, 0
      %v7796 = vcombine.low %v7658, %v7722
      %v7798 = vunpack.c.l.s4 1983009808
      %v7799 = vunpack.c.0.s8 %v7798
      %v7800 = vlaneseq
      %v7801 = vshrl.u32 %v7800, 7
      %v7802 = vsub.s32 %v7799, %v7801
      %v7803 = vrot.slane %v7796, %v7802
      %v7804 = vcombine.low %v7690, %v7754
      %v7806 = vunpack.c.l.s4 1983009808
      %v7807 = vunpack.c.0.s8 %v7806
      %v7808 = vlaneseq
      %v7809 = vshrl.u32 %v7808, 7
      %v7810 = vsub.s32 %v7807, %v7809
      %v7811 = vrot.slane %v7804, %v7810
      %v7812 = vcombine.low %v7803, %v7811
      %v7813 = vcombine.high %v7803, %v7811
      %v7815 = vunpack.c.l.s4 1934713408
      %v7816 = vunpack.c.0.s8 %v7815
      %v7817 = vlaneseq
      %v7818 = vshrl.u32 %v7817, 7
      %v7819 = vsub.s32 %v7816, %v7818
      %v7820 = vrot.slane %v7812, %v7819
      %v7822 = vunpack.c.l.s4 1934713408
      %v7823 = vunpack.c.0.s8 %v7822
      %v7824 = vlaneseq
      %v7825 = vshrl.u32 %v7824, 7
      %v7826 = vsub.s32 %v7823, %v7825
      %v7827 = vrot.slane %v7813, %v7826
      %v7828 = vcombine.high %v7820, 0
      %v7829 = vcombine.high %v7827, 0
      %v7832 = vpack.i.b16 %v7820, %v7786
      %v7834 = vshrl.u32 %v7786, 16
      %v7835 = vshrl.u32 %v7820, 16
      %v7836 = vpack.i.b16 %v7835, %v7834
      %v7840 = vpack.i.b16 %v7828, %v7794
      %v7842 = vshrl.u32 %v7794, 16
      %v7843 = vshrl.u32 %v7828, 16
      %v7844 = vpack.i.b16 %v7843, %v7842
      %v7848 = vpack.i.b16 %v7827, %v7793
      %v7850 = vshrl.u32 %v7793, 16
      %v7851 = vshrl.u32 %v7827, 16
      %v7852 = vpack.i.b16 %v7851, %v7850
      %v7856 = vpack.i.b16 %v7829, %v7795
      %v7858 = vshrl.u32 %v7795, 16
      %v7859 = vshrl.u32 %v7829, 16
      %v7860 = vpack.i.b16 %v7859, %v7858
      %7862 = vxpose.xlu0.c.b16.start [1/8] %v7832, 128
      %7863 = vxpose.xlu0.c.b16.cont [2/8] 0, 128
      %7864 = vxpose.xlu0.c.b16.cont [3/8] 0, 128
      %7865 = vxpose.xlu0.c.b16.cont [4/8] 0, 128
      %7866 = vxpose.xlu0.c.b16.cont [5/8] 0, 128
      %7867 = vxpose.xlu0.c.b16.cont [6/8] 0, 128
      %7868 = vxpose.xlu0.c.b16.cont [7/8] 0, 128
      %7869 = vxpose.xlu0.c.b16.end [8/8] 0, 128
      %v7870 = vpop.trf.xlu0
      %v7871 = vpop.trf.xlu0
      %v7872 = vpop.trf.xlu0
      %v7873 = vpop.trf.xlu0
      %v7874 = vpop.trf.xlu0
      %v7875 = vpop.trf.xlu0
      %v7876 = vpop.trf.xlu0
      %v7877 = vpop.trf.xlu0
      %7878 = vxpose.xlu0.c.b16.start [1/8] %v7836, 128
      %7879 = vxpose.xlu0.c.b16.cont [2/8] 0, 128
      %7880 = vxpose.xlu0.c.b16.cont [3/8] 0, 128
      %7881 = vxpose.xlu0.c.b16.cont [4/8] 0, 128
      %7882 = vxpose.xlu0.c.b16.cont [5/8] 0, 128
      %7883 = vxpose.xlu0.c.b16.cont [6/8] 0, 128
      %7884 = vxpose.xlu0.c.b16.cont [7/8] 0, 128
      %7885 = vxpose.xlu0.c.b16.end [8/8] 0, 128
      %v7886 = vpop.trf.xlu0
      %v7887 = vpop.trf.xlu0
      %v7888 = vpop.trf.xlu0
      %v7889 = vpop.trf.xlu0
      %v7890 = vpop.trf.xlu0
      %v7891 = vpop.trf.xlu0
      %v7892 = vpop.trf.xlu0
      %v7893 = vpop.trf.xlu0
      %7894 = vxpose.xlu0.c.b16.start [1/8] %v7840, 128
      %7895 = vxpose.xlu0.c.b16.cont [2/8] 0, 128
      %7896 = vxpose.xlu0.c.b16.cont [3/8] 0, 128
      %7897 = vxpose.xlu0.c.b16.cont [4/8] 0, 128
      %7898 = vxpose.xlu0.c.b16.cont [5/8] 0, 128
      %7899 = vxpose.xlu0.c.b16.cont [6/8] 0, 128
      %7900 = vxpose.xlu0.c.b16.cont [7/8] 0, 128
      %7901 = vxpose.xlu0.c.b16.end [8/8] 0, 128
      %v7902 = vpop.trf.xlu0
      %v7903 = vpop.trf.xlu0
      %v7904 = vpop.trf.xlu0
      %v7905 = vpop.trf.xlu0
      %v7906 = vpop.trf.xlu0
      %v7907 = vpop.trf.xlu0
      %v7908 = vpop.trf.xlu0
      %v7909 = vpop.trf.xlu0
      %7910 = vxpose.xlu0.c.b16.start [1/8] %v7844, 128
      %7911 = vxpose.xlu0.c.b16.cont [2/8] 0, 128
      %7912 = vxpose.xlu0.c.b16.cont [3/8] 0, 128
      %7913 = vxpose.xlu0.c.b16.cont [4/8] 0, 128
      %7914 = vxpose.xlu0.c.b16.cont [5/8] 0, 128
      %7915 = vxpose.xlu0.c.b16.cont [6/8] 0, 128
      %7916 = vxpose.xlu0.c.b16.cont [7/8] 0, 128
      %7917 = vxpose.xlu0.c.b16.end [8/8] 0, 128
      %v7918 = vpop.trf.xlu0
      %v7919 = vpop.trf.xlu0
      %v7920 = vpop.trf.xlu0
      %v7921 = vpop.trf.xlu0
      %v7922 = vpop.trf.xlu0
      %v7923 = vpop.trf.xlu0
      %v7924 = vpop.trf.xlu0
      %v7925 = vpop.trf.xlu0
      %7926 = vxpose.xlu0.c.b16.start [1/8] %v7848, 128
      %7927 = vxpose.xlu0.c.b16.cont [2/8] 0, 128
      %7928 = vxpose.xlu0.c.b16.cont [3/8] 0, 128
      %7929 = vxpose.xlu0.c.b16.cont [4/8] 0, 128
      %7930 = vxpose.xlu0.c.b16.cont [5/8] 0, 128
      %7931 = vxpose.xlu0.c.b16.cont [6/8] 0, 128
      %7932 = vxpose.xlu0.c.b16.cont [7/8] 0, 128
      %7933 = vxpose.xlu0.c.b16.end [8/8] 0, 128
      %v7934 = vpop.trf.xlu0
      %v7935 = vpop.trf.xlu0
      %v7936 = vpop.trf.xlu0
      %v7937 = vpop.trf.xlu0
      %v7938 = vpop.trf.xlu0
      %v7939 = vpop.trf.xlu0
      %v7940 = vpop.trf.xlu0
      %v7941 = vpop.trf.xlu0
      %7942 = vxpose.xlu0.c.b16.start [1/8] %v7852, 128
      %7943 = vxpose.xlu0.c.b16.cont [2/8] 0, 128
      %7944 = vxpose.xlu0.c.b16.cont [3/8] 0, 128
      %7945 = vxpose.xlu0.c.b16.cont [4/8] 0, 128
      %7946 = vxpose.xlu0.c.b16.cont [5/8] 0, 128
      %7947 = vxpose.xlu0.c.b16.cont [6/8] 0, 128
      %7948 = vxpose.xlu0.c.b16.cont [7/8] 0, 128
      %7949 = vxpose.xlu0.c.b16.end [8/8] 0, 128
      %v7950 = vpop.trf.xlu0
      %v7951 = vpop.trf.xlu0
      %v7952 = vpop.trf.xlu0
      %v7953 = vpop.trf.xlu0
      %v7954 = vpop.trf.xlu0
      %v7955 = vpop.trf.xlu0
      %v7956 = vpop.trf.xlu0
      %v7957 = vpop.trf.xlu0
      %7958 = vxpose.xlu0.c.b16.start [1/8] %v7856, 128
      %7959 = vxpose.xlu0.c.b16.cont [2/8] 0, 128
      %7960 = vxpose.xlu0.c.b16.cont [3/8] 0, 128
      %7961 = vxpose.xlu0.c.b16.cont [4/8] 0, 128
      %7962 = vxpose.xlu0.c.b16.cont [5/8] 0, 128
      %7963 = vxpose.xlu0.c.b16.cont [6/8] 0, 128
      %7964 = vxpose.xlu0.c.b16.cont [7/8] 0, 128
      %7965 = vxpose.xlu0.c.b16.end [8/8] 0, 128
      %v7966 = vpop.trf.xlu0
      %v7967 = vpop.trf.xlu0
      %v7968 = vpop.trf.xlu0
      %v7969 = vpop.trf.xlu0
      %v7970 = vpop.trf.xlu0
      %v7971 = vpop.trf.xlu0
      %v7972 = vpop.trf.xlu0
      %v7973 = vpop.trf.xlu0
      %7974 = vxpose.xlu0.c.b16.start [1/8] %v7860, 128
      %7975 = vxpose.xlu0.c.b16.cont [2/8] 0, 128
      %7976 = vxpose.xlu0.c.b16.cont [3/8] 0, 128
      %7977 = vxpose.xlu0.c.b16.cont [4/8] 0, 128
      %7978 = vxpose.xlu0.c.b16.cont [5/8] 0, 128
      %7979 = vxpose.xlu0.c.b16.cont [6/8] 0, 128
      %7980 = vxpose.xlu0.c.b16.cont [7/8] 0, 128
      %7981 = vxpose.xlu0.c.b16.end [8/8] 0, 128
      %v7982 = vpop.trf.xlu0
      %v7983 = vpop.trf.xlu0
      %v7984 = vpop.trf.xlu0
      %v7985 = vpop.trf.xlu0
      %v7986 = vpop.trf.xlu0
      %v7987 = vpop.trf.xlu0
      %v7988 = vpop.trf.xlu0
      %v7989 = vpop.trf.xlu0
      %v7990 = vcombine.low %v7870, %v7934
      %v7992 = vunpack.c.l.s4 1983009808
      %v7993 = vunpack.c.0.s8 %v7992
      %v7994 = vlaneseq
      %v7995 = vshrl.u32 %v7994, 7
      %v7996 = vsub.s32 %v7993, %v7995
      %v7997 = vrot.slane %v7990, %v7996
      %v7998 = vcombine.low %v7902, %v7966
      %v8000 = vunpack.c.l.s4 1983009808
      %v8001 = vunpack.c.0.s8 %v8000
      %v8002 = vlaneseq
      %v8003 = vshrl.u32 %v8002, 7
      %v8004 = vsub.s32 %v8001, %v8003
      %v8005 = vrot.slane %v7998, %v8004
      %v8006 = vcombine.low %v7997, %v8005
      %v8008 = vunpack.c.l.s4 1934713408
      %v8009 = vunpack.c.0.s8 %v8008
      %v8010 = vlaneseq
      %v8011 = vshrl.u32 %v8010, 7
      %v8012 = vsub.s32 %v8009, %v8011
      %v8013 = vrot.slane %v8006, %v8012
      %v8014 = vcombine.high %v8013, 0
      %v8015 = vcombine.low %v7886, %v7950
      %v8017 = vunpack.c.l.s4 1983009808
      %v8018 = vunpack.c.0.s8 %v8017
      %v8019 = vlaneseq
      %v8020 = vshrl.u32 %v8019, 7
      %v8021 = vsub.s32 %v8018, %v8020
      %v8022 = vrot.slane %v8015, %v8021
      %v8023 = vcombine.low %v7918, %v7982
      %v8025 = vunpack.c.l.s4 1983009808
      %v8026 = vunpack.c.0.s8 %v8025
      %v8027 = vlaneseq
      %v8028 = vshrl.u32 %v8027, 7
      %v8029 = vsub.s32 %v8026, %v8028
      %v8030 = vrot.slane %v8023, %v8029
      %v8031 = vcombine.low %v8022, %v8030
      %v8033 = vunpack.c.l.s4 1934713408
      %v8034 = vunpack.c.0.s8 %v8033
      %v8035 = vlaneseq
      %v8036 = vshrl.u32 %v8035, 7
      %v8037 = vsub.s32 %v8034, %v8036
      %v8038 = vrot.slane %v8031, %v8037
      %v8039 = vcombine.high %v8038, 0
      %v8042 = vpack.i.b16 %v8038, %v8013
      %v8043 = vshrl.u32 %v8013, 16
      %v8044 = vshrl.u32 %v8038, 16
      %v8045 = vpack.i.b16 %v8044, %v8043
      %v8048 = vpack.i.b16 %v8039, %v8014
      %v8049 = vshrl.u32 %v8014, 16
      %v8050 = vshrl.u32 %v8039, 16
      %v8051 = vpack.i.b16 %v8050, %v8049
      %v8053 = vsel %vm1302, %v7624, 0
      %v8056 = vsel %vm1306, %v8042, 0
      %8058 = vmatprep.subr.bf16.mxu0 0
      %8059 = vmatpush1.bf16.msra.mxu0 0
      %8060 = vmatprep.subr.bf16.mxu0 0
      %8061 = vmatpush1.bf16.msra.mxu0 0
      %8062 = vmatprep.subr.bf16.mxu0 0
      %8063 = vmatpush1.bf16.msra.mxu0 0
      %8064 = vmatprep.subr.bf16.mxu0 0
      %8065 = vmatpush1.bf16.msra.mxu0 0
      %8066 = vmatprep.subr.bf16.mxu0 0
      %8067 = vmatpush1.bf16.msra.mxu0 0
      %8068 = vmatprep.subr.bf16.mxu0 0
      %8069 = vmatpush1.bf16.msra.mxu0 0
      %8070 = vmatprep.subr.bf16.mxu0 0
      %8071 = vmatpush1.bf16.msra.mxu0 0
      %8072 = vmatprep.subr.bf16.mxu0 0
      %8073 = vmatpush1.bf16.msra.mxu0 %v8056
      %8074 = vmatprep.subr.bf16.mxu0 0
      %8075 = vmatpush2.bf16.msra.mxu0 0
      %8076 = vmatprep.subr.bf16.mxu0 0
      %8077 = vmatpush2.bf16.msra.mxu0 0
      %8078 = vmatprep.subr.bf16.mxu0 0
      %8079 = vmatpush2.bf16.msra.mxu0 0
      %8080 = vmatprep.subr.bf16.mxu0 0
      %8081 = vmatpush2.bf16.msra.mxu0 0
      %8082 = vmatprep.subr.bf16.mxu0 0
      %8083 = vmatpush2.bf16.msra.mxu0 0
      %8084 = vmatprep.subr.bf16.mxu0 0
      %8085 = vmatpush2.bf16.msra.mxu0 0
      %8086 = vmatprep.subr.bf16.mxu0 0
      %8087 = vmatpush2.bf16.msra.mxu0 0
      %8088 = vmatprep.subr.bf16.mxu0 0
      %8089 = vmatpush2.bf16.msra.mxu0 0
      %8090 = vmatprep.mubr.bf16.mxu0 0
      %8091 = vmatmul.mubr.bf16.gmra.mxu0 %v8053
      %v8092 = vpop.f32.mrf.mxu0
      %v8093 = vadd.f32 %v430, %v8092
      %v8094 = vpop.f32.mrf.mxu0
      %v8095 = vpop.f32.mrf.mxu0
      %v8096 = vpop.f32.mrf.mxu0
      %8097 = vdwg.mxu0
      %v8099 = vsel %vm1302, %v7627, 0
      %v8102 = vsel %vm1306, %v8045, 0
      %8104 = vmatprep.subr.bf16.mxu0 0
      %8105 = vmatpush1.bf16.msra.mxu0 0
      %8106 = vmatprep.subr.bf16.mxu0 0
      %8107 = vmatpush1.bf16.msra.mxu0 0
      %8108 = vmatprep.subr.bf16.mxu0 0
      %8109 = vmatpush1.bf16.msra.mxu0 0
      %8110 = vmatprep.subr.bf16.mxu0 0
      %8111 = vmatpush1.bf16.msra.mxu0 0
      %8112 = vmatprep.subr.bf16.mxu0 0
      %8113 = vmatpush1.bf16.msra.mxu0 0
      %8114 = vmatprep.subr.bf16.mxu0 0
      %8115 = vmatpush1.bf16.msra.mxu0 0
      %8116 = vmatprep.subr.bf16.mxu0 0
      %8117 = vmatpush1.bf16.msra.mxu0 0
      %8118 = vmatprep.subr.bf16.mxu0 0
      %8119 = vmatpush1.bf16.msra.mxu0 %v8102
      %8120 = vmatprep.subr.bf16.mxu0 0
      %8121 = vmatpush2.bf16.msra.mxu0 0
      %8122 = vmatprep.subr.bf16.mxu0 0
      %8123 = vmatpush2.bf16.msra.mxu0 0
      %8124 = vmatprep.subr.bf16.mxu0 0
      %8125 = vmatpush2.bf16.msra.mxu0 0
      %8126 = vmatprep.subr.bf16.mxu0 0
      %8127 = vmatpush2.bf16.msra.mxu0 0
      %8128 = vmatprep.subr.bf16.mxu0 0
      %8129 = vmatpush2.bf16.msra.mxu0 0
      %8130 = vmatprep.subr.bf16.mxu0 0
      %8131 = vmatpush2.bf16.msra.mxu0 0
      %8132 = vmatprep.subr.bf16.mxu0 0
      %8133 = vmatpush2.bf16.msra.mxu0 0
      %8134 = vmatprep.subr.bf16.mxu0 0
      %8135 = vmatpush2.bf16.msra.mxu0 0
      %8136 = vmatprep.mubr.bf16.mxu0 0
      %8137 = vmatmul.mubr.bf16.gmra.mxu0 %v8099
      %v8138 = vpop.f32.mrf.mxu0
      %v8139 = vadd.f32 %v430, %v8138
      %v8140 = vpop.f32.mrf.mxu0
      %v8141 = vpop.f32.mrf.mxu0
      %v8142 = vpop.f32.mrf.mxu0
      %8143 = vdwg.mxu0
      %v8145 = vsel %vm1302, %v7630, 0
      %v8148 = vsel %vm1306, %v8048, 0
      %8150 = vmatprep.subr.bf16.mxu0 0
      %8151 = vmatpush1.bf16.msra.mxu0 0
      %8152 = vmatprep.subr.bf16.mxu0 0
      %8153 = vmatpush1.bf16.msra.mxu0 0
      %8154 = vmatprep.subr.bf16.mxu0 0
      %8155 = vmatpush1.bf16.msra.mxu0 0
      %8156 = vmatprep.subr.bf16.mxu0 0
      %8157 = vmatpush1.bf16.msra.mxu0 0
      %8158 = vmatprep.subr.bf16.mxu0 0
      %8159 = vmatpush1.bf16.msra.mxu0 0
      %8160 = vmatprep.subr.bf16.mxu0 0
      %8161 = vmatpush1.bf16.msra.mxu0 0
      %8162 = vmatprep.subr.bf16.mxu0 0
      %8163 = vmatpush1.bf16.msra.mxu0 0
      %8164 = vmatprep.subr.bf16.mxu0 0
      %8165 = vmatpush1.bf16.msra.mxu0 %v8148
      %8166 = vmatprep.subr.bf16.mxu0 0
      %8167 = vmatpush2.bf16.msra.mxu0 0
      %8168 = vmatprep.subr.bf16.mxu0 0
      %8169 = vmatpush2.bf16.msra.mxu0 0
      %8170 = vmatprep.subr.bf16.mxu0 0
      %8171 = vmatpush2.bf16.msra.mxu0 0
      %8172 = vmatprep.subr.bf16.mxu0 0
      %8173 = vmatpush2.bf16.msra.mxu0 0
      %8174 = vmatprep.subr.bf16.mxu0 0
      %8175 = vmatpush2.bf16.msra.mxu0 0
      %8176 = vmatprep.subr.bf16.mxu0 0
      %8177 = vmatpush2.bf16.msra.mxu0 0
      %8178 = vmatprep.subr.bf16.mxu0 0
      %8179 = vmatpush2.bf16.msra.mxu0 0
      %8180 = vmatprep.subr.bf16.mxu0 0
      %8181 = vmatpush2.bf16.msra.mxu0 0
      %8182 = vmatprep.mubr.bf16.mxu0 0
      %8183 = vmatmul.mubr.bf16.gmra.mxu0 %v8145
      %v8184 = vpop.f32.mrf.mxu0
      %v8185 = vadd.f32 %v430, %v8184
      %v8186 = vpop.f32.mrf.mxu0
      %v8187 = vpop.f32.mrf.mxu0
      %v8188 = vpop.f32.mrf.mxu0
      %8189 = vdwg.mxu0
      %v8191 = vsel %vm1302, %v7633, 0
      %v8194 = vsel %vm1306, %v8051, 0
      %8196 = vmatprep.subr.bf16.mxu0 0
      %8197 = vmatpush1.bf16.msra.mxu0 0
      %8198 = vmatprep.subr.bf16.mxu0 0
      %8199 = vmatpush1.bf16.msra.mxu0 0
      %8200 = vmatprep.subr.bf16.mxu0 0
      %8201 = vmatpush1.bf16.msra.mxu0 0
      %8202 = vmatprep.subr.bf16.mxu0 0
      %8203 = vmatpush1.bf16.msra.mxu0 0
      %8204 = vmatprep.subr.bf16.mxu0 0
      %8205 = vmatpush1.bf16.msra.mxu0 0
      %8206 = vmatprep.subr.bf16.mxu0 0
      %8207 = vmatpush1.bf16.msra.mxu0 0
      %8208 = vmatprep.subr.bf16.mxu0 0
      %8209 = vmatpush1.bf16.msra.mxu0 0
      %8210 = vmatprep.subr.bf16.mxu0 0
      %8211 = vmatpush1.bf16.msra.mxu0 %v8194
      %8212 = vmatprep.subr.bf16.mxu0 0
      %8213 = vmatpush2.bf16.msra.mxu0 0
      %8214 = vmatprep.subr.bf16.mxu0 0
      %8215 = vmatpush2.bf16.msra.mxu0 0
      %8216 = vmatprep.subr.bf16.mxu0 0
      %8217 = vmatpush2.bf16.msra.mxu0 0
      %8218 = vmatprep.subr.bf16.mxu0 0
      %8219 = vmatpush2.bf16.msra.mxu0 0
      %8220 = vmatprep.subr.bf16.mxu0 0
      %8221 = vmatpush2.bf16.msra.mxu0 0
      %8222 = vmatprep.subr.bf16.mxu0 0
      %8223 = vmatpush2.bf16.msra.mxu0 0
      %8224 = vmatprep.subr.bf16.mxu0 0
      %8225 = vmatpush2.bf16.msra.mxu0 0
      %8226 = vmatprep.subr.bf16.mxu0 0
      %8227 = vmatpush2.bf16.msra.mxu0 0
      %8228 = vmatprep.mubr.bf16.mxu0 0
      %8229 = vmatmul.mubr.bf16.gmra.mxu0 %v8191
      %v8230 = vpop.f32.mrf.mxu0
      %v8231 = vadd.f32 %v430, %v8230
      %v8232 = vpop.f32.mrf.mxu0
      %v8233 = vpop.f32.mrf.mxu0
      %v8234 = vpop.f32.mrf.mxu0
      %8235 = vdwg.mxu0
      %v8236 = vsel %vm1302, %v8093, -inf
      %8237 = vmax.xlane.f32.xlu0 %v8236
      %v8238 = vpop.xlane.xlu0 %8237
      %v8239 = vsel %vm1302, %v8139, -inf
      %8240 = vmax.xlane.f32.xlu0 %v8239
      %v8241 = vpop.xlane.xlu0 %8240
      %v8242 = vsel %vm1302, %v8185, -inf
      %8243 = vmax.xlane.f32.xlu0 %v8242
      %v8244 = vpop.xlane.xlu0 %8243
      %v8245 = vsel %vm1302, %v8231, -inf
      %8246 = vmax.xlane.f32.xlu0 %v8245
      %v8247 = vpop.xlane.xlu0 %8246
      %v8248 = vsub.f32 %v8093, %v8238
      %v8249 = vsub.f32 %v8139, %v8241
      %v8250 = vsub.f32 %v8185, %v8244
      %v8251 = vsub.f32 %v8231, %v8247
      %v8252 = vmul.f32 %v8248, 1.442695
      %v8253 = vpow.pop %v8252
      %v8254 = vmul.f32 %v8249, 1.442695
      %v8255 = vpow.pop %v8254
      %v8256 = vmul.f32 %v8250, 1.442695
      %v8257 = vpow.pop %v8256
      %v8258 = vmul.f32 %v8251, 1.442695
      %v8259 = vpow.pop %v8258
      %v8260 = vsel %vm1302, %v8253, 0.0
      %8261 = vadd.xlane.f32.xlu0 %v8260
      %v8262 = vpop.xlane.xlu0 %8261
      %v8263 = vsel %vm1302, %v8255, 0.0
      %8264 = vadd.xlane.f32.xlu0 %v8263
      %v8265 = vpop.xlane.xlu0 %8264
      %v8266 = vsel %vm1302, %v8257, 0.0
      %8267 = vadd.xlane.f32.xlu0 %v8266
      %v8268 = vpop.xlane.xlu0 %8267
      %v8269 = vsel %vm1302, %v8259, 0.0
      %8270 = vadd.xlane.f32.xlu0 %v8269
      %v8271 = vpop.xlane.xlu0 %8270
      %v8272 = vrcp.pop %v8262
      %v8273 = vmul.f32 %v8253, %v8272
      %v8274 = vrcp.pop %v8265
      %v8275 = vmul.f32 %v8255, %v8274
      %v8276 = vrcp.pop %v8268
      %v8277 = vmul.f32 %v8257, %v8276
      %v8278 = vrcp.pop %v8271
      %v8279 = vmul.f32 %v8259, %v8278
      %v8280 = vpack.c.bf16 %v8273, %v8273
      %v8281 = vpack.c.bf16 %v8275, %v8275
      %v8282 = vpack.c.bf16 %v8277, %v8277
      %v8283 = vpack.c.bf16 %v8279, %v8279
      %v8284 = vpack.c.bf16 %v7528, %v7528
      %v8285 = vpack.c.bf16 %v7552, %v7552
      %v8286 = vpack.c.bf16 %v7535, %v7535
      %v8287 = vpack.c.bf16 %v7553, %v7553
      %v8288 = vpack.c.bf16 %v7544, %v7544
      %v8289 = vpack.c.bf16 %v7554, %v7554
      %v8290 = vpack.c.bf16 %v7551, %v7551
      %v8291 = vpack.c.bf16 %v7555, %v7555
      %8292 = vxpose.xlu0.c.b16.start [1/8] %v8284, 128
      %8293 = vxpose.xlu0.c.b16.cont [2/8] 0, 128
      %8294 = vxpose.xlu0.c.b16.cont [3/8] 0, 128
      %8295 = vxpose.xlu0.c.b16.cont [4/8] 0, 128
      %8296 = vxpose.xlu0.c.b16.cont [5/8] 0, 128
      %8297 = vxpose.xlu0.c.b16.cont [6/8] 0, 128
      %8298 = vxpose.xlu0.c.b16.cont [7/8] 0, 128
      %8299 = vxpose.xlu0.c.b16.end [8/8] 0, 128
      %v8300 = vpop.trf.xlu0
      %v8301 = vpop.trf.xlu0
      %v8302 = vpop.trf.xlu0
      %v8303 = vpop.trf.xlu0
      %v8304 = vpop.trf.xlu0
      %v8305 = vpop.trf.xlu0
      %v8306 = vpop.trf.xlu0
      %v8307 = vpop.trf.xlu0
      %8308 = vxpose.xlu0.c.b16.start [1/8] %v8285, 128
      %8309 = vxpose.xlu0.c.b16.cont [2/8] 0, 128
      %8310 = vxpose.xlu0.c.b16.cont [3/8] 0, 128
      %8311 = vxpose.xlu0.c.b16.cont [4/8] 0, 128
      %8312 = vxpose.xlu0.c.b16.cont [5/8] 0, 128
      %8313 = vxpose.xlu0.c.b16.cont [6/8] 0, 128
      %8314 = vxpose.xlu0.c.b16.cont [7/8] 0, 128
      %8315 = vxpose.xlu0.c.b16.end [8/8] 0, 128
      %v8316 = vpop.trf.xlu0
      %v8317 = vpop.trf.xlu0
      %v8318 = vpop.trf.xlu0
      %v8319 = vpop.trf.xlu0
      %v8320 = vpop.trf.xlu0
      %v8321 = vpop.trf.xlu0
      %v8322 = vpop.trf.xlu0
      %v8323 = vpop.trf.xlu0
      %8324 = vxpose.xlu0.c.b16.start [1/8] %v8286, 128
      %8325 = vxpose.xlu0.c.b16.cont [2/8] 0, 128
      %8326 = vxpose.xlu0.c.b16.cont [3/8] 0, 128
      %8327 = vxpose.xlu0.c.b16.cont [4/8] 0, 128
      %8328 = vxpose.xlu0.c.b16.cont [5/8] 0, 128
      %8329 = vxpose.xlu0.c.b16.cont [6/8] 0, 128
      %8330 = vxpose.xlu0.c.b16.cont [7/8] 0, 128
      %8331 = vxpose.xlu0.c.b16.end [8/8] 0, 128
      %v8332 = vpop.trf.xlu0
      %v8333 = vpop.trf.xlu0
      %v8334 = vpop.trf.xlu0
      %v8335 = vpop.trf.xlu0
      %v8336 = vpop.trf.xlu0
      %v8337 = vpop.trf.xlu0
      %v8338 = vpop.trf.xlu0
      %v8339 = vpop.trf.xlu0
      %8340 = vxpose.xlu0.c.b16.start [1/8] %v8287, 128
      %8341 = vxpose.xlu0.c.b16.cont [2/8] 0, 128
      %8342 = vxpose.xlu0.c.b16.cont [3/8] 0, 128
      %8343 = vxpose.xlu0.c.b16.cont [4/8] 0, 128
      %8344 = vxpose.xlu0.c.b16.cont [5/8] 0, 128
      %8345 = vxpose.xlu0.c.b16.cont [6/8] 0, 128
      %8346 = vxpose.xlu0.c.b16.cont [7/8] 0, 128
      %8347 = vxpose.xlu0.c.b16.end [8/8] 0, 128
      %v8348 = vpop.trf.xlu0
      %v8349 = vpop.trf.xlu0
      %v8350 = vpop.trf.xlu0
      %v8351 = vpop.trf.xlu0
      %v8352 = vpop.trf.xlu0
      %v8353 = vpop.trf.xlu0
      %v8354 = vpop.trf.xlu0
      %v8355 = vpop.trf.xlu0
      %8356 = vxpose.xlu0.c.b16.start [1/8] %v8288, 128
      %8357 = vxpose.xlu0.c.b16.cont [2/8] 0, 128
      %8358 = vxpose.xlu0.c.b16.cont [3/8] 0, 128
      %8359 = vxpose.xlu0.c.b16.cont [4/8] 0, 128
      %8360 = vxpose.xlu0.c.b16.cont [5/8] 0, 128
      %8361 = vxpose.xlu0.c.b16.cont [6/8] 0, 128
      %8362 = vxpose.xlu0.c.b16.cont [7/8] 0, 128
      %8363 = vxpose.xlu0.c.b16.end [8/8] 0, 128
      %v8364 = vpop.trf.xlu0
      %v8365 = vpop.trf.xlu0
      %v8366 = vpop.trf.xlu0
      %v8367 = vpop.trf.xlu0
      %v8368 = vpop.trf.xlu0
      %v8369 = vpop.trf.xlu0
      %v8370 = vpop.trf.xlu0
      %v8371 = vpop.trf.xlu0
      %8372 = vxpose.xlu0.c.b16.start [1/8] %v8289, 128
      %8373 = vxpose.xlu0.c.b16.cont [2/8] 0, 128
      %8374 = vxpose.xlu0.c.b16.cont [3/8] 0, 128
      %8375 = vxpose.xlu0.c.b16.cont [4/8] 0, 128
      %8376 = vxpose.xlu0.c.b16.cont [5/8] 0, 128
      %8377 = vxpose.xlu0.c.b16.cont [6/8] 0, 128
      %8378 = vxpose.xlu0.c.b16.cont [7/8] 0, 128
      %8379 = vxpose.xlu0.c.b16.end [8/8] 0, 128
      %v8380 = vpop.trf.xlu0
      %v8381 = vpop.trf.xlu0
      %v8382 = vpop.trf.xlu0
      %v8383 = vpop.trf.xlu0
      %v8384 = vpop.trf.xlu0
      %v8385 = vpop.trf.xlu0
      %v8386 = vpop.trf.xlu0
      %v8387 = vpop.trf.xlu0
      %8388 = vxpose.xlu0.c.b16.start [1/8] %v8290, 128
      %8389 = vxpose.xlu0.c.b16.cont [2/8] 0, 128
      %8390 = vxpose.xlu0.c.b16.cont [3/8] 0, 128
      %8391 = vxpose.xlu0.c.b16.cont [4/8] 0, 128
      %8392 = vxpose.xlu0.c.b16.cont [5/8] 0, 128
      %8393 = vxpose.xlu0.c.b16.cont [6/8] 0, 128
      %8394 = vxpose.xlu0.c.b16.cont [7/8] 0, 128
      %8395 = vxpose.xlu0.c.b16.end [8/8] 0, 128
      %v8396 = vpop.trf.xlu0
      %v8397 = vpop.trf.xlu0
      %v8398 = vpop.trf.xlu0
      %v8399 = vpop.trf.xlu0
      %v8400 = vpop.trf.xlu0
      %v8401 = vpop.trf.xlu0
      %v8402 = vpop.trf.xlu0
      %v8403 = vpop.trf.xlu0
      %8404 = vxpose.xlu0.c.b16.start [1/8] %v8291, 128
      %8405 = vxpose.xlu0.c.b16.cont [2/8] 0, 128
      %8406 = vxpose.xlu0.c.b16.cont [3/8] 0, 128
      %8407 = vxpose.xlu0.c.b16.cont [4/8] 0, 128
      %8408 = vxpose.xlu0.c.b16.cont [5/8] 0, 128
      %8409 = vxpose.xlu0.c.b16.cont [6/8] 0, 128
      %8410 = vxpose.xlu0.c.b16.cont [7/8] 0, 128
      %8411 = vxpose.xlu0.c.b16.end [8/8] 0, 128
      %v8412 = vpop.trf.xlu0
      %v8413 = vpop.trf.xlu0
      %v8414 = vpop.trf.xlu0
      %v8415 = vpop.trf.xlu0
      %v8416 = vpop.trf.xlu0
      %v8417 = vpop.trf.xlu0
      %v8418 = vpop.trf.xlu0
      %v8419 = vpop.trf.xlu0
      %v8420 = vcombine.low %v8300, %v8364
      %v8422 = vunpack.c.l.s4 1983009808
      %v8423 = vunpack.c.0.s8 %v8422
      %v8424 = vlaneseq
      %v8425 = vshrl.u32 %v8424, 7
      %v8426 = vsub.s32 %v8423, %v8425
      %v8427 = vrot.slane %v8420, %v8426
      %v8428 = vcombine.low %v8332, %v8396
      %v8430 = vunpack.c.l.s4 1983009808
      %v8431 = vunpack.c.0.s8 %v8430
      %v8432 = vlaneseq
      %v8433 = vshrl.u32 %v8432, 7
      %v8434 = vsub.s32 %v8431, %v8433
      %v8435 = vrot.slane %v8428, %v8434
      %v8436 = vcombine.low %v8427, %v8435
      %v8437 = vcombine.high %v8427, %v8435
      %v8439 = vunpack.c.l.s4 1934713408
      %v8440 = vunpack.c.0.s8 %v8439
      %v8441 = vlaneseq
      %v8442 = vshrl.u32 %v8441, 7
      %v8443 = vsub.s32 %v8440, %v8442
      %v8444 = vrot.slane %v8436, %v8443
      %v8446 = vunpack.c.l.s4 1934713408
      %v8447 = vunpack.c.0.s8 %v8446
      %v8448 = vlaneseq
      %v8449 = vshrl.u32 %v8448, 7
      %v8450 = vsub.s32 %v8447, %v8449
      %v8451 = vrot.slane %v8437, %v8450
      %v8452 = vcombine.high %v8444, 0
      %v8453 = vcombine.high %v8451, 0
      %v8454 = vcombine.low %v8316, %v8380
      %v8456 = vunpack.c.l.s4 1983009808
      %v8457 = vunpack.c.0.s8 %v8456
      %v8458 = vlaneseq
      %v8459 = vshrl.u32 %v8458, 7
      %v8460 = vsub.s32 %v8457, %v8459
      %v8461 = vrot.slane %v8454, %v8460
      %v8462 = vcombine.low %v8348, %v8412
      %v8464 = vunpack.c.l.s4 1983009808
      %v8465 = vunpack.c.0.s8 %v8464
      %v8466 = vlaneseq
      %v8467 = vshrl.u32 %v8466, 7
      %v8468 = vsub.s32 %v8465, %v8467
      %v8469 = vrot.slane %v8462, %v8468
      %v8470 = vcombine.low %v8461, %v8469
      %v8471 = vcombine.high %v8461, %v8469
      %v8473 = vunpack.c.l.s4 1934713408
      %v8474 = vunpack.c.0.s8 %v8473
      %v8475 = vlaneseq
      %v8476 = vshrl.u32 %v8475, 7
      %v8477 = vsub.s32 %v8474, %v8476
      %v8478 = vrot.slane %v8470, %v8477
      %v8480 = vunpack.c.l.s4 1934713408
      %v8481 = vunpack.c.0.s8 %v8480
      %v8482 = vlaneseq
      %v8483 = vshrl.u32 %v8482, 7
      %v8484 = vsub.s32 %v8481, %v8483
      %v8485 = vrot.slane %v8471, %v8484
      %v8486 = vcombine.high %v8478, 0
      %v8487 = vcombine.high %v8485, 0
      %v8490 = vpack.i.b16 %v8478, %v8444
      %v8492 = vshrl.u32 %v8444, 16
      %v8493 = vshrl.u32 %v8478, 16
      %v8494 = vpack.i.b16 %v8493, %v8492
      %v8498 = vpack.i.b16 %v8486, %v8452
      %v8500 = vshrl.u32 %v8452, 16
      %v8501 = vshrl.u32 %v8486, 16
      %v8502 = vpack.i.b16 %v8501, %v8500
      %v8506 = vpack.i.b16 %v8485, %v8451
      %v8508 = vshrl.u32 %v8451, 16
      %v8509 = vshrl.u32 %v8485, 16
      %v8510 = vpack.i.b16 %v8509, %v8508
      %v8514 = vpack.i.b16 %v8487, %v8453
      %v8516 = vshrl.u32 %v8453, 16
      %v8517 = vshrl.u32 %v8487, 16
      %v8518 = vpack.i.b16 %v8517, %v8516
      %8520 = vxpose.xlu0.c.b16.start [1/8] %v8490, 128
      %8521 = vxpose.xlu0.c.b16.cont [2/8] 0, 128
      %8522 = vxpose.xlu0.c.b16.cont [3/8] 0, 128
      %8523 = vxpose.xlu0.c.b16.cont [4/8] 0, 128
      %8524 = vxpose.xlu0.c.b16.cont [5/8] 0, 128
      %8525 = vxpose.xlu0.c.b16.cont [6/8] 0, 128
      %8526 = vxpose.xlu0.c.b16.cont [7/8] 0, 128
      %8527 = vxpose.xlu0.c.b16.end [8/8] 0, 128
      %v8528 = vpop.trf.xlu0
      %v8529 = vpop.trf.xlu0
      %v8530 = vpop.trf.xlu0
      %v8531 = vpop.trf.xlu0
      %v8532 = vpop.trf.xlu0
      %v8533 = vpop.trf.xlu0
      %v8534 = vpop.trf.xlu0
      %v8535 = vpop.trf.xlu0
      %8536 = vxpose.xlu0.c.b16.start [1/8] %v8494, 128
      %8537 = vxpose.xlu0.c.b16.cont [2/8] 0, 128
      %8538 = vxpose.xlu0.c.b16.cont [3/8] 0, 128
      %8539 = vxpose.xlu0.c.b16.cont [4/8] 0, 128
      %8540 = vxpose.xlu0.c.b16.cont [5/8] 0, 128
      %8541 = vxpose.xlu0.c.b16.cont [6/8] 0, 128
      %8542 = vxpose.xlu0.c.b16.cont [7/8] 0, 128
      %8543 = vxpose.xlu0.c.b16.end [8/8] 0, 128
      %v8544 = vpop.trf.xlu0
      %v8545 = vpop.trf.xlu0
      %v8546 = vpop.trf.xlu0
      %v8547 = vpop.trf.xlu0
      %v8548 = vpop.trf.xlu0
      %v8549 = vpop.trf.xlu0
      %v8550 = vpop.trf.xlu0
      %v8551 = vpop.trf.xlu0
      %8552 = vxpose.xlu0.c.b16.start [1/8] %v8498, 128
      %8553 = vxpose.xlu0.c.b16.cont [2/8] 0, 128
      %8554 = vxpose.xlu0.c.b16.cont [3/8] 0, 128
      %8555 = vxpose.xlu0.c.b16.cont [4/8] 0, 128
      %8556 = vxpose.xlu0.c.b16.cont [5/8] 0, 128
      %8557 = vxpose.xlu0.c.b16.cont [6/8] 0, 128
      %8558 = vxpose.xlu0.c.b16.cont [7/8] 0, 128
      %8559 = vxpose.xlu0.c.b16.end [8/8] 0, 128
      %v8560 = vpop.trf.xlu0
      %v8561 = vpop.trf.xlu0
      %v8562 = vpop.trf.xlu0
      %v8563 = vpop.trf.xlu0
      %v8564 = vpop.trf.xlu0
      %v8565 = vpop.trf.xlu0
      %v8566 = vpop.trf.xlu0
      %v8567 = vpop.trf.xlu0
      %8568 = vxpose.xlu0.c.b16.start [1/8] %v8502, 128
      %8569 = vxpose.xlu0.c.b16.cont [2/8] 0, 128
      %8570 = vxpose.xlu0.c.b16.cont [3/8] 0, 128
      %8571 = vxpose.xlu0.c.b16.cont [4/8] 0, 128
      %8572 = vxpose.xlu0.c.b16.cont [5/8] 0, 128
      %8573 = vxpose.xlu0.c.b16.cont [6/8] 0, 128
      %8574 = vxpose.xlu0.c.b16.cont [7/8] 0, 128
      %8575 = vxpose.xlu0.c.b16.end [8/8] 0, 128
      %v8576 = vpop.trf.xlu0
      %v8577 = vpop.trf.xlu0
      %v8578 = vpop.trf.xlu0
      %v8579 = vpop.trf.xlu0
      %v8580 = vpop.trf.xlu0
      %v8581 = vpop.trf.xlu0
      %v8582 = vpop.trf.xlu0
      %v8583 = vpop.trf.xlu0
      %8584 = vxpose.xlu0.c.b16.start [1/8] %v8506, 128
      %8585 = vxpose.xlu0.c.b16.cont [2/8] 0, 128
      %8586 = vxpose.xlu0.c.b16.cont [3/8] 0, 128
      %8587 = vxpose.xlu0.c.b16.cont [4/8] 0, 128
      %8588 = vxpose.xlu0.c.b16.cont [5/8] 0, 128
      %8589 = vxpose.xlu0.c.b16.cont [6/8] 0, 128
      %8590 = vxpose.xlu0.c.b16.cont [7/8] 0, 128
      %8591 = vxpose.xlu0.c.b16.end [8/8] 0, 128
      %v8592 = vpop.trf.xlu0
      %v8593 = vpop.trf.xlu0
      %v8594 = vpop.trf.xlu0
      %v8595 = vpop.trf.xlu0
      %v8596 = vpop.trf.xlu0
      %v8597 = vpop.trf.xlu0
      %v8598 = vpop.trf.xlu0
      %v8599 = vpop.trf.xlu0
      %8600 = vxpose.xlu0.c.b16.start [1/8] %v8510, 128
      %8601 = vxpose.xlu0.c.b16.cont [2/8] 0, 128
      %8602 = vxpose.xlu0.c.b16.cont [3/8] 0, 128
      %8603 = vxpose.xlu0.c.b16.cont [4/8] 0, 128
      %8604 = vxpose.xlu0.c.b16.cont [5/8] 0, 128
      %8605 = vxpose.xlu0.c.b16.cont [6/8] 0, 128
      %8606 = vxpose.xlu0.c.b16.cont [7/8] 0, 128
      %8607 = vxpose.xlu0.c.b16.end [8/8] 0, 128
      %v8608 = vpop.trf.xlu0
      %v8609 = vpop.trf.xlu0
      %v8610 = vpop.trf.xlu0
      %v8611 = vpop.trf.xlu0
      %v8612 = vpop.trf.xlu0
      %v8613 = vpop.trf.xlu0
      %v8614 = vpop.trf.xlu0
      %v8615 = vpop.trf.xlu0
      %8616 = vxpose.xlu0.c.b16.start [1/8] %v8514, 128
      %8617 = vxpose.xlu0.c.b16.cont [2/8] 0, 128
      %8618 = vxpose.xlu0.c.b16.cont [3/8] 0, 128
      %8619 = vxpose.xlu0.c.b16.cont [4/8] 0, 128
      %8620 = vxpose.xlu0.c.b16.cont [5/8] 0, 128
      %8621 = vxpose.xlu0.c.b16.cont [6/8] 0, 128
      %8622 = vxpose.xlu0.c.b16.cont [7/8] 0, 128
      %8623 = vxpose.xlu0.c.b16.end [8/8] 0, 128
      %v8624 = vpop.trf.xlu0
      %v8625 = vpop.trf.xlu0
      %v8626 = vpop.trf.xlu0
      %v8627 = vpop.trf.xlu0
      %v8628 = vpop.trf.xlu0
      %v8629 = vpop.trf.xlu0
      %v8630 = vpop.trf.xlu0
      %v8631 = vpop.trf.xlu0
      %8632 = vxpose.xlu0.c.b16.start [1/8] %v8518, 128
      %8633 = vxpose.xlu0.c.b16.cont [2/8] 0, 128
      %8634 = vxpose.xlu0.c.b16.cont [3/8] 0, 128
      %8635 = vxpose.xlu0.c.b16.cont [4/8] 0, 128
      %8636 = vxpose.xlu0.c.b16.cont [5/8] 0, 128
      %8637 = vxpose.xlu0.c.b16.cont [6/8] 0, 128
      %8638 = vxpose.xlu0.c.b16.cont [7/8] 0, 128
      %8639 = vxpose.xlu0.c.b16.end [8/8] 0, 128
      %v8640 = vpop.trf.xlu0
      %v8641 = vpop.trf.xlu0
      %v8642 = vpop.trf.xlu0
      %v8643 = vpop.trf.xlu0
      %v8644 = vpop.trf.xlu0
      %v8645 = vpop.trf.xlu0
      %v8646 = vpop.trf.xlu0
      %v8647 = vpop.trf.xlu0
      %v8648 = vcombine.low %v8528, %v8592
      %v8650 = vunpack.c.l.s4 1983009808
      %v8651 = vunpack.c.0.s8 %v8650
      %v8652 = vlaneseq
      %v8653 = vshrl.u32 %v8652, 7
      %v8654 = vsub.s32 %v8651, %v8653
      %v8655 = vrot.slane %v8648, %v8654
      %v8656 = vcombine.low %v8560, %v8624
      %v8658 = vunpack.c.l.s4 1983009808
      %v8659 = vunpack.c.0.s8 %v8658
      %v8660 = vlaneseq
      %v8661 = vshrl.u32 %v8660, 7
      %v8662 = vsub.s32 %v8659, %v8661
      %v8663 = vrot.slane %v8656, %v8662
      %v8664 = vcombine.low %v8655, %v8663
      %v8666 = vunpack.c.l.s4 1934713408
      %v8667 = vunpack.c.0.s8 %v8666
      %v8668 = vlaneseq
      %v8669 = vshrl.u32 %v8668, 7
      %v8670 = vsub.s32 %v8667, %v8669
      %v8671 = vrot.slane %v8664, %v8670
      %v8672 = vcombine.high %v8671, 0
      %v8673 = vcombine.low %v8544, %v8608
      %v8675 = vunpack.c.l.s4 1983009808
      %v8676 = vunpack.c.0.s8 %v8675
      %v8677 = vlaneseq
      %v8678 = vshrl.u32 %v8677, 7
      %v8679 = vsub.s32 %v8676, %v8678
      %v8680 = vrot.slane %v8673, %v8679
      %v8681 = vcombine.low %v8576, %v8640
      %v8683 = vunpack.c.l.s4 1983009808
      %v8684 = vunpack.c.0.s8 %v8683
      %v8685 = vlaneseq
      %v8686 = vshrl.u32 %v8685, 7
      %v8687 = vsub.s32 %v8684, %v8686
      %v8688 = vrot.slane %v8681, %v8687
      %v8689 = vcombine.low %v8680, %v8688
      %v8691 = vunpack.c.l.s4 1934713408
      %v8692 = vunpack.c.0.s8 %v8691
      %v8693 = vlaneseq
      %v8694 = vshrl.u32 %v8693, 7
      %v8695 = vsub.s32 %v8692, %v8694
      %v8696 = vrot.slane %v8689, %v8695
      %v8697 = vcombine.high %v8696, 0
      %v8700 = vpack.i.b16 %v8696, %v8671
      %v8701 = vshrl.u32 %v8671, 16
      %v8702 = vshrl.u32 %v8696, 16
      %v8703 = vpack.i.b16 %v8702, %v8701
      %v8706 = vpack.i.b16 %v8697, %v8672
      %v8707 = vshrl.u32 %v8672, 16
      %v8708 = vshrl.u32 %v8697, 16
      %v8709 = vpack.i.b16 %v8708, %v8707
      %v8711 = vsel %vm1302, %v8700, 0
      %v8714 = vsel %vm1302, %v8280, 0
      %8716 = vmatprep.subr.bf16.mxu0 0
      %8717 = vmatpush1.bf16.xpose.msra.mxu0 0
      %8718 = vmatprep.subr.bf16.mxu0 0
      %8719 = vmatpush1.bf16.xpose.msra.mxu0 0
      %8720 = vmatprep.subr.bf16.mxu0 0
      %8721 = vmatpush1.bf16.xpose.msra.mxu0 0
      %8722 = vmatprep.subr.bf16.mxu0 0
      %8723 = vmatpush1.bf16.xpose.msra.mxu0 0
      %8724 = vmatprep.subr.bf16.mxu0 0
      %8725 = vmatpush1.bf16.xpose.msra.mxu0 0
      %8726 = vmatprep.subr.bf16.mxu0 0
      %8727 = vmatpush1.bf16.xpose.msra.mxu0 0
      %8728 = vmatprep.subr.bf16.mxu0 0
      %8729 = vmatpush1.bf16.xpose.msra.mxu0 0
      %8730 = vmatprep.subr.bf16.mxu0 0
      %8731 = vmatpush1.bf16.xpose.msra.mxu0 %v8714
      %8732 = vmatprep.subr.bf16.mxu0 0
      %8733 = vmatpush2.bf16.xpose.msra.mxu0 0
      %8734 = vmatprep.subr.bf16.mxu0 0
      %8735 = vmatpush2.bf16.xpose.msra.mxu0 0
      %8736 = vmatprep.subr.bf16.mxu0 0
      %8737 = vmatpush2.bf16.xpose.msra.mxu0 0
      %8738 = vmatprep.subr.bf16.mxu0 0
      %8739 = vmatpush2.bf16.xpose.msra.mxu0 0
      %8740 = vmatprep.subr.bf16.mxu0 0
      %8741 = vmatpush2.bf16.xpose.msra.mxu0 0
      %8742 = vmatprep.subr.bf16.mxu0 0
      %8743 = vmatpush2.bf16.xpose.msra.mxu0 0
      %8744 = vmatprep.subr.bf16.mxu0 0
      %8745 = vmatpush2.bf16.xpose.msra.mxu0 0
      %8746 = vmatprep.subr.bf16.mxu0 0
      %8747 = vmatpush2.bf16.xpose.msra.mxu0 0
      %8748 = vmatprep.mubr.bf16.mxu0 0
      %8749 = vmatmul.mubr.bf16.gmra.mxu0 %v8711
      %v8750 = vpop.f32.mrf.mxu0
      %v8751 = vadd.f32 0.0, %v8750
      %v8752 = vpop.f32.mrf.mxu0
      %v8753 = vpop.f32.mrf.mxu0
      %v8754 = vpop.f32.mrf.mxu0
      %8755 = vdwg.mxu0
      %v8757 = vsel %vm1302, %v8703, 0
      %v8760 = vsel %vm1302, %v8281, 0
      %8762 = vmatprep.subr.bf16.mxu0 0
      %8763 = vmatpush1.bf16.xpose.msra.mxu0 0
      %8764 = vmatprep.subr.bf16.mxu0 0
      %8765 = vmatpush1.bf16.xpose.msra.mxu0 0
      %8766 = vmatprep.subr.bf16.mxu0 0
      %8767 = vmatpush1.bf16.xpose.msra.mxu0 0
      %8768 = vmatprep.subr.bf16.mxu0 0
      %8769 = vmatpush1.bf16.xpose.msra.mxu0 0
      %8770 = vmatprep.subr.bf16.mxu0 0
      %8771 = vmatpush1.bf16.xpose.msra.mxu0 0
      %8772 = vmatprep.subr.bf16.mxu0 0
      %8773 = vmatpush1.bf16.xpose.msra.mxu0 0
      %8774 = vmatprep.subr.bf16.mxu0 0
      %8775 = vmatpush1.bf16.xpose.msra.mxu0 0
      %8776 = vmatprep.subr.bf16.mxu0 0
      %8777 = vmatpush1.bf16.xpose.msra.mxu0 %v8760
      %8778 = vmatprep.subr.bf16.mxu0 0
      %8779 = vmatpush2.bf16.xpose.msra.mxu0 0
      %8780 = vmatprep.subr.bf16.mxu0 0
      %8781 = vmatpush2.bf16.xpose.msra.mxu0 0
      %8782 = vmatprep.subr.bf16.mxu0 0
      %8783 = vmatpush2.bf16.xpose.msra.mxu0 0
      %8784 = vmatprep.subr.bf16.mxu0 0
      %8785 = vmatpush2.bf16.xpose.msra.mxu0 0
      %8786 = vmatprep.subr.bf16.mxu0 0
      %8787 = vmatpush2.bf16.xpose.msra.mxu0 0
      %8788 = vmatprep.subr.bf16.mxu0 0
      %8789 = vmatpush2.bf16.xpose.msra.mxu0 0
      %8790 = vmatprep.subr.bf16.mxu0 0
      %8791 = vmatpush2.bf16.xpose.msra.mxu0 0
      %8792 = vmatprep.subr.bf16.mxu0 0
      %8793 = vmatpush2.bf16.xpose.msra.mxu0 0
      %8794 = vmatprep.mubr.bf16.mxu0 0
      %8795 = vmatmul.mubr.bf16.gmra.mxu0 %v8757
      %v8796 = vpop.f32.mrf.mxu0
      %v8797 = vadd.f32 0.0, %v8796
      %v8798 = vpop.f32.mrf.mxu0
      %v8799 = vpop.f32.mrf.mxu0
      %v8800 = vpop.f32.mrf.mxu0
      %8801 = vdwg.mxu0
      %v8803 = vsel %vm1302, %v8706, 0
      %v8806 = vsel %vm1302, %v8282, 0
      %8808 = vmatprep.subr.bf16.mxu0 0
      %8809 = vmatpush1.bf16.xpose.msra.mxu0 0
      %8810 = vmatprep.subr.bf16.mxu0 0
      %8811 = vmatpush1.bf16.xpose.msra.mxu0 0
      %8812 = vmatprep.subr.bf16.mxu0 0
      %8813 = vmatpush1.bf16.xpose.msra.mxu0 0
      %8814 = vmatprep.subr.bf16.mxu0 0
      %8815 = vmatpush1.bf16.xpose.msra.mxu0 0
      %8816 = vmatprep.subr.bf16.mxu0 0
      %8817 = vmatpush1.bf16.xpose.msra.mxu0 0
      %8818 = vmatprep.subr.bf16.mxu0 0
      %8819 = vmatpush1.bf16.xpose.msra.mxu0 0
      %8820 = vmatprep.subr.bf16.mxu0 0
      %8821 = vmatpush1.bf16.xpose.msra.mxu0 0
      %8822 = vmatprep.subr.bf16.mxu0 0
      %8823 = vmatpush1.bf16.xpose.msra.mxu0 %v8806
      %8824 = vmatprep.subr.bf16.mxu0 0
      %8825 = vmatpush2.bf16.xpose.msra.mxu0 0
      %8826 = vmatprep.subr.bf16.mxu0 0
      %8827 = vmatpush2.bf16.xpose.msra.mxu0 0
      %8828 = vmatprep.subr.bf16.mxu0 0
      %8829 = vmatpush2.bf16.xpose.msra.mxu0 0
      %8830 = vmatprep.subr.bf16.mxu0 0
      %8831 = vmatpush2.bf16.xpose.msra.mxu0 0
      %8832 = vmatprep.subr.bf16.mxu0 0
      %8833 = vmatpush2.bf16.xpose.msra.mxu0 0
      %8834 = vmatprep.subr.bf16.mxu0 0
      %8835 = vmatpush2.bf16.xpose.msra.mxu0 0
      %8836 = vmatprep.subr.bf16.mxu0 0
      %8837 = vmatpush2.bf16.xpose.msra.mxu0 0
      %8838 = vmatprep.subr.bf16.mxu0 0
      %8839 = vmatpush2.bf16.xpose.msra.mxu0 0
      %8840 = vmatprep.mubr.bf16.mxu0 0
      %8841 = vmatmul.mubr.bf16.gmra.mxu0 %v8803
      %v8842 = vpop.f32.mrf.mxu0
      %v8843 = vadd.f32 0.0, %v8842
      %v8844 = vpop.f32.mrf.mxu0
      %v8845 = vpop.f32.mrf.mxu0
      %v8846 = vpop.f32.mrf.mxu0
      %8847 = vdwg.mxu0
      %v8849 = vsel %vm1302, %v8709, 0
      %v8852 = vsel %vm1302, %v8283, 0
      %8854 = vmatprep.subr.bf16.mxu0 0
      %8855 = vmatpush1.bf16.xpose.msra.mxu0 0
      %8856 = vmatprep.subr.bf16.mxu0 0
      %8857 = vmatpush1.bf16.xpose.msra.mxu0 0
      %8858 = vmatprep.subr.bf16.mxu0 0
      %8859 = vmatpush1.bf16.xpose.msra.mxu0 0
      %8860 = vmatprep.subr.bf16.mxu0 0
      %8861 = vmatpush1.bf16.xpose.msra.mxu0 0
      %8862 = vmatprep.subr.bf16.mxu0 0
      %8863 = vmatpush1.bf16.xpose.msra.mxu0 0
      %8864 = vmatprep.subr.bf16.mxu0 0
      %8865 = vmatpush1.bf16.xpose.msra.mxu0 0
      %8866 = vmatprep.subr.bf16.mxu0 0
      %8867 = vmatpush1.bf16.xpose.msra.mxu0 0
      %8868 = vmatprep.subr.bf16.mxu0 0
      %8869 = vmatpush1.bf16.xpose.msra.mxu0 %v8852
      %8870 = vmatprep.subr.bf16.mxu0 0
      %8871 = vmatpush2.bf16.xpose.msra.mxu0 0
      %8872 = vmatprep.subr.bf16.mxu0 0
      %8873 = vmatpush2.bf16.xpose.msra.mxu0 0
      %8874 = vmatprep.subr.bf16.mxu0 0
      %8875 = vmatpush2.bf16.xpose.msra.mxu0 0
      %8876 = vmatprep.subr.bf16.mxu0 0
      %8877 = vmatpush2.bf16.xpose.msra.mxu0 0
      %8878 = vmatprep.subr.bf16.mxu0 0
      %8879 = vmatpush2.bf16.xpose.msra.mxu0 0
      %8880 = vmatprep.subr.bf16.mxu0 0
      %8881 = vmatpush2.bf16.xpose.msra.mxu0 0
      %8882 = vmatprep.subr.bf16.mxu0 0
      %8883 = vmatpush2.bf16.xpose.msra.mxu0 0
      %8884 = vmatprep.subr.bf16.mxu0 0
      %8885 = vmatpush2.bf16.xpose.msra.mxu0 0
      %8886 = vmatprep.mubr.bf16.mxu0 0
      %8887 = vmatmul.mubr.bf16.gmra.mxu0 %v8849
      %v8888 = vpop.f32.mrf.mxu0
      %v8889 = vadd.f32 0.0, %v8888
      %v8890 = vpop.f32.mrf.mxu0
      %v8891 = vpop.f32.mrf.mxu0
      %v8892 = vpop.f32.mrf.mxu0
      %8893 = vdwg.mxu0
      %8894 = vxpose.xlu0.b32.start [1/16] %v8751, 128
      %8895 = vxpose.xlu0.b32.cont [2/16] 0.0, 128
      %8896 = vxpose.xlu0.b32.cont [3/16] 0.0, 128
      %8897 = vxpose.xlu0.b32.cont [4/16] 0.0, 128
      %8898 = vxpose.xlu0.b32.cont [5/16] 0.0, 128
      %8899 = vxpose.xlu0.b32.cont [6/16] 0.0, 128
      %8900 = vxpose.xlu0.b32.cont [7/16] 0.0, 128
      %8901 = vxpose.xlu0.b32.cont [8/16] 0.0, 128
      %8902 = vxpose.xlu0.b32.cont [9/16] 0.0, 128
      %8903 = vxpose.xlu0.b32.cont [10/16] 0.0, 128
      %8904 = vxpose.xlu0.b32.cont [11/16] 0.0, 128
      %8905 = vxpose.xlu0.b32.cont [12/16] 0.0, 128
      %8906 = vxpose.xlu0.b32.cont [13/16] 0.0, 128
      %8907 = vxpose.xlu0.b32.cont [14/16] 0.0, 128
      %8908 = vxpose.xlu0.b32.cont [15/16] 0.0, 128
      %8909 = vxpose.xlu0.b32.end [16/16] 0.0, 128
      %v8910 = vpop.trf.xlu0
      %v8911 = vpop.trf.xlu0
      %v8912 = vpop.trf.xlu0
      %v8913 = vpop.trf.xlu0
      %v8914 = vpop.trf.xlu0
      %v8915 = vpop.trf.xlu0
      %v8916 = vpop.trf.xlu0
      %v8917 = vpop.trf.xlu0
      %v8918 = vpop.trf.xlu0
      %v8919 = vpop.trf.xlu0
      %v8920 = vpop.trf.xlu0
      %v8921 = vpop.trf.xlu0
      %v8922 = vpop.trf.xlu0
      %v8923 = vpop.trf.xlu0
      %v8924 = vpop.trf.xlu0
      %v8925 = vpop.trf.xlu0
      %8926 = vxpose.xlu0.b32.start [1/16] %v8797, 128
      %8927 = vxpose.xlu0.b32.cont [2/16] 0.0, 128
      %8928 = vxpose.xlu0.b32.cont [3/16] 0.0, 128
      %8929 = vxpose.xlu0.b32.cont [4/16] 0.0, 128
      %8930 = vxpose.xlu0.b32.cont [5/16] 0.0, 128
      %8931 = vxpose.xlu0.b32.cont [6/16] 0.0, 128
      %8932 = vxpose.xlu0.b32.cont [7/16] 0.0, 128
      %8933 = vxpose.xlu0.b32.cont [8/16] 0.0, 128
      %8934 = vxpose.xlu0.b32.cont [9/16] 0.0, 128
      %8935 = vxpose.xlu0.b32.cont [10/16] 0.0, 128
      %8936 = vxpose.xlu0.b32.cont [11/16] 0.0, 128
      %8937 = vxpose.xlu0.b32.cont [12/16] 0.0, 128
      %8938 = vxpose.xlu0.b32.cont [13/16] 0.0, 128
      %8939 = vxpose.xlu0.b32.cont [14/16] 0.0, 128
      %8940 = vxpose.xlu0.b32.cont [15/16] 0.0, 128
      %8941 = vxpose.xlu0.b32.end [16/16] 0.0, 128
      %v8942 = vpop.trf.xlu0
      %v8943 = vpop.trf.xlu0
      %v8944 = vpop.trf.xlu0
      %v8945 = vpop.trf.xlu0
      %v8946 = vpop.trf.xlu0
      %v8947 = vpop.trf.xlu0
      %v8948 = vpop.trf.xlu0
      %v8949 = vpop.trf.xlu0
      %v8950 = vpop.trf.xlu0
      %v8951 = vpop.trf.xlu0
      %v8952 = vpop.trf.xlu0
      %v8953 = vpop.trf.xlu0
      %v8954 = vpop.trf.xlu0
      %v8955 = vpop.trf.xlu0
      %v8956 = vpop.trf.xlu0
      %v8957 = vpop.trf.xlu0
      %8958 = vxpose.xlu0.b32.start [1/16] %v8843, 128
      %8959 = vxpose.xlu0.b32.cont [2/16] 0.0, 128
      %8960 = vxpose.xlu0.b32.cont [3/16] 0.0, 128
      %8961 = vxpose.xlu0.b32.cont [4/16] 0.0, 128
      %8962 = vxpose.xlu0.b32.cont [5/16] 0.0, 128
      %8963 = vxpose.xlu0.b32.cont [6/16] 0.0, 128
      %8964 = vxpose.xlu0.b32.cont [7/16] 0.0, 128
      %8965 = vxpose.xlu0.b32.cont [8/16] 0.0, 128
      %8966 = vxpose.xlu0.b32.cont [9/16] 0.0, 128
      %8967 = vxpose.xlu0.b32.cont [10/16] 0.0, 128
      %8968 = vxpose.xlu0.b32.cont [11/16] 0.0, 128
      %8969 = vxpose.xlu0.b32.cont [12/16] 0.0, 128
      %8970 = vxpose.xlu0.b32.cont [13/16] 0.0, 128
      %8971 = vxpose.xlu0.b32.cont [14/16] 0.0, 128
      %8972 = vxpose.xlu0.b32.cont [15/16] 0.0, 128
      %8973 = vxpose.xlu0.b32.end [16/16] 0.0, 128
      %v8974 = vpop.trf.xlu0
      %v8975 = vpop.trf.xlu0
      %v8976 = vpop.trf.xlu0
      %v8977 = vpop.trf.xlu0
      %v8978 = vpop.trf.xlu0
      %v8979 = vpop.trf.xlu0
      %v8980 = vpop.trf.xlu0
      %v8981 = vpop.trf.xlu0
      %v8982 = vpop.trf.xlu0
      %v8983 = vpop.trf.xlu0
      %v8984 = vpop.trf.xlu0
      %v8985 = vpop.trf.xlu0
      %v8986 = vpop.trf.xlu0
      %v8987 = vpop.trf.xlu0
      %v8988 = vpop.trf.xlu0
      %v8989 = vpop.trf.xlu0
      %8990 = vxpose.xlu0.b32.start [1/16] %v8889, 128
      %8991 = vxpose.xlu0.b32.cont [2/16] 0.0, 128
      %8992 = vxpose.xlu0.b32.cont [3/16] 0.0, 128
      %8993 = vxpose.xlu0.b32.cont [4/16] 0.0, 128
      %8994 = vxpose.xlu0.b32.cont [5/16] 0.0, 128
      %8995 = vxpose.xlu0.b32.cont [6/16] 0.0, 128
      %8996 = vxpose.xlu0.b32.cont [7/16] 0.0, 128
      %8997 = vxpose.xlu0.b32.cont [8/16] 0.0, 128
      %8998 = vxpose.xlu0.b32.cont [9/16] 0.0, 128
      %8999 = vxpose.xlu0.b32.cont [10/16] 0.0, 128
      %9000 = vxpose.xlu0.b32.cont [11/16] 0.0, 128
      %9001 = vxpose.xlu0.b32.cont [12/16] 0.0, 128
      %9002 = vxpose.xlu0.b32.cont [13/16] 0.0, 128
      %9003 = vxpose.xlu0.b32.cont [14/16] 0.0, 128
      %9004 = vxpose.xlu0.b32.cont [15/16] 0.0, 128
      %9005 = vxpose.xlu0.b32.end [16/16] 0.0, 128
      %v9006 = vpop.trf.xlu0
      %v9007 = vpop.trf.xlu0
      %v9008 = vpop.trf.xlu0
      %v9009 = vpop.trf.xlu0
      %v9010 = vpop.trf.xlu0
      %v9011 = vpop.trf.xlu0
      %v9012 = vpop.trf.xlu0
      %v9013 = vpop.trf.xlu0
      %v9014 = vpop.trf.xlu0
      %v9015 = vpop.trf.xlu0
      %v9016 = vpop.trf.xlu0
      %v9017 = vpop.trf.xlu0
      %v9018 = vpop.trf.xlu0
      %v9019 = vpop.trf.xlu0
      %v9020 = vpop.trf.xlu0
      %v9021 = vpop.trf.xlu0
      %v9022 = vcombine.low %v8910, %v8974
      %v9023 = vcombine.high %v8910, %v8974
      %v9025 = vunpack.c.l.s4 1983009808
      %v9026 = vunpack.c.0.s8 %v9025
      %v9027 = vlaneseq
      %v9028 = vshrl.u32 %v9027, 7
      %v9029 = vsub.s32 %v9026, %v9028
      %v9030 = vrot.slane %v9022, %v9029
      %v9032 = vunpack.c.l.s4 1983009808
      %v9033 = vunpack.c.0.s8 %v9032
      %v9034 = vlaneseq
      %v9035 = vshrl.u32 %v9034, 7
      %v9036 = vsub.s32 %v9033, %v9035
      %v9037 = vrot.slane %v9023, %v9036
      %v9038 = vcombine.low %v8942, %v9006
      %v9039 = vcombine.high %v8942, %v9006
      %v9041 = vunpack.c.l.s4 1983009808
      %v9042 = vunpack.c.0.s8 %v9041
      %v9043 = vlaneseq
      %v9044 = vshrl.u32 %v9043, 7
      %v9045 = vsub.s32 %v9042, %v9044
      %v9046 = vrot.slane %v9038, %v9045
      %v9048 = vunpack.c.l.s4 1983009808
      %v9049 = vunpack.c.0.s8 %v9048
      %v9050 = vlaneseq
      %v9051 = vshrl.u32 %v9050, 7
      %v9052 = vsub.s32 %v9049, %v9051
      %v9053 = vrot.slane %v9039, %v9052
      %v9054 = vcombine.low %v9030, %v9046
      %v9055 = vcombine.high %v9030, %v9046
      %v9057 = vunpack.c.l.s4 1934713408
      %v9058 = vunpack.c.0.s8 %v9057
      %v9059 = vlaneseq
      %v9060 = vshrl.u32 %v9059, 7
      %v9061 = vsub.s32 %v9058, %v9060
      %v9062 = vrot.slane %v9054, %v9061
      %v9064 = vunpack.c.l.s4 1934713408
      %v9065 = vunpack.c.0.s8 %v9064
      %v9066 = vlaneseq
      %v9067 = vshrl.u32 %v9066, 7
      %v9068 = vsub.s32 %v9065, %v9067
      %v9069 = vrot.slane %v9055, %v9068
      %v9070 = vcombine.low %v9037, %v9053
      %v9071 = vcombine.high %v9037, %v9053
      %v9073 = vunpack.c.l.s4 1934713408
      %v9074 = vunpack.c.0.s8 %v9073
      %v9075 = vlaneseq
      %v9076 = vshrl.u32 %v9075, 7
      %v9077 = vsub.s32 %v9074, %v9076
      %v9078 = vrot.slane %v9070, %v9077
      %v9080 = vunpack.c.l.s4 1934713408
      %v9081 = vunpack.c.0.s8 %v9080
      %v9082 = vlaneseq
      %v9083 = vshrl.u32 %v9082, 7
      %v9084 = vsub.s32 %v9081, %v9083
      %v9085 = vrot.slane %v9071, %v9084
      %v9086 = vcombine.high %v9062, 0.0
      %v9087 = vcombine.high %v9069, 0.0
      %v9088 = vcombine.high %v9078, 0.0
      %v9089 = vcombine.high %v9085, 0.0
      %v9090 = vcombine.low %v9062, %v9069
      %v9092 = vunpack.c.l.s4 1983009808
      %v9093 = vunpack.c.0.s8 %v9092
      %v9094 = vlaneseq
      %v9095 = vshrl.u32 %v9094, 7
      %v9096 = vsub.s32 %v9093, %v9095
      %v9097 = vrot.slane %v9090, %v9096
      %v9098 = vcombine.low %v9086, %v9087
      %v9100 = vunpack.c.l.s4 1983009808
      %v9101 = vunpack.c.0.s8 %v9100
      %v9102 = vlaneseq
      %v9103 = vshrl.u32 %v9102, 7
      %v9104 = vsub.s32 %v9101, %v9103
      %v9105 = vrot.slane %v9098, %v9104
      %v9106 = vcombine.low %v9078, %v9085
      %v9108 = vunpack.c.l.s4 1983009808
      %v9109 = vunpack.c.0.s8 %v9108
      %v9110 = vlaneseq
      %v9111 = vshrl.u32 %v9110, 7
      %v9112 = vsub.s32 %v9109, %v9111
      %v9113 = vrot.slane %v9106, %v9112
      %v9114 = vcombine.low %v9088, %v9089
      %v9116 = vunpack.c.l.s4 1983009808
      %v9117 = vunpack.c.0.s8 %v9116
      %v9118 = vlaneseq
      %v9119 = vshrl.u32 %v9118, 7
      %v9120 = vsub.s32 %v9117, %v9119
      %v9121 = vrot.slane %v9114, %v9120
      %v9122 = vcombine.low %v9097, %v9105
      %v9123 = vcombine.high %v9097, %v9105
      %v9125 = vunpack.c.l.s4 1934713408
      %v9126 = vunpack.c.0.s8 %v9125
      %v9127 = vlaneseq
      %v9128 = vshrl.u32 %v9127, 7
      %v9129 = vsub.s32 %v9126, %v9128
      %v9130 = vrot.slane %v9122, %v9129
      %v9132 = vunpack.c.l.s4 1934713408
      %v9133 = vunpack.c.0.s8 %v9132
      %v9134 = vlaneseq
      %v9135 = vshrl.u32 %v9134, 7
      %v9136 = vsub.s32 %v9133, %v9135
      %v9137 = vrot.slane %v9123, %v9136
      %v9138 = vcombine.low %v9113, %v9121
      %v9139 = vcombine.high %v9113, %v9121
      %v9141 = vunpack.c.l.s4 1934713408
      %v9142 = vunpack.c.0.s8 %v9141
      %v9143 = vlaneseq
      %v9144 = vshrl.u32 %v9143, 7
      %v9145 = vsub.s32 %v9142, %v9144
      %v9146 = vrot.slane %v9138, %v9145
      %v9148 = vunpack.c.l.s4 1934713408
      %v9149 = vunpack.c.0.s8 %v9148
      %v9150 = vlaneseq
      %v9151 = vshrl.u32 %v9150, 7
      %v9152 = vsub.s32 %v9149, %v9151
      %v9153 = vrot.slane %v9139, %v9152
      %v9154 = vcombine.low %v9130, %v9146
      %v9155 = vcombine.high %v9130, %v9146
      %v9156 = vcombine.low %v9137, %v9153
      %v9157 = vcombine.high %v9137, %v9153
      %9159 = vrot.lane.b32.xlu0 %v9155, 8
      %v9160 = vpop.permute.xlu0 %9159
      %9163 = vrot.lane.b32.xlu0 %v9156, 16
      %v9164 = vpop.permute.xlu0 %9163
      %9167 = vrot.lane.b32.xlu0 %v9157, 24
      %v9168 = vpop.permute.xlu0 %9167
      %v9170 = vsel %vm1302, %v9154, %v9160
      %v9171 = vsel %vm2423, %v9170, %v9164
      %v9172 = vsel %vm2425, %v9171, %v9168
      %v9173 = vpack.c.bf16 %v9172, %v9172
      %s9174 = scalar_lea.vmem %s6, 48
      %v9175 = vld [vmem:[%s9174] sm:$0xf]
      %v9176 = vld [vmem:[%s9174 + $0x4] sm:$0xf]
      %v9177 = vld [vmem:[%s9174 + $0x8] sm:$0xf]
      %v9178 = vld [vmem:[%s9174 + $0xc] sm:$0xf]
      %v9183 = vunpack.c.l.b16 %v9175
      %v9184 = vunpack.c.l.b16 %v9176
      %v9185 = vunpack.c.l.b16 %v9177
      %v9186 = vunpack.c.l.b16 %v9178
      %v9187 = vpack.c.b16 %v9184, %v9183
      %v9188 = vpack.c.b16 %v9186, %v9185
      %v9192 = vsel %vm433, %v9173, 0
      %9194 = vmatprep.subr.bf16.mxu0 0
      %9195 = vmatpush1.bf16.msra.mxu0 0
      %9196 = vmatprep.subr.bf16.mxu0 0
      %9197 = vmatpush1.bf16.msra.mxu0 0
      %9198 = vmatprep.subr.bf16.mxu0 0
      %9199 = vmatpush1.bf16.msra.mxu0 0
      %9200 = vmatprep.subr.bf16.mxu0 0
      %9201 = vmatpush1.bf16.msra.mxu0 0
      %9202 = vmatprep.subr.bf16.mxu0 0
      %9203 = vmatpush1.bf16.msra.mxu0 0
      %9204 = vmatprep.subr.bf16.mxu0 0
      %9205 = vmatpush1.bf16.msra.mxu0 0
      %9206 = vmatprep.subr.bf16.mxu0 0
      %9207 = vmatpush1.bf16.msra.mxu0 %v9188
      %9208 = vmatprep.subr.bf16.mxu0 0
      %9209 = vmatpush1.bf16.msra.mxu0 %v9187
      %9210 = vmatprep.subr.bf16.mxu0 0
      %9211 = vmatpush2.bf16.msra.mxu0 0
      %9212 = vmatprep.subr.bf16.mxu0 0
      %9213 = vmatpush2.bf16.msra.mxu0 0
      %9214 = vmatprep.subr.bf16.mxu0 0
      %9215 = vmatpush2.bf16.msra.mxu0 0
      %9216 = vmatprep.subr.bf16.mxu0 0
      %9217 = vmatpush2.bf16.msra.mxu0 0
      %9218 = vmatprep.subr.bf16.mxu0 0
      %9219 = vmatpush2.bf16.msra.mxu0 0
      %9220 = vmatprep.subr.bf16.mxu0 0
      %9221 = vmatpush2.bf16.msra.mxu0 0
      %9222 = vmatprep.subr.bf16.mxu0 0
      %9223 = vmatpush2.bf16.msra.mxu0 0
      %9224 = vmatprep.subr.bf16.mxu0 0
      %9225 = vmatpush2.bf16.msra.mxu0 0
      %9226 = vmatprep.mubr.bf16.mxu0 0
      %9227 = vmatmul.mubr.bf16.gmra.mxu0 %v9192
      %v9228 = vpop.f32.mrf.mxu0
      %v9229 = vadd.f32 0.0, %v9228
      %v9230 = vpop.f32.mrf.mxu0
      %v9231 = vpop.f32.mrf.mxu0
      %v9232 = vpop.f32.mrf.mxu0
      %9233 = vdwg.mxu0
      %v9234 = vadd.f32 %v7179, %v9229
      %s9235 = scalar_lea.vmem %s2, 3
      %v9236 = vld [vmem:[%s9235] sm:$0x1]
      %v9237 = vmul.f32 %v9234, %v9234
      %v9238 = vsel %vm433, %v9237, 0.0
      %9239 = vadd.xlane.f32.xlu0 %v9238
      %v9240 = vpop.xlane.xlu0 %9239
      %v9241 = vmul.f32 %v9240, %v437
      %v9242 = vadd.f32 %v9241, 1e-06
      %v9243 = vrsqrt.pop %v9242
      %v9244 = vmul.f32 %v9234, %v9243
      %v9246 = vlaneseq
      %v9247 = vshrl.u32 %v9246, 7
      %v9248 = vsub.s32 0, %v9247
      %v9249 = vrot.slane %v9236, %v9248
      %v9251 = vmul.f32 %v9244, %v9249
      %v9252 = vpack.c.bf16 %v9251, %v9251
      %s9253 = scalar_lea.vmem %s7, 48
      %v9254 = vld [vmem:[%s9253] sm:$0xf]
      %v9255 = vld [vmem:[%s9253 + $0x4] sm:$0xf]
      %v9256 = vld [vmem:[%s9253 + $0x8] sm:$0xf]
      %v9257 = vld [vmem:[%s9253 + $0xc] sm:$0xf]
      %v9262 = vunpack.c.l.b16 %v9254
      %v9263 = vunpack.c.l.b16 %v9255
      %v9264 = vunpack.c.l.b16 %v9256
      %v9265 = vunpack.c.l.b16 %v9257
      %v9266 = vpack.c.b16 %v9263, %v9262
      %v9267 = vpack.c.b16 %v9265, %v9264
      %v9271 = vsel %vm433, %v9252, 0
      %9273 = vmatprep.subr.bf16.mxu0 0
      %9274 = vmatpush1.bf16.msra.mxu0 0
      %9275 = vmatprep.subr.bf16.mxu0 0
      %9276 = vmatpush1.bf16.msra.mxu0 0
      %9277 = vmatprep.subr.bf16.mxu0 0
      %9278 = vmatpush1.bf16.msra.mxu0 0
      %9279 = vmatprep.subr.bf16.mxu0 0
      %9280 = vmatpush1.bf16.msra.mxu0 0
      %9281 = vmatprep.subr.bf16.mxu0 0
      %9282 = vmatpush1.bf16.msra.mxu0 0
      %9283 = vmatprep.subr.bf16.mxu0 0
      %9284 = vmatpush1.bf16.msra.mxu0 0
      %9285 = vmatprep.subr.bf16.mxu0 0
      %9286 = vmatpush1.bf16.msra.mxu0 %v9267
      %9287 = vmatprep.subr.bf16.mxu0 0
      %9288 = vmatpush1.bf16.msra.mxu0 %v9266
      %9289 = vmatprep.subr.bf16.mxu0 0
      %9290 = vmatpush2.bf16.msra.mxu0 0
      %9291 = vmatprep.subr.bf16.mxu0 0
      %9292 = vmatpush2.bf16.msra.mxu0 0
      %9293 = vmatprep.subr.bf16.mxu0 0
      %9294 = vmatpush2.bf16.msra.mxu0 0
      %9295 = vmatprep.subr.bf16.mxu0 0
      %9296 = vmatpush2.bf16.msra.mxu0 0
      %9297 = vmatprep.subr.bf16.mxu0 0
      %9298 = vmatpush2.bf16.msra.mxu0 0
      %9299 = vmatprep.subr.bf16.mxu0 0
      %9300 = vmatpush2.bf16.msra.mxu0 0
      %9301 = vmatprep.subr.bf16.mxu0 0
      %9302 = vmatpush2.bf16.msra.mxu0 0
      %9303 = vmatprep.subr.bf16.mxu0 0
      %9304 = vmatpush2.bf16.msra.mxu0 0
      %9305 = vmatprep.mubr.bf16.mxu0 0
      %9306 = vmatmul.mubr.bf16.gmra.mxu0 %v9271
      %v9307 = vpop.f32.mrf.mxu0
      %v9308 = vadd.f32 0.0, %v9307
      %v9309 = vpop.f32.mrf.mxu0
      %v9310 = vpop.f32.mrf.mxu0
      %v9311 = vpop.f32.mrf.mxu0
      %9312 = vdwg.mxu0
      %v9313 = vxor.u32 %v9308, 2147483648
      %v9314 = vmul.f32 %v9313, 1.442695
      %v9315 = vpow.pop %v9314
      %v9316 = vadd.f32 %v9315, 1.0
      %v9317 = vrcp.pop %v9316
      %v9318 = vmul.f32 1.0, %v9317
      %v9319 = vmul.f32 %v9308, %v9318
      %9320 = vrot.lane.b32.xlu0 %v9308, 64
      %v9321 = vpop.permute.xlu0 %9320
      %v9322 = vmul.f32 %v9319, %v9321
      %v9323 = vpack.c.bf16 %v9322, %v9322
      %s9324 = scalar_lea.vmem %s8, 192
      %v9325 = vld [vmem:[%s9324] sm:$0xf]
      %v9326 = vld [vmem:[%s9324 + $0x4] sm:$0xf]
      %v9327 = vld [vmem:[%s9324 + $0x8] sm:$0xf]
      %v9328 = vld [vmem:[%s9324 + $0xc] sm:$0xf]
      %v9329 = vld [vmem:[%s9324 + $0x10] sm:$0xf]
      %v9330 = vld [vmem:[%s9324 + $0x14] sm:$0xf]
      %v9331 = vld [vmem:[%s9324 + $0x18] sm:$0xf]
      %v9332 = vld [vmem:[%s9324 + $0x1c] sm:$0xf]
      %v9333 = vld [vmem:[%s9324 + $0x20] sm:$0xf]
      %v9334 = vld [vmem:[%s9324 + $0x24] sm:$0xf]
      %v9335 = vld [vmem:[%s9324 + $0x28] sm:$0xf]
      %v9336 = vld [vmem:[%s9324 + $0x2c] sm:$0xf]
      %v9337 = vld [vmem:[%s9324 + $0x30] sm:$0xf]
      %v9338 = vld [vmem:[%s9324 + $0x34] sm:$0xf]
      %v9339 = vld [vmem:[%s9324 + $0x38] sm:$0xf]
      %v9340 = vld [vmem:[%s9324 + $0x3c] sm:$0xf]
      %v9357 = vunpack.c.l.b16 %v9325
      %v9358 = vunpack.c.l.b16 %v9326
      %v9359 = vunpack.c.l.b16 %v9327
      %v9360 = vunpack.c.l.b16 %v9328
      %v9361 = vunpack.c.l.b16 %v9329
      %v9362 = vunpack.c.l.b16 %v9330
      %v9363 = vunpack.c.l.b16 %v9331
      %v9364 = vunpack.c.l.b16 %v9332
      %v9365 = vunpack.c.l.b16 %v9333
      %v9366 = vunpack.c.l.b16 %v9334
      %v9367 = vunpack.c.l.b16 %v9335
      %v9368 = vunpack.c.l.b16 %v9336
      %v9369 = vunpack.c.l.b16 %v9337
      %v9370 = vunpack.c.l.b16 %v9338
      %v9371 = vunpack.c.l.b16 %v9339
      %v9372 = vunpack.c.l.b16 %v9340
      %v9373 = vpack.c.b16 %v9358, %v9357
      %v9374 = vpack.c.b16 %v9360, %v9359
      %v9375 = vpack.c.b16 %v9362, %v9361
      %v9376 = vpack.c.b16 %v9364, %v9363
      %v9377 = vpack.c.b16 %v9366, %v9365
      %v9378 = vpack.c.b16 %v9368, %v9367
      %v9379 = vpack.c.b16 %v9370, %v9369
      %v9380 = vpack.c.b16 %v9372, %v9371
      %9389 = vmatprep.subr.bf16.mxu0 0
      %9390 = vmatpush1.bf16.msra.mxu0 %v9380
      %9391 = vmatprep.subr.bf16.mxu0 0
      %9392 = vmatpush1.bf16.msra.mxu0 %v9379
      %9393 = vmatprep.subr.bf16.mxu0 0
      %9394 = vmatpush1.bf16.msra.mxu0 %v9378
      %9395 = vmatprep.subr.bf16.mxu0 0
      %9396 = vmatpush1.bf16.msra.mxu0 %v9377
      %9397 = vmatprep.subr.bf16.mxu0 0
      %9398 = vmatpush1.bf16.msra.mxu0 %v9376
      %9399 = vmatprep.subr.bf16.mxu0 0
      %9400 = vmatpush1.bf16.msra.mxu0 %v9375
      %9401 = vmatprep.subr.bf16.mxu0 0
      %9402 = vmatpush1.bf16.msra.mxu0 %v9374
      %9403 = vmatprep.subr.bf16.mxu0 0
      %9404 = vmatpush1.bf16.msra.mxu0 %v9373
      %9405 = vmatprep.subr.bf16.mxu0 0
      %9406 = vmatpush2.bf16.msra.mxu0 0
      %9407 = vmatprep.subr.bf16.mxu0 0
      %9408 = vmatpush2.bf16.msra.mxu0 0
      %9409 = vmatprep.subr.bf16.mxu0 0
      %9410 = vmatpush2.bf16.msra.mxu0 0
      %9411 = vmatprep.subr.bf16.mxu0 0
      %9412 = vmatpush2.bf16.msra.mxu0 0
      %9413 = vmatprep.subr.bf16.mxu0 0
      %9414 = vmatpush2.bf16.msra.mxu0 0
      %9415 = vmatprep.subr.bf16.mxu0 0
      %9416 = vmatpush2.bf16.msra.mxu0 0
      %9417 = vmatprep.subr.bf16.mxu0 0
      %9418 = vmatpush2.bf16.msra.mxu0 0
      %9419 = vmatprep.subr.bf16.mxu0 0
      %9420 = vmatpush2.bf16.msra.mxu0 0
      %9421 = vmatprep.mubr.bf16.mxu0 0
      %9422 = vmatmul.mubr.bf16.gmra.mxu0 %v9323
      %v9423 = vpop.f32.mrf.mxu0
      %v9424 = vadd.f32 0.0, %v9423
      %v9425 = vpop.f32.mrf.mxu0
      %v9426 = vpop.f32.mrf.mxu0
      %v9427 = vpop.f32.mrf.mxu0
      %9428 = vdwg.mxu0
      %v9429 = vadd.f32 %v9234, %v9424
      %v9430 = vld [vmem:[%s3] sm:$0x1]
      %v9431 = vmul.f32 %v9429, %v9429
      %v9432 = vsel %vm433, %v9431, 0.0
      %9433 = vadd.xlane.f32.xlu0 %v9432
      %v9434 = vpop.xlane.xlu0 %9433
      %v9435 = vmul.f32 %v9434, %v437
      %v9436 = vadd.f32 %v9435, 1e-06
      %v9437 = vrsqrt.pop %v9436
      %v9438 = vmul.f32 %v9429, %v9437
      %v9440 = vlaneseq
      %v9441 = vshrl.u32 %v9440, 7
      %v9442 = vsub.s32 0, %v9441
      %v9443 = vrot.slane %v9430, %v9442
      %v9445 = vmul.f32 %v9438, %v9443
      %9446 = vst.msk [vmem:[%s425] sm:$0xff] %vm433, %v9445
      %p9447 = scmp.lt.s32.totalorder %s23, 1
      %s9448 = scalar_select %p9447, %s23, 1
      %s9449 = smul.addr %s9448, 8
      %s9450 = scalar_lea.vmem %s12, %s9449
      // Predicated region
      $region69: #{clsnet_forward.1} parent=67 // pred_check
        %p9451 = pneg %p303
      $region70: #{clsnet_forward.1} parent=67 // pred_check_branch
        %9453 = sbr.rel (%p9451) target = $region72
      $region71: #{clsnet_forward.1} parent=67 // pred_region
        _
      $region72: #{clsnet_forward.1} parent=67 // pred_fallthru
        _
    $region68: #{clsnet_forward.1} parent=5 // pred_fallthru
      _
    %p9454 = scmp.le.s32.totalorder 2, %s18
    // Predicated region
    $region73: #{clsnet_forward.1} parent=5 // pred_check
      %p9455 = pneg %p9454
    $region74: #{clsnet_forward.1} parent=5 // pred_check_branch
      %9457 = sbr.rel (%p9455) target = $region76
    $region75: #{clsnet_forward.1} parent=5 // pred_region
      %s9458 = ssub.s32 %s18, 2
      // Predicated region
      $region77: #{clsnet_forward.1} parent=75 // pred_check
        %p9459 = pneg %p309
      $region78: #{clsnet_forward.1} parent=75 // pred_check_branch
        %9461 = sbr.rel (%p9459) target = $region80
      $region79: #{clsnet_forward.1} parent=75 // pred_region
        %p9462 = scmp.lt.s32.totalorder %s24, 1
        %s9463 = scalar_select %p9462, %s24, 1
        %s9464 = smul.addr %s9463, 8
        %s9465 = scalar_lea.vmem %s12, %s9464
      $region80: #{clsnet_forward.1} parent=75 // pred_fallthru
        _
    $region76: #{clsnet_forward.1} parent=5 // pred_fallthru
      _
  $region6: #{clsnet_forward.1} parent=0 // loop_footer
    %s22 = sadd.s32 1, %s18
  $region7: #{clsnet_forward.1} parent=0 // loop_footer_branch
    %17 = sbr.rel target = $region3
  $region8: #{clsnet_forward.1} parent=0 // loop_exit
    _

</llo_original>
